<compile_context>
chip_gen: v7x
topology: tpu7x:2x2x1
jax: 0.10.0
libtpu: 0.0.40
codegen_flags: <defaults>
</compile_context>

<pallas_src>
import functools

import jax
import jax.numpy as jnp
from jax import lax
from jax.experimental import pallas as pl
from jax.experimental.pallas import tpu as pltpu


# ----------------------------------------------------------------------------
# In-kernel helpers
# ----------------------------------------------------------------------------
def _bf16_dot(a, b):
    """MXU matmul: bf16 operands, f32 accumulation."""
    return jnp.dot(a.astype(jnp.bfloat16), b.astype(jnp.bfloat16),
                   preferred_element_type=jnp.float32)


def _bf16_dot_t(a, b):
    """a @ b.T via dot_general (contract last dims, no materialized transpose)."""
    return lax.dot_general(a.astype(jnp.bfloat16), b.astype(jnp.bfloat16),
                           dimension_numbers=(((1,), (1,)), ((), ())),
                           preferred_element_type=jnp.float32)


def _sigmoid(x):
    # 1 / (1 + exp(-x)); reciprocal goes to the EUP slot.
    return pl.reciprocal(1.0 + jnp.exp(-x), approx=True)


def _attention_residual(x_in, y_in, wq, wk, wv_scaled, wu, bu, num_heads):
    """DynamicMultiHeadAttention(x, y).squeeze(0) + x (eval, batch=1).

    head_weights are pre-folded into the columns of wv; per-head outputs are
    folded into the unify projection (sum_h (P_h @ V_h) @ Wu_h), so no
    concatenate / VMEM scratch is materialized.
    """
    d = x_in.shape[1]
    hd = d // num_heads
    scale = hd ** (-0.5)
    q = _bf16_dot(y_in, wq)          # queries come from y
    k = _bf16_dot(x_in, wk)          # keys/values come from x
    v = _bf16_dot(x_in, wv_scaled)   # head_weights folded into wv columns
    acc = jnp.zeros(x_in.shape, jnp.float32)
    for h in range(num_heads):       # static, unrolled (num_heads is small)
        lo = h * hd
        s = _bf16_dot_t(q[:, lo:lo + hd], k[:, lo:lo + hd]) * scale
        s = s - jnp.max(s, axis=-1, keepdims=True)
        p = jnp.exp(s)
        p = p * pl.reciprocal(jnp.sum(p, axis=-1, keepdims=True), approx=True)
        # TODO(synk): training-mode Dropout(0.2) on p not implemented (eval mode).
        oh = _bf16_dot(p, v[:, lo:lo + hd])             # (M, hd)
        acc = acc + _bf16_dot(oh, wu[lo:lo + hd, :])    # accumulate into (M, D)
    return acc + bu + x_in


# ----------------------------------------------------------------------------
# The fused forward-pass kernel
# ----------------------------------------------------------------------------
def make_forward_kernel(num_heads, n_input):
    def kernel(x_ref, adj_ref,
               we1_ref, be1_ref, s1_ref, t1_ref,
               we2_ref, be2_ref, s2_ref, t2_ref,
               wg1_ref, wg2_ref,
               a1q_ref, a1k_ref, a1v_ref, a1u_ref, a1b_ref,
               wz_ref, bz_ref,
               a2q_ref, a2k_ref, a2v_ref, a2u_ref, a2b_ref,
               wd1_ref, bd1_ref, wd2_ref, bd2_ref,
               wh_ref, bh_ref,
               z_ref, a_pred_ref, pi_ref, mean_ref, disp_ref):
        x = x_ref[...]
        adj_b = adj_ref[...].astype(jnp.bfloat16)   # loaded & cast once, reused

        # --- encoder layer 1: BN1(relu(x @ We1 + b))  (GaussianNoise = id in eval)
        h = _bf16_dot(x, we1_ref[...]) + be1_ref[...]
        enc_h1 = jnp.maximum(h, 0.0) * s1_ref[...] + t1_ref[...]

        # --- GNN chain: tanh(adj @ (feat @ W)); adj stays resident in VMEM
        h1 = jnp.tanh(_bf16_dot(adj_b, _bf16_dot(enc_h1, wg1_ref[...])))
        h2 = jnp.tanh(_bf16_dot(adj_b, _bf16_dot(h1, wg2_ref[...])))

        # --- A_pred = sigmoid(h2 @ h2.T)   (h2 reused straight from VMEM/vregs)
        a_pred_ref[...] = _sigmoid(_bf16_dot_t(h2, h2))

        # --- encoder layer 2 + attention 1 (residual on enc_h2)
        h = _bf16_dot(enc_h1, we2_ref[...]) + be2_ref[...]
        enc_h2 = jnp.maximum(h, 0.0) * s2_ref[...] + t2_ref[...]
        enc_h2 = _attention_residual(enc_h2, h1, a1q_ref[...], a1k_ref[...],
                                     a1v_ref[...], a1u_ref[...], a1b_ref[...],
                                     num_heads)

        # --- z layer + attention 2 (residual on z)
        z = _bf16_dot(enc_h2, wz_ref[...]) + bz_ref[...]
        z = _attention_residual(z, h2, a2q_ref[...], a2k_ref[...],
                                a2v_ref[...], a2u_ref[...], a2b_ref[...],
                                num_heads)
        z_ref[...] = z

        # --- decoder
        dec_h1 = jnp.maximum(_bf16_dot(z, wd1_ref[...]) + bd1_ref[...], 0.0)
        dec_h2 = jnp.maximum(_bf16_dot(dec_h1, wd2_ref[...]) + bd2_ref[...], 0.0)

        # --- pi/mean/disp output heads fused into ONE lane-dense matmul
        heads_out = _bf16_dot(dec_h2, wh_ref[...]) + bh_ref[...]   # (M, 3*n_input)
        pi_logits = heads_out[:, :n_input]
        mean_logits = heads_out[:, n_input:2 * n_input]
        disp_logits = heads_out[:, 2 * n_input:]
        pi_ref[...] = _sigmoid(pi_logits)                              # PiAct
        mean_ref[...] = jnp.clip(jnp.exp(mean_logits), 1e-5, 1e4)      # MeanAct
        sp = jnp.where(disp_logits > 20.0, disp_logits,                # DispAct
                       jnp.log1p(jnp.exp(jnp.minimum(disp_logits, 20.0))))
        disp_ref[...] = jnp.clip(sp, 1e-4, 1000.0)

    return kernel


# ----------------------------------------------------------------------------
# Wrapper: one pallas_call for the whole forward pass
# ----------------------------------------------------------------------------
def forward(params, x, adj, heads):
    p = params
    M, n_input = x.shape
    n_enc_2 = p["W_e2"].shape[1]
    n_z = p["W_z"].shape[1]
    assert n_enc_2 % heads == 0 and n_z % heads == 0, "emb_dim % heads != 0"

    bf = lambda w: w.astype(jnp.bfloat16)
    row = lambda v: v.reshape(1, -1).astype(jnp.float32)

    def fold_hw(wv, hw):
        # (P @ V_h) * hw_h == P @ (V_h * hw_h): fold head weights into wv columns.
        hd = wv.shape[1] // heads
        return wv * jnp.repeat(hw, hd)[None, :]

    # Fused pi/mean/disp head: a single (n_dec_2, 3*n_input) weight.
    w_heads = jnp.concatenate([p["W_pi"], p["W_mean"], p["W_disp"]], axis=1)
    b_heads = jnp.concatenate([p["b_pi"], p["b_mean"], p["b_disp"]])

    inputs = [
        x.astype(jnp.float32), adj.astype(jnp.float32),
        bf(p["W_e1"]), row(p["b_e1"]), row(p["bn1_scale"]), row(p["bn1_shift"]),
        bf(p["W_e2"]), row(p["b_e2"]), row(p["bn2_scale"]), row(p["bn2_shift"]),
        bf(p["W_g1"]), bf(p["W_g2"]),
        bf(p["a1_wq"]), bf(p["a1_wk"]), bf(fold_hw(p["a1_wv"], p["a1_hw"])),
        bf(p["a1_wu"]), row(p["a1_bu"]),
        bf(p["W_z"]), row(p["b_z"]),
        bf(p["a2_wq"]), bf(p["a2_wk"]), bf(fold_hw(p["a2_wv"], p["a2_hw"])),
        bf(p["a2_wu"]), row(p["a2_bu"]),
        bf(p["W_d1"]), row(p["b_d1"]), bf(p["W_d2"]), row(p["b_d2"]),
        bf(w_heads), row(b_heads),
    ]

    def spec(a):
        # All operands are 2-D and fit in VMEM; full-array blocks, single step.
        return pl.BlockSpec(a.shape, lambda i: (0, 0))

    out_shapes = (
        jax.ShapeDtypeStruct((M, n_z), jnp.float32),       # z
        jax.ShapeDtypeStruct((M, M), jnp.float32),         # A_pred
        jax.ShapeDtypeStruct((M, n_input), jnp.float32),   # pi
        jax.ShapeDtypeStruct((M, n_input), jnp.float32),   # mean
        jax.ShapeDtypeStruct((M, n_input), jnp.float32),   # disp
    )
    out_specs = tuple(pl.BlockSpec(s.shape, lambda i: (0, 0)) for s in out_shapes)

    # NOTE: at realistic cell counts (M in the thousands) the decoder / linear
    # parts should get a parallel row grid (2 TCs on v7x) and adj/A_pred a
    # VMEM-tiled path re-derived against 64 MiB; at M=128 a single fused
    # launch is optimal.
    return pl.pallas_call(
        make_forward_kernel(heads, n_input),
        out_shape=out_shapes,
        grid=(1,),
        in_specs=[spec(a) for a in inputs],
        out_specs=out_specs,
        compiler_params=pltpu.CompilerParams(dimension_semantics=("arbitrary",)),
    )(*inputs)


# ----------------------------------------------------------------------------
# Parameter init (deterministic, PyTorch-default-like)
# ----------------------------------------------------------------------------
def init_params(key, n_input, n_enc_1, n_enc_2, n_dec_1, n_dec_2, n_z, heads):
    keys = iter(jax.random.split(key, 24))

    def linear(fan_in, fan_out, bias=True):
        k = next(keys)
        bound = 1.0 / (fan_in ** 0.5)
        kw, kb = jax.random.split(k)
        w = jax.random.uniform(kw, (fan_in, fan_out), jnp.float32, -bound, bound)
        b = (jax.random.uniform(kb, (fan_out,), jnp.float32, -bound, bound)
             if bias else jnp.zeros((fan_out,), jnp.float32))
        return w, b

    def xavier(fan_in, fan_out):
        k = next(keys)
        bound = (6.0 / (fan_in + fan_out)) ** 0.5
        return jax.random.uniform(k, (fan_in, fan_out), jnp.float32, -bound, bound)

    p = {}
    p["W_e1"], p["b_e1"] = linear(n_input, n_enc_1)
    p["W_e2"], p["b_e2"] = linear(n_enc_1, n_enc_2)
    p["W_z"], p["b_z"] = linear(n_enc_2, n_z)
    p["W_d1"], p["b_d1"] = linear(n_z, n_dec_1)
    p["W_d2"], p["b_d2"] = linear(n_dec_1, n_dec_2)
    p["W_pi"], p["b_pi"] = linear(n_dec_2, n_input)
    p["W_disp"], p["b_disp"] = linear(n_dec_2, n_input)
    p["W_mean"], p["b_mean"] = linear(n_dec_2, n_input)
    p["W_g1"] = xavier(n_enc_1, n_enc_2)
    p["W_g2"] = xavier(n_enc_2, n_z)
    # attention 1 (emb = n_enc_2)
    p["a1_wq"], _ = linear(n_enc_2, n_enc_2, bias=False)
    p["a1_wk"], _ = linear(n_enc_2, n_enc_2, bias=False)
    p["a1_wv"], _ = linear(n_enc_2, n_enc_2, bias=False)
    p["a1_wu"], p["a1_bu"] = linear(n_enc_2, n_enc_2)
    p["a1_hw"] = jnp.full((heads,), 1.0 / heads, jnp.float32)
    # attention 2 (emb = n_z)
    p["a2_wq"], _ = linear(n_z, n_z, bias=False)
    p["a2_wk"], _ = linear(n_z, n_z, bias=False)
    p["a2_wv"], _ = linear(n_z, n_z, bias=False)
    p["a2_wu"], p["a2_bu"] = linear(n_z, n_z)
    p["a2_hw"] = jnp.full((heads,), 1.0 / heads, jnp.float32)

    # BatchNorm1d eval-mode fold (gamma=1, beta=0, running_mean=0, running_var=1).
    # TODO(synk): training-mode batch-statistics BatchNorm not implemented.
    def bn(n, eps=1e-5):
        gamma = jnp.ones((n,), jnp.float32)
        beta = jnp.zeros((n,), jnp.float32)
        rm = jnp.zeros((n,), jnp.float32)
        rv = jnp.ones((n,), jnp.float32)
        scale = gamma / jnp.sqrt(rv + eps)
        shift = beta - rm * scale
        return scale, shift

    p["bn1_scale"], p["bn1_shift"] = bn(n_enc_1)
    p["bn2_scale"], p["bn2_shift"] = bn(n_enc_2)
    return p


if __name__ == "__main__":
    N_CELLS, N_INPUT = 128, 64
    N_ENC_1, N_ENC_2 = 128, 64
    N_DEC_1, N_DEC_2 = 64, 128
    N_Z, HEADS = 32, 4

    key = jax.random.PRNGKey(0)
    kx, ka, kp = jax.random.split(key, 3)

    x = jax.random.normal(kx, (N_CELLS, N_INPUT), jnp.float32)
    a = jax.random.uniform(ka, (N_CELLS, N_CELLS), jnp.float32)
    a = ((a + a.T) * 0.5 > 0.9).astype(jnp.float32) + jnp.eye(N_CELLS, dtype=jnp.float32)
    adj = a / jnp.sum(a, axis=1, keepdims=True)  # row-normalized adjacency

    params = init_params(kp, N_INPUT, N_ENC_1, N_ENC_2, N_DEC_1, N_DEC_2, N_Z, HEADS)

    fwd = jax.jit(functools.partial(forward, heads=HEADS))
    z, A_pred, pi, mean, disp = fwd(params, x, adj)
    jax.block_until_ready((z, A_pred, pi, mean, disp))

    assert z.shape == (N_CELLS, N_Z)
    assert A_pred.shape == (N_CELLS, N_CELLS)
    assert pi.shape == (N_CELLS, N_INPUT)
    assert mean.shape == (N_CELLS, N_INPUT)
    assert disp.shape == (N_CELLS, N_INPUT)
    assert bool(jnp.all(jnp.isfinite(z)))
    assert bool(jnp.all((A_pred >= 0.0) & (A_pred <= 1.0)))
    print("KERNEL_OK")
</pallas_src>

<mosaic_0001>
module attributes {stable_mosaic.version = 11 : i64} {
  func.func @kernel(%arg0: i32, %arg1: memref<128x64xf32, #tpu.memory_space<vmem>>, %arg2: memref<128x128xf32, #tpu.memory_space<vmem>>, %arg3: memref<64x128xbf16, #tpu.memory_space<vmem>>, %arg4: memref<1x128xf32, #tpu.memory_space<vmem>>, %arg5: memref<1x128xf32, #tpu.memory_space<vmem>>, %arg6: memref<1x128xf32, #tpu.memory_space<vmem>>, %arg7: memref<128x64xbf16, #tpu.memory_space<vmem>>, %arg8: memref<1x64xf32, #tpu.memory_space<vmem>>, %arg9: memref<1x64xf32, #tpu.memory_space<vmem>>, %arg10: memref<1x64xf32, #tpu.memory_space<vmem>>, %arg11: memref<128x64xbf16, #tpu.memory_space<vmem>>, %arg12: memref<64x32xbf16, #tpu.memory_space<vmem>>, %arg13: memref<64x64xbf16, #tpu.memory_space<vmem>>, %arg14: memref<64x64xbf16, #tpu.memory_space<vmem>>, %arg15: memref<64x64xbf16, #tpu.memory_space<vmem>>, %arg16: memref<64x64xbf16, #tpu.memory_space<vmem>>, %arg17: memref<1x64xf32, #tpu.memory_space<vmem>>, %arg18: memref<64x32xbf16, #tpu.memory_space<vmem>>, %arg19: memref<1x32xf32, #tpu.memory_space<vmem>>, %arg20: memref<32x32xbf16, #tpu.memory_space<vmem>>, %arg21: memref<32x32xbf16, #tpu.memory_space<vmem>>, %arg22: memref<32x32xbf16, #tpu.memory_space<vmem>>, %arg23: memref<32x32xbf16, #tpu.memory_space<vmem>>, %arg24: memref<1x32xf32, #tpu.memory_space<vmem>>, %arg25: memref<32x64xbf16, #tpu.memory_space<vmem>>, %arg26: memref<1x64xf32, #tpu.memory_space<vmem>>, %arg27: memref<64x128xbf16, #tpu.memory_space<vmem>>, %arg28: memref<1x128xf32, #tpu.memory_space<vmem>>, %arg29: memref<128x192xbf16, #tpu.memory_space<vmem>>, %arg30: memref<1x192xf32, #tpu.memory_space<vmem>>, %arg31: memref<128x32xf32, #tpu.memory_space<vmem>>, %arg32: memref<128x128xf32, #tpu.memory_space<vmem>>, %arg33: memref<128x64xf32, #tpu.memory_space<vmem>>, %arg34: memref<128x64xf32, #tpu.memory_space<vmem>>, %arg35: memref<128x64xf32, #tpu.memory_space<vmem>>) attributes {dimension_semantics = [#tpu.dimension_semantics<arbitrary>], iteration_bounds = array<i64: 1>, scalar_prefetch = 0 : i64, scratch_operands = 0 : i64, tpu.core_type = #tpu.core_type<tc>, window_params = [{pipeline_mode = #tpu.pipeline_mode<synchronous>, transform_indices = @transform_0, window_bounds = array<i64: 128, 64>}, {pipeline_mode = #tpu.pipeline_mode<synchronous>, transform_indices = @transform_1, window_bounds = array<i64: 128, 128>}, {pipeline_mode = #tpu.pipeline_mode<synchronous>, transform_indices = @transform_2, window_bounds = array<i64: 64, 128>}, {pipeline_mode = #tpu.pipeline_mode<synchronous>, transform_indices = @transform_3, window_bounds = array<i64: 1, 128>}, {pipeline_mode = #tpu.pipeline_mode<synchronous>, transform_indices = @transform_4, window_bounds = array<i64: 1, 128>}, {pipeline_mode = #tpu.pipeline_mode<synchronous>, transform_indices = @transform_5, window_bounds = array<i64: 1, 128>}, {pipeline_mode = #tpu.pipeline_mode<synchronous>, transform_indices = @transform_6, window_bounds = array<i64: 128, 64>}, {pipeline_mode = #tpu.pipeline_mode<synchronous>, transform_indices = @transform_7, window_bounds = array<i64: 1, 64>}, {pipeline_mode = #tpu.pipeline_mode<synchronous>, transform_indices = @transform_8, window_bounds = array<i64: 1, 64>}, {pipeline_mode = #tpu.pipeline_mode<synchronous>, transform_indices = @transform_9, window_bounds = array<i64: 1, 64>}, {pipeline_mode = #tpu.pipeline_mode<synchronous>, transform_indices = @transform_10, window_bounds = array<i64: 128, 64>}, {pipeline_mode = #tpu.pipeline_mode<synchronous>, transform_indices = @transform_11, window_bounds = array<i64: 64, 32>}, {pipeline_mode = #tpu.pipeline_mode<synchronous>, transform_indices = @transform_12, window_bounds = array<i64: 64, 64>}, {pipeline_mode = #tpu.pipeline_mode<synchronous>, transform_indices = @transform_13, window_bounds = array<i64: 64, 64>}, {pipeline_mode = #tpu.pipeline_mode<synchronous>, transform_indices = @transform_14, window_bounds = array<i64: 64, 64>}, {pipeline_mode = #tpu.pipeline_mode<synchronous>, transform_indices = @transform_15, window_bounds = array<i64: 64, 64>}, {pipeline_mode = #tpu.pipeline_mode<synchronous>, transform_indices = @transform_16, window_bounds = array<i64: 1, 64>}, {pipeline_mode = #tpu.pipeline_mode<synchronous>, transform_indices = @transform_17, window_bounds = array<i64: 64, 32>}, {pipeline_mode = #tpu.pipeline_mode<synchronous>, transform_indices = @transform_18, window_bounds = array<i64: 1, 32>}, {pipeline_mode = #tpu.pipeline_mode<synchronous>, transform_indices = @transform_19, window_bounds = array<i64: 32, 32>}, {pipeline_mode = #tpu.pipeline_mode<synchronous>, transform_indices = @transform_20, window_bounds = array<i64: 32, 32>}, {pipeline_mode = #tpu.pipeline_mode<synchronous>, transform_indices = @transform_21, window_bounds = array<i64: 32, 32>}, {pipeline_mode = #tpu.pipeline_mode<synchronous>, transform_indices = @transform_22, window_bounds = array<i64: 32, 32>}, {pipeline_mode = #tpu.pipeline_mode<synchronous>, transform_indices = @transform_23, window_bounds = array<i64: 1, 32>}, {pipeline_mode = #tpu.pipeline_mode<synchronous>, transform_indices = @transform_24, window_bounds = array<i64: 32, 64>}, {pipeline_mode = #tpu.pipeline_mode<synchronous>, transform_indices = @transform_25, window_bounds = array<i64: 1, 64>}, {pipeline_mode = #tpu.pipeline_mode<synchronous>, transform_indices = @transform_26, window_bounds = array<i64: 64, 128>}, {pipeline_mode = #tpu.pipeline_mode<synchronous>, transform_indices = @transform_27, window_bounds = array<i64: 1, 128>}, {pipeline_mode = #tpu.pipeline_mode<synchronous>, transform_indices = @transform_28, window_bounds = array<i64: 128, 192>}, {pipeline_mode = #tpu.pipeline_mode<synchronous>, transform_indices = @transform_29, window_bounds = array<i64: 1, 192>}, {pipeline_mode = #tpu.pipeline_mode<synchronous>, transform_indices = @transform_30, window_bounds = array<i64: 128, 32>}, {pipeline_mode = #tpu.pipeline_mode<synchronous>, transform_indices = @transform_31, window_bounds = array<i64: 128, 128>}, {pipeline_mode = #tpu.pipeline_mode<synchronous>, transform_indices = @transform_32, window_bounds = array<i64: 128, 64>}, {pipeline_mode = #tpu.pipeline_mode<synchronous>, transform_indices = @transform_33, window_bounds = array<i64: 128, 64>}, {pipeline_mode = #tpu.pipeline_mode<synchronous>, transform_indices = @transform_34, window_bounds = array<i64: 128, 64>}]} {
    %c0 = arith.constant 0 : index
    %c0_0 = arith.constant 0 : index
    %0 = vector.load %arg1[%c0, %c0_0] : memref<128x64xf32, #tpu.memory_space<vmem>>, vector<128x64xf32>
    %c0_1 = arith.constant 0 : index
    %c0_2 = arith.constant 0 : index
    %1 = vector.load %arg2[%c0_1, %c0_2] : memref<128x128xf32, #tpu.memory_space<vmem>>, vector<128x128xf32>
    %2 = arith.truncf %1 : vector<128x128xf32> to vector<128x128xbf16>
    %c0_3 = arith.constant 0 : index
    %c0_4 = arith.constant 0 : index
    %3 = vector.load %arg3[%c0_3, %c0_4] : memref<64x128xbf16, #tpu.memory_space<vmem>>, vector<64x128xbf16>
    %4 = arith.truncf %0 : vector<128x64xf32> to vector<128x64xbf16>
    %cst = arith.constant dense<0.000000e+00> : vector<128x128xf32>
    %5 = tpu.matmul %4, %3, %cst {dimension_numbers = #tpu.dot_dimension_numbers<[1], [0], [0], [1], [0, 0, 1, 1], [], []>} : vector<128x64xbf16>, vector<64x128xbf16>, vector<128x128xf32> -> vector<128x128xf32>
    %c0_5 = arith.constant 0 : index
    %c0_6 = arith.constant 0 : index
    %6 = vector.load %arg4[%c0_5, %c0_6] : memref<1x128xf32, #tpu.memory_space<vmem>>, vector<1x128xf32>
    %7 = vector.broadcast %6 : vector<1x128xf32> to vector<128x128xf32>
    %8 = arith.addf %5, %7 : vector<128x128xf32>
    %cst_7 = arith.constant 0.000000e+00 : f32
    %9 = vector.broadcast %cst_7 : f32 to vector<128x128xf32>
    %10 = arith.maximumf %8, %9 : vector<128x128xf32>
    %c0_8 = arith.constant 0 : index
    %c0_9 = arith.constant 0 : index
    %11 = vector.load %arg5[%c0_8, %c0_9] : memref<1x128xf32, #tpu.memory_space<vmem>>, vector<1x128xf32>
    %12 = vector.broadcast %11 : vector<1x128xf32> to vector<128x128xf32>
    %13 = arith.mulf %10, %12 : vector<128x128xf32>
    %c0_10 = arith.constant 0 : index
    %c0_11 = arith.constant 0 : index
    %14 = vector.load %arg6[%c0_10, %c0_11] : memref<1x128xf32, #tpu.memory_space<vmem>>, vector<1x128xf32>
    %15 = vector.broadcast %14 : vector<1x128xf32> to vector<128x128xf32>
    %16 = arith.addf %13, %15 : vector<128x128xf32>
    %c0_12 = arith.constant 0 : index
    %c0_13 = arith.constant 0 : index
    %17 = vector.load %arg11[%c0_12, %c0_13] : memref<128x64xbf16, #tpu.memory_space<vmem>>, vector<128x64xbf16>
    %18 = arith.truncf %16 : vector<128x128xf32> to vector<128x128xbf16>
    %cst_14 = arith.constant dense<0.000000e+00> : vector<128x64xf32>
    %19 = tpu.matmul %18, %17, %cst_14 {dimension_numbers = #tpu.dot_dimension_numbers<[1], [0], [0], [1], [0, 0, 1, 1], [], []>} : vector<128x128xbf16>, vector<128x64xbf16>, vector<128x64xf32> -> vector<128x64xf32>
    %20 = arith.truncf %19 : vector<128x64xf32> to vector<128x64xbf16>
    %cst_15 = arith.constant dense<0.000000e+00> : vector<128x64xf32>
    %21 = tpu.matmul %2, %20, %cst_15 {dimension_numbers = #tpu.dot_dimension_numbers<[1], [0], [0], [1], [0, 0, 1, 1], [], []>} : vector<128x128xbf16>, vector<128x64xbf16>, vector<128x64xf32> -> vector<128x64xf32>
    %22 = math.tanh %21 : vector<128x64xf32>
    %c0_16 = arith.constant 0 : index
    %c0_17 = arith.constant 0 : index
    %23 = vector.load %arg12[%c0_16, %c0_17] : memref<64x32xbf16, #tpu.memory_space<vmem>>, vector<64x32xbf16>
    %24 = arith.truncf %22 : vector<128x64xf32> to vector<128x64xbf16>
    %cst_18 = arith.constant dense<0.000000e+00> : vector<128x32xf32>
    %25 = tpu.matmul %24, %23, %cst_18 {dimension_numbers = #tpu.dot_dimension_numbers<[1], [0], [0], [1], [0, 0, 1, 1], [], []>} : vector<128x64xbf16>, vector<64x32xbf16>, vector<128x32xf32> -> vector<128x32xf32>
    %26 = arith.truncf %25 : vector<128x32xf32> to vector<128x32xbf16>
    %cst_19 = arith.constant dense<0.000000e+00> : vector<128x32xf32>
    %27 = tpu.matmul %2, %26, %cst_19 {dimension_numbers = #tpu.dot_dimension_numbers<[1], [0], [0], [1], [0, 0, 1, 1], [], []>} : vector<128x128xbf16>, vector<128x32xbf16>, vector<128x32xf32> -> vector<128x32xf32>
    %28 = math.tanh %27 : vector<128x32xf32>
    %29 = arith.truncf %28 : vector<128x32xf32> to vector<128x32xbf16>
    %30 = arith.truncf %28 : vector<128x32xf32> to vector<128x32xbf16>
    %cst_20 = arith.constant dense<0.000000e+00> : vector<128x128xf32>
    %31 = tpu.matmul %29, %30, %cst_20 {dimension_numbers = #tpu.dot_dimension_numbers<[1], [1], [0], [0], [0, 0, 1, 0], [], []>} : vector<128x32xbf16>, vector<128x32xbf16>, vector<128x128xf32> -> vector<128x128xf32>
    %cst_21 = arith.constant 0.000000e+00 : f32
    %32 = vector.broadcast %cst_21 : f32 to vector<128x128xf32>
    %33 = arith.subf %32, %31 : vector<128x128xf32>
    %34 = math.exp %33 : vector<128x128xf32>
    %cst_22 = arith.constant 1.000000e+00 : f32
    %35 = vector.broadcast %cst_22 : f32 to vector<128x128xf32>
    %36 = arith.addf %35, %34 : vector<128x128xf32>
    %37 = tpu.reciprocal %36 {approx = true} : vector<128x128xf32> -> vector<128x128xf32>
    %c0_23 = arith.constant 0 : index
    %c0_24 = arith.constant 0 : index
    %38 = vector.load %arg32[%c0_23, %c0_24] : memref<128x128xf32, #tpu.memory_space<vmem>>, vector<128x128xf32>
    tpu.vector_store %arg32[%c0_23, %c0_24], %37 {strides = array<i32>} : memref<128x128xf32, #tpu.memory_space<vmem>>, vector<128x128xf32>,
    %c0_25 = arith.constant 0 : index
    %c0_26 = arith.constant 0 : index
    %39 = vector.load %arg7[%c0_25, %c0_26] : memref<128x64xbf16, #tpu.memory_space<vmem>>, vector<128x64xbf16>
    %40 = arith.truncf %16 : vector<128x128xf32> to vector<128x128xbf16>
    %cst_27 = arith.constant dense<0.000000e+00> : vector<128x64xf32>
    %41 = tpu.matmul %40, %39, %cst_27 {dimension_numbers = #tpu.dot_dimension_numbers<[1], [0], [0], [1], [0, 0, 1, 1], [], []>} : vector<128x128xbf16>, vector<128x64xbf16>, vector<128x64xf32> -> vector<128x64xf32>
    %c0_28 = arith.constant 0 : index
    %c0_29 = arith.constant 0 : index
    %42 = vector.load %arg8[%c0_28, %c0_29] : memref<1x64xf32, #tpu.memory_space<vmem>>, vector<1x64xf32>
    %43 = vector.broadcast %42 : vector<1x64xf32> to vector<128x64xf32>
    %44 = arith.addf %41, %43 : vector<128x64xf32>
    %cst_30 = arith.constant 0.000000e+00 : f32
    %45 = vector.broadcast %cst_30 : f32 to vector<128x64xf32>
    %46 = arith.maximumf %44, %45 : vector<128x64xf32>
    %c0_31 = arith.constant 0 : index
    %c0_32 = arith.constant 0 : index
    %47 = vector.load %arg9[%c0_31, %c0_32] : memref<1x64xf32, #tpu.memory_space<vmem>>, vector<1x64xf32>
    %48 = vector.broadcast %47 : vector<1x64xf32> to vector<128x64xf32>
    %49 = arith.mulf %46, %48 : vector<128x64xf32>
    %c0_33 = arith.constant 0 : index
    %c0_34 = arith.constant 0 : index
    %50 = vector.load %arg10[%c0_33, %c0_34] : memref<1x64xf32, #tpu.memory_space<vmem>>, vector<1x64xf32>
    %51 = vector.broadcast %50 : vector<1x64xf32> to vector<128x64xf32>
    %52 = arith.addf %49, %51 : vector<128x64xf32>
    %c0_35 = arith.constant 0 : index
    %c0_36 = arith.constant 0 : index
    %53 = vector.load %arg13[%c0_35, %c0_36] : memref<64x64xbf16, #tpu.memory_space<vmem>>, vector<64x64xbf16>
    %c0_37 = arith.constant 0 : index
    %c0_38 = arith.constant 0 : index
    %54 = vector.load %arg14[%c0_37, %c0_38] : memref<64x64xbf16, #tpu.memory_space<vmem>>, vector<64x64xbf16>
    %c0_39 = arith.constant 0 : index
    %c0_40 = arith.constant 0 : index
    %55 = vector.load %arg15[%c0_39, %c0_40] : memref<64x64xbf16, #tpu.memory_space<vmem>>, vector<64x64xbf16>
    %c0_41 = arith.constant 0 : index
    %c0_42 = arith.constant 0 : index
    %56 = vector.load %arg16[%c0_41, %c0_42] : memref<64x64xbf16, #tpu.memory_space<vmem>>, vector<64x64xbf16>
    %c0_43 = arith.constant 0 : index
    %c0_44 = arith.constant 0 : index
    %57 = vector.load %arg17[%c0_43, %c0_44] : memref<1x64xf32, #tpu.memory_space<vmem>>, vector<1x64xf32>
    %58 = arith.truncf %22 : vector<128x64xf32> to vector<128x64xbf16>
    %cst_45 = arith.constant dense<0.000000e+00> : vector<128x64xf32>
    %59 = tpu.matmul %58, %53, %cst_45 {dimension_numbers = #tpu.dot_dimension_numbers<[1], [0], [0], [1], [0, 0, 1, 1], [], []>} : vector<128x64xbf16>, vector<64x64xbf16>, vector<128x64xf32> -> vector<128x64xf32>
    %60 = arith.truncf %52 : vector<128x64xf32> to vector<128x64xbf16>
    %cst_46 = arith.constant dense<0.000000e+00> : vector<128x64xf32>
    %61 = tpu.matmul %60, %54, %cst_46 {dimension_numbers = #tpu.dot_dimension_numbers<[1], [0], [0], [1], [0, 0, 1, 1], [], []>} : vector<128x64xbf16>, vector<64x64xbf16>, vector<128x64xf32> -> vector<128x64xf32>
    %62 = arith.truncf %52 : vector<128x64xf32> to vector<128x64xbf16>
    %cst_47 = arith.constant dense<0.000000e+00> : vector<128x64xf32>
    %63 = tpu.matmul %62, %55, %cst_47 {dimension_numbers = #tpu.dot_dimension_numbers<[1], [0], [0], [1], [0, 0, 1, 1], [], []>} : vector<128x64xbf16>, vector<64x64xbf16>, vector<128x64xf32> -> vector<128x64xf32>
    %cst_48 = arith.constant 0.000000e+00 : f32
    %64 = vector.broadcast %cst_48 : f32 to vector<128x64xf32>
    %65 = vector.extract_strided_slice %59 {offsets = [0, 0], sizes = [128, 16], strides = [1, 1]} : vector<128x64xf32> to vector<128x16xf32>
    %66 = vector.extract_strided_slice %61 {offsets = [0, 0], sizes = [128, 16], strides = [1, 1]} : vector<128x64xf32> to vector<128x16xf32>
    %67 = arith.truncf %65 : vector<128x16xf32> to vector<128x16xbf16>
    %68 = arith.truncf %66 : vector<128x16xf32> to vector<128x16xbf16>
    %cst_49 = arith.constant dense<0.000000e+00> : vector<128x128xf32>
    %69 = tpu.matmul %67, %68, %cst_49 {dimension_numbers = #tpu.dot_dimension_numbers<[1], [1], [0], [0], [0, 0, 1, 0], [], []>} : vector<128x16xbf16>, vector<128x16xbf16>, vector<128x128xf32> -> vector<128x128xf32>
    %cst_50 = arith.constant 2.500000e-01 : f32
    %70 = vector.broadcast %cst_50 : f32 to vector<128x128xf32>
    %71 = arith.mulf %69, %70 : vector<128x128xf32>
    %cst_51 = arith.constant dense<0xFF800000> : vector<128xf32>
    %72 = vector.multi_reduction <maximumf>, %71, %cst_51 [1] : vector<128x128xf32> to vector<128xf32>
    %73 = vector.shape_cast %72 : vector<128xf32> to vector<128x1xf32>
    %74 = vector.broadcast %73 : vector<128x1xf32> to vector<128x128xf32>
    %75 = arith.subf %71, %74 : vector<128x128xf32>
    %76 = math.exp %75 : vector<128x128xf32>
    %cst_52 = arith.constant dense<0.000000e+00> : vector<128xf32>
    %77 = vector.multi_reduction <add>, %76, %cst_52 [1] : vector<128x128xf32> to vector<128xf32>
    %78 = vector.shape_cast %77 : vector<128xf32> to vector<128x1xf32>
    %79 = tpu.reciprocal %78 {approx = true} : vector<128x1xf32> -> vector<128x1xf32>
    %80 = vector.broadcast %79 : vector<128x1xf32> to vector<128x128xf32>
    %81 = arith.mulf %76, %80 : vector<128x128xf32>
    %82 = vector.extract_strided_slice %63 {offsets = [0, 0], sizes = [128, 16], strides = [1, 1]} : vector<128x64xf32> to vector<128x16xf32>
    %83 = arith.truncf %81 : vector<128x128xf32> to vector<128x128xbf16>
    %84 = arith.truncf %82 : vector<128x16xf32> to vector<128x16xbf16>
    %cst_53 = arith.constant dense<0.000000e+00> : vector<128x16xf32>
    %85 = tpu.matmul %83, %84, %cst_53 {dimension_numbers = #tpu.dot_dimension_numbers<[1], [0], [0], [1], [0, 0, 1, 1], [], []>} : vector<128x128xbf16>, vector<128x16xbf16>, vector<128x16xf32> -> vector<128x16xf32>
    %86 = vector.extract_strided_slice %56 {offsets = [0, 0], sizes = [16, 64], strides = [1, 1]} : vector<64x64xbf16> to vector<16x64xbf16>
    %87 = arith.truncf %85 : vector<128x16xf32> to vector<128x16xbf16>
    %cst_54 = arith.constant dense<0.000000e+00> : vector<128x64xf32>
    %88 = tpu.matmul %87, %86, %cst_54 {dimension_numbers = #tpu.dot_dimension_numbers<[1], [0], [0], [1], [0, 0, 1, 1], [], []>} : vector<128x16xbf16>, vector<16x64xbf16>, vector<128x64xf32> -> vector<128x64xf32>
    %89 = arith.addf %64, %88 : vector<128x64xf32>
    %90 = vector.extract_strided_slice %59 {offsets = [0, 16], sizes = [128, 16], strides = [1, 1]} : vector<128x64xf32> to vector<128x16xf32>
    %91 = vector.extract_strided_slice %61 {offsets = [0, 16], sizes = [128, 16], strides = [1, 1]} : vector<128x64xf32> to vector<128x16xf32>
    %92 = arith.truncf %90 : vector<128x16xf32> to vector<128x16xbf16>
    %93 = arith.truncf %91 : vector<128x16xf32> to vector<128x16xbf16>
    %cst_55 = arith.constant dense<0.000000e+00> : vector<128x128xf32>
    %94 = tpu.matmul %92, %93, %cst_55 {dimension_numbers = #tpu.dot_dimension_numbers<[1], [1], [0], [0], [0, 0, 1, 0], [], []>} : vector<128x16xbf16>, vector<128x16xbf16>, vector<128x128xf32> -> vector<128x128xf32>
    %cst_56 = arith.constant 2.500000e-01 : f32
    %95 = vector.broadcast %cst_56 : f32 to vector<128x128xf32>
    %96 = arith.mulf %94, %95 : vector<128x128xf32>
    %cst_57 = arith.constant dense<0xFF800000> : vector<128xf32>
    %97 = vector.multi_reduction <maximumf>, %96, %cst_57 [1] : vector<128x128xf32> to vector<128xf32>
    %98 = vector.shape_cast %97 : vector<128xf32> to vector<128x1xf32>
    %99 = vector.broadcast %98 : vector<128x1xf32> to vector<128x128xf32>
    %100 = arith.subf %96, %99 : vector<128x128xf32>
    %101 = math.exp %100 : vector<128x128xf32>
    %cst_58 = arith.constant dense<0.000000e+00> : vector<128xf32>
    %102 = vector.multi_reduction <add>, %101, %cst_58 [1] : vector<128x128xf32> to vector<128xf32>
    %103 = vector.shape_cast %102 : vector<128xf32> to vector<128x1xf32>
    %104 = tpu.reciprocal %103 {approx = true} : vector<128x1xf32> -> vector<128x1xf32>
    %105 = vector.broadcast %104 : vector<128x1xf32> to vector<128x128xf32>
    %106 = arith.mulf %101, %105 : vector<128x128xf32>
    %107 = vector.extract_strided_slice %63 {offsets = [0, 16], sizes = [128, 16], strides = [1, 1]} : vector<128x64xf32> to vector<128x16xf32>
    %108 = arith.truncf %106 : vector<128x128xf32> to vector<128x128xbf16>
    %109 = arith.truncf %107 : vector<128x16xf32> to vector<128x16xbf16>
    %cst_59 = arith.constant dense<0.000000e+00> : vector<128x16xf32>
    %110 = tpu.matmul %108, %109, %cst_59 {dimension_numbers = #tpu.dot_dimension_numbers<[1], [0], [0], [1], [0, 0, 1, 1], [], []>} : vector<128x128xbf16>, vector<128x16xbf16>, vector<128x16xf32> -> vector<128x16xf32>
    %111 = vector.extract_strided_slice %56 {offsets = [16, 0], sizes = [16, 64], strides = [1, 1]} : vector<64x64xbf16> to vector<16x64xbf16>
    %112 = arith.truncf %110 : vector<128x16xf32> to vector<128x16xbf16>
    %cst_60 = arith.constant dense<0.000000e+00> : vector<128x64xf32>
    %113 = tpu.matmul %112, %111, %cst_60 {dimension_numbers = #tpu.dot_dimension_numbers<[1], [0], [0], [1], [0, 0, 1, 1], [], []>} : vector<128x16xbf16>, vector<16x64xbf16>, vector<128x64xf32> -> vector<128x64xf32>
    %114 = arith.addf %89, %113 : vector<128x64xf32>
    %115 = vector.extract_strided_slice %59 {offsets = [0, 32], sizes = [128, 16], strides = [1, 1]} : vector<128x64xf32> to vector<128x16xf32>
    %116 = vector.extract_strided_slice %61 {offsets = [0, 32], sizes = [128, 16], strides = [1, 1]} : vector<128x64xf32> to vector<128x16xf32>
    %117 = arith.truncf %115 : vector<128x16xf32> to vector<128x16xbf16>
    %118 = arith.truncf %116 : vector<128x16xf32> to vector<128x16xbf16>
    %cst_61 = arith.constant dense<0.000000e+00> : vector<128x128xf32>
    %119 = tpu.matmul %117, %118, %cst_61 {dimension_numbers = #tpu.dot_dimension_numbers<[1], [1], [0], [0], [0, 0, 1, 0], [], []>} : vector<128x16xbf16>, vector<128x16xbf16>, vector<128x128xf32> -> vector<128x128xf32>
    %cst_62 = arith.constant 2.500000e-01 : f32
    %120 = vector.broadcast %cst_62 : f32 to vector<128x128xf32>
    %121 = arith.mulf %119, %120 : vector<128x128xf32>
    %cst_63 = arith.constant dense<0xFF800000> : vector<128xf32>
    %122 = vector.multi_reduction <maximumf>, %121, %cst_63 [1] : vector<128x128xf32> to vector<128xf32>
    %123 = vector.shape_cast %122 : vector<128xf32> to vector<128x1xf32>
    %124 = vector.broadcast %123 : vector<128x1xf32> to vector<128x128xf32>
    %125 = arith.subf %121, %124 : vector<128x128xf32>
    %126 = math.exp %125 : vector<128x128xf32>
    %cst_64 = arith.constant dense<0.000000e+00> : vector<128xf32>
    %127 = vector.multi_reduction <add>, %126, %cst_64 [1] : vector<128x128xf32> to vector<128xf32>
    %128 = vector.shape_cast %127 : vector<128xf32> to vector<128x1xf32>
    %129 = tpu.reciprocal %128 {approx = true} : vector<128x1xf32> -> vector<128x1xf32>
    %130 = vector.broadcast %129 : vector<128x1xf32> to vector<128x128xf32>
    %131 = arith.mulf %126, %130 : vector<128x128xf32>
    %132 = vector.extract_strided_slice %63 {offsets = [0, 32], sizes = [128, 16], strides = [1, 1]} : vector<128x64xf32> to vector<128x16xf32>
    %133 = arith.truncf %131 : vector<128x128xf32> to vector<128x128xbf16>
    %134 = arith.truncf %132 : vector<128x16xf32> to vector<128x16xbf16>
    %cst_65 = arith.constant dense<0.000000e+00> : vector<128x16xf32>
    %135 = tpu.matmul %133, %134, %cst_65 {dimension_numbers = #tpu.dot_dimension_numbers<[1], [0], [0], [1], [0, 0, 1, 1], [], []>} : vector<128x128xbf16>, vector<128x16xbf16>, vector<128x16xf32> -> vector<128x16xf32>
    %136 = vector.extract_strided_slice %56 {offsets = [32, 0], sizes = [16, 64], strides = [1, 1]} : vector<64x64xbf16> to vector<16x64xbf16>
    %137 = arith.truncf %135 : vector<128x16xf32> to vector<128x16xbf16>
    %cst_66 = arith.constant dense<0.000000e+00> : vector<128x64xf32>
    %138 = tpu.matmul %137, %136, %cst_66 {dimension_numbers = #tpu.dot_dimension_numbers<[1], [0], [0], [1], [0, 0, 1, 1], [], []>} : vector<128x16xbf16>, vector<16x64xbf16>, vector<128x64xf32> -> vector<128x64xf32>
    %139 = arith.addf %114, %138 : vector<128x64xf32>
    %140 = vector.extract_strided_slice %59 {offsets = [0, 48], sizes = [128, 16], strides = [1, 1]} : vector<128x64xf32> to vector<128x16xf32>
    %141 = vector.extract_strided_slice %61 {offsets = [0, 48], sizes = [128, 16], strides = [1, 1]} : vector<128x64xf32> to vector<128x16xf32>
    %142 = arith.truncf %140 : vector<128x16xf32> to vector<128x16xbf16>
    %143 = arith.truncf %141 : vector<128x16xf32> to vector<128x16xbf16>
    %cst_67 = arith.constant dense<0.000000e+00> : vector<128x128xf32>
    %144 = tpu.matmul %142, %143, %cst_67 {dimension_numbers = #tpu.dot_dimension_numbers<[1], [1], [0], [0], [0, 0, 1, 0], [], []>} : vector<128x16xbf16>, vector<128x16xbf16>, vector<128x128xf32> -> vector<128x128xf32>
    %cst_68 = arith.constant 2.500000e-01 : f32
    %145 = vector.broadcast %cst_68 : f32 to vector<128x128xf32>
    %146 = arith.mulf %144, %145 : vector<128x128xf32>
    %cst_69 = arith.constant dense<0xFF800000> : vector<128xf32>
    %147 = vector.multi_reduction <maximumf>, %146, %cst_69 [1] : vector<128x128xf32> to vector<128xf32>
    %148 = vector.shape_cast %147 : vector<128xf32> to vector<128x1xf32>
    %149 = vector.broadcast %148 : vector<128x1xf32> to vector<128x128xf32>
    %150 = arith.subf %146, %149 : vector<128x128xf32>
    %151 = math.exp %150 : vector<128x128xf32>
    %cst_70 = arith.constant dense<0.000000e+00> : vector<128xf32>
    %152 = vector.multi_reduction <add>, %151, %cst_70 [1] : vector<128x128xf32> to vector<128xf32>
    %153 = vector.shape_cast %152 : vector<128xf32> to vector<128x1xf32>
    %154 = tpu.reciprocal %153 {approx = true} : vector<128x1xf32> -> vector<128x1xf32>
    %155 = vector.broadcast %154 : vector<128x1xf32> to vector<128x128xf32>
    %156 = arith.mulf %151, %155 : vector<128x128xf32>
    %157 = vector.extract_strided_slice %63 {offsets = [0, 48], sizes = [128, 16], strides = [1, 1]} : vector<128x64xf32> to vector<128x16xf32>
    %158 = arith.truncf %156 : vector<128x128xf32> to vector<128x128xbf16>
    %159 = arith.truncf %157 : vector<128x16xf32> to vector<128x16xbf16>
    %cst_71 = arith.constant dense<0.000000e+00> : vector<128x16xf32>
    %160 = tpu.matmul %158, %159, %cst_71 {dimension_numbers = #tpu.dot_dimension_numbers<[1], [0], [0], [1], [0, 0, 1, 1], [], []>} : vector<128x128xbf16>, vector<128x16xbf16>, vector<128x16xf32> -> vector<128x16xf32>
    %161 = vector.extract_strided_slice %56 {offsets = [48, 0], sizes = [16, 64], strides = [1, 1]} : vector<64x64xbf16> to vector<16x64xbf16>
    %162 = arith.truncf %160 : vector<128x16xf32> to vector<128x16xbf16>
    %cst_72 = arith.constant dense<0.000000e+00> : vector<128x64xf32>
    %163 = tpu.matmul %162, %161, %cst_72 {dimension_numbers = #tpu.dot_dimension_numbers<[1], [0], [0], [1], [0, 0, 1, 1], [], []>} : vector<128x16xbf16>, vector<16x64xbf16>, vector<128x64xf32> -> vector<128x64xf32>
    %164 = arith.addf %139, %163 : vector<128x64xf32>
    %165 = vector.broadcast %57 : vector<1x64xf32> to vector<128x64xf32>
    %166 = arith.addf %164, %165 : vector<128x64xf32>
    %167 = arith.addf %166, %52 : vector<128x64xf32>
    %c0_73 = arith.constant 0 : index
    %c0_74 = arith.constant 0 : index
    %168 = vector.load %arg18[%c0_73, %c0_74] : memref<64x32xbf16, #tpu.memory_space<vmem>>, vector<64x32xbf16>
    %169 = arith.truncf %167 : vector<128x64xf32> to vector<128x64xbf16>
    %cst_75 = arith.constant dense<0.000000e+00> : vector<128x32xf32>
    %170 = tpu.matmul %169, %168, %cst_75 {dimension_numbers = #tpu.dot_dimension_numbers<[1], [0], [0], [1], [0, 0, 1, 1], [], []>} : vector<128x64xbf16>, vector<64x32xbf16>, vector<128x32xf32> -> vector<128x32xf32>
    %c0_76 = arith.constant 0 : index
    %c0_77 = arith.constant 0 : index
    %171 = vector.load %arg19[%c0_76, %c0_77] : memref<1x32xf32, #tpu.memory_space<vmem>>, vector<1x32xf32>
    %172 = vector.broadcast %171 : vector<1x32xf32> to vector<128x32xf32>
    %173 = arith.addf %170, %172 : vector<128x32xf32>
    %c0_78 = arith.constant 0 : index
    %c0_79 = arith.constant 0 : index
    %174 = vector.load %arg20[%c0_78, %c0_79] : memref<32x32xbf16, #tpu.memory_space<vmem>>, vector<32x32xbf16>
    %c0_80 = arith.constant 0 : index
    %c0_81 = arith.constant 0 : index
    %175 = vector.load %arg21[%c0_80, %c0_81] : memref<32x32xbf16, #tpu.memory_space<vmem>>, vector<32x32xbf16>
    %c0_82 = arith.constant 0 : index
    %c0_83 = arith.constant 0 : index
    %176 = vector.load %arg22[%c0_82, %c0_83] : memref<32x32xbf16, #tpu.memory_space<vmem>>, vector<32x32xbf16>
    %c0_84 = arith.constant 0 : index
    %c0_85 = arith.constant 0 : index
    %177 = vector.load %arg23[%c0_84, %c0_85] : memref<32x32xbf16, #tpu.memory_space<vmem>>, vector<32x32xbf16>
    %c0_86 = arith.constant 0 : index
    %c0_87 = arith.constant 0 : index
    %178 = vector.load %arg24[%c0_86, %c0_87] : memref<1x32xf32, #tpu.memory_space<vmem>>, vector<1x32xf32>
    %179 = arith.truncf %28 : vector<128x32xf32> to vector<128x32xbf16>
    %cst_88 = arith.constant dense<0.000000e+00> : vector<128x32xf32>
    %180 = tpu.matmul %179, %174, %cst_88 {dimension_numbers = #tpu.dot_dimension_numbers<[1], [0], [0], [1], [0, 0, 1, 1], [], []>} : vector<128x32xbf16>, vector<32x32xbf16>, vector<128x32xf32> -> vector<128x32xf32>
    %181 = arith.truncf %173 : vector<128x32xf32> to vector<128x32xbf16>
    %cst_89 = arith.constant dense<0.000000e+00> : vector<128x32xf32>
    %182 = tpu.matmul %181, %175, %cst_89 {dimension_numbers = #tpu.dot_dimension_numbers<[1], [0], [0], [1], [0, 0, 1, 1], [], []>} : vector<128x32xbf16>, vector<32x32xbf16>, vector<128x32xf32> -> vector<128x32xf32>
    %183 = arith.truncf %173 : vector<128x32xf32> to vector<128x32xbf16>
    %cst_90 = arith.constant dense<0.000000e+00> : vector<128x32xf32>
    %184 = tpu.matmul %183, %176, %cst_90 {dimension_numbers = #tpu.dot_dimension_numbers<[1], [0], [0], [1], [0, 0, 1, 1], [], []>} : vector<128x32xbf16>, vector<32x32xbf16>, vector<128x32xf32> -> vector<128x32xf32>
    %cst_91 = arith.constant 0.000000e+00 : f32
    %185 = vector.broadcast %cst_91 : f32 to vector<128x32xf32>
    %186 = vector.extract_strided_slice %180 {offsets = [0, 0], sizes = [128, 8], strides = [1, 1]} : vector<128x32xf32> to vector<128x8xf32>
    %187 = vector.extract_strided_slice %182 {offsets = [0, 0], sizes = [128, 8], strides = [1, 1]} : vector<128x32xf32> to vector<128x8xf32>
    %188 = arith.truncf %186 : vector<128x8xf32> to vector<128x8xbf16>
    %189 = arith.truncf %187 : vector<128x8xf32> to vector<128x8xbf16>
    %cst_92 = arith.constant dense<0.000000e+00> : vector<128x128xf32>
    %190 = tpu.matmul %188, %189, %cst_92 {dimension_numbers = #tpu.dot_dimension_numbers<[1], [1], [0], [0], [0, 0, 1, 0], [], []>} : vector<128x8xbf16>, vector<128x8xbf16>, vector<128x128xf32> -> vector<128x128xf32>
    %cst_93 = arith.constant 0.353553385 : f32
    %191 = vector.broadcast %cst_93 : f32 to vector<128x128xf32>
    %192 = arith.mulf %190, %191 : vector<128x128xf32>
    %cst_94 = arith.constant dense<0xFF800000> : vector<128xf32>
    %193 = vector.multi_reduction <maximumf>, %192, %cst_94 [1] : vector<128x128xf32> to vector<128xf32>
    %194 = vector.shape_cast %193 : vector<128xf32> to vector<128x1xf32>
    %195 = vector.broadcast %194 : vector<128x1xf32> to vector<128x128xf32>
    %196 = arith.subf %192, %195 : vector<128x128xf32>
    %197 = math.exp %196 : vector<128x128xf32>
    %cst_95 = arith.constant dense<0.000000e+00> : vector<128xf32>
    %198 = vector.multi_reduction <add>, %197, %cst_95 [1] : vector<128x128xf32> to vector<128xf32>
    %199 = vector.shape_cast %198 : vector<128xf32> to vector<128x1xf32>
    %200 = tpu.reciprocal %199 {approx = true} : vector<128x1xf32> -> vector<128x1xf32>
    %201 = vector.broadcast %200 : vector<128x1xf32> to vector<128x128xf32>
    %202 = arith.mulf %197, %201 : vector<128x128xf32>
    %203 = vector.extract_strided_slice %184 {offsets = [0, 0], sizes = [128, 8], strides = [1, 1]} : vector<128x32xf32> to vector<128x8xf32>
    %204 = arith.truncf %202 : vector<128x128xf32> to vector<128x128xbf16>
    %205 = arith.truncf %203 : vector<128x8xf32> to vector<128x8xbf16>
    %cst_96 = arith.constant dense<0.000000e+00> : vector<128x8xf32>
    %206 = tpu.matmul %204, %205, %cst_96 {dimension_numbers = #tpu.dot_dimension_numbers<[1], [0], [0], [1], [0, 0, 1, 1], [], []>} : vector<128x128xbf16>, vector<128x8xbf16>, vector<128x8xf32> -> vector<128x8xf32>
    %207 = vector.extract_strided_slice %177 {offsets = [0, 0], sizes = [8, 32], strides = [1, 1]} : vector<32x32xbf16> to vector<8x32xbf16>
    %208 = arith.truncf %206 : vector<128x8xf32> to vector<128x8xbf16>
    %cst_97 = arith.constant dense<0.000000e+00> : vector<128x32xf32>
    %209 = tpu.matmul %208, %207, %cst_97 {dimension_numbers = #tpu.dot_dimension_numbers<[1], [0], [0], [1], [0, 0, 1, 1], [], []>} : vector<128x8xbf16>, vector<8x32xbf16>, vector<128x32xf32> -> vector<128x32xf32>
    %210 = arith.addf %185, %209 : vector<128x32xf32>
    %211 = vector.extract_strided_slice %180 {offsets = [0, 8], sizes = [128, 8], strides = [1, 1]} : vector<128x32xf32> to vector<128x8xf32>
    %212 = vector.extract_strided_slice %182 {offsets = [0, 8], sizes = [128, 8], strides = [1, 1]} : vector<128x32xf32> to vector<128x8xf32>
    %213 = arith.truncf %211 : vector<128x8xf32> to vector<128x8xbf16>
    %214 = arith.truncf %212 : vector<128x8xf32> to vector<128x8xbf16>
    %cst_98 = arith.constant dense<0.000000e+00> : vector<128x128xf32>
    %215 = tpu.matmul %213, %214, %cst_98 {dimension_numbers = #tpu.dot_dimension_numbers<[1], [1], [0], [0], [0, 0, 1, 0], [], []>} : vector<128x8xbf16>, vector<128x8xbf16>, vector<128x128xf32> -> vector<128x128xf32>
    %cst_99 = arith.constant 0.353553385 : f32
    %216 = vector.broadcast %cst_99 : f32 to vector<128x128xf32>
    %217 = arith.mulf %215, %216 : vector<128x128xf32>
    %cst_100 = arith.constant dense<0xFF800000> : vector<128xf32>
    %218 = vector.multi_reduction <maximumf>, %217, %cst_100 [1] : vector<128x128xf32> to vector<128xf32>
    %219 = vector.shape_cast %218 : vector<128xf32> to vector<128x1xf32>
    %220 = vector.broadcast %219 : vector<128x1xf32> to vector<128x128xf32>
    %221 = arith.subf %217, %220 : vector<128x128xf32>
    %222 = math.exp %221 : vector<128x128xf32>
    %cst_101 = arith.constant dense<0.000000e+00> : vector<128xf32>
    %223 = vector.multi_reduction <add>, %222, %cst_101 [1] : vector<128x128xf32> to vector<128xf32>
    %224 = vector.shape_cast %223 : vector<128xf32> to vector<128x1xf32>
    %225 = tpu.reciprocal %224 {approx = true} : vector<128x1xf32> -> vector<128x1xf32>
    %226 = vector.broadcast %225 : vector<128x1xf32> to vector<128x128xf32>
    %227 = arith.mulf %222, %226 : vector<128x128xf32>
    %228 = vector.extract_strided_slice %184 {offsets = [0, 8], sizes = [128, 8], strides = [1, 1]} : vector<128x32xf32> to vector<128x8xf32>
    %229 = arith.truncf %227 : vector<128x128xf32> to vector<128x128xbf16>
    %230 = arith.truncf %228 : vector<128x8xf32> to vector<128x8xbf16>
    %cst_102 = arith.constant dense<0.000000e+00> : vector<128x8xf32>
    %231 = tpu.matmul %229, %230, %cst_102 {dimension_numbers = #tpu.dot_dimension_numbers<[1], [0], [0], [1], [0, 0, 1, 1], [], []>} : vector<128x128xbf16>, vector<128x8xbf16>, vector<128x8xf32> -> vector<128x8xf32>
    %232 = vector.extract_strided_slice %177 {offsets = [8, 0], sizes = [8, 32], strides = [1, 1]} : vector<32x32xbf16> to vector<8x32xbf16>
    %233 = arith.truncf %231 : vector<128x8xf32> to vector<128x8xbf16>
    %cst_103 = arith.constant dense<0.000000e+00> : vector<128x32xf32>
    %234 = tpu.matmul %233, %232, %cst_103 {dimension_numbers = #tpu.dot_dimension_numbers<[1], [0], [0], [1], [0, 0, 1, 1], [], []>} : vector<128x8xbf16>, vector<8x32xbf16>, vector<128x32xf32> -> vector<128x32xf32>
    %235 = arith.addf %210, %234 : vector<128x32xf32>
    %236 = vector.extract_strided_slice %180 {offsets = [0, 16], sizes = [128, 8], strides = [1, 1]} : vector<128x32xf32> to vector<128x8xf32>
    %237 = vector.extract_strided_slice %182 {offsets = [0, 16], sizes = [128, 8], strides = [1, 1]} : vector<128x32xf32> to vector<128x8xf32>
    %238 = arith.truncf %236 : vector<128x8xf32> to vector<128x8xbf16>
    %239 = arith.truncf %237 : vector<128x8xf32> to vector<128x8xbf16>
    %cst_104 = arith.constant dense<0.000000e+00> : vector<128x128xf32>
    %240 = tpu.matmul %238, %239, %cst_104 {dimension_numbers = #tpu.dot_dimension_numbers<[1], [1], [0], [0], [0, 0, 1, 0], [], []>} : vector<128x8xbf16>, vector<128x8xbf16>, vector<128x128xf32> -> vector<128x128xf32>
    %cst_105 = arith.constant 0.353553385 : f32
    %241 = vector.broadcast %cst_105 : f32 to vector<128x128xf32>
    %242 = arith.mulf %240, %241 : vector<128x128xf32>
    %cst_106 = arith.constant dense<0xFF800000> : vector<128xf32>
    %243 = vector.multi_reduction <maximumf>, %242, %cst_106 [1] : vector<128x128xf32> to vector<128xf32>
    %244 = vector.shape_cast %243 : vector<128xf32> to vector<128x1xf32>
    %245 = vector.broadcast %244 : vector<128x1xf32> to vector<128x128xf32>
    %246 = arith.subf %242, %245 : vector<128x128xf32>
    %247 = math.exp %246 : vector<128x128xf32>
    %cst_107 = arith.constant dense<0.000000e+00> : vector<128xf32>
    %248 = vector.multi_reduction <add>, %247, %cst_107 [1] : vector<128x128xf32> to vector<128xf32>
    %249 = vector.shape_cast %248 : vector<128xf32> to vector<128x1xf32>
    %250 = tpu.reciprocal %249 {approx = true} : vector<128x1xf32> -> vector<128x1xf32>
    %251 = vector.broadcast %250 : vector<128x1xf32> to vector<128x128xf32>
    %252 = arith.mulf %247, %251 : vector<128x128xf32>
    %253 = vector.extract_strided_slice %184 {offsets = [0, 16], sizes = [128, 8], strides = [1, 1]} : vector<128x32xf32> to vector<128x8xf32>
    %254 = arith.truncf %252 : vector<128x128xf32> to vector<128x128xbf16>
    %255 = arith.truncf %253 : vector<128x8xf32> to vector<128x8xbf16>
    %cst_108 = arith.constant dense<0.000000e+00> : vector<128x8xf32>
    %256 = tpu.matmul %254, %255, %cst_108 {dimension_numbers = #tpu.dot_dimension_numbers<[1], [0], [0], [1], [0, 0, 1, 1], [], []>} : vector<128x128xbf16>, vector<128x8xbf16>, vector<128x8xf32> -> vector<128x8xf32>
    %257 = vector.extract_strided_slice %177 {offsets = [16, 0], sizes = [8, 32], strides = [1, 1]} : vector<32x32xbf16> to vector<8x32xbf16>
    %258 = arith.truncf %256 : vector<128x8xf32> to vector<128x8xbf16>
    %cst_109 = arith.constant dense<0.000000e+00> : vector<128x32xf32>
    %259 = tpu.matmul %258, %257, %cst_109 {dimension_numbers = #tpu.dot_dimension_numbers<[1], [0], [0], [1], [0, 0, 1, 1], [], []>} : vector<128x8xbf16>, vector<8x32xbf16>, vector<128x32xf32> -> vector<128x32xf32>
    %260 = arith.addf %235, %259 : vector<128x32xf32>
    %261 = vector.extract_strided_slice %180 {offsets = [0, 24], sizes = [128, 8], strides = [1, 1]} : vector<128x32xf32> to vector<128x8xf32>
    %262 = vector.extract_strided_slice %182 {offsets = [0, 24], sizes = [128, 8], strides = [1, 1]} : vector<128x32xf32> to vector<128x8xf32>
    %263 = arith.truncf %261 : vector<128x8xf32> to vector<128x8xbf16>
    %264 = arith.truncf %262 : vector<128x8xf32> to vector<128x8xbf16>
    %cst_110 = arith.constant dense<0.000000e+00> : vector<128x128xf32>
    %265 = tpu.matmul %263, %264, %cst_110 {dimension_numbers = #tpu.dot_dimension_numbers<[1], [1], [0], [0], [0, 0, 1, 0], [], []>} : vector<128x8xbf16>, vector<128x8xbf16>, vector<128x128xf32> -> vector<128x128xf32>
    %cst_111 = arith.constant 0.353553385 : f32
    %266 = vector.broadcast %cst_111 : f32 to vector<128x128xf32>
    %267 = arith.mulf %265, %266 : vector<128x128xf32>
    %cst_112 = arith.constant dense<0xFF800000> : vector<128xf32>
    %268 = vector.multi_reduction <maximumf>, %267, %cst_112 [1] : vector<128x128xf32> to vector<128xf32>
    %269 = vector.shape_cast %268 : vector<128xf32> to vector<128x1xf32>
    %270 = vector.broadcast %269 : vector<128x1xf32> to vector<128x128xf32>
    %271 = arith.subf %267, %270 : vector<128x128xf32>
    %272 = math.exp %271 : vector<128x128xf32>
    %cst_113 = arith.constant dense<0.000000e+00> : vector<128xf32>
    %273 = vector.multi_reduction <add>, %272, %cst_113 [1] : vector<128x128xf32> to vector<128xf32>
    %274 = vector.shape_cast %273 : vector<128xf32> to vector<128x1xf32>
    %275 = tpu.reciprocal %274 {approx = true} : vector<128x1xf32> -> vector<128x1xf32>
    %276 = vector.broadcast %275 : vector<128x1xf32> to vector<128x128xf32>
    %277 = arith.mulf %272, %276 : vector<128x128xf32>
    %278 = vector.extract_strided_slice %184 {offsets = [0, 24], sizes = [128, 8], strides = [1, 1]} : vector<128x32xf32> to vector<128x8xf32>
    %279 = arith.truncf %277 : vector<128x128xf32> to vector<128x128xbf16>
    %280 = arith.truncf %278 : vector<128x8xf32> to vector<128x8xbf16>
    %cst_114 = arith.constant dense<0.000000e+00> : vector<128x8xf32>
    %281 = tpu.matmul %279, %280, %cst_114 {dimension_numbers = #tpu.dot_dimension_numbers<[1], [0], [0], [1], [0, 0, 1, 1], [], []>} : vector<128x128xbf16>, vector<128x8xbf16>, vector<128x8xf32> -> vector<128x8xf32>
    %282 = vector.extract_strided_slice %177 {offsets = [24, 0], sizes = [8, 32], strides = [1, 1]} : vector<32x32xbf16> to vector<8x32xbf16>
    %283 = arith.truncf %281 : vector<128x8xf32> to vector<128x8xbf16>
    %cst_115 = arith.constant dense<0.000000e+00> : vector<128x32xf32>
    %284 = tpu.matmul %283, %282, %cst_115 {dimension_numbers = #tpu.dot_dimension_numbers<[1], [0], [0], [1], [0, 0, 1, 1], [], []>} : vector<128x8xbf16>, vector<8x32xbf16>, vector<128x32xf32> -> vector<128x32xf32>
    %285 = arith.addf %260, %284 : vector<128x32xf32>
    %286 = vector.broadcast %178 : vector<1x32xf32> to vector<128x32xf32>
    %287 = arith.addf %285, %286 : vector<128x32xf32>
    %288 = arith.addf %287, %173 : vector<128x32xf32>
    %c0_116 = arith.constant 0 : index
    %c0_117 = arith.constant 0 : index
    %289 = vector.load %arg31[%c0_116, %c0_117] : memref<128x32xf32, #tpu.memory_space<vmem>>, vector<128x32xf32>
    tpu.vector_store %arg31[%c0_116, %c0_117], %288 {strides = array<i32>} : memref<128x32xf32, #tpu.memory_space<vmem>>, vector<128x32xf32>,
    %c0_118 = arith.constant 0 : index
    %c0_119 = arith.constant 0 : index
    %290 = vector.load %arg25[%c0_118, %c0_119] : memref<32x64xbf16, #tpu.memory_space<vmem>>, vector<32x64xbf16>
    %291 = arith.truncf %288 : vector<128x32xf32> to vector<128x32xbf16>
    %cst_120 = arith.constant dense<0.000000e+00> : vector<128x64xf32>
    %292 = tpu.matmul %291, %290, %cst_120 {dimension_numbers = #tpu.dot_dimension_numbers<[1], [0], [0], [1], [0, 0, 1, 1], [], []>} : vector<128x32xbf16>, vector<32x64xbf16>, vector<128x64xf32> -> vector<128x64xf32>
    %c0_121 = arith.constant 0 : index
    %c0_122 = arith.constant 0 : index
    %293 = vector.load %arg26[%c0_121, %c0_122] : memref<1x64xf32, #tpu.memory_space<vmem>>, vector<1x64xf32>
    %294 = vector.broadcast %293 : vector<1x64xf32> to vector<128x64xf32>
    %295 = arith.addf %292, %294 : vector<128x64xf32>
    %cst_123 = arith.constant 0.000000e+00 : f32
    %296 = vector.broadcast %cst_123 : f32 to vector<128x64xf32>
    %297 = arith.maximumf %295, %296 : vector<128x64xf32>
    %c0_124 = arith.constant 0 : index
    %c0_125 = arith.constant 0 : index
    %298 = vector.load %arg27[%c0_124, %c0_125] : memref<64x128xbf16, #tpu.memory_space<vmem>>, vector<64x128xbf16>
    %299 = arith.truncf %297 : vector<128x64xf32> to vector<128x64xbf16>
    %cst_126 = arith.constant dense<0.000000e+00> : vector<128x128xf32>
    %300 = tpu.matmul %299, %298, %cst_126 {dimension_numbers = #tpu.dot_dimension_numbers<[1], [0], [0], [1], [0, 0, 1, 1], [], []>} : vector<128x64xbf16>, vector<64x128xbf16>, vector<128x128xf32> -> vector<128x128xf32>
    %c0_127 = arith.constant 0 : index
    %c0_128 = arith.constant 0 : index
    %301 = vector.load %arg28[%c0_127, %c0_128] : memref<1x128xf32, #tpu.memory_space<vmem>>, vector<1x128xf32>
    %302 = vector.broadcast %301 : vector<1x128xf32> to vector<128x128xf32>
    %303 = arith.addf %300, %302 : vector<128x128xf32>
    %cst_129 = arith.constant 0.000000e+00 : f32
    %304 = vector.broadcast %cst_129 : f32 to vector<128x128xf32>
    %305 = arith.maximumf %303, %304 : vector<128x128xf32>
    %c0_130 = arith.constant 0 : index
    %c0_131 = arith.constant 0 : index
    %306 = vector.load %arg29[%c0_130, %c0_131] : memref<128x192xbf16, #tpu.memory_space<vmem>>, vector<128x192xbf16>
    %307 = arith.truncf %305 : vector<128x128xf32> to vector<128x128xbf16>
    %cst_132 = arith.constant dense<0.000000e+00> : vector<128x192xf32>
    %308 = tpu.matmul %307, %306, %cst_132 {dimension_numbers = #tpu.dot_dimension_numbers<[1], [0], [0], [1], [0, 0, 1, 1], [], []>} : vector<128x128xbf16>, vector<128x192xbf16>, vector<128x192xf32> -> vector<128x192xf32>
    %c0_133 = arith.constant 0 : index
    %c0_134 = arith.constant 0 : index
    %309 = vector.load %arg30[%c0_133, %c0_134] : memref<1x192xf32, #tpu.memory_space<vmem>>, vector<1x192xf32>
    %310 = vector.broadcast %309 : vector<1x192xf32> to vector<128x192xf32>
    %311 = arith.addf %308, %310 : vector<128x192xf32>
    %312 = vector.extract_strided_slice %311 {offsets = [0, 0], sizes = [128, 64], strides = [1, 1]} : vector<128x192xf32> to vector<128x64xf32>
    %313 = vector.extract_strided_slice %311 {offsets = [0, 64], sizes = [128, 64], strides = [1, 1]} : vector<128x192xf32> to vector<128x64xf32>
    %314 = vector.extract_strided_slice %311 {offsets = [0, 128], sizes = [128, 64], strides = [1, 1]} : vector<128x192xf32> to vector<128x64xf32>
    %cst_135 = arith.constant 0.000000e+00 : f32
    %315 = vector.broadcast %cst_135 : f32 to vector<128x64xf32>
    %316 = arith.subf %315, %312 : vector<128x64xf32>
    %317 = math.exp %316 : vector<128x64xf32>
    %cst_136 = arith.constant 1.000000e+00 : f32
    %318 = vector.broadcast %cst_136 : f32 to vector<128x64xf32>
    %319 = arith.addf %318, %317 : vector<128x64xf32>
    %320 = tpu.reciprocal %319 {approx = true} : vector<128x64xf32> -> vector<128x64xf32>
    %c0_137 = arith.constant 0 : index
    %c0_138 = arith.constant 0 : index
    %321 = vector.load %arg33[%c0_137, %c0_138] : memref<128x64xf32, #tpu.memory_space<vmem>>, vector<128x64xf32>
    tpu.vector_store %arg33[%c0_137, %c0_138], %320 {strides = array<i32>} : memref<128x64xf32, #tpu.memory_space<vmem>>, vector<128x64xf32>,
    %322 = math.exp %313 : vector<128x64xf32>
    %cst_139 = arith.constant 9.99999974E-6 : f32
    %cst_140 = arith.constant 1.000000e+04 : f32
    %323 = vector.broadcast %cst_139 : f32 to vector<128x64xf32>
    %324 = arith.maximumf %323, %322 : vector<128x64xf32>
    %325 = vector.broadcast %cst_140 : f32 to vector<128x64xf32>
    %326 = arith.minimumf %325, %324 : vector<128x64xf32>
    %c0_141 = arith.constant 0 : index
    %c0_142 = arith.constant 0 : index
    %327 = vector.load %arg34[%c0_141, %c0_142] : memref<128x64xf32, #tpu.memory_space<vmem>>, vector<128x64xf32>
    tpu.vector_store %arg34[%c0_141, %c0_142], %326 {strides = array<i32>} : memref<128x64xf32, #tpu.memory_space<vmem>>, vector<128x64xf32>,
    %cst_143 = arith.constant 2.000000e+01 : f32
    %328 = vector.broadcast %cst_143 : f32 to vector<128x64xf32>
    %329 = arith.cmpf ogt, %314, %328 : vector<128x64xf32>
    %cst_144 = arith.constant 2.000000e+01 : f32
    %330 = vector.broadcast %cst_144 : f32 to vector<128x64xf32>
    %331 = arith.minimumf %314, %330 : vector<128x64xf32>
    %332 = math.exp %331 : vector<128x64xf32>
    %333 = math.log1p %332 : vector<128x64xf32>
    %334 = arith.select %329, %314, %333 : vector<128x64xi1>, vector<128x64xf32>
    %cst_145 = arith.constant 9.99999974E-5 : f32
    %cst_146 = arith.constant 1.000000e+03 : f32
    %335 = vector.broadcast %cst_145 : f32 to vector<128x64xf32>
    %336 = arith.maximumf %335, %334 : vector<128x64xf32>
    %337 = vector.broadcast %cst_146 : f32 to vector<128x64xf32>
    %338 = arith.minimumf %337, %336 : vector<128x64xf32>
    %c0_147 = arith.constant 0 : index
    %c0_148 = arith.constant 0 : index
    %339 = vector.load %arg35[%c0_147, %c0_148] : memref<128x64xf32, #tpu.memory_space<vmem>>, vector<128x64xf32>
    tpu.vector_store %arg35[%c0_147, %c0_148], %338 {strides = array<i32>} : memref<128x64xf32, #tpu.memory_space<vmem>>, vector<128x64xf32>,
    return
  }
  func.func @transform_0(%arg0: i32) -> (i32, i32) {
    %c0_i32 = arith.constant 0 : i32
    %c0_i32_0 = arith.constant 0 : i32
    %c0_i32_1 = arith.constant 0 : i32
    return %c0_i32, %c0_i32_0 : i32, i32
  }
  func.func @transform_1(%arg0: i32) -> (i32, i32) {
    %c0_i32 = arith.constant 0 : i32
    %c0_i32_0 = arith.constant 0 : i32
    %c0_i32_1 = arith.constant 0 : i32
    return %c0_i32, %c0_i32_0 : i32, i32
  }
  func.func @transform_2(%arg0: i32) -> (i32, i32) {
    %c0_i32 = arith.constant 0 : i32
    %c0_i32_0 = arith.constant 0 : i32
    %c0_i32_1 = arith.constant 0 : i32
    return %c0_i32, %c0_i32_0 : i32, i32
  }
  func.func @transform_3(%arg0: i32) -> (i32, i32) {
    %c0_i32 = arith.constant 0 : i32
    %c0_i32_0 = arith.constant 0 : i32
    %c0_i32_1 = arith.constant 0 : i32
    return %c0_i32, %c0_i32_0 : i32, i32
  }
  func.func @transform_4(%arg0: i32) -> (i32, i32) {
    %c0_i32 = arith.constant 0 : i32
    %c0_i32_0 = arith.constant 0 : i32
    %c0_i32_1 = arith.constant 0 : i32
    return %c0_i32, %c0_i32_0 : i32, i32
  }
  func.func @transform_5(%arg0: i32) -> (i32, i32) {
    %c0_i32 = arith.constant 0 : i32
    %c0_i32_0 = arith.constant 0 : i32
    %c0_i32_1 = arith.constant 0 : i32
    return %c0_i32, %c0_i32_0 : i32, i32
  }
  func.func @transform_6(%arg0: i32) -> (i32, i32) {
    %c0_i32 = arith.constant 0 : i32
    %c0_i32_0 = arith.constant 0 : i32
    %c0_i32_1 = arith.constant 0 : i32
    return %c0_i32, %c0_i32_0 : i32, i32
  }
  func.func @transform_7(%arg0: i32) -> (i32, i32) {
    %c0_i32 = arith.constant 0 : i32
    %c0_i32_0 = arith.constant 0 : i32
    %c0_i32_1 = arith.constant 0 : i32
    return %c0_i32, %c0_i32_0 : i32, i32
  }
  func.func @transform_8(%arg0: i32) -> (i32, i32) {
    %c0_i32 = arith.constant 0 : i32
    %c0_i32_0 = arith.constant 0 : i32
    %c0_i32_1 = arith.constant 0 : i32
    return %c0_i32, %c0_i32_0 : i32, i32
  }
  func.func @transform_9(%arg0: i32) -> (i32, i32) {
    %c0_i32 = arith.constant 0 : i32
    %c0_i32_0 = arith.constant 0 : i32
    %c0_i32_1 = arith.constant 0 : i32
    return %c0_i32, %c0_i32_0 : i32, i32
  }
  func.func @transform_10(%arg0: i32) -> (i32, i32) {
    %c0_i32 = arith.constant 0 : i32
    %c0_i32_0 = arith.constant 0 : i32
    %c0_i32_1 = arith.constant 0 : i32
    return %c0_i32, %c0_i32_0 : i32, i32
  }
  func.func @transform_11(%arg0: i32) -> (i32, i32) {
    %c0_i32 = arith.constant 0 : i32
    %c0_i32_0 = arith.constant 0 : i32
    %c0_i32_1 = arith.constant 0 : i32
    return %c0_i32, %c0_i32_0 : i32, i32
  }
  func.func @transform_12(%arg0: i32) -> (i32, i32) {
    %c0_i32 = arith.constant 0 : i32
    %c0_i32_0 = arith.constant 0 : i32
    %c0_i32_1 = arith.constant 0 : i32
    return %c0_i32, %c0_i32_0 : i32, i32
  }
  func.func @transform_13(%arg0: i32) -> (i32, i32) {
    %c0_i32 = arith.constant 0 : i32
    %c0_i32_0 = arith.constant 0 : i32
    %c0_i32_1 = arith.constant 0 : i32
    return %c0_i32, %c0_i32_0 : i32, i32
  }
  func.func @transform_14(%arg0: i32) -> (i32, i32) {
    %c0_i32 = arith.constant 0 : i32
    %c0_i32_0 = arith.constant 0 : i32
    %c0_i32_1 = arith.constant 0 : i32
    return %c0_i32, %c0_i32_0 : i32, i32
  }
  func.func @transform_15(%arg0: i32) -> (i32, i32) {
    %c0_i32 = arith.constant 0 : i32
    %c0_i32_0 = arith.constant 0 : i32
    %c0_i32_1 = arith.constant 0 : i32
    return %c0_i32, %c0_i32_0 : i32, i32
  }
  func.func @transform_16(%arg0: i32) -> (i32, i32) {
    %c0_i32 = arith.constant 0 : i32
    %c0_i32_0 = arith.constant 0 : i32
    %c0_i32_1 = arith.constant 0 : i32
    return %c0_i32, %c0_i32_0 : i32, i32
  }
  func.func @transform_17(%arg0: i32) -> (i32, i32) {
    %c0_i32 = arith.constant 0 : i32
    %c0_i32_0 = arith.constant 0 : i32
    %c0_i32_1 = arith.constant 0 : i32
    return %c0_i32, %c0_i32_0 : i32, i32
  }
  func.func @transform_18(%arg0: i32) -> (i32, i32) {
    %c0_i32 = arith.constant 0 : i32
    %c0_i32_0 = arith.constant 0 : i32
    %c0_i32_1 = arith.constant 0 : i32
    return %c0_i32, %c0_i32_0 : i32, i32
  }
  func.func @transform_19(%arg0: i32) -> (i32, i32) {
    %c0_i32 = arith.constant 0 : i32
    %c0_i32_0 = arith.constant 0 : i32
    %c0_i32_1 = arith.constant 0 : i32
    return %c0_i32, %c0_i32_0 : i32, i32
  }
  func.func @transform_20(%arg0: i32) -> (i32, i32) {
    %c0_i32 = arith.constant 0 : i32
    %c0_i32_0 = arith.constant 0 : i32
    %c0_i32_1 = arith.constant 0 : i32
    return %c0_i32, %c0_i32_0 : i32, i32
  }
  func.func @transform_21(%arg0: i32) -> (i32, i32) {
    %c0_i32 = arith.constant 0 : i32
    %c0_i32_0 = arith.constant 0 : i32
    %c0_i32_1 = arith.constant 0 : i32
    return %c0_i32, %c0_i32_0 : i32, i32
  }
  func.func @transform_22(%arg0: i32) -> (i32, i32) {
    %c0_i32 = arith.constant 0 : i32
    %c0_i32_0 = arith.constant 0 : i32
    %c0_i32_1 = arith.constant 0 : i32
    return %c0_i32, %c0_i32_0 : i32, i32
  }
  func.func @transform_23(%arg0: i32) -> (i32, i32) {
    %c0_i32 = arith.constant 0 : i32
    %c0_i32_0 = arith.constant 0 : i32
    %c0_i32_1 = arith.constant 0 : i32
    return %c0_i32, %c0_i32_0 : i32, i32
  }
  func.func @transform_24(%arg0: i32) -> (i32, i32) {
    %c0_i32 = arith.constant 0 : i32
    %c0_i32_0 = arith.constant 0 : i32
    %c0_i32_1 = arith.constant 0 : i32
    return %c0_i32, %c0_i32_0 : i32, i32
  }
  func.func @transform_25(%arg0: i32) -> (i32, i32) {
    %c0_i32 = arith.constant 0 : i32
    %c0_i32_0 = arith.constant 0 : i32
    %c0_i32_1 = arith.constant 0 : i32
    return %c0_i32, %c0_i32_0 : i32, i32
  }
  func.func @transform_26(%arg0: i32) -> (i32, i32) {
    %c0_i32 = arith.constant 0 : i32
    %c0_i32_0 = arith.constant 0 : i32
    %c0_i32_1 = arith.constant 0 : i32
    return %c0_i32, %c0_i32_0 : i32, i32
  }
  func.func @transform_27(%arg0: i32) -> (i32, i32) {
    %c0_i32 = arith.constant 0 : i32
    %c0_i32_0 = arith.constant 0 : i32
    %c0_i32_1 = arith.constant 0 : i32
    return %c0_i32, %c0_i32_0 : i32, i32
  }
  func.func @transform_28(%arg0: i32) -> (i32, i32) {
    %c0_i32 = arith.constant 0 : i32
    %c0_i32_0 = arith.constant 0 : i32
    %c0_i32_1 = arith.constant 0 : i32
    return %c0_i32, %c0_i32_0 : i32, i32
  }
  func.func @transform_29(%arg0: i32) -> (i32, i32) {
    %c0_i32 = arith.constant 0 : i32
    %c0_i32_0 = arith.constant 0 : i32
    %c0_i32_1 = arith.constant 0 : i32
    return %c0_i32, %c0_i32_0 : i32, i32
  }
  func.func @transform_30(%arg0: i32) -> (i32, i32) {
    %c0_i32 = arith.constant 0 : i32
    %c0_i32_0 = arith.constant 0 : i32
    %c0_i32_1 = arith.constant 0 : i32
    return %c0_i32, %c0_i32_0 : i32, i32
  }
  func.func @transform_31(%arg0: i32) -> (i32, i32) {
    %c0_i32 = arith.constant 0 : i32
    %c0_i32_0 = arith.constant 0 : i32
    %c0_i32_1 = arith.constant 0 : i32
    return %c0_i32, %c0_i32_0 : i32, i32
  }
  func.func @transform_32(%arg0: i32) -> (i32, i32) {
    %c0_i32 = arith.constant 0 : i32
    %c0_i32_0 = arith.constant 0 : i32
    %c0_i32_1 = arith.constant 0 : i32
    return %c0_i32, %c0_i32_0 : i32, i32
  }
  func.func @transform_33(%arg0: i32) -> (i32, i32) {
    %c0_i32 = arith.constant 0 : i32
    %c0_i32_0 = arith.constant 0 : i32
    %c0_i32_1 = arith.constant 0 : i32
    return %c0_i32, %c0_i32_0 : i32, i32
  }
  func.func @transform_34(%arg0: i32) -> (i32, i32) {
    %c0_i32 = arith.constant 0 : i32
    %c0_i32_0 = arith.constant 0 : i32
    %c0_i32_1 = arith.constant 0 : i32
    return %c0_i32, %c0_i32_0 : i32, i32
  }
}

</mosaic_0001>

<llo_original>
// kernel: mul.9
$region0: #{mul.9}
  %s0 = inlined_call_operand.vmem [shape: f32[4,16], index: 0, kind: input, shape index: {}]
  %s1 = inlined_call_operand.vmem [shape: f32[64], index: 1, kind: output, shape index: {}]
  $region1: #{mul.9} parent=0
    #allocation0 [shape = 'u8[4096]{0}', space=vmem, size = 0x1000, scoped, tag = 'scoped mem for output reshape']
    #allocation1 [shape = 'u8[4096]{0}', space=vmem, size = 0x1000, scoped, tag = 'scoped mem for input reshape']
    %s3 = sshllo.u32 0, 4
    %v4 = vld [vmem:[%s0] sm:%s3]
    %5 = vst [vmem:[#allocation1] sm:%s3] %v4
    %v6 = vld [vmem:[#allocation1] sm:$0x1]
    %vm7 = vcmask 130048
    %8 = vst.msk [vmem:[#allocation0] sm:$0x1] %vm7, %v6
    %s9 = scalar_lea.vmem [#allocation1], 3
    %v10 = vld [vmem:[%s9] sm:$0x1]
    %11 = vrot.lane.b32.xlu0 %v10, 48
    %v12 = vpop.permute.xlu0 %11
    %vm13 = vcmask 523648
    %14 = vst.msk [vmem:[#allocation0] sm:$0x1] %vm13, %v12
    %s15 = scalar_lea.vmem [#allocation1], 2
    %v16 = vld [vmem:[%s15] sm:$0x1]
    %17 = vrot.lane.b32.xlu0 %v16, 32
    %v18 = vpop.permute.xlu0 %17
    %vm19 = vcmask 392448
    %20 = vst.msk [vmem:[#allocation0] sm:$0x1] %vm19, %v18
    %s21 = scalar_lea.vmem [#allocation1], 1
    %v22 = vld [vmem:[%s21] sm:$0x1]
    %23 = vrot.lane.b32.xlu0 %v22, 16
    %v24 = vpop.permute.xlu0 %23
    %vm25 = vcmask 261248
    %26 = vst.msk [vmem:[#allocation0] sm:$0x1] %vm25, %v24
    %s28 = sshllo.u32 0, 1
    %v30 = vld [vmem:[#allocation0] sm:%s28]
    %s31 = sshllo.u32 0, 1
    %32 = vst [vmem:[%s1] sm:%s31] %v30

// kernel: mul.13
$region0: #{mul.13}
  %s0 = inlined_call_operand.vmem [shape: f32[4,8], index: 0, kind: input, shape index: {}]
  %s1 = inlined_call_operand.vmem [shape: f32[32], index: 1, kind: output, shape index: {}]
  $region1: #{mul.13} parent=0
    #allocation0 [shape = 'u8[4096]{0}', space=vmem, size = 0x1000, scoped, tag = 'scoped mem for output reshape']
    #allocation1 [shape = 'u8[4096]{0}', space=vmem, size = 0x1000, scoped, tag = 'scoped mem for input reshape']
    %s3 = sshllo.u32 0, 4
    %v4 = vld [vmem:[%s0] sm:%s3]
    %5 = vst [vmem:[#allocation1] sm:%s3] %v4
    %v6 = vld [vmem:[#allocation1] sm:$0x1]
    %vm7 = vcmask 64512
    %8 = vst.msk [vmem:[#allocation0] sm:$0x1] %vm7, %v6
    %s9 = scalar_lea.vmem [#allocation1], 3
    %v10 = vld [vmem:[%s9] sm:$0x1]
    %11 = vrot.lane.b32.xlu0 %v10, 24
    %v12 = vpop.permute.xlu0 %11
    %vm13 = vcmask 261312
    %14 = vst.msk [vmem:[#allocation0] sm:$0x1] %vm13, %v12
    %s15 = scalar_lea.vmem [#allocation1], 2
    %v16 = vld [vmem:[%s15] sm:$0x1]
    %17 = vrot.lane.b32.xlu0 %v16, 16
    %v18 = vpop.permute.xlu0 %17
    %vm19 = vcmask 195712
    %20 = vst.msk [vmem:[#allocation0] sm:$0x1] %vm19, %v18
    %s21 = scalar_lea.vmem [#allocation1], 1
    %v22 = vld [vmem:[%s21] sm:$0x1]
    %23 = vrot.lane.b32.xlu0 %v22, 8
    %v24 = vpop.permute.xlu0 %23
    %vm25 = vcmask 130112
    %26 = vst.msk [vmem:[#allocation0] sm:$0x1] %vm25, %v24
    %s28 = sshllo.u32 0, 1
    %v30 = vld [vmem:[#allocation0] sm:%s28]
    %s31 = sshllo.u32 0, 1
    %32 = vst [vmem:[%s1] sm:%s31] %v30

// kernel: forward.1
$region0: #{forward.1}
  #allocation0 [shape = 'u32[]', space=smem, size = 0x4, offset = 0x4, fixed_abs, tag = 'smem constant byte address 0x4 - core index']
  #allocation1 [shape = 'u32[144,128]{1,0:T(1,128)}', space=vmem, size = 0x12000, scoped, tag = 'internal scratch']
  %s0 = inlined_call_operand.smem [shape: u32[35], index: -1, kind: input, shape index: {}]
  %s1 = sld [smem:[%s0]]
  %s2 = scalar_lea.smem %s0, 1
  %s3 = sld [smem:[%s2]]
  %s4 = scalar_lea.smem %s0, 2
  %s5 = sld [smem:[%s4]]
  %s6 = scalar_lea.smem %s0, 3
  %s7 = sld [smem:[%s6]]
  %s8 = scalar_lea.smem %s0, 4
  %s9 = sld [smem:[%s8]]
  %s10 = scalar_lea.smem %s0, 5
  %s11 = sld [smem:[%s10]]
  %s12 = scalar_lea.smem %s0, 6
  %s13 = sld [smem:[%s12]]
  %s14 = scalar_lea.smem %s0, 7
  %s15 = sld [smem:[%s14]]
  %s16 = scalar_lea.smem %s0, 8
  %s17 = sld [smem:[%s16]]
  %s18 = scalar_lea.smem %s0, 9
  %s19 = sld [smem:[%s18]]
  %s20 = scalar_lea.smem %s0, 10
  %s21 = sld [smem:[%s20]]
  %s22 = scalar_lea.smem %s0, 11
  %s23 = sld [smem:[%s22]]
  %s24 = scalar_lea.smem %s0, 12
  %s25 = sld [smem:[%s24]]
  %s26 = scalar_lea.smem %s0, 13
  %s27 = sld [smem:[%s26]]
  %s28 = scalar_lea.smem %s0, 14
  %s29 = sld [smem:[%s28]]
  %s30 = scalar_lea.smem %s0, 15
  %s31 = sld [smem:[%s30]]
  %s32 = scalar_lea.smem %s0, 16
  %s33 = sld [smem:[%s32]]
  %s34 = scalar_lea.smem %s0, 17
  %s35 = sld [smem:[%s34]]
  %s36 = scalar_lea.smem %s0, 18
  %s37 = sld [smem:[%s36]]
  %s38 = scalar_lea.smem %s0, 19
  %s39 = sld [smem:[%s38]]
  %s40 = scalar_lea.smem %s0, 20
  %s41 = sld [smem:[%s40]]
  %s42 = scalar_lea.smem %s0, 21
  %s43 = sld [smem:[%s42]]
  %s44 = scalar_lea.smem %s0, 22
  %s45 = sld [smem:[%s44]]
  %s46 = scalar_lea.smem %s0, 23
  %s47 = sld [smem:[%s46]]
  %s48 = scalar_lea.smem %s0, 24
  %s49 = sld [smem:[%s48]]
  %s50 = scalar_lea.smem %s0, 25
  %s51 = sld [smem:[%s50]]
  %s52 = scalar_lea.smem %s0, 26
  %s53 = sld [smem:[%s52]]
  %s54 = scalar_lea.smem %s0, 27
  %s55 = sld [smem:[%s54]]
  %s56 = scalar_lea.smem %s0, 28
  %s57 = sld [smem:[%s56]]
  %s58 = scalar_lea.smem %s0, 29
  %s59 = sld [smem:[%s58]]
  %s60 = scalar_lea.smem %s0, 30
  %s61 = sld [smem:[%s60]]
  %s62 = scalar_lea.smem %s0, 31
  %s63 = sld [smem:[%s62]]
  %s64 = scalar_lea.smem %s0, 32
  %s65 = sld [smem:[%s64]]
  %s66 = scalar_lea.smem %s0, 33
  %s67 = sld [smem:[%s66]]
  %s68 = scalar_lea.smem %s0, 34
  %s69 = sld [smem:[%s68]]
  %70 = xla_tuple %s61, %s63, %s65, %s67, %s69
  %s71 = sld [smem:[#allocation0]]
  $region162: #{forward.1} parent=0
    _
  %s73 = ssub.s32 1, %s71
  %s74 = scalar_select 0, %s73, %s71
  $region1: #{forward.1} parent=0
    #allocation2 [shape = 'u8[65536]{0}', space=vmem, size = 0x10000, scoped, tag = 'output window, operand 1, single buffered']
    #allocation3 [shape = 's32[1]{0}', space=sflag, size = 0x4, scoped, tag = 'scoped memory for forward.1']
    %75 = vsyncpa [#allocation3], 0
    // Predicated region
    $region2: #{forward.1} parent=1 // pred_check
      _
    $region3: #{forward.1} parent=1 // pred_check_branch
      %77 = sbr.rel (0) target = $region5
    $region4: #{forward.1} parent=1 // pred_region
      _
    $region5: #{forward.1} parent=1 // pred_fallthru
      _
    // Predicated region
    $region6: #{forward.1} parent=1 // pred_check
      _
    $region7: #{forward.1} parent=1 // pred_check_branch
      %79 = sbr.rel (0) target = $region9
    $region8: #{forward.1} parent=1 // pred_region
      _
    $region9: #{forward.1} parent=1 // pred_fallthru
      _
    // Predicated region
    $region10: #{forward.1} parent=1 // pred_check
      _
    $region11: #{forward.1} parent=1 // pred_check_branch
      %81 = sbr.rel (0) target = $region13
    $region12: #{forward.1} parent=1 // pred_region
      _
    $region13: #{forward.1} parent=1 // pred_fallthru
      _
    // Predicated region
    $region14: #{forward.1} parent=1 // pred_check
      _
    $region15: #{forward.1} parent=1 // pred_check_branch
      %83 = sbr.rel (0) target = $region17
    $region16: #{forward.1} parent=1 // pred_region
      _
    $region17: #{forward.1} parent=1 // pred_fallthru
      _
    // Predicated region
    $region18: #{forward.1} parent=1 // pred_check
      _
    $region19: #{forward.1} parent=1 // pred_check_branch
      %85 = sbr.rel (0) target = $region21
    $region20: #{forward.1} parent=1 // pred_region
      _
    $region21: #{forward.1} parent=1 // pred_fallthru
      _
    // Predicated region
    $region22: #{forward.1} parent=1 // pred_check
      _
    $region23: #{forward.1} parent=1 // pred_check_branch
      %87 = sbr.rel (0) target = $region25
    $region24: #{forward.1} parent=1 // pred_region
      _
    $region25: #{forward.1} parent=1 // pred_fallthru
      _
    // Predicated region
    $region26: #{forward.1} parent=1 // pred_check
      _
    $region27: #{forward.1} parent=1 // pred_check_branch
      %89 = sbr.rel (0) target = $region29
    $region28: #{forward.1} parent=1 // pred_region
      _
    $region29: #{forward.1} parent=1 // pred_fallthru
      _
    // Predicated region
    $region30: #{forward.1} parent=1 // pred_check
      _
    $region31: #{forward.1} parent=1 // pred_check_branch
      %91 = sbr.rel (0) target = $region33
    $region32: #{forward.1} parent=1 // pred_region
      _
    $region33: #{forward.1} parent=1 // pred_fallthru
      _
    // Predicated region
    $region34: #{forward.1} parent=1 // pred_check
      _
    $region35: #{forward.1} parent=1 // pred_check_branch
      %93 = sbr.rel (0) target = $region37
    $region36: #{forward.1} parent=1 // pred_region
      _
    $region37: #{forward.1} parent=1 // pred_fallthru
      _
    // Predicated region
    $region38: #{forward.1} parent=1 // pred_check
      _
    $region39: #{forward.1} parent=1 // pred_check_branch
      %95 = sbr.rel (0) target = $region41
    $region40: #{forward.1} parent=1 // pred_region
      _
    $region41: #{forward.1} parent=1 // pred_fallthru
      _
    // Predicated region
    $region42: #{forward.1} parent=1 // pred_check
      _
    $region43: #{forward.1} parent=1 // pred_check_branch
      %97 = sbr.rel (0) target = $region45
    $region44: #{forward.1} parent=1 // pred_region
      _
    $region45: #{forward.1} parent=1 // pred_fallthru
      _
    // Predicated region
    $region46: #{forward.1} parent=1 // pred_check
      _
    $region47: #{forward.1} parent=1 // pred_check_branch
      %99 = sbr.rel (0) target = $region49
    $region48: #{forward.1} parent=1 // pred_region
      _
    $region49: #{forward.1} parent=1 // pred_fallthru
      _
    // Predicated region
    $region50: #{forward.1} parent=1 // pred_check
      _
    $region51: #{forward.1} parent=1 // pred_check_branch
      %101 = sbr.rel (0) target = $region53
    $region52: #{forward.1} parent=1 // pred_region
      _
    $region53: #{forward.1} parent=1 // pred_fallthru
      _
    // Predicated region
    $region54: #{forward.1} parent=1 // pred_check
      _
    $region55: #{forward.1} parent=1 // pred_check_branch
      %103 = sbr.rel (0) target = $region57
    $region56: #{forward.1} parent=1 // pred_region
      _
    $region57: #{forward.1} parent=1 // pred_fallthru
      _
    // Predicated region
    $region58: #{forward.1} parent=1 // pred_check
      _
    $region59: #{forward.1} parent=1 // pred_check_branch
      %105 = sbr.rel (0) target = $region61
    $region60: #{forward.1} parent=1 // pred_region
      _
    $region61: #{forward.1} parent=1 // pred_fallthru
      _
    // Predicated region
    $region62: #{forward.1} parent=1 // pred_check
      _
    $region63: #{forward.1} parent=1 // pred_check_branch
      %107 = sbr.rel (0) target = $region65
    $region64: #{forward.1} parent=1 // pred_region
      _
    $region65: #{forward.1} parent=1 // pred_fallthru
      _
    // Predicated region
    $region66: #{forward.1} parent=1 // pred_check
      _
    $region67: #{forward.1} parent=1 // pred_check_branch
      %109 = sbr.rel (0) target = $region69
    $region68: #{forward.1} parent=1 // pred_region
      _
    $region69: #{forward.1} parent=1 // pred_fallthru
      _
    // Predicated region
    $region70: #{forward.1} parent=1 // pred_check
      _
    $region71: #{forward.1} parent=1 // pred_check_branch
      %111 = sbr.rel (0) target = $region73
    $region72: #{forward.1} parent=1 // pred_region
      _
    $region73: #{forward.1} parent=1 // pred_fallthru
      _
    // Predicated region
    $region74: #{forward.1} parent=1 // pred_check
      _
    $region75: #{forward.1} parent=1 // pred_check_branch
      %113 = sbr.rel (0) target = $region77
    $region76: #{forward.1} parent=1 // pred_region
      _
    $region77: #{forward.1} parent=1 // pred_fallthru
      _
    // Predicated region
    $region78: #{forward.1} parent=1 // pred_check
      _
    $region79: #{forward.1} parent=1 // pred_check_branch
      %115 = sbr.rel (0) target = $region81
    $region80: #{forward.1} parent=1 // pred_region
      _
    $region81: #{forward.1} parent=1 // pred_fallthru
      _
    // Predicated region
    $region82: #{forward.1} parent=1 // pred_check
      _
    $region83: #{forward.1} parent=1 // pred_check_branch
      %117 = sbr.rel (0) target = $region85
    $region84: #{forward.1} parent=1 // pred_region
      _
    $region85: #{forward.1} parent=1 // pred_fallthru
      _
    // Predicated region
    $region86: #{forward.1} parent=1 // pred_check
      _
    $region87: #{forward.1} parent=1 // pred_check_branch
      %119 = sbr.rel (0) target = $region89
    $region88: #{forward.1} parent=1 // pred_region
      _
    $region89: #{forward.1} parent=1 // pred_fallthru
      _
    // Predicated region
    $region90: #{forward.1} parent=1 // pred_check
      _
    $region91: #{forward.1} parent=1 // pred_check_branch
      %121 = sbr.rel (0) target = $region93
    $region92: #{forward.1} parent=1 // pred_region
      _
    $region93: #{forward.1} parent=1 // pred_fallthru
      _
    // Predicated region
    $region94: #{forward.1} parent=1 // pred_check
      _
    $region95: #{forward.1} parent=1 // pred_check_branch
      %123 = sbr.rel (0) target = $region97
    $region96: #{forward.1} parent=1 // pred_region
      _
    $region97: #{forward.1} parent=1 // pred_fallthru
      _
    // Predicated region
    $region98: #{forward.1} parent=1 // pred_check
      _
    $region99: #{forward.1} parent=1 // pred_check_branch
      %125 = sbr.rel (0) target = $region101
    $region100: #{forward.1} parent=1 // pred_region
      _
    $region101: #{forward.1} parent=1 // pred_fallthru
      _
    // Predicated region
    $region102: #{forward.1} parent=1 // pred_check
      _
    $region103: #{forward.1} parent=1 // pred_check_branch
      %127 = sbr.rel (0) target = $region105
    $region104: #{forward.1} parent=1 // pred_region
      _
    $region105: #{forward.1} parent=1 // pred_fallthru
      _
    // Predicated region
    $region106: #{forward.1} parent=1 // pred_check
      _
    $region107: #{forward.1} parent=1 // pred_check_branch
      %129 = sbr.rel (0) target = $region109
    $region108: #{forward.1} parent=1 // pred_region
      _
    $region109: #{forward.1} parent=1 // pred_fallthru
      _
    // Predicated region
    $region110: #{forward.1} parent=1 // pred_check
      _
    $region111: #{forward.1} parent=1 // pred_check_branch
      %131 = sbr.rel (0) target = $region113
    $region112: #{forward.1} parent=1 // pred_region
      _
    $region113: #{forward.1} parent=1 // pred_fallthru
      _
    // Predicated region
    $region114: #{forward.1} parent=1 // pred_check
      _
    $region115: #{forward.1} parent=1 // pred_check_branch
      %133 = sbr.rel (0) target = $region117
    $region116: #{forward.1} parent=1 // pred_region
      _
    $region117: #{forward.1} parent=1 // pred_fallthru
      _
    // Predicated region
    $region118: #{forward.1} parent=1 // pred_check
      _
    $region119: #{forward.1} parent=1 // pred_check_branch
      %135 = sbr.rel (0) target = $region121
    $region120: #{forward.1} parent=1 // pred_region
      _
    $region121: #{forward.1} parent=1 // pred_fallthru
      _
    %v137 = vld [vmem:[%s1] sm:$0xff]
    %v138 = vld [vmem:[%s1 + $0x8] sm:$0xff]
    %v139 = vld [vmem:[%s1 + $0x10] sm:$0xff]
    %v140 = vld [vmem:[%s1 + $0x18] sm:$0xff]
    %v141 = vld [vmem:[%s1 + $0x20] sm:$0xff]
    %v142 = vld [vmem:[%s1 + $0x28] sm:$0xff]
    %v143 = vld [vmem:[%s1 + $0x30] sm:$0xff]
    %v144 = vld [vmem:[%s1 + $0x38] sm:$0xff]
    %v145 = vld [vmem:[%s1 + $0x40] sm:$0xff]
    %v146 = vld [vmem:[%s1 + $0x48] sm:$0xff]
    %v147 = vld [vmem:[%s1 + $0x50] sm:$0xff]
    %v148 = vld [vmem:[%s1 + $0x58] sm:$0xff]
    %v149 = vld [vmem:[%s1 + $0x60] sm:$0xff]
    %v150 = vld [vmem:[%s1 + $0x68] sm:$0xff]
    %v151 = vld [vmem:[%s1 + $0x70] sm:$0xff]
    %v152 = vld [vmem:[%s1 + $0x78] sm:$0xff]
    %v153 = vld [vmem:[%s3] sm:$0xff]
    %v154 = vld [vmem:[%s3 + $0x8] sm:$0xff]
    %v155 = vld [vmem:[%s3 + $0x10] sm:$0xff]
    %v156 = vld [vmem:[%s3 + $0x18] sm:$0xff]
    %v157 = vld [vmem:[%s3 + $0x20] sm:$0xff]
    %v158 = vld [vmem:[%s3 + $0x28] sm:$0xff]
    %v159 = vld [vmem:[%s3 + $0x30] sm:$0xff]
    %v160 = vld [vmem:[%s3 + $0x38] sm:$0xff]
    %v161 = vld [vmem:[%s3 + $0x40] sm:$0xff]
    %v162 = vld [vmem:[%s3 + $0x48] sm:$0xff]
    %v163 = vld [vmem:[%s3 + $0x50] sm:$0xff]
    %v164 = vld [vmem:[%s3 + $0x58] sm:$0xff]
    %v165 = vld [vmem:[%s3 + $0x60] sm:$0xff]
    %v166 = vld [vmem:[%s3 + $0x68] sm:$0xff]
    %v167 = vld [vmem:[%s3 + $0x70] sm:$0xff]
    %v168 = vld [vmem:[%s3 + $0x78] sm:$0xff]
    %v169 = vpack.c.bf16 %v154, %v153
    %v170 = vpack.c.bf16 %v156, %v155
    %v171 = vpack.c.bf16 %v158, %v157
    %v172 = vpack.c.bf16 %v160, %v159
    %v173 = vpack.c.bf16 %v162, %v161
    %v174 = vpack.c.bf16 %v164, %v163
    %v175 = vpack.c.bf16 %v166, %v165
    %v176 = vpack.c.bf16 %v168, %v167
    %v177 = vld [vmem:[%s5] sm:$0xf]
    %v178 = vld [vmem:[%s5 + $0x4] sm:$0xf]
    %v179 = vld [vmem:[%s5 + $0x8] sm:$0xf]
    %v180 = vld [vmem:[%s5 + $0xc] sm:$0xf]
    %v181 = vld [vmem:[%s5 + $0x10] sm:$0xf]
    %v182 = vld [vmem:[%s5 + $0x14] sm:$0xf]
    %v183 = vld [vmem:[%s5 + $0x18] sm:$0xf]
    %v184 = vld [vmem:[%s5 + $0x1c] sm:$0xf]
    %v185 = vpack.c.bf16 %v138, %v137
    %v186 = vpack.c.bf16 %v140, %v139
    %v187 = vpack.c.bf16 %v142, %v141
    %v188 = vpack.c.bf16 %v144, %v143
    %v189 = vpack.c.bf16 %v146, %v145
    %v190 = vpack.c.bf16 %v148, %v147
    %v191 = vpack.c.bf16 %v150, %v149
    %v192 = vpack.c.bf16 %v152, %v151
    %v193 = vld [vmem:[%s7] sm:$0x1]
    %v195 = vlaneseq
    %v196 = vshrl.u32 %v195, 7
    %v197 = vsub.s32 0, %v196
    %v198 = vrot.slane %v193, %v197
    %v208 = vunpack.c.l.b16 %v177
    %v209 = vunpack.c.l.b16 %v178
    %v210 = vunpack.c.l.b16 %v179
    %v211 = vunpack.c.l.b16 %v180
    %v212 = vunpack.c.l.b16 %v181
    %v213 = vunpack.c.l.b16 %v182
    %v214 = vunpack.c.l.b16 %v183
    %v215 = vunpack.c.l.b16 %v184
    %v216 = vpack.c.b16 %v209, %v208
    %v217 = vpack.c.b16 %v211, %v210
    %v218 = vpack.c.b16 %v213, %v212
    %v219 = vpack.c.b16 %v215, %v214
    %vm224 = vcmask 523264
    %v226 = vsel %vm224, %v185, 0
    %v229 = vsel %vm224, %v186, 0
    %v232 = vsel %vm224, %v187, 0
    %v235 = vsel %vm224, %v188, 0
    %v238 = vsel %vm224, %v189, 0
    %v241 = vsel %vm224, %v190, 0
    %v244 = vsel %vm224, %v191, 0
    %v247 = vsel %vm224, %v192, 0
    %249 = vmatprep.subr.bf16.mxu0 0
    %250 = vmatpush1.bf16.msra.mxu0 %v216
    %251 = vmatprep.subr.bf16.mxu0 0
    %252 = vmatpush1.bf16.msra.mxu0 %v217
    %253 = vmatprep.subr.bf16.mxu0 0
    %254 = vmatpush1.bf16.msra.mxu0 %v218
    %255 = vmatprep.subr.bf16.mxu0 0
    %256 = vmatpush1.bf16.msra.mxu0 %v219
    %257 = vmatprep.subr.bf16.mxu0 0
    %258 = vmatpush1.bf16.msra.mxu0 0
    %259 = vmatprep.subr.bf16.mxu0 0
    %260 = vmatpush1.bf16.msra.mxu0 0
    %261 = vmatprep.subr.bf16.mxu0 0
    %262 = vmatpush1.bf16.msra.mxu0 0
    %263 = vmatprep.subr.bf16.mxu0 0
    %264 = vmatpush1.bf16.msra.mxu0 0
    %265 = vmatprep.subr.bf16.mxu0 0
    %266 = vmatpush1.bf16.msra.mxu0 0
    %267 = vmatprep.subr.bf16.mxu0 0
    %268 = vmatpush1.bf16.msra.mxu0 0
    %269 = vmatprep.subr.bf16.mxu0 0
    %270 = vmatpush1.bf16.msra.mxu0 0
    %271 = vmatprep.subr.bf16.mxu0 0
    %272 = vmatpush1.bf16.msra.mxu0 0
    %273 = vmatprep.subr.bf16.mxu0 0
    %274 = vmatpush1.bf16.msra.mxu0 0
    %275 = vmatprep.subr.bf16.mxu0 0
    %276 = vmatpush1.bf16.msra.mxu0 0
    %277 = vmatprep.subr.bf16.mxu0 0
    %278 = vmatpush1.bf16.msra.mxu0 0
    %279 = vmatprep.subr.bf16.mxu0 0
    %280 = vmatpush1.bf16.msra.mxu0 0
    %281 = vmatprep.mubr.bf16.mxu0 0
    %282 = vmatmul.mubr.bf16.gmra.mrb[0].mxu0 %v226
    %v283 = vpop.f32.mrb[0].mxu0
    %v284 = vadd.f32 %v198, %v283
    %v285 = vpop.f32.mrb[0].mxu0
    %v286 = vpop.f32.mrb[0].mxu0
    %v287 = vadd.f32 %v198, %v286
    %v288 = vpop.f32.mrb[0].mxu0
    %289 = vmatprep.mubr.bf16.mxu0 0
    %290 = vmatmul.mubr.bf16.gmra.mrb[0].mxu0 %v229
    %v291 = vpop.f32.mrb[0].mxu0
    %v292 = vadd.f32 %v198, %v291
    %v293 = vpop.f32.mrb[0].mxu0
    %v294 = vpop.f32.mrb[0].mxu0
    %v295 = vadd.f32 %v198, %v294
    %v296 = vpop.f32.mrb[0].mxu0
    %297 = vmatprep.mubr.bf16.mxu0 0
    %298 = vmatmul.mubr.bf16.gmra.mrb[0].mxu0 %v232
    %v299 = vpop.f32.mrb[0].mxu0
    %v300 = vadd.f32 %v198, %v299
    %v301 = vpop.f32.mrb[0].mxu0
    %v302 = vpop.f32.mrb[0].mxu0
    %v303 = vadd.f32 %v198, %v302
    %v304 = vpop.f32.mrb[0].mxu0
    %305 = vmatprep.mubr.bf16.mxu0 0
    %306 = vmatmul.mubr.bf16.gmra.mrb[0].mxu0 %v235
    %v307 = vpop.f32.mrb[0].mxu0
    %v308 = vadd.f32 %v198, %v307
    %v309 = vpop.f32.mrb[0].mxu0
    %v310 = vpop.f32.mrb[0].mxu0
    %v311 = vadd.f32 %v198, %v310
    %v312 = vpop.f32.mrb[0].mxu0
    %313 = vmatprep.mubr.bf16.mxu0 0
    %314 = vmatmul.mubr.bf16.gmra.mrb[0].mxu0 %v238
    %v315 = vpop.f32.mrb[0].mxu0
    %v316 = vadd.f32 %v198, %v315
    %v317 = vpop.f32.mrb[0].mxu0
    %v318 = vpop.f32.mrb[0].mxu0
    %v319 = vadd.f32 %v198, %v318
    %v320 = vpop.f32.mrb[0].mxu0
    %321 = vmatprep.mubr.bf16.mxu0 0
    %322 = vmatmul.mubr.bf16.gmra.mrb[0].mxu0 %v241
    %v323 = vpop.f32.mrb[0].mxu0
    %v324 = vadd.f32 %v198, %v323
    %v325 = vpop.f32.mrb[0].mxu0
    %v326 = vpop.f32.mrb[0].mxu0
    %v327 = vadd.f32 %v198, %v326
    %v328 = vpop.f32.mrb[0].mxu0
    %329 = vmatprep.mubr.bf16.mxu0 0
    %330 = vmatmul.mubr.bf16.gmra.mrb[0].mxu0 %v244
    %v331 = vpop.f32.mrb[0].mxu0
    %v332 = vadd.f32 %v198, %v331
    %v333 = vpop.f32.mrb[0].mxu0
    %v334 = vpop.f32.mrb[0].mxu0
    %v335 = vadd.f32 %v198, %v334
    %v336 = vpop.f32.mrb[0].mxu0
    %337 = vmatprep.mubr.bf16.mxu0 0
    %338 = vmatmul.mubr.bf16.gmra.mrb[0].mxu0 %v247
    %v339 = vpop.f32.mrb[0].mxu0
    %v340 = vadd.f32 %v198, %v339
    %v341 = vpop.f32.mrb[0].mxu0
    %v342 = vpop.f32.mrb[0].mxu0
    %v343 = vadd.f32 %v198, %v342
    %v344 = vpop.f32.mrb[0].mxu0
    %345 = vdwg.mxu0
    %v346 = vmax.f32 %v284, 0.0
    %v347 = vmax.f32 %v287, 0.0
    %v348 = vmax.f32 %v292, 0.0
    %v349 = vmax.f32 %v295, 0.0
    %v350 = vmax.f32 %v300, 0.0
    %v351 = vmax.f32 %v303, 0.0
    %v352 = vmax.f32 %v308, 0.0
    %v353 = vmax.f32 %v311, 0.0
    %v354 = vmax.f32 %v316, 0.0
    %v355 = vmax.f32 %v319, 0.0
    %v356 = vmax.f32 %v324, 0.0
    %v357 = vmax.f32 %v327, 0.0
    %v358 = vmax.f32 %v332, 0.0
    %v359 = vmax.f32 %v335, 0.0
    %v360 = vmax.f32 %v340, 0.0
    %v361 = vmax.f32 %v343, 0.0
    %v362 = vld [vmem:[%s9] sm:$0x1]
    %v364 = vlaneseq
    %v365 = vshrl.u32 %v364, 7
    %v366 = vsub.s32 0, %v365
    %v367 = vrot.slane %v362, %v366
    %v369 = vmul.f32 %v346, %v367
    %v370 = vmul.f32 %v347, %v367
    %v371 = vmul.f32 %v348, %v367
    %v372 = vmul.f32 %v349, %v367
    %v373 = vmul.f32 %v350, %v367
    %v374 = vmul.f32 %v351, %v367
    %v375 = vmul.f32 %v352, %v367
    %v376 = vmul.f32 %v353, %v367
    %v377 = vmul.f32 %v354, %v367
    %v378 = vmul.f32 %v355, %v367
    %v379 = vmul.f32 %v356, %v367
    %v380 = vmul.f32 %v357, %v367
    %v381 = vmul.f32 %v358, %v367
    %v382 = vmul.f32 %v359, %v367
    %v383 = vmul.f32 %v360, %v367
    %v384 = vmul.f32 %v361, %v367
    %v385 = vld [vmem:[%s11] sm:$0x1]
    %v387 = vlaneseq
    %v388 = vshrl.u32 %v387, 7
    %v389 = vsub.s32 0, %v388
    %v390 = vrot.slane %v385, %v389
    %v392 = vadd.f32 %v369, %v390
    %v393 = vadd.f32 %v370, %v390
    %v394 = vadd.f32 %v371, %v390
    %v395 = vadd.f32 %v372, %v390
    %v396 = vadd.f32 %v373, %v390
    %v397 = vadd.f32 %v374, %v390
    %v398 = vadd.f32 %v375, %v390
    %v399 = vadd.f32 %v376, %v390
    %v400 = vadd.f32 %v377, %v390
    %v401 = vadd.f32 %v378, %v390
    %v402 = vadd.f32 %v379, %v390
    %v403 = vadd.f32 %v380, %v390
    %v404 = vadd.f32 %v381, %v390
    %v405 = vadd.f32 %v382, %v390
    %v406 = vadd.f32 %v383, %v390
    %v407 = vadd.f32 %v384, %v390
    %v408 = vld [vmem:[%s21] sm:$0xf]
    %v409 = vld [vmem:[%s21 + $0x4] sm:$0xf]
    %v410 = vld [vmem:[%s21 + $0x8] sm:$0xf]
    %v411 = vld [vmem:[%s21 + $0xc] sm:$0xf]
    %v412 = vld [vmem:[%s21 + $0x10] sm:$0xf]
    %v413 = vld [vmem:[%s21 + $0x14] sm:$0xf]
    %v414 = vld [vmem:[%s21 + $0x18] sm:$0xf]
    %v415 = vld [vmem:[%s21 + $0x1c] sm:$0xf]
    %v416 = vld [vmem:[%s21 + $0x20] sm:$0xf]
    %v417 = vld [vmem:[%s21 + $0x24] sm:$0xf]
    %v418 = vld [vmem:[%s21 + $0x28] sm:$0xf]
    %v419 = vld [vmem:[%s21 + $0x2c] sm:$0xf]
    %v420 = vld [vmem:[%s21 + $0x30] sm:$0xf]
    %v421 = vld [vmem:[%s21 + $0x34] sm:$0xf]
    %v422 = vld [vmem:[%s21 + $0x38] sm:$0xf]
    %v423 = vld [vmem:[%s21 + $0x3c] sm:$0xf]
    %v424 = vpack.c.bf16 %v393, %v392
    %v425 = vpack.c.bf16 %v395, %v394
    %v426 = vpack.c.bf16 %v397, %v396
    %v427 = vpack.c.bf16 %v399, %v398
    %v428 = vpack.c.bf16 %v401, %v400
    %v429 = vpack.c.bf16 %v403, %v402
    %v430 = vpack.c.bf16 %v405, %v404
    %v431 = vpack.c.bf16 %v407, %v406
    %v448 = vunpack.c.l.b16 %v408
    %v449 = vunpack.c.l.b16 %v409
    %v450 = vunpack.c.l.b16 %v410
    %v451 = vunpack.c.l.b16 %v411
    %v452 = vunpack.c.l.b16 %v412
    %v453 = vunpack.c.l.b16 %v413
    %v454 = vunpack.c.l.b16 %v414
    %v455 = vunpack.c.l.b16 %v415
    %v456 = vunpack.c.l.b16 %v416
    %v457 = vunpack.c.l.b16 %v417
    %v458 = vunpack.c.l.b16 %v418
    %v459 = vunpack.c.l.b16 %v419
    %v460 = vunpack.c.l.b16 %v420
    %v461 = vunpack.c.l.b16 %v421
    %v462 = vunpack.c.l.b16 %v422
    %v463 = vunpack.c.l.b16 %v423
    %v464 = vpack.c.b16 %v449, %v448
    %v465 = vpack.c.b16 %v451, %v450
    %v466 = vpack.c.b16 %v453, %v452
    %v467 = vpack.c.b16 %v455, %v454
    %v468 = vpack.c.b16 %v457, %v456
    %v469 = vpack.c.b16 %v459, %v458
    %v470 = vpack.c.b16 %v461, %v460
    %v471 = vpack.c.b16 %v463, %v462
    %480 = vmatprep.subr.bf16.mxu0 0
    %481 = vmatpush1.bf16.msra.mxu0 %v464
    %482 = vmatprep.subr.bf16.mxu0 0
    %483 = vmatpush1.bf16.msra.mxu0 %v465
    %484 = vmatprep.subr.bf16.mxu0 0
    %485 = vmatpush1.bf16.msra.mxu0 %v466
    %486 = vmatprep.subr.bf16.mxu0 0
    %487 = vmatpush1.bf16.msra.mxu0 %v467
    %488 = vmatprep.subr.bf16.mxu0 0
    %489 = vmatpush1.bf16.msra.mxu0 %v468
    %490 = vmatprep.subr.bf16.mxu0 0
    %491 = vmatpush1.bf16.msra.mxu0 %v469
    %492 = vmatprep.subr.bf16.mxu0 0
    %493 = vmatpush1.bf16.msra.mxu0 %v470
    %494 = vmatprep.subr.bf16.mxu0 0
    %495 = vmatpush1.bf16.msra.mxu0 %v471
    %496 = vmatprep.subr.bf16.mxu0 0
    %497 = vmatpush1.bf16.msra.mxu0 0
    %498 = vmatprep.subr.bf16.mxu0 0
    %499 = vmatpush1.bf16.msra.mxu0 0
    %500 = vmatprep.subr.bf16.mxu0 0
    %501 = vmatpush1.bf16.msra.mxu0 0
    %502 = vmatprep.subr.bf16.mxu0 0
    %503 = vmatpush1.bf16.msra.mxu0 0
    %504 = vmatprep.subr.bf16.mxu0 0
    %505 = vmatpush1.bf16.msra.mxu0 0
    %506 = vmatprep.subr.bf16.mxu0 0
    %507 = vmatpush1.bf16.msra.mxu0 0
    %508 = vmatprep.subr.bf16.mxu0 0
    %509 = vmatpush1.bf16.msra.mxu0 0
    %510 = vmatprep.subr.bf16.mxu0 0
    %511 = vmatpush1.bf16.msra.mxu0 0
    %512 = vmatprep.mubr.bf16.mxu0 0
    %513 = vmatmul.mubr.bf16.gmra.mrb[0].mxu0 %v424
    %v514 = vpop.f32.mrb[0].mxu0
    %v515 = vadd.f32 0.0, %v514
    %v516 = vpop.f32.mrb[0].mxu0
    %v517 = vpop.f32.mrb[0].mxu0
    %v518 = vadd.f32 0.0, %v517
    %v519 = vpop.f32.mrb[0].mxu0
    %520 = vmatprep.mubr.bf16.mxu0 0
    %521 = vmatmul.mubr.bf16.gmra.mrb[0].mxu0 %v425
    %v522 = vpop.f32.mrb[0].mxu0
    %v523 = vadd.f32 0.0, %v522
    %v524 = vpop.f32.mrb[0].mxu0
    %v525 = vpop.f32.mrb[0].mxu0
    %v526 = vadd.f32 0.0, %v525
    %v527 = vpop.f32.mrb[0].mxu0
    %528 = vmatprep.mubr.bf16.mxu0 0
    %529 = vmatmul.mubr.bf16.gmra.mrb[0].mxu0 %v426
    %v530 = vpop.f32.mrb[0].mxu0
    %v531 = vadd.f32 0.0, %v530
    %v532 = vpop.f32.mrb[0].mxu0
    %v533 = vpop.f32.mrb[0].mxu0
    %v534 = vadd.f32 0.0, %v533
    %v535 = vpop.f32.mrb[0].mxu0
    %536 = vmatprep.mubr.bf16.mxu0 0
    %537 = vmatmul.mubr.bf16.gmra.mrb[0].mxu0 %v427
    %v538 = vpop.f32.mrb[0].mxu0
    %v539 = vadd.f32 0.0, %v538
    %v540 = vpop.f32.mrb[0].mxu0
    %v541 = vpop.f32.mrb[0].mxu0
    %v542 = vadd.f32 0.0, %v541
    %v543 = vpop.f32.mrb[0].mxu0
    %544 = vmatprep.mubr.bf16.mxu0 0
    %545 = vmatmul.mubr.bf16.gmra.mrb[0].mxu0 %v428
    %v546 = vpop.f32.mrb[0].mxu0
    %v547 = vadd.f32 0.0, %v546
    %v548 = vpop.f32.mrb[0].mxu0
    %v549 = vpop.f32.mrb[0].mxu0
    %v550 = vadd.f32 0.0, %v549
    %v551 = vpop.f32.mrb[0].mxu0
    %552 = vmatprep.mubr.bf16.mxu0 0
    %553 = vmatmul.mubr.bf16.gmra.mrb[0].mxu0 %v429
    %v554 = vpop.f32.mrb[0].mxu0
    %v555 = vadd.f32 0.0, %v554
    %v556 = vpop.f32.mrb[0].mxu0
    %v557 = vpop.f32.mrb[0].mxu0
    %v558 = vadd.f32 0.0, %v557
    %v559 = vpop.f32.mrb[0].mxu0
    %560 = vmatprep.mubr.bf16.mxu0 0
    %561 = vmatmul.mubr.bf16.gmra.mrb[0].mxu0 %v430
    %v562 = vpop.f32.mrb[0].mxu0
    %v563 = vadd.f32 0.0, %v562
    %v564 = vpop.f32.mrb[0].mxu0
    %v565 = vpop.f32.mrb[0].mxu0
    %v566 = vadd.f32 0.0, %v565
    %v567 = vpop.f32.mrb[0].mxu0
    %568 = vmatprep.mubr.bf16.mxu0 0
    %569 = vmatmul.mubr.bf16.gmra.mrb[0].mxu0 %v431
    %v570 = vpop.f32.mrb[0].mxu0
    %v571 = vadd.f32 0.0, %v570
    %v572 = vpop.f32.mrb[0].mxu0
    %v573 = vpop.f32.mrb[0].mxu0
    %v574 = vadd.f32 0.0, %v573
    %v575 = vpop.f32.mrb[0].mxu0
    %576 = vdwg.mxu0
    %v577 = vpack.c.bf16 %v518, %v515
    %v578 = vpack.c.bf16 %v526, %v523
    %v579 = vpack.c.bf16 %v534, %v531
    %v580 = vpack.c.bf16 %v542, %v539
    %v581 = vpack.c.bf16 %v550, %v547
    %v582 = vpack.c.bf16 %v558, %v555
    %v583 = vpack.c.bf16 %v566, %v563
    %v584 = vpack.c.bf16 %v574, %v571
    %585 = vmatprep.subr.bf16.mxu0 0
    %586 = vmatpush1.bf16.msra.mxu0 %v577
    %587 = vmatprep.subr.bf16.mxu0 0
    %588 = vmatpush1.bf16.msra.mxu0 %v578
    %589 = vmatprep.subr.bf16.mxu0 0
    %590 = vmatpush1.bf16.msra.mxu0 %v579
    %591 = vmatprep.subr.bf16.mxu0 0
    %592 = vmatpush1.bf16.msra.mxu0 %v580
    %593 = vmatprep.subr.bf16.mxu0 0
    %594 = vmatpush1.bf16.msra.mxu0 %v581
    %595 = vmatprep.subr.bf16.mxu0 0
    %596 = vmatpush1.bf16.msra.mxu0 %v582
    %597 = vmatprep.subr.bf16.mxu0 0
    %598 = vmatpush1.bf16.msra.mxu0 %v583
    %599 = vmatprep.subr.bf16.mxu0 0
    %600 = vmatpush1.bf16.msra.mxu0 %v584
    %601 = vmatprep.subr.bf16.mxu0 0
    %602 = vmatpush1.bf16.msra.mxu0 0
    %603 = vmatprep.subr.bf16.mxu0 0
    %604 = vmatpush1.bf16.msra.mxu0 0
    %605 = vmatprep.subr.bf16.mxu0 0
    %606 = vmatpush1.bf16.msra.mxu0 0
    %607 = vmatprep.subr.bf16.mxu0 0
    %608 = vmatpush1.bf16.msra.mxu0 0
    %609 = vmatprep.subr.bf16.mxu0 0
    %610 = vmatpush1.bf16.msra.mxu0 0
    %611 = vmatprep.subr.bf16.mxu0 0
    %612 = vmatpush1.bf16.msra.mxu0 0
    %613 = vmatprep.subr.bf16.mxu0 0
    %614 = vmatpush1.bf16.msra.mxu0 0
    %615 = vmatprep.subr.bf16.mxu0 0
    %616 = vmatpush1.bf16.msra.mxu0 0
    %617 = vmatprep.mubr.bf16.mxu0 0
    %618 = vmatmul.mubr.bf16.gmra.mrb[0].mxu0 %v169
    %v619 = vpop.f32.mrb[0].mxu0
    %v620 = vadd.f32 0.0, %v619
    %v621 = vpop.f32.mrb[0].mxu0
    %v622 = vpop.f32.mrb[0].mxu0
    %v623 = vadd.f32 0.0, %v622
    %v624 = vpop.f32.mrb[0].mxu0
    %625 = vmatprep.mubr.bf16.mxu0 0
    %626 = vmatmul.mubr.bf16.gmra.mrb[0].mxu0 %v170
    %v627 = vpop.f32.mrb[0].mxu0
    %v628 = vadd.f32 0.0, %v627
    %v629 = vpop.f32.mrb[0].mxu0
    %v630 = vpop.f32.mrb[0].mxu0
    %v631 = vadd.f32 0.0, %v630
    %v632 = vpop.f32.mrb[0].mxu0
    %633 = vmatprep.mubr.bf16.mxu0 0
    %634 = vmatmul.mubr.bf16.gmra.mrb[0].mxu0 %v171
    %v635 = vpop.f32.mrb[0].mxu0
    %v636 = vadd.f32 0.0, %v635
    %v637 = vpop.f32.mrb[0].mxu0
    %v638 = vpop.f32.mrb[0].mxu0
    %v639 = vadd.f32 0.0, %v638
    %v640 = vpop.f32.mrb[0].mxu0
    %641 = vmatprep.mubr.bf16.mxu0 0
    %642 = vmatmul.mubr.bf16.gmra.mrb[0].mxu0 %v172
    %v643 = vpop.f32.mrb[0].mxu0
    %v644 = vadd.f32 0.0, %v643
    %v645 = vpop.f32.mrb[0].mxu0
    %v646 = vpop.f32.mrb[0].mxu0
    %v647 = vadd.f32 0.0, %v646
    %v648 = vpop.f32.mrb[0].mxu0
    %649 = vmatprep.mubr.bf16.mxu0 0
    %650 = vmatmul.mubr.bf16.gmra.mrb[0].mxu0 %v173
    %v651 = vpop.f32.mrb[0].mxu0
    %v652 = vadd.f32 0.0, %v651
    %v653 = vpop.f32.mrb[0].mxu0
    %v654 = vpop.f32.mrb[0].mxu0
    %v655 = vadd.f32 0.0, %v654
    %v656 = vpop.f32.mrb[0].mxu0
    %657 = vmatprep.mubr.bf16.mxu0 0
    %658 = vmatmul.mubr.bf16.gmra.mrb[0].mxu0 %v174
    %v659 = vpop.f32.mrb[0].mxu0
    %v660 = vadd.f32 0.0, %v659
    %v661 = vpop.f32.mrb[0].mxu0
    %v662 = vpop.f32.mrb[0].mxu0
    %v663 = vadd.f32 0.0, %v662
    %v664 = vpop.f32.mrb[0].mxu0
    %665 = vmatprep.mubr.bf16.mxu0 0
    %666 = vmatmul.mubr.bf16.gmra.mrb[0].mxu0 %v175
    %v667 = vpop.f32.mrb[0].mxu0
    %v668 = vadd.f32 0.0, %v667
    %v669 = vpop.f32.mrb[0].mxu0
    %v670 = vpop.f32.mrb[0].mxu0
    %v671 = vadd.f32 0.0, %v670
    %v672 = vpop.f32.mrb[0].mxu0
    %673 = vmatprep.mubr.bf16.mxu0 0
    %674 = vmatmul.mubr.bf16.gmra.mrb[0].mxu0 %v176
    %v675 = vpop.f32.mrb[0].mxu0
    %v676 = vadd.f32 0.0, %v675
    %v677 = vpop.f32.mrb[0].mxu0
    %v678 = vpop.f32.mrb[0].mxu0
    %v679 = vadd.f32 0.0, %v678
    %v680 = vpop.f32.mrb[0].mxu0
    %681 = vdwg.mxu0
    %v682 = vtanh.pop %v620
    %v683 = vtanh.pop %v623
    %v684 = vtanh.pop %v628
    %v685 = vtanh.pop %v631
    %v686 = vtanh.pop %v636
    %v687 = vtanh.pop %v639
    %v688 = vtanh.pop %v644
    %v689 = vtanh.pop %v647
    %v690 = vtanh.pop %v652
    %v691 = vtanh.pop %v655
    %v692 = vtanh.pop %v660
    %v693 = vtanh.pop %v663
    %v694 = vtanh.pop %v668
    %v695 = vtanh.pop %v671
    %v696 = vtanh.pop %v676
    %v697 = vtanh.pop %v679
    %v698 = vld [vmem:[%s23] sm:$0xf]
    %v699 = vld [vmem:[%s23 + $0x4] sm:$0xf]
    %v700 = vld [vmem:[%s23 + $0x8] sm:$0xf]
    %v701 = vld [vmem:[%s23 + $0xc] sm:$0xf]
    %v702 = vld [vmem:[%s23 + $0x10] sm:$0xf]
    %v703 = vld [vmem:[%s23 + $0x14] sm:$0xf]
    %v704 = vld [vmem:[%s23 + $0x18] sm:$0xf]
    %v705 = vld [vmem:[%s23 + $0x1c] sm:$0xf]
    %v706 = vpack.c.bf16 %v683, %v682
    %v707 = vpack.c.bf16 %v685, %v684
    %v708 = vpack.c.bf16 %v687, %v686
    %v709 = vpack.c.bf16 %v689, %v688
    %v710 = vpack.c.bf16 %v691, %v690
    %v711 = vpack.c.bf16 %v693, %v692
    %v712 = vpack.c.bf16 %v695, %v694
    %v713 = vpack.c.bf16 %v697, %v696
    %v722 = vunpack.c.l.b16 %v698
    %v723 = vunpack.c.l.b16 %v699
    %v724 = vunpack.c.l.b16 %v700
    %v725 = vunpack.c.l.b16 %v701
    %v726 = vunpack.c.l.b16 %v702
    %v727 = vunpack.c.l.b16 %v703
    %v728 = vunpack.c.l.b16 %v704
    %v729 = vunpack.c.l.b16 %v705
    %v730 = vpack.c.b16 %v723, %v722
    %v731 = vpack.c.b16 %v725, %v724
    %v732 = vpack.c.b16 %v727, %v726
    %v733 = vpack.c.b16 %v729, %v728
    %v739 = vsel %vm224, %v706, 0
    %v742 = vsel %vm224, %v707, 0
    %v745 = vsel %vm224, %v708, 0
    %v748 = vsel %vm224, %v709, 0
    %v751 = vsel %vm224, %v710, 0
    %v754 = vsel %vm224, %v711, 0
    %v757 = vsel %vm224, %v712, 0
    %v760 = vsel %vm224, %v713, 0
    %762 = vmatprep.subr.bf16.mxu0 0
    %763 = vmatpush1.bf16.msra.mxu0 %v730
    %764 = vmatprep.subr.bf16.mxu0 0
    %765 = vmatpush1.bf16.msra.mxu0 %v731
    %766 = vmatprep.subr.bf16.mxu0 0
    %767 = vmatpush1.bf16.msra.mxu0 %v732
    %768 = vmatprep.subr.bf16.mxu0 0
    %769 = vmatpush1.bf16.msra.mxu0 %v733
    %770 = vmatprep.subr.bf16.mxu0 0
    %771 = vmatpush1.bf16.msra.mxu0 0
    %772 = vmatprep.subr.bf16.mxu0 0
    %773 = vmatpush1.bf16.msra.mxu0 0
    %774 = vmatprep.subr.bf16.mxu0 0
    %775 = vmatpush1.bf16.msra.mxu0 0
    %776 = vmatprep.subr.bf16.mxu0 0
    %777 = vmatpush1.bf16.msra.mxu0 0
    %778 = vmatprep.subr.bf16.mxu0 0
    %779 = vmatpush1.bf16.msra.mxu0 0
    %780 = vmatprep.subr.bf16.mxu0 0
    %781 = vmatpush1.bf16.msra.mxu0 0
    %782 = vmatprep.subr.bf16.mxu0 0
    %783 = vmatpush1.bf16.msra.mxu0 0
    %784 = vmatprep.subr.bf16.mxu0 0
    %785 = vmatpush1.bf16.msra.mxu0 0
    %786 = vmatprep.subr.bf16.mxu0 0
    %787 = vmatpush1.bf16.msra.mxu0 0
    %788 = vmatprep.subr.bf16.mxu0 0
    %789 = vmatpush1.bf16.msra.mxu0 0
    %790 = vmatprep.subr.bf16.mxu0 0
    %791 = vmatpush1.bf16.msra.mxu0 0
    %792 = vmatprep.subr.bf16.mxu0 0
    %793 = vmatpush1.bf16.msra.mxu0 0
    %794 = vmatprep.mubr.bf16.mxu0 0
    %795 = vmatmul.mubr.bf16.gmra.mrb[0].mxu0 %v739
    %v796 = vpop.f32.mrb[0].mxu0
    %v797 = vadd.f32 0.0, %v796
    %v798 = vpop.f32.mrb[0].mxu0
    %v799 = vpop.f32.mrb[0].mxu0
    %v800 = vadd.f32 0.0, %v799
    %v801 = vpop.f32.mrb[0].mxu0
    %802 = vmatprep.mubr.bf16.mxu0 0
    %803 = vmatmul.mubr.bf16.gmra.mrb[0].mxu0 %v742
    %v804 = vpop.f32.mrb[0].mxu0
    %v805 = vadd.f32 0.0, %v804
    %v806 = vpop.f32.mrb[0].mxu0
    %v807 = vpop.f32.mrb[0].mxu0
    %v808 = vadd.f32 0.0, %v807
    %v809 = vpop.f32.mrb[0].mxu0
    %810 = vmatprep.mubr.bf16.mxu0 0
    %811 = vmatmul.mubr.bf16.gmra.mrb[0].mxu0 %v745
    %v812 = vpop.f32.mrb[0].mxu0
    %v813 = vadd.f32 0.0, %v812
    %v814 = vpop.f32.mrb[0].mxu0
    %v815 = vpop.f32.mrb[0].mxu0
    %v816 = vadd.f32 0.0, %v815
    %v817 = vpop.f32.mrb[0].mxu0
    %818 = vmatprep.mubr.bf16.mxu0 0
    %819 = vmatmul.mubr.bf16.gmra.mrb[0].mxu0 %v748
    %v820 = vpop.f32.mrb[0].mxu0
    %v821 = vadd.f32 0.0, %v820
    %v822 = vpop.f32.mrb[0].mxu0
    %v823 = vpop.f32.mrb[0].mxu0
    %v824 = vadd.f32 0.0, %v823
    %v825 = vpop.f32.mrb[0].mxu0
    %826 = vmatprep.mubr.bf16.mxu0 0
    %827 = vmatmul.mubr.bf16.gmra.mrb[0].mxu0 %v751
    %v828 = vpop.f32.mrb[0].mxu0
    %v829 = vadd.f32 0.0, %v828
    %v830 = vpop.f32.mrb[0].mxu0
    %v831 = vpop.f32.mrb[0].mxu0
    %v832 = vadd.f32 0.0, %v831
    %v833 = vpop.f32.mrb[0].mxu0
    %834 = vmatprep.mubr.bf16.mxu0 0
    %835 = vmatmul.mubr.bf16.gmra.mrb[0].mxu0 %v754
    %v836 = vpop.f32.mrb[0].mxu0
    %v837 = vadd.f32 0.0, %v836
    %v838 = vpop.f32.mrb[0].mxu0
    %v839 = vpop.f32.mrb[0].mxu0
    %v840 = vadd.f32 0.0, %v839
    %v841 = vpop.f32.mrb[0].mxu0
    %842 = vmatprep.mubr.bf16.mxu0 0
    %843 = vmatmul.mubr.bf16.gmra.mrb[0].mxu0 %v757
    %v844 = vpop.f32.mrb[0].mxu0
    %v845 = vadd.f32 0.0, %v844
    %v846 = vpop.f32.mrb[0].mxu0
    %v847 = vpop.f32.mrb[0].mxu0
    %v848 = vadd.f32 0.0, %v847
    %v849 = vpop.f32.mrb[0].mxu0
    %850 = vmatprep.mubr.bf16.mxu0 0
    %851 = vmatmul.mubr.bf16.gmra.mrb[0].mxu0 %v760
    %v852 = vpop.f32.mrb[0].mxu0
    %v853 = vadd.f32 0.0, %v852
    %v854 = vpop.f32.mrb[0].mxu0
    %v855 = vpop.f32.mrb[0].mxu0
    %v856 = vadd.f32 0.0, %v855
    %v857 = vpop.f32.mrb[0].mxu0
    %858 = vdwg.mxu0
    %v859 = vpack.c.bf16 %v800, %v797
    %v860 = vpack.c.bf16 %v808, %v805
    %v861 = vpack.c.bf16 %v816, %v813
    %v862 = vpack.c.bf16 %v824, %v821
    %v863 = vpack.c.bf16 %v832, %v829
    %v864 = vpack.c.bf16 %v840, %v837
    %v865 = vpack.c.bf16 %v848, %v845
    %v866 = vpack.c.bf16 %v856, %v853
    %867 = vmatprep.subr.bf16.mxu0 0
    %868 = vmatpush1.bf16.msra.mxu0 %v859
    %869 = vmatprep.subr.bf16.mxu0 0
    %870 = vmatpush1.bf16.msra.mxu0 %v860
    %871 = vmatprep.subr.bf16.mxu0 0
    %872 = vmatpush1.bf16.msra.mxu0 %v861
    %873 = vmatprep.subr.bf16.mxu0 0
    %874 = vmatpush1.bf16.msra.mxu0 %v862
    %875 = vmatprep.subr.bf16.mxu0 0
    %876 = vmatpush1.bf16.msra.mxu0 %v863
    %877 = vmatprep.subr.bf16.mxu0 0
    %878 = vmatpush1.bf16.msra.mxu0 %v864
    %879 = vmatprep.subr.bf16.mxu0 0
    %880 = vmatpush1.bf16.msra.mxu0 %v865
    %881 = vmatprep.subr.bf16.mxu0 0
    %882 = vmatpush1.bf16.msra.mxu0 %v866
    %883 = vmatprep.subr.bf16.mxu0 0
    %884 = vmatpush1.bf16.msra.mxu0 0
    %885 = vmatprep.subr.bf16.mxu0 0
    %886 = vmatpush1.bf16.msra.mxu0 0
    %887 = vmatprep.subr.bf16.mxu0 0
    %888 = vmatpush1.bf16.msra.mxu0 0
    %889 = vmatprep.subr.bf16.mxu0 0
    %890 = vmatpush1.bf16.msra.mxu0 0
    %891 = vmatprep.subr.bf16.mxu0 0
    %892 = vmatpush1.bf16.msra.mxu0 0
    %893 = vmatprep.subr.bf16.mxu0 0
    %894 = vmatpush1.bf16.msra.mxu0 0
    %895 = vmatprep.subr.bf16.mxu0 0
    %896 = vmatpush1.bf16.msra.mxu0 0
    %897 = vmatprep.subr.bf16.mxu0 0
    %898 = vmatpush1.bf16.msra.mxu0 0
    %899 = vmatprep.mubr.bf16.mxu0 0
    %900 = vmatmul.mubr.bf16.gmra.mrb[0].mxu0 %v169
    %v901 = vpop.f32.mrb[0].mxu0
    %v902 = vadd.f32 0.0, %v901
    %v903 = vpop.f32.mrb[0].mxu0
    %v904 = vpop.f32.mrb[0].mxu0
    %v905 = vadd.f32 0.0, %v904
    %v906 = vpop.f32.mrb[0].mxu0
    %907 = vmatprep.mubr.bf16.mxu0 0
    %908 = vmatmul.mubr.bf16.gmra.mrb[0].mxu0 %v170
    %v909 = vpop.f32.mrb[0].mxu0
    %v910 = vadd.f32 0.0, %v909
    %v911 = vpop.f32.mrb[0].mxu0
    %v912 = vpop.f32.mrb[0].mxu0
    %v913 = vadd.f32 0.0, %v912
    %v914 = vpop.f32.mrb[0].mxu0
    %915 = vmatprep.mubr.bf16.mxu0 0
    %916 = vmatmul.mubr.bf16.gmra.mrb[0].mxu0 %v171
    %v917 = vpop.f32.mrb[0].mxu0
    %v918 = vadd.f32 0.0, %v917
    %v919 = vpop.f32.mrb[0].mxu0
    %v920 = vpop.f32.mrb[0].mxu0
    %v921 = vadd.f32 0.0, %v920
    %v922 = vpop.f32.mrb[0].mxu0
    %923 = vmatprep.mubr.bf16.mxu0 0
    %924 = vmatmul.mubr.bf16.gmra.mrb[0].mxu0 %v172
    %v925 = vpop.f32.mrb[0].mxu0
    %v926 = vadd.f32 0.0, %v925
    %v927 = vpop.f32.mrb[0].mxu0
    %v928 = vpop.f32.mrb[0].mxu0
    %v929 = vadd.f32 0.0, %v928
    %v930 = vpop.f32.mrb[0].mxu0
    %931 = vmatprep.mubr.bf16.mxu0 0
    %932 = vmatmul.mubr.bf16.gmra.mrb[0].mxu0 %v173
    %v933 = vpop.f32.mrb[0].mxu0
    %v934 = vadd.f32 0.0, %v933
    %v935 = vpop.f32.mrb[0].mxu0
    %v936 = vpop.f32.mrb[0].mxu0
    %v937 = vadd.f32 0.0, %v936
    %v938 = vpop.f32.mrb[0].mxu0
    %939 = vmatprep.mubr.bf16.mxu0 0
    %940 = vmatmul.mubr.bf16.gmra.mrb[0].mxu0 %v174
    %v941 = vpop.f32.mrb[0].mxu0
    %v942 = vadd.f32 0.0, %v941
    %v943 = vpop.f32.mrb[0].mxu0
    %v944 = vpop.f32.mrb[0].mxu0
    %v945 = vadd.f32 0.0, %v944
    %v946 = vpop.f32.mrb[0].mxu0
    %947 = vmatprep.mubr.bf16.mxu0 0
    %948 = vmatmul.mubr.bf16.gmra.mrb[0].mxu0 %v175
    %v949 = vpop.f32.mrb[0].mxu0
    %v950 = vadd.f32 0.0, %v949
    %v951 = vpop.f32.mrb[0].mxu0
    %v952 = vpop.f32.mrb[0].mxu0
    %v953 = vadd.f32 0.0, %v952
    %v954 = vpop.f32.mrb[0].mxu0
    %955 = vmatprep.mubr.bf16.mxu0 0
    %956 = vmatmul.mubr.bf16.gmra.mrb[0].mxu0 %v176
    %v957 = vpop.f32.mrb[0].mxu0
    %v958 = vadd.f32 0.0, %v957
    %v959 = vpop.f32.mrb[0].mxu0
    %v960 = vpop.f32.mrb[0].mxu0
    %v961 = vadd.f32 0.0, %v960
    %v962 = vpop.f32.mrb[0].mxu0
    %963 = vdwg.mxu0
    %v964 = vtanh.pop %v902
    %v965 = vtanh.pop %v905
    %v966 = vtanh.pop %v910
    %v967 = vtanh.pop %v913
    %v968 = vtanh.pop %v918
    %v969 = vtanh.pop %v921
    %v970 = vtanh.pop %v926
    %v971 = vtanh.pop %v929
    %v972 = vtanh.pop %v934
    %v973 = vtanh.pop %v937
    %v974 = vtanh.pop %v942
    %v975 = vtanh.pop %v945
    %v976 = vtanh.pop %v950
    %v977 = vtanh.pop %v953
    %v978 = vtanh.pop %v958
    %v979 = vtanh.pop %v961
    %v980 = vpack.c.bf16 %v965, %v964
    %v981 = vpack.c.bf16 %v967, %v966
    %v982 = vpack.c.bf16 %v969, %v968
    %v983 = vpack.c.bf16 %v971, %v970
    %v984 = vpack.c.bf16 %v973, %v972
    %v985 = vpack.c.bf16 %v975, %v974
    %v986 = vpack.c.bf16 %v977, %v976
    %v987 = vpack.c.bf16 %v979, %v978
    %vm988 = vcmask 261120
    %v990 = vsel %vm988, %v980, 0
    %v993 = vsel %vm988, %v981, 0
    %v996 = vsel %vm988, %v982, 0
    %v999 = vsel %vm988, %v983, 0
    %v1002 = vsel %vm988, %v984, 0
    %v1005 = vsel %vm988, %v985, 0
    %v1008 = vsel %vm988, %v986, 0
    %v1011 = vsel %vm988, %v987, 0
    %1013 = vmatprep.subr.bf16.mxu0 0
    %1014 = vmatpush1.bf16.xpose.msra.mxu0 %v990
    %1015 = vmatprep.subr.bf16.mxu0 0
    %1016 = vmatpush1.bf16.xpose.msra.mxu0 %v993
    %1017 = vmatprep.subr.bf16.mxu0 0
    %1018 = vmatpush1.bf16.xpose.msra.mxu0 %v996
    %1019 = vmatprep.subr.bf16.mxu0 0
    %1020 = vmatpush1.bf16.xpose.msra.mxu0 %v999
    %1021 = vmatprep.subr.bf16.mxu0 0
    %1022 = vmatpush1.bf16.xpose.msra.mxu0 %v1002
    %1023 = vmatprep.subr.bf16.mxu0 0
    %1024 = vmatpush1.bf16.xpose.msra.mxu0 %v1005
    %1025 = vmatprep.subr.bf16.mxu0 0
    %1026 = vmatpush1.bf16.xpose.msra.mxu0 %v1008
    %1027 = vmatprep.subr.bf16.mxu0 0
    %1028 = vmatpush1.bf16.xpose.msra.mxu0 %v1011
    %1029 = vmatprep.subr.bf16.mxu0 0
    %1030 = vmatpush1.bf16.xpose.msra.mxu0 0
    %1031 = vmatprep.subr.bf16.mxu0 0
    %1032 = vmatpush1.bf16.xpose.msra.mxu0 0
    %1033 = vmatprep.subr.bf16.mxu0 0
    %1034 = vmatpush1.bf16.xpose.msra.mxu0 0
    %1035 = vmatprep.subr.bf16.mxu0 0
    %1036 = vmatpush1.bf16.xpose.msra.mxu0 0
    %1037 = vmatprep.subr.bf16.mxu0 0
    %1038 = vmatpush1.bf16.xpose.msra.mxu0 0
    %1039 = vmatprep.subr.bf16.mxu0 0
    %1040 = vmatpush1.bf16.xpose.msra.mxu0 0
    %1041 = vmatprep.subr.bf16.mxu0 0
    %1042 = vmatpush1.bf16.xpose.msra.mxu0 0
    %1043 = vmatprep.subr.bf16.mxu0 0
    %1044 = vmatpush1.bf16.xpose.msra.mxu0 0
    %1045 = vmatprep.mubr.bf16.mxu0 0
    %1046 = vmatmul.mubr.bf16.gmra.mrb[0].mxu0 %v990
    %v1047 = vpop.f32.mrb[0].mxu0
    %v1048 = vadd.f32 0.0, %v1047
    %v1049 = vpop.f32.mrb[0].mxu0
    %v1050 = vpop.f32.mrb[0].mxu0
    %v1051 = vadd.f32 0.0, %v1050
    %v1052 = vpop.f32.mrb[0].mxu0
    %1053 = vmatprep.mubr.bf16.mxu0 0
    %1054 = vmatmul.mubr.bf16.gmra.mrb[0].mxu0 %v993
    %v1055 = vpop.f32.mrb[0].mxu0
    %v1056 = vadd.f32 0.0, %v1055
    %v1057 = vpop.f32.mrb[0].mxu0
    %v1058 = vpop.f32.mrb[0].mxu0
    %v1059 = vadd.f32 0.0, %v1058
    %v1060 = vpop.f32.mrb[0].mxu0
    %1061 = vmatprep.mubr.bf16.mxu0 0
    %1062 = vmatmul.mubr.bf16.gmra.mrb[0].mxu0 %v996
    %v1063 = vpop.f32.mrb[0].mxu0
    %v1064 = vadd.f32 0.0, %v1063
    %v1065 = vpop.f32.mrb[0].mxu0
    %v1066 = vpop.f32.mrb[0].mxu0
    %v1067 = vadd.f32 0.0, %v1066
    %v1068 = vpop.f32.mrb[0].mxu0
    %1069 = vmatprep.mubr.bf16.mxu0 0
    %1070 = vmatmul.mubr.bf16.gmra.mrb[0].mxu0 %v999
    %v1071 = vpop.f32.mrb[0].mxu0
    %v1072 = vadd.f32 0.0, %v1071
    %v1073 = vpop.f32.mrb[0].mxu0
    %v1074 = vpop.f32.mrb[0].mxu0
    %v1075 = vadd.f32 0.0, %v1074
    %v1076 = vpop.f32.mrb[0].mxu0
    %1077 = vmatprep.mubr.bf16.mxu0 0
    %1078 = vmatmul.mubr.bf16.gmra.mrb[0].mxu0 %v1002
    %v1079 = vpop.f32.mrb[0].mxu0
    %v1080 = vadd.f32 0.0, %v1079
    %v1081 = vpop.f32.mrb[0].mxu0
    %v1082 = vpop.f32.mrb[0].mxu0
    %v1083 = vadd.f32 0.0, %v1082
    %v1084 = vpop.f32.mrb[0].mxu0
    %1085 = vmatprep.mubr.bf16.mxu0 0
    %1086 = vmatmul.mubr.bf16.gmra.mrb[0].mxu0 %v1005
    %v1087 = vpop.f32.mrb[0].mxu0
    %v1088 = vadd.f32 0.0, %v1087
    %v1089 = vpop.f32.mrb[0].mxu0
    %v1090 = vpop.f32.mrb[0].mxu0
    %v1091 = vadd.f32 0.0, %v1090
    %v1092 = vpop.f32.mrb[0].mxu0
    %1093 = vmatprep.mubr.bf16.mxu0 0
    %1094 = vmatmul.mubr.bf16.gmra.mrb[0].mxu0 %v1008
    %v1095 = vpop.f32.mrb[0].mxu0
    %v1096 = vadd.f32 0.0, %v1095
    %v1097 = vpop.f32.mrb[0].mxu0
    %v1098 = vpop.f32.mrb[0].mxu0
    %v1099 = vadd.f32 0.0, %v1098
    %v1100 = vpop.f32.mrb[0].mxu0
    %1101 = vmatprep.mubr.bf16.mxu0 0
    %1102 = vmatmul.mubr.bf16.gmra.mrb[0].mxu0 %v1011
    %v1103 = vpop.f32.mrb[0].mxu0
    %v1104 = vadd.f32 0.0, %v1103
    %v1105 = vpop.f32.mrb[0].mxu0
    %v1106 = vpop.f32.mrb[0].mxu0
    %v1107 = vadd.f32 0.0, %v1106
    %v1108 = vpop.f32.mrb[0].mxu0
    %1109 = vdwg.mxu0
    %v1110 = vsub.f32 0.0, %v1048
    %v1111 = vsub.f32 0.0, %v1051
    %v1112 = vsub.f32 0.0, %v1056
    %v1113 = vsub.f32 0.0, %v1059
    %v1114 = vsub.f32 0.0, %v1064
    %v1115 = vsub.f32 0.0, %v1067
    %v1116 = vsub.f32 0.0, %v1072
    %v1117 = vsub.f32 0.0, %v1075
    %v1118 = vsub.f32 0.0, %v1080
    %v1119 = vsub.f32 0.0, %v1083
    %v1120 = vsub.f32 0.0, %v1088
    %v1121 = vsub.f32 0.0, %v1091
    %v1122 = vsub.f32 0.0, %v1096
    %v1123 = vsub.f32 0.0, %v1099
    %v1124 = vsub.f32 0.0, %v1104
    %v1125 = vsub.f32 0.0, %v1107
    %v1126 = vmul.f32 %v1110, 1.442695
    %v1127 = vpow.pop %v1126
    %v1128 = vmul.f32 %v1111, 1.442695
    %v1129 = vpow.pop %v1128
    %v1130 = vmul.f32 %v1112, 1.442695
    %v1131 = vpow.pop %v1130
    %v1132 = vmul.f32 %v1113, 1.442695
    %v1133 = vpow.pop %v1132
    %v1134 = vmul.f32 %v1114, 1.442695
    %v1135 = vpow.pop %v1134
    %v1136 = vmul.f32 %v1115, 1.442695
    %v1137 = vpow.pop %v1136
    %v1138 = vmul.f32 %v1116, 1.442695
    %v1139 = vpow.pop %v1138
    %v1140 = vmul.f32 %v1117, 1.442695
    %v1141 = vpow.pop %v1140
    %v1142 = vmul.f32 %v1118, 1.442695
    %v1143 = vpow.pop %v1142
    %v1144 = vmul.f32 %v1119, 1.442695
    %v1145 = vpow.pop %v1144
    %v1146 = vmul.f32 %v1120, 1.442695
    %v1147 = vpow.pop %v1146
    %v1148 = vmul.f32 %v1121, 1.442695
    %v1149 = vpow.pop %v1148
    %v1150 = vmul.f32 %v1122, 1.442695
    %v1151 = vpow.pop %v1150
    %v1152 = vmul.f32 %v1123, 1.442695
    %v1153 = vpow.pop %v1152
    %v1154 = vmul.f32 %v1124, 1.442695
    %v1155 = vpow.pop %v1154
    %v1156 = vmul.f32 %v1125, 1.442695
    %v1157 = vpow.pop %v1156
    %v1158 = vadd.f32 %v1127, 1.0
    %v1159 = vadd.f32 %v1129, 1.0
    %v1160 = vadd.f32 %v1131, 1.0
    %v1161 = vadd.f32 %v1133, 1.0
    %v1162 = vadd.f32 %v1135, 1.0
    %v1163 = vadd.f32 %v1137, 1.0
    %v1164 = vadd.f32 %v1139, 1.0
    %v1165 = vadd.f32 %v1141, 1.0
    %v1166 = vadd.f32 %v1143, 1.0
    %v1167 = vadd.f32 %v1145, 1.0
    %v1168 = vadd.f32 %v1147, 1.0
    %v1169 = vadd.f32 %v1149, 1.0
    %v1170 = vadd.f32 %v1151, 1.0
    %v1171 = vadd.f32 %v1153, 1.0
    %v1172 = vadd.f32 %v1155, 1.0
    %v1173 = vadd.f32 %v1157, 1.0
    %v1174 = vrcp.pop %v1158
    %v1175 = vrcp.pop %v1159
    %v1176 = vrcp.pop %v1160
    %v1177 = vrcp.pop %v1161
    %v1178 = vrcp.pop %v1162
    %v1179 = vrcp.pop %v1163
    %v1180 = vrcp.pop %v1164
    %v1181 = vrcp.pop %v1165
    %v1182 = vrcp.pop %v1166
    %v1183 = vrcp.pop %v1167
    %v1184 = vrcp.pop %v1168
    %v1185 = vrcp.pop %v1169
    %v1186 = vrcp.pop %v1170
    %v1187 = vrcp.pop %v1171
    %v1188 = vrcp.pop %v1172
    %v1189 = vrcp.pop %v1173
    %1190 = vst [vmem:[#allocation2] sm:$0xff] %v1174
    %1191 = vst [vmem:[#allocation2 + $0x8] sm:$0xff] %v1175
    %1192 = vst [vmem:[#allocation2 + $0x10] sm:$0xff] %v1176
    %1193 = vst [vmem:[#allocation2 + $0x18] sm:$0xff] %v1177
    %1194 = vst [vmem:[#allocation2 + $0x20] sm:$0xff] %v1178
    %1195 = vst [vmem:[#allocation2 + $0x28] sm:$0xff] %v1179
    %1196 = vst [vmem:[#allocation2 + $0x30] sm:$0xff] %v1180
    %1197 = vst [vmem:[#allocation2 + $0x38] sm:$0xff] %v1181
    %1198 = vst [vmem:[#allocation2 + $0x40] sm:$0xff] %v1182
    %1199 = vst [vmem:[#allocation2 + $0x48] sm:$0xff] %v1183
    %1200 = vst [vmem:[#allocation2 + $0x50] sm:$0xff] %v1184
    %1201 = vst [vmem:[#allocation2 + $0x58] sm:$0xff] %v1185
    %1202 = vst [vmem:[#allocation2 + $0x60] sm:$0xff] %v1186
    %1203 = vst [vmem:[#allocation2 + $0x68] sm:$0xff] %v1187
    %1204 = vst [vmem:[#allocation2 + $0x70] sm:$0xff] %v1188
    %1205 = vst [vmem:[#allocation2 + $0x78] sm:$0xff] %v1189
    %v1206 = vld [vmem:[%s13] sm:$0xf]
    %v1207 = vld [vmem:[%s13 + $0x4] sm:$0xf]
    %v1208 = vld [vmem:[%s13 + $0x8] sm:$0xf]
    %v1209 = vld [vmem:[%s13 + $0xc] sm:$0xf]
    %v1210 = vld [vmem:[%s13 + $0x10] sm:$0xf]
    %v1211 = vld [vmem:[%s13 + $0x14] sm:$0xf]
    %v1212 = vld [vmem:[%s13 + $0x18] sm:$0xf]
    %v1213 = vld [vmem:[%s13 + $0x1c] sm:$0xf]
    %v1214 = vld [vmem:[%s13 + $0x20] sm:$0xf]
    %v1215 = vld [vmem:[%s13 + $0x24] sm:$0xf]
    %v1216 = vld [vmem:[%s13 + $0x28] sm:$0xf]
    %v1217 = vld [vmem:[%s13 + $0x2c] sm:$0xf]
    %v1218 = vld [vmem:[%s13 + $0x30] sm:$0xf]
    %v1219 = vld [vmem:[%s13 + $0x34] sm:$0xf]
    %v1220 = vld [vmem:[%s13 + $0x38] sm:$0xf]
    %v1221 = vld [vmem:[%s13 + $0x3c] sm:$0xf]
    %v1222 = vld [vmem:[%s15] sm:$0x1]
    %v1224 = vlaneseq
    %v1225 = vshrl.u32 %v1224, 7
    %v1226 = vsub.s32 0, %v1225
    %v1227 = vrot.slane %v1222, %v1226
    %v1245 = vunpack.c.l.b16 %v1206
    %v1246 = vunpack.c.l.b16 %v1207
    %v1247 = vunpack.c.l.b16 %v1208
    %v1248 = vunpack.c.l.b16 %v1209
    %v1249 = vunpack.c.l.b16 %v1210
    %v1250 = vunpack.c.l.b16 %v1211
    %v1251 = vunpack.c.l.b16 %v1212
    %v1252 = vunpack.c.l.b16 %v1213
    %v1253 = vunpack.c.l.b16 %v1214
    %v1254 = vunpack.c.l.b16 %v1215
    %v1255 = vunpack.c.l.b16 %v1216
    %v1256 = vunpack.c.l.b16 %v1217
    %v1257 = vunpack.c.l.b16 %v1218
    %v1258 = vunpack.c.l.b16 %v1219
    %v1259 = vunpack.c.l.b16 %v1220
    %v1260 = vunpack.c.l.b16 %v1221
    %v1261 = vpack.c.b16 %v1246, %v1245
    %v1262 = vpack.c.b16 %v1248, %v1247
    %v1263 = vpack.c.b16 %v1250, %v1249
    %v1264 = vpack.c.b16 %v1252, %v1251
    %v1265 = vpack.c.b16 %v1254, %v1253
    %v1266 = vpack.c.b16 %v1256, %v1255
    %v1267 = vpack.c.b16 %v1258, %v1257
    %v1268 = vpack.c.b16 %v1260, %v1259
    %1277 = vmatprep.subr.bf16.mxu0 0
    %1278 = vmatpush1.bf16.msra.mxu0 %v1261
    %1279 = vmatprep.subr.bf16.mxu0 0
    %1280 = vmatpush1.bf16.msra.mxu0 %v1262
    %1281 = vmatprep.subr.bf16.mxu0 0
    %1282 = vmatpush1.bf16.msra.mxu0 %v1263
    %1283 = vmatprep.subr.bf16.mxu0 0
    %1284 = vmatpush1.bf16.msra.mxu0 %v1264
    %1285 = vmatprep.subr.bf16.mxu0 0
    %1286 = vmatpush1.bf16.msra.mxu0 %v1265
    %1287 = vmatprep.subr.bf16.mxu0 0
    %1288 = vmatpush1.bf16.msra.mxu0 %v1266
    %1289 = vmatprep.subr.bf16.mxu0 0
    %1290 = vmatpush1.bf16.msra.mxu0 %v1267
    %1291 = vmatprep.subr.bf16.mxu0 0
    %1292 = vmatpush1.bf16.msra.mxu0 %v1268
    %1293 = vmatprep.subr.bf16.mxu0 0
    %1294 = vmatpush1.bf16.msra.mxu0 0
    %1295 = vmatprep.subr.bf16.mxu0 0
    %1296 = vmatpush1.bf16.msra.mxu0 0
    %1297 = vmatprep.subr.bf16.mxu0 0
    %1298 = vmatpush1.bf16.msra.mxu0 0
    %1299 = vmatprep.subr.bf16.mxu0 0
    %1300 = vmatpush1.bf16.msra.mxu0 0
    %1301 = vmatprep.subr.bf16.mxu0 0
    %1302 = vmatpush1.bf16.msra.mxu0 0
    %1303 = vmatprep.subr.bf16.mxu0 0
    %1304 = vmatpush1.bf16.msra.mxu0 0
    %1305 = vmatprep.subr.bf16.mxu0 0
    %1306 = vmatpush1.bf16.msra.mxu0 0
    %1307 = vmatprep.subr.bf16.mxu0 0
    %1308 = vmatpush1.bf16.msra.mxu0 0
    %1309 = vmatprep.mubr.bf16.mxu0 0
    %1310 = vmatmul.mubr.bf16.gmra.mrb[0].mxu0 %v424
    %v1311 = vpop.f32.mrb[0].mxu0
    %v1312 = vadd.f32 %v1227, %v1311
    %v1313 = vpop.f32.mrb[0].mxu0
    %v1314 = vpop.f32.mrb[0].mxu0
    %v1315 = vadd.f32 %v1227, %v1314
    %v1316 = vpop.f32.mrb[0].mxu0
    %1317 = vmatprep.mubr.bf16.mxu0 0
    %1318 = vmatmul.mubr.bf16.gmra.mrb[0].mxu0 %v425
    %v1319 = vpop.f32.mrb[0].mxu0
    %v1320 = vadd.f32 %v1227, %v1319
    %v1321 = vpop.f32.mrb[0].mxu0
    %v1322 = vpop.f32.mrb[0].mxu0
    %v1323 = vadd.f32 %v1227, %v1322
    %v1324 = vpop.f32.mrb[0].mxu0
    %1325 = vmatprep.mubr.bf16.mxu0 0
    %1326 = vmatmul.mubr.bf16.gmra.mrb[0].mxu0 %v426
    %v1327 = vpop.f32.mrb[0].mxu0
    %v1328 = vadd.f32 %v1227, %v1327
    %v1329 = vpop.f32.mrb[0].mxu0
    %v1330 = vpop.f32.mrb[0].mxu0
    %v1331 = vadd.f32 %v1227, %v1330
    %v1332 = vpop.f32.mrb[0].mxu0
    %1333 = vmatprep.mubr.bf16.mxu0 0
    %1334 = vmatmul.mubr.bf16.gmra.mrb[0].mxu0 %v427
    %v1335 = vpop.f32.mrb[0].mxu0
    %v1336 = vadd.f32 %v1227, %v1335
    %v1337 = vpop.f32.mrb[0].mxu0
    %v1338 = vpop.f32.mrb[0].mxu0
    %v1339 = vadd.f32 %v1227, %v1338
    %v1340 = vpop.f32.mrb[0].mxu0
    %1341 = vmatprep.mubr.bf16.mxu0 0
    %1342 = vmatmul.mubr.bf16.gmra.mrb[0].mxu0 %v428
    %v1343 = vpop.f32.mrb[0].mxu0
    %v1344 = vadd.f32 %v1227, %v1343
    %v1345 = vpop.f32.mrb[0].mxu0
    %v1346 = vpop.f32.mrb[0].mxu0
    %v1347 = vadd.f32 %v1227, %v1346
    %v1348 = vpop.f32.mrb[0].mxu0
    %1349 = vmatprep.mubr.bf16.mxu0 0
    %1350 = vmatmul.mubr.bf16.gmra.mrb[0].mxu0 %v429
    %v1351 = vpop.f32.mrb[0].mxu0
    %v1352 = vadd.f32 %v1227, %v1351
    %v1353 = vpop.f32.mrb[0].mxu0
    %v1354 = vpop.f32.mrb[0].mxu0
    %v1355 = vadd.f32 %v1227, %v1354
    %v1356 = vpop.f32.mrb[0].mxu0
    %1357 = vmatprep.mubr.bf16.mxu0 0
    %1358 = vmatmul.mubr.bf16.gmra.mrb[0].mxu0 %v430
    %v1359 = vpop.f32.mrb[0].mxu0
    %v1360 = vadd.f32 %v1227, %v1359
    %v1361 = vpop.f32.mrb[0].mxu0
    %v1362 = vpop.f32.mrb[0].mxu0
    %v1363 = vadd.f32 %v1227, %v1362
    %v1364 = vpop.f32.mrb[0].mxu0
    %1365 = vmatprep.mubr.bf16.mxu0 0
    %1366 = vmatmul.mubr.bf16.gmra.mrb[0].mxu0 %v431
    %v1367 = vpop.f32.mrb[0].mxu0
    %v1368 = vadd.f32 %v1227, %v1367
    %v1369 = vpop.f32.mrb[0].mxu0
    %v1370 = vpop.f32.mrb[0].mxu0
    %v1371 = vadd.f32 %v1227, %v1370
    %v1372 = vpop.f32.mrb[0].mxu0
    %1373 = vdwg.mxu0
    %v1374 = vmax.f32 %v1312, 0.0
    %v1375 = vmax.f32 %v1315, 0.0
    %v1376 = vmax.f32 %v1320, 0.0
    %v1377 = vmax.f32 %v1323, 0.0
    %v1378 = vmax.f32 %v1328, 0.0
    %v1379 = vmax.f32 %v1331, 0.0
    %v1380 = vmax.f32 %v1336, 0.0
    %v1381 = vmax.f32 %v1339, 0.0
    %v1382 = vmax.f32 %v1344, 0.0
    %v1383 = vmax.f32 %v1347, 0.0
    %v1384 = vmax.f32 %v1352, 0.0
    %v1385 = vmax.f32 %v1355, 0.0
    %v1386 = vmax.f32 %v1360, 0.0
    %v1387 = vmax.f32 %v1363, 0.0
    %v1388 = vmax.f32 %v1368, 0.0
    %v1389 = vmax.f32 %v1371, 0.0
    %v1390 = vld [vmem:[%s17] sm:$0x1]
    %v1392 = vlaneseq
    %v1393 = vshrl.u32 %v1392, 7
    %v1394 = vsub.s32 0, %v1393
    %v1395 = vrot.slane %v1390, %v1394
    %v1397 = vmul.f32 %v1374, %v1395
    %v1398 = vmul.f32 %v1375, %v1395
    %v1399 = vmul.f32 %v1376, %v1395
    %v1400 = vmul.f32 %v1377, %v1395
    %v1401 = vmul.f32 %v1378, %v1395
    %v1402 = vmul.f32 %v1379, %v1395
    %v1403 = vmul.f32 %v1380, %v1395
    %v1404 = vmul.f32 %v1381, %v1395
    %v1405 = vmul.f32 %v1382, %v1395
    %v1406 = vmul.f32 %v1383, %v1395
    %v1407 = vmul.f32 %v1384, %v1395
    %v1408 = vmul.f32 %v1385, %v1395
    %v1409 = vmul.f32 %v1386, %v1395
    %v1410 = vmul.f32 %v1387, %v1395
    %v1411 = vmul.f32 %v1388, %v1395
    %v1412 = vmul.f32 %v1389, %v1395
    %v1413 = vld [vmem:[%s19] sm:$0x1]
    %v1415 = vlaneseq
    %v1416 = vshrl.u32 %v1415, 7
    %v1417 = vsub.s32 0, %v1416
    %v1418 = vrot.slane %v1413, %v1417
    %v1420 = vadd.f32 %v1397, %v1418
    %v1421 = vadd.f32 %v1398, %v1418
    %v1422 = vadd.f32 %v1399, %v1418
    %v1423 = vadd.f32 %v1400, %v1418
    %v1424 = vadd.f32 %v1401, %v1418
    %v1425 = vadd.f32 %v1402, %v1418
    %v1426 = vadd.f32 %v1403, %v1418
    %v1427 = vadd.f32 %v1404, %v1418
    %v1428 = vadd.f32 %v1405, %v1418
    %v1429 = vadd.f32 %v1406, %v1418
    %v1430 = vadd.f32 %v1407, %v1418
    %v1431 = vadd.f32 %v1408, %v1418
    %v1432 = vadd.f32 %v1409, %v1418
    %v1433 = vadd.f32 %v1410, %v1418
    %v1434 = vadd.f32 %v1411, %v1418
    %v1435 = vadd.f32 %v1412, %v1418
    %v1436 = vld [vmem:[%s25] sm:$0xf]
    %v1437 = vld [vmem:[%s25 + $0x4] sm:$0xf]
    %v1438 = vld [vmem:[%s25 + $0x8] sm:$0xf]
    %v1439 = vld [vmem:[%s25 + $0xc] sm:$0xf]
    %v1440 = vld [vmem:[%s25 + $0x10] sm:$0xf]
    %v1441 = vld [vmem:[%s25 + $0x14] sm:$0xf]
    %v1442 = vld [vmem:[%s25 + $0x18] sm:$0xf]
    %v1443 = vld [vmem:[%s25 + $0x1c] sm:$0xf]
    %v1444 = vld [vmem:[%s27] sm:$0xf]
    %v1445 = vld [vmem:[%s27 + $0x4] sm:$0xf]
    %v1446 = vld [vmem:[%s27 + $0x8] sm:$0xf]
    %v1447 = vld [vmem:[%s27 + $0xc] sm:$0xf]
    %v1448 = vld [vmem:[%s27 + $0x10] sm:$0xf]
    %v1449 = vld [vmem:[%s27 + $0x14] sm:$0xf]
    %v1450 = vld [vmem:[%s27 + $0x18] sm:$0xf]
    %v1451 = vld [vmem:[%s27 + $0x1c] sm:$0xf]
    %v1452 = vld [vmem:[%s29] sm:$0xf]
    %v1453 = vld [vmem:[%s29 + $0x4] sm:$0xf]
    %v1454 = vld [vmem:[%s29 + $0x8] sm:$0xf]
    %v1455 = vld [vmem:[%s29 + $0xc] sm:$0xf]
    %v1456 = vld [vmem:[%s29 + $0x10] sm:$0xf]
    %v1457 = vld [vmem:[%s29 + $0x14] sm:$0xf]
    %v1458 = vld [vmem:[%s29 + $0x18] sm:$0xf]
    %v1459 = vld [vmem:[%s29 + $0x1c] sm:$0xf]
    %v1460 = vld [vmem:[%s31] sm:$0xf]
    %v1461 = vld [vmem:[%s31 + $0x4] sm:$0xf]
    %v1462 = vld [vmem:[%s31 + $0x8] sm:$0xf]
    %v1463 = vld [vmem:[%s31 + $0xc] sm:$0xf]
    %v1464 = vld [vmem:[%s31 + $0x10] sm:$0xf]
    %v1465 = vld [vmem:[%s31 + $0x14] sm:$0xf]
    %v1466 = vld [vmem:[%s31 + $0x18] sm:$0xf]
    %v1467 = vld [vmem:[%s31 + $0x1c] sm:$0xf]
    %v1468 = vld [vmem:[%s33] sm:$0x1]
    %v1477 = vunpack.c.l.b16 %v1436
    %v1478 = vunpack.c.l.b16 %v1437
    %v1479 = vunpack.c.l.b16 %v1438
    %v1480 = vunpack.c.l.b16 %v1439
    %v1481 = vunpack.c.l.b16 %v1440
    %v1482 = vunpack.c.l.b16 %v1441
    %v1483 = vunpack.c.l.b16 %v1442
    %v1484 = vunpack.c.l.b16 %v1443
    %v1485 = vpack.c.b16 %v1478, %v1477
    %v1486 = vpack.c.b16 %v1480, %v1479
    %v1487 = vpack.c.b16 %v1482, %v1481
    %v1488 = vpack.c.b16 %v1484, %v1483
    %1493 = vmatprep.subr.bf16.mxu0 0
    %1494 = vmatpush1.bf16.msra.mxu0 %v1485
    %1495 = vmatprep.subr.bf16.mxu0 0
    %1496 = vmatpush1.bf16.msra.mxu0 %v1486
    %1497 = vmatprep.subr.bf16.mxu0 0
    %1498 = vmatpush1.bf16.msra.mxu0 %v1487
    %1499 = vmatprep.subr.bf16.mxu0 0
    %1500 = vmatpush1.bf16.msra.mxu0 %v1488
    %1501 = vmatprep.subr.bf16.mxu0 0
    %1502 = vmatpush1.bf16.msra.mxu0 0
    %1503 = vmatprep.subr.bf16.mxu0 0
    %1504 = vmatpush1.bf16.msra.mxu0 0
    %1505 = vmatprep.subr.bf16.mxu0 0
    %1506 = vmatpush1.bf16.msra.mxu0 0
    %1507 = vmatprep.subr.bf16.mxu0 0
    %1508 = vmatpush1.bf16.msra.mxu0 0
    %1509 = vmatprep.subr.bf16.mxu0 0
    %1510 = vmatpush1.bf16.msra.mxu0 0
    %1511 = vmatprep.subr.bf16.mxu0 0
    %1512 = vmatpush1.bf16.msra.mxu0 0
    %1513 = vmatprep.subr.bf16.mxu0 0
    %1514 = vmatpush1.bf16.msra.mxu0 0
    %1515 = vmatprep.subr.bf16.mxu0 0
    %1516 = vmatpush1.bf16.msra.mxu0 0
    %1517 = vmatprep.subr.bf16.mxu0 0
    %1518 = vmatpush1.bf16.msra.mxu0 0
    %1519 = vmatprep.subr.bf16.mxu0 0
    %1520 = vmatpush1.bf16.msra.mxu0 0
    %1521 = vmatprep.subr.bf16.mxu0 0
    %1522 = vmatpush1.bf16.msra.mxu0 0
    %1523 = vmatprep.subr.bf16.mxu0 0
    %1524 = vmatpush1.bf16.msra.mxu0 0
    %1525 = vmatprep.mubr.bf16.mxu0 0
    %1526 = vmatmul.mubr.bf16.gmra.mrb[0].mxu0 %v739
    %v1527 = vpop.f32.mrb[0].mxu0
    %v1528 = vadd.f32 0.0, %v1527
    %v1529 = vpop.f32.mrb[0].mxu0
    %v1530 = vpop.f32.mrb[0].mxu0
    %v1531 = vadd.f32 0.0, %v1530
    %v1532 = vpop.f32.mrb[0].mxu0
    %1533 = vmatprep.mubr.bf16.mxu0 0
    %1534 = vmatmul.mubr.bf16.gmra.mrb[0].mxu0 %v742
    %v1535 = vpop.f32.mrb[0].mxu0
    %v1536 = vadd.f32 0.0, %v1535
    %v1537 = vpop.f32.mrb[0].mxu0
    %v1538 = vpop.f32.mrb[0].mxu0
    %v1539 = vadd.f32 0.0, %v1538
    %v1540 = vpop.f32.mrb[0].mxu0
    %1541 = vmatprep.mubr.bf16.mxu0 0
    %1542 = vmatmul.mubr.bf16.gmra.mrb[0].mxu0 %v745
    %v1543 = vpop.f32.mrb[0].mxu0
    %v1544 = vadd.f32 0.0, %v1543
    %v1545 = vpop.f32.mrb[0].mxu0
    %v1546 = vpop.f32.mrb[0].mxu0
    %v1547 = vadd.f32 0.0, %v1546
    %v1548 = vpop.f32.mrb[0].mxu0
    %1549 = vmatprep.mubr.bf16.mxu0 0
    %1550 = vmatmul.mubr.bf16.gmra.mrb[0].mxu0 %v748
    %v1551 = vpop.f32.mrb[0].mxu0
    %v1552 = vadd.f32 0.0, %v1551
    %v1553 = vpop.f32.mrb[0].mxu0
    %v1554 = vpop.f32.mrb[0].mxu0
    %v1555 = vadd.f32 0.0, %v1554
    %v1556 = vpop.f32.mrb[0].mxu0
    %1557 = vmatprep.mubr.bf16.mxu0 0
    %1558 = vmatmul.mubr.bf16.gmra.mrb[0].mxu0 %v751
    %v1559 = vpop.f32.mrb[0].mxu0
    %v1560 = vadd.f32 0.0, %v1559
    %v1561 = vpop.f32.mrb[0].mxu0
    %v1562 = vpop.f32.mrb[0].mxu0
    %v1563 = vadd.f32 0.0, %v1562
    %v1564 = vpop.f32.mrb[0].mxu0
    %1565 = vmatprep.mubr.bf16.mxu0 0
    %1566 = vmatmul.mubr.bf16.gmra.mrb[0].mxu0 %v754
    %v1567 = vpop.f32.mrb[0].mxu0
    %v1568 = vadd.f32 0.0, %v1567
    %v1569 = vpop.f32.mrb[0].mxu0
    %v1570 = vpop.f32.mrb[0].mxu0
    %v1571 = vadd.f32 0.0, %v1570
    %v1572 = vpop.f32.mrb[0].mxu0
    %1573 = vmatprep.mubr.bf16.mxu0 0
    %1574 = vmatmul.mubr.bf16.gmra.mrb[0].mxu0 %v757
    %v1575 = vpop.f32.mrb[0].mxu0
    %v1576 = vadd.f32 0.0, %v1575
    %v1577 = vpop.f32.mrb[0].mxu0
    %v1578 = vpop.f32.mrb[0].mxu0
    %v1579 = vadd.f32 0.0, %v1578
    %v1580 = vpop.f32.mrb[0].mxu0
    %1581 = vmatprep.mubr.bf16.mxu0 0
    %1582 = vmatmul.mubr.bf16.gmra.mrb[0].mxu0 %v760
    %v1583 = vpop.f32.mrb[0].mxu0
    %v1584 = vadd.f32 0.0, %v1583
    %v1585 = vpop.f32.mrb[0].mxu0
    %v1586 = vpop.f32.mrb[0].mxu0
    %v1587 = vadd.f32 0.0, %v1586
    %v1588 = vpop.f32.mrb[0].mxu0
    %1589 = vdwg.mxu0
    %v1590 = vpack.c.bf16 %v1421, %v1420
    %v1591 = vpack.c.bf16 %v1423, %v1422
    %v1592 = vpack.c.bf16 %v1425, %v1424
    %v1593 = vpack.c.bf16 %v1427, %v1426
    %v1594 = vpack.c.bf16 %v1429, %v1428
    %v1595 = vpack.c.bf16 %v1431, %v1430
    %v1596 = vpack.c.bf16 %v1433, %v1432
    %v1597 = vpack.c.bf16 %v1435, %v1434
    %v1606 = vunpack.c.l.b16 %v1444
    %v1607 = vunpack.c.l.b16 %v1445
    %v1608 = vunpack.c.l.b16 %v1446
    %v1609 = vunpack.c.l.b16 %v1447
    %v1610 = vunpack.c.l.b16 %v1448
    %v1611 = vunpack.c.l.b16 %v1449
    %v1612 = vunpack.c.l.b16 %v1450
    %v1613 = vunpack.c.l.b16 %v1451
    %v1614 = vpack.c.b16 %v1607, %v1606
    %v1615 = vpack.c.b16 %v1609, %v1608
    %v1616 = vpack.c.b16 %v1611, %v1610
    %v1617 = vpack.c.b16 %v1613, %v1612
    %v1623 = vsel %vm224, %v1590, 0
    %v1626 = vsel %vm224, %v1591, 0
    %v1629 = vsel %vm224, %v1592, 0
    %v1632 = vsel %vm224, %v1593, 0
    %v1635 = vsel %vm224, %v1594, 0
    %v1638 = vsel %vm224, %v1595, 0
    %v1641 = vsel %vm224, %v1596, 0
    %v1644 = vsel %vm224, %v1597, 0
    %1646 = vmatprep.subr.bf16.mxu0 0
    %1647 = vmatpush1.bf16.msra.mxu0 %v1614
    %1648 = vmatprep.subr.bf16.mxu0 0
    %1649 = vmatpush1.bf16.msra.mxu0 %v1615
    %1650 = vmatprep.subr.bf16.mxu0 0
    %1651 = vmatpush1.bf16.msra.mxu0 %v1616
    %1652 = vmatprep.subr.bf16.mxu0 0
    %1653 = vmatpush1.bf16.msra.mxu0 %v1617
    %1654 = vmatprep.subr.bf16.mxu0 0
    %1655 = vmatpush1.bf16.msra.mxu0 0
    %1656 = vmatprep.subr.bf16.mxu0 0
    %1657 = vmatpush1.bf16.msra.mxu0 0
    %1658 = vmatprep.subr.bf16.mxu0 0
    %1659 = vmatpush1.bf16.msra.mxu0 0
    %1660 = vmatprep.subr.bf16.mxu0 0
    %1661 = vmatpush1.bf16.msra.mxu0 0
    %1662 = vmatprep.subr.bf16.mxu0 0
    %1663 = vmatpush1.bf16.msra.mxu0 0
    %1664 = vmatprep.subr.bf16.mxu0 0
    %1665 = vmatpush1.bf16.msra.mxu0 0
    %1666 = vmatprep.subr.bf16.mxu0 0
    %1667 = vmatpush1.bf16.msra.mxu0 0
    %1668 = vmatprep.subr.bf16.mxu0 0
    %1669 = vmatpush1.bf16.msra.mxu0 0
    %1670 = vmatprep.subr.bf16.mxu0 0
    %1671 = vmatpush1.bf16.msra.mxu0 0
    %1672 = vmatprep.subr.bf16.mxu0 0
    %1673 = vmatpush1.bf16.msra.mxu0 0
    %1674 = vmatprep.subr.bf16.mxu0 0
    %1675 = vmatpush1.bf16.msra.mxu0 0
    %1676 = vmatprep.subr.bf16.mxu0 0
    %1677 = vmatpush1.bf16.msra.mxu0 0
    %1678 = vmatprep.mubr.bf16.mxu0 0
    %1679 = vmatmul.mubr.bf16.gmra.mrb[0].mxu0 %v1623
    %v1680 = vpop.f32.mrb[0].mxu0
    %v1681 = vadd.f32 0.0, %v1680
    %v1682 = vpop.f32.mrb[0].mxu0
    %v1683 = vpop.f32.mrb[0].mxu0
    %v1684 = vadd.f32 0.0, %v1683
    %v1685 = vpop.f32.mrb[0].mxu0
    %1686 = vmatprep.mubr.bf16.mxu0 0
    %1687 = vmatmul.mubr.bf16.gmra.mrb[0].mxu0 %v1626
    %v1688 = vpop.f32.mrb[0].mxu0
    %v1689 = vadd.f32 0.0, %v1688
    %v1690 = vpop.f32.mrb[0].mxu0
    %v1691 = vpop.f32.mrb[0].mxu0
    %v1692 = vadd.f32 0.0, %v1691
    %v1693 = vpop.f32.mrb[0].mxu0
    %1694 = vmatprep.mubr.bf16.mxu0 0
    %1695 = vmatmul.mubr.bf16.gmra.mrb[0].mxu0 %v1629
    %v1696 = vpop.f32.mrb[0].mxu0
    %v1697 = vadd.f32 0.0, %v1696
    %v1698 = vpop.f32.mrb[0].mxu0
    %v1699 = vpop.f32.mrb[0].mxu0
    %v1700 = vadd.f32 0.0, %v1699
    %v1701 = vpop.f32.mrb[0].mxu0
    %1702 = vmatprep.mubr.bf16.mxu0 0
    %1703 = vmatmul.mubr.bf16.gmra.mrb[0].mxu0 %v1632
    %v1704 = vpop.f32.mrb[0].mxu0
    %v1705 = vadd.f32 0.0, %v1704
    %v1706 = vpop.f32.mrb[0].mxu0
    %v1707 = vpop.f32.mrb[0].mxu0
    %v1708 = vadd.f32 0.0, %v1707
    %v1709 = vpop.f32.mrb[0].mxu0
    %1710 = vmatprep.mubr.bf16.mxu0 0
    %1711 = vmatmul.mubr.bf16.gmra.mrb[0].mxu0 %v1635
    %v1712 = vpop.f32.mrb[0].mxu0
    %v1713 = vadd.f32 0.0, %v1712
    %v1714 = vpop.f32.mrb[0].mxu0
    %v1715 = vpop.f32.mrb[0].mxu0
    %v1716 = vadd.f32 0.0, %v1715
    %v1717 = vpop.f32.mrb[0].mxu0
    %1718 = vmatprep.mubr.bf16.mxu0 0
    %1719 = vmatmul.mubr.bf16.gmra.mrb[0].mxu0 %v1638
    %v1720 = vpop.f32.mrb[0].mxu0
    %v1721 = vadd.f32 0.0, %v1720
    %v1722 = vpop.f32.mrb[0].mxu0
    %v1723 = vpop.f32.mrb[0].mxu0
    %v1724 = vadd.f32 0.0, %v1723
    %v1725 = vpop.f32.mrb[0].mxu0
    %1726 = vmatprep.mubr.bf16.mxu0 0
    %1727 = vmatmul.mubr.bf16.gmra.mrb[0].mxu0 %v1641
    %v1728 = vpop.f32.mrb[0].mxu0
    %v1729 = vadd.f32 0.0, %v1728
    %v1730 = vpop.f32.mrb[0].mxu0
    %v1731 = vpop.f32.mrb[0].mxu0
    %v1732 = vadd.f32 0.0, %v1731
    %v1733 = vpop.f32.mrb[0].mxu0
    %1734 = vmatprep.mubr.bf16.mxu0 0
    %1735 = vmatmul.mubr.bf16.gmra.mrb[0].mxu0 %v1644
    %v1736 = vpop.f32.mrb[0].mxu0
    %v1737 = vadd.f32 0.0, %v1736
    %v1738 = vpop.f32.mrb[0].mxu0
    %v1739 = vpop.f32.mrb[0].mxu0
    %v1740 = vadd.f32 0.0, %v1739
    %v1741 = vpop.f32.mrb[0].mxu0
    %1742 = vdwg.mxu0
    %v1751 = vunpack.c.l.b16 %v1452
    %v1752 = vunpack.c.l.b16 %v1453
    %v1753 = vunpack.c.l.b16 %v1454
    %v1754 = vunpack.c.l.b16 %v1455
    %v1755 = vunpack.c.l.b16 %v1456
    %v1756 = vunpack.c.l.b16 %v1457
    %v1757 = vunpack.c.l.b16 %v1458
    %v1758 = vunpack.c.l.b16 %v1459
    %v1759 = vpack.c.b16 %v1752, %v1751
    %v1760 = vpack.c.b16 %v1754, %v1753
    %v1761 = vpack.c.b16 %v1756, %v1755
    %v1762 = vpack.c.b16 %v1758, %v1757
    %1767 = vmatprep.subr.bf16.mxu0 0
    %1768 = vmatpush1.bf16.msra.mxu0 %v1759
    %1769 = vmatprep.subr.bf16.mxu0 0
    %1770 = vmatpush1.bf16.msra.mxu0 %v1760
    %1771 = vmatprep.subr.bf16.mxu0 0
    %1772 = vmatpush1.bf16.msra.mxu0 %v1761
    %1773 = vmatprep.subr.bf16.mxu0 0
    %1774 = vmatpush1.bf16.msra.mxu0 %v1762
    %1775 = vmatprep.subr.bf16.mxu0 0
    %1776 = vmatpush1.bf16.msra.mxu0 0
    %1777 = vmatprep.subr.bf16.mxu0 0
    %1778 = vmatpush1.bf16.msra.mxu0 0
    %1779 = vmatprep.subr.bf16.mxu0 0
    %1780 = vmatpush1.bf16.msra.mxu0 0
    %1781 = vmatprep.subr.bf16.mxu0 0
    %1782 = vmatpush1.bf16.msra.mxu0 0
    %1783 = vmatprep.subr.bf16.mxu0 0
    %1784 = vmatpush1.bf16.msra.mxu0 0
    %1785 = vmatprep.subr.bf16.mxu0 0
    %1786 = vmatpush1.bf16.msra.mxu0 0
    %1787 = vmatprep.subr.bf16.mxu0 0
    %1788 = vmatpush1.bf16.msra.mxu0 0
    %1789 = vmatprep.subr.bf16.mxu0 0
    %1790 = vmatpush1.bf16.msra.mxu0 0
    %1791 = vmatprep.subr.bf16.mxu0 0
    %1792 = vmatpush1.bf16.msra.mxu0 0
    %1793 = vmatprep.subr.bf16.mxu0 0
    %1794 = vmatpush1.bf16.msra.mxu0 0
    %1795 = vmatprep.subr.bf16.mxu0 0
    %1796 = vmatpush1.bf16.msra.mxu0 0
    %1797 = vmatprep.subr.bf16.mxu0 0
    %1798 = vmatpush1.bf16.msra.mxu0 0
    %1799 = vmatprep.mubr.bf16.mxu0 0
    %1800 = vmatmul.mubr.bf16.gmra.mrb[0].mxu0 %v1623
    %v1801 = vpop.f32.mrb[0].mxu0
    %v1802 = vadd.f32 0.0, %v1801
    %v1803 = vpop.f32.mrb[0].mxu0
    %v1804 = vpop.f32.mrb[0].mxu0
    %v1805 = vadd.f32 0.0, %v1804
    %v1806 = vpop.f32.mrb[0].mxu0
    %1807 = vmatprep.mubr.bf16.mxu0 0
    %1808 = vmatmul.mubr.bf16.gmra.mrb[0].mxu0 %v1626
    %v1809 = vpop.f32.mrb[0].mxu0
    %v1810 = vadd.f32 0.0, %v1809
    %v1811 = vpop.f32.mrb[0].mxu0
    %v1812 = vpop.f32.mrb[0].mxu0
    %v1813 = vadd.f32 0.0, %v1812
    %v1814 = vpop.f32.mrb[0].mxu0
    %1815 = vmatprep.mubr.bf16.mxu0 0
    %1816 = vmatmul.mubr.bf16.gmra.mrb[0].mxu0 %v1629
    %v1817 = vpop.f32.mrb[0].mxu0
    %v1818 = vadd.f32 0.0, %v1817
    %v1819 = vpop.f32.mrb[0].mxu0
    %v1820 = vpop.f32.mrb[0].mxu0
    %v1821 = vadd.f32 0.0, %v1820
    %v1822 = vpop.f32.mrb[0].mxu0
    %1823 = vmatprep.mubr.bf16.mxu0 0
    %1824 = vmatmul.mubr.bf16.gmra.mrb[0].mxu0 %v1632
    %v1825 = vpop.f32.mrb[0].mxu0
    %v1826 = vadd.f32 0.0, %v1825
    %v1827 = vpop.f32.mrb[0].mxu0
    %v1828 = vpop.f32.mrb[0].mxu0
    %v1829 = vadd.f32 0.0, %v1828
    %v1830 = vpop.f32.mrb[0].mxu0
    %1831 = vmatprep.mubr.bf16.mxu0 0
    %1832 = vmatmul.mubr.bf16.gmra.mrb[0].mxu0 %v1635
    %v1833 = vpop.f32.mrb[0].mxu0
    %v1834 = vadd.f32 0.0, %v1833
    %v1835 = vpop.f32.mrb[0].mxu0
    %v1836 = vpop.f32.mrb[0].mxu0
    %v1837 = vadd.f32 0.0, %v1836
    %v1838 = vpop.f32.mrb[0].mxu0
    %1839 = vmatprep.mubr.bf16.mxu0 0
    %1840 = vmatmul.mubr.bf16.gmra.mrb[0].mxu0 %v1638
    %v1841 = vpop.f32.mrb[0].mxu0
    %v1842 = vadd.f32 0.0, %v1841
    %v1843 = vpop.f32.mrb[0].mxu0
    %v1844 = vpop.f32.mrb[0].mxu0
    %v1845 = vadd.f32 0.0, %v1844
    %v1846 = vpop.f32.mrb[0].mxu0
    %1847 = vmatprep.mubr.bf16.mxu0 0
    %1848 = vmatmul.mubr.bf16.gmra.mrb[0].mxu0 %v1641
    %v1849 = vpop.f32.mrb[0].mxu0
    %v1850 = vadd.f32 0.0, %v1849
    %v1851 = vpop.f32.mrb[0].mxu0
    %v1852 = vpop.f32.mrb[0].mxu0
    %v1853 = vadd.f32 0.0, %v1852
    %v1854 = vpop.f32.mrb[0].mxu0
    %1855 = vmatprep.mubr.bf16.mxu0 0
    %1856 = vmatmul.mubr.bf16.gmra.mrb[0].mxu0 %v1644
    %v1857 = vpop.f32.mrb[0].mxu0
    %v1858 = vadd.f32 0.0, %v1857
    %v1859 = vpop.f32.mrb[0].mxu0
    %v1860 = vpop.f32.mrb[0].mxu0
    %v1861 = vadd.f32 0.0, %v1860
    %v1862 = vpop.f32.mrb[0].mxu0
    %1863 = vdwg.mxu0
    %v1864 = vpack.c.bf16 %v1531, %v1528
    %v1865 = vpack.c.bf16 %v1539, %v1536
    %v1866 = vpack.c.bf16 %v1547, %v1544
    %v1867 = vpack.c.bf16 %v1555, %v1552
    %v1868 = vpack.c.bf16 %v1563, %v1560
    %v1869 = vpack.c.bf16 %v1571, %v1568
    %v1870 = vpack.c.bf16 %v1579, %v1576
    %v1871 = vpack.c.bf16 %v1587, %v1584
    %v1872 = vpack.c.bf16 %v1684, %v1681
    %v1873 = vpack.c.bf16 %v1692, %v1689
    %v1874 = vpack.c.bf16 %v1700, %v1697
    %v1875 = vpack.c.bf16 %v1708, %v1705
    %v1876 = vpack.c.bf16 %v1716, %v1713
    %v1877 = vpack.c.bf16 %v1724, %v1721
    %v1878 = vpack.c.bf16 %v1732, %v1729
    %v1879 = vpack.c.bf16 %v1740, %v1737
    %vm1880 = vcmask 130048
    %v1882 = vsel %vm1880, %v1864, 0
    %v1885 = vsel %vm1880, %v1865, 0
    %v1888 = vsel %vm1880, %v1866, 0
    %v1891 = vsel %vm1880, %v1867, 0
    %v1894 = vsel %vm1880, %v1868, 0
    %v1897 = vsel %vm1880, %v1869, 0
    %v1900 = vsel %vm1880, %v1870, 0
    %v1903 = vsel %vm1880, %v1871, 0
    %v1906 = vsel %vm1880, %v1872, 0
    %v1909 = vsel %vm1880, %v1873, 0
    %v1912 = vsel %vm1880, %v1874, 0
    %v1915 = vsel %vm1880, %v1875, 0
    %v1918 = vsel %vm1880, %v1876, 0
    %v1921 = vsel %vm1880, %v1877, 0
    %v1924 = vsel %vm1880, %v1878, 0
    %v1927 = vsel %vm1880, %v1879, 0
    %1929 = vmatprep.subr.bf16.mxu0 0
    %1930 = vmatpush1.bf16.xpose.msra.mxu0 %v1906
    %1931 = vmatprep.subr.bf16.mxu0 0
    %1932 = vmatpush1.bf16.xpose.msra.mxu0 %v1909
    %1933 = vmatprep.subr.bf16.mxu0 0
    %1934 = vmatpush1.bf16.xpose.msra.mxu0 %v1912
    %1935 = vmatprep.subr.bf16.mxu0 0
    %1936 = vmatpush1.bf16.xpose.msra.mxu0 %v1915
    %1937 = vmatprep.subr.bf16.mxu0 0
    %1938 = vmatpush1.bf16.xpose.msra.mxu0 %v1918
    %1939 = vmatprep.subr.bf16.mxu0 0
    %1940 = vmatpush1.bf16.xpose.msra.mxu0 %v1921
    %1941 = vmatprep.subr.bf16.mxu0 0
    %1942 = vmatpush1.bf16.xpose.msra.mxu0 %v1924
    %1943 = vmatprep.subr.bf16.mxu0 0
    %1944 = vmatpush1.bf16.xpose.msra.mxu0 %v1927
    %1945 = vmatprep.subr.bf16.mxu0 0
    %1946 = vmatpush1.bf16.xpose.msra.mxu0 0
    %1947 = vmatprep.subr.bf16.mxu0 0
    %1948 = vmatpush1.bf16.xpose.msra.mxu0 0
    %1949 = vmatprep.subr.bf16.mxu0 0
    %1950 = vmatpush1.bf16.xpose.msra.mxu0 0
    %1951 = vmatprep.subr.bf16.mxu0 0
    %1952 = vmatpush1.bf16.xpose.msra.mxu0 0
    %1953 = vmatprep.subr.bf16.mxu0 0
    %1954 = vmatpush1.bf16.xpose.msra.mxu0 0
    %1955 = vmatprep.subr.bf16.mxu0 0
    %1956 = vmatpush1.bf16.xpose.msra.mxu0 0
    %1957 = vmatprep.subr.bf16.mxu0 0
    %1958 = vmatpush1.bf16.xpose.msra.mxu0 0
    %1959 = vmatprep.subr.bf16.mxu0 0
    %1960 = vmatpush1.bf16.xpose.msra.mxu0 0
    %1961 = vmatprep.mubr.bf16.mxu0 0
    %1962 = vmatmul.mubr.bf16.gmra.mrb[0].mxu0 %v1882
    %v1963 = vpop.f32.mrb[0].mxu0
    %v1964 = vadd.f32 0.0, %v1963
    %v1965 = vpop.f32.mrb[0].mxu0
    %v1966 = vpop.f32.mrb[0].mxu0
    %v1967 = vadd.f32 0.0, %v1966
    %v1968 = vpop.f32.mrb[0].mxu0
    %1969 = vmatprep.mubr.bf16.mxu0 0
    %1970 = vmatmul.mubr.bf16.gmra.mrb[0].mxu0 %v1885
    %v1971 = vpop.f32.mrb[0].mxu0
    %v1972 = vadd.f32 0.0, %v1971
    %v1973 = vpop.f32.mrb[0].mxu0
    %v1974 = vpop.f32.mrb[0].mxu0
    %v1975 = vadd.f32 0.0, %v1974
    %v1976 = vpop.f32.mrb[0].mxu0
    %1977 = vmatprep.mubr.bf16.mxu0 0
    %1978 = vmatmul.mubr.bf16.gmra.mrb[0].mxu0 %v1888
    %v1979 = vpop.f32.mrb[0].mxu0
    %v1980 = vadd.f32 0.0, %v1979
    %v1981 = vpop.f32.mrb[0].mxu0
    %v1982 = vpop.f32.mrb[0].mxu0
    %v1983 = vadd.f32 0.0, %v1982
    %v1984 = vpop.f32.mrb[0].mxu0
    %1985 = vmatprep.mubr.bf16.mxu0 0
    %1986 = vmatmul.mubr.bf16.gmra.mrb[0].mxu0 %v1891
    %v1987 = vpop.f32.mrb[0].mxu0
    %v1988 = vadd.f32 0.0, %v1987
    %v1989 = vpop.f32.mrb[0].mxu0
    %v1990 = vpop.f32.mrb[0].mxu0
    %v1991 = vadd.f32 0.0, %v1990
    %v1992 = vpop.f32.mrb[0].mxu0
    %1993 = vmatprep.mubr.bf16.mxu0 0
    %1994 = vmatmul.mubr.bf16.gmra.mrb[0].mxu0 %v1894
    %v1995 = vpop.f32.mrb[0].mxu0
    %v1996 = vadd.f32 0.0, %v1995
    %v1997 = vpop.f32.mrb[0].mxu0
    %v1998 = vpop.f32.mrb[0].mxu0
    %v1999 = vadd.f32 0.0, %v1998
    %v2000 = vpop.f32.mrb[0].mxu0
    %2001 = vmatprep.mubr.bf16.mxu0 0
    %2002 = vmatmul.mubr.bf16.gmra.mrb[0].mxu0 %v1897
    %v2003 = vpop.f32.mrb[0].mxu0
    %v2004 = vadd.f32 0.0, %v2003
    %v2005 = vpop.f32.mrb[0].mxu0
    %v2006 = vpop.f32.mrb[0].mxu0
    %v2007 = vadd.f32 0.0, %v2006
    %v2008 = vpop.f32.mrb[0].mxu0
    %2009 = vmatprep.mubr.bf16.mxu0 0
    %2010 = vmatmul.mubr.bf16.gmra.mrb[0].mxu0 %v1900
    %v2011 = vpop.f32.mrb[0].mxu0
    %v2012 = vadd.f32 0.0, %v2011
    %v2013 = vpop.f32.mrb[0].mxu0
    %v2014 = vpop.f32.mrb[0].mxu0
    %v2015 = vadd.f32 0.0, %v2014
    %v2016 = vpop.f32.mrb[0].mxu0
    %2017 = vmatprep.mubr.bf16.mxu0 0
    %2018 = vmatmul.mubr.bf16.gmra.mrb[0].mxu0 %v1903
    %v2019 = vpop.f32.mrb[0].mxu0
    %v2020 = vadd.f32 0.0, %v2019
    %v2021 = vpop.f32.mrb[0].mxu0
    %v2022 = vpop.f32.mrb[0].mxu0
    %v2023 = vadd.f32 0.0, %v2022
    %v2024 = vpop.f32.mrb[0].mxu0
    %2025 = vdwg.mxu0
    %v2026 = vmul.f32 %v1964, 0.25
    %v2027 = vmul.f32 %v1967, 0.25
    %v2028 = vmul.f32 %v1972, 0.25
    %v2029 = vmul.f32 %v1975, 0.25
    %v2030 = vmul.f32 %v1980, 0.25
    %v2031 = vmul.f32 %v1983, 0.25
    %v2032 = vmul.f32 %v1988, 0.25
    %v2033 = vmul.f32 %v1991, 0.25
    %v2034 = vmul.f32 %v1996, 0.25
    %v2035 = vmul.f32 %v1999, 0.25
    %v2036 = vmul.f32 %v2004, 0.25
    %v2037 = vmul.f32 %v2007, 0.25
    %v2038 = vmul.f32 %v2012, 0.25
    %v2039 = vmul.f32 %v2015, 0.25
    %v2040 = vmul.f32 %v2020, 0.25
    %v2041 = vmul.f32 %v2023, 0.25
    %2042 = vmax.xlane.f32.xlu0 %v2026
    %v2043 = vpop.xlane.xlu0 %2042
    %2044 = vmax.xlane.f32.xlu0 %v2027
    %v2045 = vpop.xlane.xlu0 %2044
    %2046 = vmax.xlane.f32.xlu0 %v2028
    %v2047 = vpop.xlane.xlu0 %2046
    %2048 = vmax.xlane.f32.xlu0 %v2029
    %v2049 = vpop.xlane.xlu0 %2048
    %2050 = vmax.xlane.f32.xlu0 %v2030
    %v2051 = vpop.xlane.xlu0 %2050
    %2052 = vmax.xlane.f32.xlu0 %v2031
    %v2053 = vpop.xlane.xlu0 %2052
    %2054 = vmax.xlane.f32.xlu0 %v2032
    %v2055 = vpop.xlane.xlu0 %2054
    %2056 = vmax.xlane.f32.xlu0 %v2033
    %v2057 = vpop.xlane.xlu0 %2056
    %2058 = vmax.xlane.f32.xlu0 %v2034
    %v2059 = vpop.xlane.xlu0 %2058
    %2060 = vmax.xlane.f32.xlu0 %v2035
    %v2061 = vpop.xlane.xlu0 %2060
    %2062 = vmax.xlane.f32.xlu0 %v2036
    %v2063 = vpop.xlane.xlu0 %2062
    %2064 = vmax.xlane.f32.xlu0 %v2037
    %v2065 = vpop.xlane.xlu0 %2064
    %2066 = vmax.xlane.f32.xlu0 %v2038
    %v2067 = vpop.xlane.xlu0 %2066
    %2068 = vmax.xlane.f32.xlu0 %v2039
    %v2069 = vpop.xlane.xlu0 %2068
    %2070 = vmax.xlane.f32.xlu0 %v2040
    %v2071 = vpop.xlane.xlu0 %2070
    %2072 = vmax.xlane.f32.xlu0 %v2041
    %v2073 = vpop.xlane.xlu0 %2072
    %v2074 = vsub.f32 %v2026, %v2043
    %v2075 = vsub.f32 %v2027, %v2045
    %v2076 = vsub.f32 %v2028, %v2047
    %v2077 = vsub.f32 %v2029, %v2049
    %v2078 = vsub.f32 %v2030, %v2051
    %v2079 = vsub.f32 %v2031, %v2053
    %v2080 = vsub.f32 %v2032, %v2055
    %v2081 = vsub.f32 %v2033, %v2057
    %v2082 = vsub.f32 %v2034, %v2059
    %v2083 = vsub.f32 %v2035, %v2061
    %v2084 = vsub.f32 %v2036, %v2063
    %v2085 = vsub.f32 %v2037, %v2065
    %v2086 = vsub.f32 %v2038, %v2067
    %v2087 = vsub.f32 %v2039, %v2069
    %v2088 = vsub.f32 %v2040, %v2071
    %v2089 = vsub.f32 %v2041, %v2073
    %v2090 = vmul.f32 %v2074, 1.442695
    %v2091 = vpow.pop %v2090
    %v2092 = vmul.f32 %v2075, 1.442695
    %v2093 = vpow.pop %v2092
    %v2094 = vmul.f32 %v2076, 1.442695
    %v2095 = vpow.pop %v2094
    %v2096 = vmul.f32 %v2077, 1.442695
    %v2097 = vpow.pop %v2096
    %v2098 = vmul.f32 %v2078, 1.442695
    %v2099 = vpow.pop %v2098
    %v2100 = vmul.f32 %v2079, 1.442695
    %v2101 = vpow.pop %v2100
    %v2102 = vmul.f32 %v2080, 1.442695
    %v2103 = vpow.pop %v2102
    %v2104 = vmul.f32 %v2081, 1.442695
    %v2105 = vpow.pop %v2104
    %v2106 = vmul.f32 %v2082, 1.442695
    %v2107 = vpow.pop %v2106
    %v2108 = vmul.f32 %v2083, 1.442695
    %v2109 = vpow.pop %v2108
    %v2110 = vmul.f32 %v2084, 1.442695
    %v2111 = vpow.pop %v2110
    %v2112 = vmul.f32 %v2085, 1.442695
    %v2113 = vpow.pop %v2112
    %v2114 = vmul.f32 %v2086, 1.442695
    %v2115 = vpow.pop %v2114
    %v2116 = vmul.f32 %v2087, 1.442695
    %v2117 = vpow.pop %v2116
    %v2118 = vmul.f32 %v2088, 1.442695
    %v2119 = vpow.pop %v2118
    %v2120 = vmul.f32 %v2089, 1.442695
    %v2121 = vpow.pop %v2120
    %2122 = vadd.xlane.f32.xlu0 %v2091
    %v2123 = vpop.xlane.xlu0 %2122
    %2124 = vadd.xlane.f32.xlu0 %v2093
    %v2125 = vpop.xlane.xlu0 %2124
    %2126 = vadd.xlane.f32.xlu0 %v2095
    %v2127 = vpop.xlane.xlu0 %2126
    %2128 = vadd.xlane.f32.xlu0 %v2097
    %v2129 = vpop.xlane.xlu0 %2128
    %2130 = vadd.xlane.f32.xlu0 %v2099
    %v2131 = vpop.xlane.xlu0 %2130
    %2132 = vadd.xlane.f32.xlu0 %v2101
    %v2133 = vpop.xlane.xlu0 %2132
    %2134 = vadd.xlane.f32.xlu0 %v2103
    %v2135 = vpop.xlane.xlu0 %2134
    %2136 = vadd.xlane.f32.xlu0 %v2105
    %v2137 = vpop.xlane.xlu0 %2136
    %2138 = vadd.xlane.f32.xlu0 %v2107
    %v2139 = vpop.xlane.xlu0 %2138
    %2140 = vadd.xlane.f32.xlu0 %v2109
    %v2141 = vpop.xlane.xlu0 %2140
    %2142 = vadd.xlane.f32.xlu0 %v2111
    %v2143 = vpop.xlane.xlu0 %2142
    %2144 = vadd.xlane.f32.xlu0 %v2113
    %v2145 = vpop.xlane.xlu0 %2144
    %2146 = vadd.xlane.f32.xlu0 %v2115
    %v2147 = vpop.xlane.xlu0 %2146
    %2148 = vadd.xlane.f32.xlu0 %v2117
    %v2149 = vpop.xlane.xlu0 %2148
    %2150 = vadd.xlane.f32.xlu0 %v2119
    %v2151 = vpop.xlane.xlu0 %2150
    %2152 = vadd.xlane.f32.xlu0 %v2121
    %v2153 = vpop.xlane.xlu0 %2152
    %v2154 = vrcp.pop %v2123
    %v2155 = vrcp.pop %v2125
    %v2156 = vrcp.pop %v2127
    %v2157 = vrcp.pop %v2129
    %v2158 = vrcp.pop %v2131
    %v2159 = vrcp.pop %v2133
    %v2160 = vrcp.pop %v2135
    %v2161 = vrcp.pop %v2137
    %v2162 = vrcp.pop %v2139
    %v2163 = vrcp.pop %v2141
    %v2164 = vrcp.pop %v2143
    %v2165 = vrcp.pop %v2145
    %v2166 = vrcp.pop %v2147
    %v2167 = vrcp.pop %v2149
    %v2168 = vrcp.pop %v2151
    %v2169 = vrcp.pop %v2153
    %v2170 = vmul.f32 %v2091, %v2154
    %v2171 = vmul.f32 %v2093, %v2155
    %v2172 = vmul.f32 %v2095, %v2156
    %v2173 = vmul.f32 %v2097, %v2157
    %v2174 = vmul.f32 %v2099, %v2158
    %v2175 = vmul.f32 %v2101, %v2159
    %v2176 = vmul.f32 %v2103, %v2160
    %v2177 = vmul.f32 %v2105, %v2161
    %v2178 = vmul.f32 %v2107, %v2162
    %v2179 = vmul.f32 %v2109, %v2163
    %v2180 = vmul.f32 %v2111, %v2164
    %v2181 = vmul.f32 %v2113, %v2165
    %v2182 = vmul.f32 %v2115, %v2166
    %v2183 = vmul.f32 %v2117, %v2167
    %v2184 = vmul.f32 %v2119, %v2168
    %v2185 = vmul.f32 %v2121, %v2169
    %v2186 = vpack.c.bf16 %v2171, %v2170
    %v2187 = vpack.c.bf16 %v2173, %v2172
    %v2188 = vpack.c.bf16 %v2175, %v2174
    %v2189 = vpack.c.bf16 %v2177, %v2176
    %v2190 = vpack.c.bf16 %v2179, %v2178
    %v2191 = vpack.c.bf16 %v2181, %v2180
    %v2192 = vpack.c.bf16 %v2183, %v2182
    %v2193 = vpack.c.bf16 %v2185, %v2184
    %v2194 = vpack.c.bf16 %v1805, %v1802
    %v2195 = vpack.c.bf16 %v1813, %v1810
    %v2196 = vpack.c.bf16 %v1821, %v1818
    %v2197 = vpack.c.bf16 %v1829, %v1826
    %v2198 = vpack.c.bf16 %v1837, %v1834
    %v2199 = vpack.c.bf16 %v1845, %v1842
    %v2200 = vpack.c.bf16 %v1853, %v1850
    %v2201 = vpack.c.bf16 %v1861, %v1858
    %2202 = vmatprep.subr.bf16.mxu0 0
    %2203 = vmatpush1.bf16.msra.mxu0 %v2194
    %2204 = vmatprep.subr.bf16.mxu0 0
    %2205 = vmatpush1.bf16.msra.mxu0 %v2195
    %2206 = vmatprep.subr.bf16.mxu0 0
    %2207 = vmatpush1.bf16.msra.mxu0 %v2196
    %2208 = vmatprep.subr.bf16.mxu0 0
    %2209 = vmatpush1.bf16.msra.mxu0 %v2197
    %2210 = vmatprep.subr.bf16.mxu0 0
    %2211 = vmatpush1.bf16.msra.mxu0 %v2198
    %2212 = vmatprep.subr.bf16.mxu0 0
    %2213 = vmatpush1.bf16.msra.mxu0 %v2199
    %2214 = vmatprep.subr.bf16.mxu0 0
    %2215 = vmatpush1.bf16.msra.mxu0 %v2200
    %2216 = vmatprep.subr.bf16.mxu0 0
    %2217 = vmatpush1.bf16.msra.mxu0 %v2201
    %2218 = vmatprep.subr.bf16.mxu0 0
    %2219 = vmatpush1.bf16.msra.mxu0 0
    %2220 = vmatprep.subr.bf16.mxu0 0
    %2221 = vmatpush1.bf16.msra.mxu0 0
    %2222 = vmatprep.subr.bf16.mxu0 0
    %2223 = vmatpush1.bf16.msra.mxu0 0
    %2224 = vmatprep.subr.bf16.mxu0 0
    %2225 = vmatpush1.bf16.msra.mxu0 0
    %2226 = vmatprep.subr.bf16.mxu0 0
    %2227 = vmatpush1.bf16.msra.mxu0 0
    %2228 = vmatprep.subr.bf16.mxu0 0
    %2229 = vmatpush1.bf16.msra.mxu0 0
    %2230 = vmatprep.subr.bf16.mxu0 0
    %2231 = vmatpush1.bf16.msra.mxu0 0
    %2232 = vmatprep.subr.bf16.mxu0 0
    %2233 = vmatpush1.bf16.msra.mxu0 0
    %2234 = vmatprep.mubr.bf16.mxu0 0
    %2235 = vmatmul.mubr.bf16.gmra.mrb[0].mxu0 %v2186
    %v2236 = vpop.f32.mrb[0].mxu0
    %v2237 = vadd.f32 0.0, %v2236
    %v2238 = vpop.f32.mrb[0].mxu0
    %v2239 = vpop.f32.mrb[0].mxu0
    %v2240 = vadd.f32 0.0, %v2239
    %v2241 = vpop.f32.mrb[0].mxu0
    %2242 = vmatprep.mubr.bf16.mxu0 0
    %2243 = vmatmul.mubr.bf16.gmra.mrb[0].mxu0 %v2187
    %v2244 = vpop.f32.mrb[0].mxu0
    %v2245 = vadd.f32 0.0, %v2244
    %v2246 = vpop.f32.mrb[0].mxu0
    %v2247 = vpop.f32.mrb[0].mxu0
    %v2248 = vadd.f32 0.0, %v2247
    %v2249 = vpop.f32.mrb[0].mxu0
    %2250 = vmatprep.mubr.bf16.mxu0 0
    %2251 = vmatmul.mubr.bf16.gmra.mrb[0].mxu0 %v2188
    %v2252 = vpop.f32.mrb[0].mxu0
    %v2253 = vadd.f32 0.0, %v2252
    %v2254 = vpop.f32.mrb[0].mxu0
    %v2255 = vpop.f32.mrb[0].mxu0
    %v2256 = vadd.f32 0.0, %v2255
    %v2257 = vpop.f32.mrb[0].mxu0
    %2258 = vmatprep.mubr.bf16.mxu0 0
    %2259 = vmatmul.mubr.bf16.gmra.mrb[0].mxu0 %v2189
    %v2260 = vpop.f32.mrb[0].mxu0
    %v2261 = vadd.f32 0.0, %v2260
    %v2262 = vpop.f32.mrb[0].mxu0
    %v2263 = vpop.f32.mrb[0].mxu0
    %v2264 = vadd.f32 0.0, %v2263
    %v2265 = vpop.f32.mrb[0].mxu0
    %2266 = vmatprep.mubr.bf16.mxu0 0
    %2267 = vmatmul.mubr.bf16.gmra.mrb[0].mxu0 %v2190
    %v2268 = vpop.f32.mrb[0].mxu0
    %v2269 = vadd.f32 0.0, %v2268
    %v2270 = vpop.f32.mrb[0].mxu0
    %v2271 = vpop.f32.mrb[0].mxu0
    %v2272 = vadd.f32 0.0, %v2271
    %v2273 = vpop.f32.mrb[0].mxu0
    %2274 = vmatprep.mubr.bf16.mxu0 0
    %2275 = vmatmul.mubr.bf16.gmra.mrb[0].mxu0 %v2191
    %v2276 = vpop.f32.mrb[0].mxu0
    %v2277 = vadd.f32 0.0, %v2276
    %v2278 = vpop.f32.mrb[0].mxu0
    %v2279 = vpop.f32.mrb[0].mxu0
    %v2280 = vadd.f32 0.0, %v2279
    %v2281 = vpop.f32.mrb[0].mxu0
    %2282 = vmatprep.mubr.bf16.mxu0 0
    %2283 = vmatmul.mubr.bf16.gmra.mrb[0].mxu0 %v2192
    %v2284 = vpop.f32.mrb[0].mxu0
    %v2285 = vadd.f32 0.0, %v2284
    %v2286 = vpop.f32.mrb[0].mxu0
    %v2287 = vpop.f32.mrb[0].mxu0
    %v2288 = vadd.f32 0.0, %v2287
    %v2289 = vpop.f32.mrb[0].mxu0
    %2290 = vmatprep.mubr.bf16.mxu0 0
    %2291 = vmatmul.mubr.bf16.gmra.mrb[0].mxu0 %v2193
    %v2292 = vpop.f32.mrb[0].mxu0
    %v2293 = vadd.f32 0.0, %v2292
    %v2294 = vpop.f32.mrb[0].mxu0
    %v2295 = vpop.f32.mrb[0].mxu0
    %v2296 = vadd.f32 0.0, %v2295
    %v2297 = vpop.f32.mrb[0].mxu0
    %2298 = vdwg.mxu0
    %v2299 = vpack.c.bf16 %v2240, %v2237
    %v2300 = vpack.c.bf16 %v2248, %v2245
    %v2301 = vpack.c.bf16 %v2256, %v2253
    %v2302 = vpack.c.bf16 %v2264, %v2261
    %v2303 = vpack.c.bf16 %v2272, %v2269
    %v2304 = vpack.c.bf16 %v2280, %v2277
    %v2305 = vpack.c.bf16 %v2288, %v2285
    %v2306 = vpack.c.bf16 %v2296, %v2293
    %2315 = vrot.lane.b32.xlu0 %v1864, 112
    %v2316 = vpop.permute.xlu0 %2315
    %2317 = vrot.lane.b32.xlu0 %v1865, 112
    %v2318 = vpop.permute.xlu0 %2317
    %2319 = vrot.lane.b32.xlu0 %v1866, 112
    %v2320 = vpop.permute.xlu0 %2319
    %2321 = vrot.lane.b32.xlu0 %v1867, 112
    %v2322 = vpop.permute.xlu0 %2321
    %2323 = vrot.lane.b32.xlu0 %v1868, 112
    %v2324 = vpop.permute.xlu0 %2323
    %2325 = vrot.lane.b32.xlu0 %v1869, 112
    %v2326 = vpop.permute.xlu0 %2325
    %2327 = vrot.lane.b32.xlu0 %v1870, 112
    %v2328 = vpop.permute.xlu0 %2327
    %2329 = vrot.lane.b32.xlu0 %v1871, 112
    %v2330 = vpop.permute.xlu0 %2329
    %2339 = vrot.lane.b32.xlu0 %v1872, 112
    %v2340 = vpop.permute.xlu0 %2339
    %2341 = vrot.lane.b32.xlu0 %v1873, 112
    %v2342 = vpop.permute.xlu0 %2341
    %2343 = vrot.lane.b32.xlu0 %v1874, 112
    %v2344 = vpop.permute.xlu0 %2343
    %2345 = vrot.lane.b32.xlu0 %v1875, 112
    %v2346 = vpop.permute.xlu0 %2345
    %2347 = vrot.lane.b32.xlu0 %v1876, 112
    %v2348 = vpop.permute.xlu0 %2347
    %2349 = vrot.lane.b32.xlu0 %v1877, 112
    %v2350 = vpop.permute.xlu0 %2349
    %2351 = vrot.lane.b32.xlu0 %v1878, 112
    %v2352 = vpop.permute.xlu0 %2351
    %2353 = vrot.lane.b32.xlu0 %v1879, 112
    %v2354 = vpop.permute.xlu0 %2353
    %v2356 = vsel %vm1880, %v2316, 0
    %v2359 = vsel %vm1880, %v2318, 0
    %v2362 = vsel %vm1880, %v2320, 0
    %v2365 = vsel %vm1880, %v2322, 0
    %v2368 = vsel %vm1880, %v2324, 0
    %v2371 = vsel %vm1880, %v2326, 0
    %v2374 = vsel %vm1880, %v2328, 0
    %v2377 = vsel %vm1880, %v2330, 0
    %v2380 = vsel %vm1880, %v2340, 0
    %v2383 = vsel %vm1880, %v2342, 0
    %v2386 = vsel %vm1880, %v2344, 0
    %v2389 = vsel %vm1880, %v2346, 0
    %v2392 = vsel %vm1880, %v2348, 0
    %v2395 = vsel %vm1880, %v2350, 0
    %v2398 = vsel %vm1880, %v2352, 0
    %v2401 = vsel %vm1880, %v2354, 0
    %2403 = vmatprep.subr.bf16.mxu0 0
    %2404 = vmatpush1.bf16.xpose.msra.mxu0 %v2380
    %2405 = vmatprep.subr.bf16.mxu0 0
    %2406 = vmatpush1.bf16.xpose.msra.mxu0 %v2383
    %2407 = vmatprep.subr.bf16.mxu0 0
    %2408 = vmatpush1.bf16.xpose.msra.mxu0 %v2386
    %2409 = vmatprep.subr.bf16.mxu0 0
    %2410 = vmatpush1.bf16.xpose.msra.mxu0 %v2389
    %2411 = vmatprep.subr.bf16.mxu0 0
    %2412 = vmatpush1.bf16.xpose.msra.mxu0 %v2392
    %2413 = vmatprep.subr.bf16.mxu0 0
    %2414 = vmatpush1.bf16.xpose.msra.mxu0 %v2395
    %2415 = vmatprep.subr.bf16.mxu0 0
    %2416 = vmatpush1.bf16.xpose.msra.mxu0 %v2398
    %2417 = vmatprep.subr.bf16.mxu0 0
    %2418 = vmatpush1.bf16.xpose.msra.mxu0 %v2401
    %2419 = vmatprep.subr.bf16.mxu0 0
    %2420 = vmatpush1.bf16.xpose.msra.mxu0 0
    %2421 = vmatprep.subr.bf16.mxu0 0
    %2422 = vmatpush1.bf16.xpose.msra.mxu0 0
    %2423 = vmatprep.subr.bf16.mxu0 0
    %2424 = vmatpush1.bf16.xpose.msra.mxu0 0
    %2425 = vmatprep.subr.bf16.mxu0 0
    %2426 = vmatpush1.bf16.xpose.msra.mxu0 0
    %2427 = vmatprep.subr.bf16.mxu0 0
    %2428 = vmatpush1.bf16.xpose.msra.mxu0 0
    %2429 = vmatprep.subr.bf16.mxu0 0
    %2430 = vmatpush1.bf16.xpose.msra.mxu0 0
    %2431 = vmatprep.subr.bf16.mxu0 0
    %2432 = vmatpush1.bf16.xpose.msra.mxu0 0
    %2433 = vmatprep.subr.bf16.mxu0 0
    %2434 = vmatpush1.bf16.xpose.msra.mxu0 0
    %2435 = vmatprep.mubr.bf16.mxu0 0
    %2436 = vmatmul.mubr.bf16.gmra.mrb[0].mxu0 %v2356
    %v2437 = vpop.f32.mrb[0].mxu0
    %v2438 = vadd.f32 0.0, %v2437
    %v2439 = vpop.f32.mrb[0].mxu0
    %v2440 = vpop.f32.mrb[0].mxu0
    %v2441 = vadd.f32 0.0, %v2440
    %v2442 = vpop.f32.mrb[0].mxu0
    %2443 = vmatprep.mubr.bf16.mxu0 0
    %2444 = vmatmul.mubr.bf16.gmra.mrb[0].mxu0 %v2359
    %v2445 = vpop.f32.mrb[0].mxu0
    %v2446 = vadd.f32 0.0, %v2445
    %v2447 = vpop.f32.mrb[0].mxu0
    %v2448 = vpop.f32.mrb[0].mxu0
    %v2449 = vadd.f32 0.0, %v2448
    %v2450 = vpop.f32.mrb[0].mxu0
    %2451 = vmatprep.mubr.bf16.mxu0 0
    %2452 = vmatmul.mubr.bf16.gmra.mrb[0].mxu0 %v2362
    %v2453 = vpop.f32.mrb[0].mxu0
    %v2454 = vadd.f32 0.0, %v2453
    %v2455 = vpop.f32.mrb[0].mxu0
    %v2456 = vpop.f32.mrb[0].mxu0
    %v2457 = vadd.f32 0.0, %v2456
    %v2458 = vpop.f32.mrb[0].mxu0
    %2459 = vmatprep.mubr.bf16.mxu0 0
    %2460 = vmatmul.mubr.bf16.gmra.mrb[0].mxu0 %v2365
    %v2461 = vpop.f32.mrb[0].mxu0
    %v2462 = vadd.f32 0.0, %v2461
    %v2463 = vpop.f32.mrb[0].mxu0
    %v2464 = vpop.f32.mrb[0].mxu0
    %v2465 = vadd.f32 0.0, %v2464
    %v2466 = vpop.f32.mrb[0].mxu0
    %2467 = vmatprep.mubr.bf16.mxu0 0
    %2468 = vmatmul.mubr.bf16.gmra.mrb[0].mxu0 %v2368
    %v2469 = vpop.f32.mrb[0].mxu0
    %v2470 = vadd.f32 0.0, %v2469
    %v2471 = vpop.f32.mrb[0].mxu0
    %v2472 = vpop.f32.mrb[0].mxu0
    %v2473 = vadd.f32 0.0, %v2472
    %v2474 = vpop.f32.mrb[0].mxu0
    %2475 = vmatprep.mubr.bf16.mxu0 0
    %2476 = vmatmul.mubr.bf16.gmra.mrb[0].mxu0 %v2371
    %v2477 = vpop.f32.mrb[0].mxu0
    %v2478 = vadd.f32 0.0, %v2477
    %v2479 = vpop.f32.mrb[0].mxu0
    %v2480 = vpop.f32.mrb[0].mxu0
    %v2481 = vadd.f32 0.0, %v2480
    %v2482 = vpop.f32.mrb[0].mxu0
    %2483 = vmatprep.mubr.bf16.mxu0 0
    %2484 = vmatmul.mubr.bf16.gmra.mrb[0].mxu0 %v2374
    %v2485 = vpop.f32.mrb[0].mxu0
    %v2486 = vadd.f32 0.0, %v2485
    %v2487 = vpop.f32.mrb[0].mxu0
    %v2488 = vpop.f32.mrb[0].mxu0
    %v2489 = vadd.f32 0.0, %v2488
    %v2490 = vpop.f32.mrb[0].mxu0
    %2491 = vmatprep.mubr.bf16.mxu0 0
    %2492 = vmatmul.mubr.bf16.gmra.mrb[0].mxu0 %v2377
    %v2493 = vpop.f32.mrb[0].mxu0
    %v2494 = vadd.f32 0.0, %v2493
    %v2495 = vpop.f32.mrb[0].mxu0
    %v2496 = vpop.f32.mrb[0].mxu0
    %v2497 = vadd.f32 0.0, %v2496
    %v2498 = vpop.f32.mrb[0].mxu0
    %2499 = vdwg.mxu0
    %v2500 = vmul.f32 %v2438, 0.25
    %v2501 = vmul.f32 %v2441, 0.25
    %v2502 = vmul.f32 %v2446, 0.25
    %v2503 = vmul.f32 %v2449, 0.25
    %v2504 = vmul.f32 %v2454, 0.25
    %v2505 = vmul.f32 %v2457, 0.25
    %v2506 = vmul.f32 %v2462, 0.25
    %v2507 = vmul.f32 %v2465, 0.25
    %v2508 = vmul.f32 %v2470, 0.25
    %v2509 = vmul.f32 %v2473, 0.25
    %v2510 = vmul.f32 %v2478, 0.25
    %v2511 = vmul.f32 %v2481, 0.25
    %v2512 = vmul.f32 %v2486, 0.25
    %v2513 = vmul.f32 %v2489, 0.25
    %v2514 = vmul.f32 %v2494, 0.25
    %v2515 = vmul.f32 %v2497, 0.25
    %2516 = vmax.xlane.f32.xlu0 %v2500
    %v2517 = vpop.xlane.xlu0 %2516
    %2518 = vmax.xlane.f32.xlu0 %v2501
    %v2519 = vpop.xlane.xlu0 %2518
    %2520 = vmax.xlane.f32.xlu0 %v2502
    %v2521 = vpop.xlane.xlu0 %2520
    %2522 = vmax.xlane.f32.xlu0 %v2503
    %v2523 = vpop.xlane.xlu0 %2522
    %2524 = vmax.xlane.f32.xlu0 %v2504
    %v2525 = vpop.xlane.xlu0 %2524
    %2526 = vmax.xlane.f32.xlu0 %v2505
    %v2527 = vpop.xlane.xlu0 %2526
    %2528 = vmax.xlane.f32.xlu0 %v2506
    %v2529 = vpop.xlane.xlu0 %2528
    %2530 = vmax.xlane.f32.xlu0 %v2507
    %v2531 = vpop.xlane.xlu0 %2530
    %2532 = vmax.xlane.f32.xlu0 %v2508
    %v2533 = vpop.xlane.xlu0 %2532
    %2534 = vmax.xlane.f32.xlu0 %v2509
    %v2535 = vpop.xlane.xlu0 %2534
    %2536 = vmax.xlane.f32.xlu0 %v2510
    %v2537 = vpop.xlane.xlu0 %2536
    %2538 = vmax.xlane.f32.xlu0 %v2511
    %v2539 = vpop.xlane.xlu0 %2538
    %2540 = vmax.xlane.f32.xlu0 %v2512
    %v2541 = vpop.xlane.xlu0 %2540
    %2542 = vmax.xlane.f32.xlu0 %v2513
    %v2543 = vpop.xlane.xlu0 %2542
    %2544 = vmax.xlane.f32.xlu0 %v2514
    %v2545 = vpop.xlane.xlu0 %2544
    %2546 = vmax.xlane.f32.xlu0 %v2515
    %v2547 = vpop.xlane.xlu0 %2546
    %v2548 = vsub.f32 %v2500, %v2517
    %v2549 = vsub.f32 %v2501, %v2519
    %v2550 = vsub.f32 %v2502, %v2521
    %v2551 = vsub.f32 %v2503, %v2523
    %v2552 = vsub.f32 %v2504, %v2525
    %v2553 = vsub.f32 %v2505, %v2527
    %v2554 = vsub.f32 %v2506, %v2529
    %v2555 = vsub.f32 %v2507, %v2531
    %v2556 = vsub.f32 %v2508, %v2533
    %v2557 = vsub.f32 %v2509, %v2535
    %v2558 = vsub.f32 %v2510, %v2537
    %v2559 = vsub.f32 %v2511, %v2539
    %v2560 = vsub.f32 %v2512, %v2541
    %v2561 = vsub.f32 %v2513, %v2543
    %v2562 = vsub.f32 %v2514, %v2545
    %v2563 = vsub.f32 %v2515, %v2547
    %v2564 = vmul.f32 %v2548, 1.442695
    %v2565 = vpow.pop %v2564
    %v2566 = vmul.f32 %v2549, 1.442695
    %v2567 = vpow.pop %v2566
    %v2568 = vmul.f32 %v2550, 1.442695
    %v2569 = vpow.pop %v2568
    %v2570 = vmul.f32 %v2551, 1.442695
    %v2571 = vpow.pop %v2570
    %v2572 = vmul.f32 %v2552, 1.442695
    %v2573 = vpow.pop %v2572
    %v2574 = vmul.f32 %v2553, 1.442695
    %v2575 = vpow.pop %v2574
    %v2576 = vmul.f32 %v2554, 1.442695
    %v2577 = vpow.pop %v2576
    %v2578 = vmul.f32 %v2555, 1.442695
    %v2579 = vpow.pop %v2578
    %v2580 = vmul.f32 %v2556, 1.442695
    %v2581 = vpow.pop %v2580
    %v2582 = vmul.f32 %v2557, 1.442695
    %v2583 = vpow.pop %v2582
    %v2584 = vmul.f32 %v2558, 1.442695
    %v2585 = vpow.pop %v2584
    %v2586 = vmul.f32 %v2559, 1.442695
    %v2587 = vpow.pop %v2586
    %v2588 = vmul.f32 %v2560, 1.442695
    %v2589 = vpow.pop %v2588
    %v2590 = vmul.f32 %v2561, 1.442695
    %v2591 = vpow.pop %v2590
    %v2592 = vmul.f32 %v2562, 1.442695
    %v2593 = vpow.pop %v2592
    %v2594 = vmul.f32 %v2563, 1.442695
    %v2595 = vpow.pop %v2594
    %2596 = vadd.xlane.f32.xlu0 %v2565
    %v2597 = vpop.xlane.xlu0 %2596
    %2598 = vadd.xlane.f32.xlu0 %v2567
    %v2599 = vpop.xlane.xlu0 %2598
    %2600 = vadd.xlane.f32.xlu0 %v2569
    %v2601 = vpop.xlane.xlu0 %2600
    %2602 = vadd.xlane.f32.xlu0 %v2571
    %v2603 = vpop.xlane.xlu0 %2602
    %2604 = vadd.xlane.f32.xlu0 %v2573
    %v2605 = vpop.xlane.xlu0 %2604
    %2606 = vadd.xlane.f32.xlu0 %v2575
    %v2607 = vpop.xlane.xlu0 %2606
    %2608 = vadd.xlane.f32.xlu0 %v2577
    %v2609 = vpop.xlane.xlu0 %2608
    %2610 = vadd.xlane.f32.xlu0 %v2579
    %v2611 = vpop.xlane.xlu0 %2610
    %2612 = vadd.xlane.f32.xlu0 %v2581
    %v2613 = vpop.xlane.xlu0 %2612
    %2614 = vadd.xlane.f32.xlu0 %v2583
    %v2615 = vpop.xlane.xlu0 %2614
    %2616 = vadd.xlane.f32.xlu0 %v2585
    %v2617 = vpop.xlane.xlu0 %2616
    %2618 = vadd.xlane.f32.xlu0 %v2587
    %v2619 = vpop.xlane.xlu0 %2618
    %2620 = vadd.xlane.f32.xlu0 %v2589
    %v2621 = vpop.xlane.xlu0 %2620
    %2622 = vadd.xlane.f32.xlu0 %v2591
    %v2623 = vpop.xlane.xlu0 %2622
    %2624 = vadd.xlane.f32.xlu0 %v2593
    %v2625 = vpop.xlane.xlu0 %2624
    %2626 = vadd.xlane.f32.xlu0 %v2595
    %v2627 = vpop.xlane.xlu0 %2626
    %v2628 = vrcp.pop %v2597
    %v2629 = vrcp.pop %v2599
    %v2630 = vrcp.pop %v2601
    %v2631 = vrcp.pop %v2603
    %v2632 = vrcp.pop %v2605
    %v2633 = vrcp.pop %v2607
    %v2634 = vrcp.pop %v2609
    %v2635 = vrcp.pop %v2611
    %v2636 = vrcp.pop %v2613
    %v2637 = vrcp.pop %v2615
    %v2638 = vrcp.pop %v2617
    %v2639 = vrcp.pop %v2619
    %v2640 = vrcp.pop %v2621
    %v2641 = vrcp.pop %v2623
    %v2642 = vrcp.pop %v2625
    %v2643 = vrcp.pop %v2627
    %v2644 = vmul.f32 %v2565, %v2628
    %v2645 = vmul.f32 %v2567, %v2629
    %v2646 = vmul.f32 %v2569, %v2630
    %v2647 = vmul.f32 %v2571, %v2631
    %v2648 = vmul.f32 %v2573, %v2632
    %v2649 = vmul.f32 %v2575, %v2633
    %v2650 = vmul.f32 %v2577, %v2634
    %v2651 = vmul.f32 %v2579, %v2635
    %v2652 = vmul.f32 %v2581, %v2636
    %v2653 = vmul.f32 %v2583, %v2637
    %v2654 = vmul.f32 %v2585, %v2638
    %v2655 = vmul.f32 %v2587, %v2639
    %v2656 = vmul.f32 %v2589, %v2640
    %v2657 = vmul.f32 %v2591, %v2641
    %v2658 = vmul.f32 %v2593, %v2642
    %v2659 = vmul.f32 %v2595, %v2643
    %v2660 = vpack.c.bf16 %v2645, %v2644
    %v2661 = vpack.c.bf16 %v2647, %v2646
    %v2662 = vpack.c.bf16 %v2649, %v2648
    %v2663 = vpack.c.bf16 %v2651, %v2650
    %v2664 = vpack.c.bf16 %v2653, %v2652
    %v2665 = vpack.c.bf16 %v2655, %v2654
    %v2666 = vpack.c.bf16 %v2657, %v2656
    %v2667 = vpack.c.bf16 %v2659, %v2658
    %2676 = vrot.lane.b32.xlu0 %v2194, 112
    %v2677 = vpop.permute.xlu0 %2676
    %2678 = vrot.lane.b32.xlu0 %v2195, 112
    %v2679 = vpop.permute.xlu0 %2678
    %2680 = vrot.lane.b32.xlu0 %v2196, 112
    %v2681 = vpop.permute.xlu0 %2680
    %2682 = vrot.lane.b32.xlu0 %v2197, 112
    %v2683 = vpop.permute.xlu0 %2682
    %2684 = vrot.lane.b32.xlu0 %v2198, 112
    %v2685 = vpop.permute.xlu0 %2684
    %2686 = vrot.lane.b32.xlu0 %v2199, 112
    %v2687 = vpop.permute.xlu0 %2686
    %2688 = vrot.lane.b32.xlu0 %v2200, 112
    %v2689 = vpop.permute.xlu0 %2688
    %2690 = vrot.lane.b32.xlu0 %v2201, 112
    %v2691 = vpop.permute.xlu0 %2690
    %2700 = vmatprep.subr.bf16.mxu0 0
    %2701 = vmatpush1.bf16.msra.mxu0 %v2677
    %2702 = vmatprep.subr.bf16.mxu0 0
    %2703 = vmatpush1.bf16.msra.mxu0 %v2679
    %2704 = vmatprep.subr.bf16.mxu0 0
    %2705 = vmatpush1.bf16.msra.mxu0 %v2681
    %2706 = vmatprep.subr.bf16.mxu0 0
    %2707 = vmatpush1.bf16.msra.mxu0 %v2683
    %2708 = vmatprep.subr.bf16.mxu0 0
    %2709 = vmatpush1.bf16.msra.mxu0 %v2685
    %2710 = vmatprep.subr.bf16.mxu0 0
    %2711 = vmatpush1.bf16.msra.mxu0 %v2687
    %2712 = vmatprep.subr.bf16.mxu0 0
    %2713 = vmatpush1.bf16.msra.mxu0 %v2689
    %2714 = vmatprep.subr.bf16.mxu0 0
    %2715 = vmatpush1.bf16.msra.mxu0 %v2691
    %2716 = vmatprep.subr.bf16.mxu0 0
    %2717 = vmatpush1.bf16.msra.mxu0 0
    %2718 = vmatprep.subr.bf16.mxu0 0
    %2719 = vmatpush1.bf16.msra.mxu0 0
    %2720 = vmatprep.subr.bf16.mxu0 0
    %2721 = vmatpush1.bf16.msra.mxu0 0
    %2722 = vmatprep.subr.bf16.mxu0 0
    %2723 = vmatpush1.bf16.msra.mxu0 0
    %2724 = vmatprep.subr.bf16.mxu0 0
    %2725 = vmatpush1.bf16.msra.mxu0 0
    %2726 = vmatprep.subr.bf16.mxu0 0
    %2727 = vmatpush1.bf16.msra.mxu0 0
    %2728 = vmatprep.subr.bf16.mxu0 0
    %2729 = vmatpush1.bf16.msra.mxu0 0
    %2730 = vmatprep.subr.bf16.mxu0 0
    %2731 = vmatpush1.bf16.msra.mxu0 0
    %2732 = vmatprep.mubr.bf16.mxu0 0
    %2733 = vmatmul.mubr.bf16.gmra.mrb[0].mxu0 %v2660
    %v2734 = vpop.f32.mrb[0].mxu0
    %v2735 = vadd.f32 0.0, %v2734
    %v2736 = vpop.f32.mrb[0].mxu0
    %v2737 = vpop.f32.mrb[0].mxu0
    %v2738 = vadd.f32 0.0, %v2737
    %v2739 = vpop.f32.mrb[0].mxu0
    %2740 = vmatprep.mubr.bf16.mxu0 0
    %2741 = vmatmul.mubr.bf16.gmra.mrb[0].mxu0 %v2661
    %v2742 = vpop.f32.mrb[0].mxu0
    %v2743 = vadd.f32 0.0, %v2742
    %v2744 = vpop.f32.mrb[0].mxu0
    %v2745 = vpop.f32.mrb[0].mxu0
    %v2746 = vadd.f32 0.0, %v2745
    %v2747 = vpop.f32.mrb[0].mxu0
    %2748 = vmatprep.mubr.bf16.mxu0 0
    %2749 = vmatmul.mubr.bf16.gmra.mrb[0].mxu0 %v2662
    %v2750 = vpop.f32.mrb[0].mxu0
    %v2751 = vadd.f32 0.0, %v2750
    %v2752 = vpop.f32.mrb[0].mxu0
    %v2753 = vpop.f32.mrb[0].mxu0
    %v2754 = vadd.f32 0.0, %v2753
    %v2755 = vpop.f32.mrb[0].mxu0
    %2756 = vmatprep.mubr.bf16.mxu0 0
    %2757 = vmatmul.mubr.bf16.gmra.mrb[0].mxu0 %v2663
    %v2758 = vpop.f32.mrb[0].mxu0
    %v2759 = vadd.f32 0.0, %v2758
    %v2760 = vpop.f32.mrb[0].mxu0
    %v2761 = vpop.f32.mrb[0].mxu0
    %v2762 = vadd.f32 0.0, %v2761
    %v2763 = vpop.f32.mrb[0].mxu0
    %2764 = vmatprep.mubr.bf16.mxu0 0
    %2765 = vmatmul.mubr.bf16.gmra.mrb[0].mxu0 %v2664
    %v2766 = vpop.f32.mrb[0].mxu0
    %v2767 = vadd.f32 0.0, %v2766
    %v2768 = vpop.f32.mrb[0].mxu0
    %v2769 = vpop.f32.mrb[0].mxu0
    %v2770 = vadd.f32 0.0, %v2769
    %v2771 = vpop.f32.mrb[0].mxu0
    %2772 = vmatprep.mubr.bf16.mxu0 0
    %2773 = vmatmul.mubr.bf16.gmra.mrb[0].mxu0 %v2665
    %v2774 = vpop.f32.mrb[0].mxu0
    %v2775 = vadd.f32 0.0, %v2774
    %v2776 = vpop.f32.mrb[0].mxu0
    %v2777 = vpop.f32.mrb[0].mxu0
    %v2778 = vadd.f32 0.0, %v2777
    %v2779 = vpop.f32.mrb[0].mxu0
    %2780 = vmatprep.mubr.bf16.mxu0 0
    %2781 = vmatmul.mubr.bf16.gmra.mrb[0].mxu0 %v2666
    %v2782 = vpop.f32.mrb[0].mxu0
    %v2783 = vadd.f32 0.0, %v2782
    %v2784 = vpop.f32.mrb[0].mxu0
    %v2785 = vpop.f32.mrb[0].mxu0
    %v2786 = vadd.f32 0.0, %v2785
    %v2787 = vpop.f32.mrb[0].mxu0
    %2788 = vmatprep.mubr.bf16.mxu0 0
    %2789 = vmatmul.mubr.bf16.gmra.mrb[0].mxu0 %v2667
    %v2790 = vpop.f32.mrb[0].mxu0
    %v2791 = vadd.f32 0.0, %v2790
    %v2792 = vpop.f32.mrb[0].mxu0
    %v2793 = vpop.f32.mrb[0].mxu0
    %v2794 = vadd.f32 0.0, %v2793
    %v2795 = vpop.f32.mrb[0].mxu0
    %2796 = vdwg.mxu0
    %v2797 = vpack.c.bf16 %v2738, %v2735
    %v2798 = vpack.c.bf16 %v2746, %v2743
    %v2799 = vpack.c.bf16 %v2754, %v2751
    %v2800 = vpack.c.bf16 %v2762, %v2759
    %v2801 = vpack.c.bf16 %v2770, %v2767
    %v2802 = vpack.c.bf16 %v2778, %v2775
    %v2803 = vpack.c.bf16 %v2786, %v2783
    %v2804 = vpack.c.bf16 %v2794, %v2791
    %v2807 = vunpack.c.l.b16 %v1462
    %v2808 = vunpack.c.l.b16 %v1463
    %v2809 = vpack.c.b16 %v2808, %v2807
    %v2812 = vsel %vm1880, %v2797, 0
    %v2815 = vsel %vm1880, %v2798, 0
    %v2818 = vsel %vm1880, %v2799, 0
    %v2821 = vsel %vm1880, %v2800, 0
    %v2824 = vsel %vm1880, %v2801, 0
    %v2827 = vsel %vm1880, %v2802, 0
    %v2830 = vsel %vm1880, %v2803, 0
    %v2833 = vsel %vm1880, %v2804, 0
    %2835 = vmatprep.subr.bf16.mxu0 0
    %2836 = vmatpush1.bf16.msra.mxu0 %v2809
    %2837 = vmatprep.subr.bf16.mxu0 0
    %2838 = vmatpush1.bf16.msra.mxu0 0
    %2839 = vmatprep.subr.bf16.mxu0 0
    %2840 = vmatpush1.bf16.msra.mxu0 0
    %2841 = vmatprep.subr.bf16.mxu0 0
    %2842 = vmatpush1.bf16.msra.mxu0 0
    %2843 = vmatprep.subr.bf16.mxu0 0
    %2844 = vmatpush1.bf16.msra.mxu0 0
    %2845 = vmatprep.subr.bf16.mxu0 0
    %2846 = vmatpush1.bf16.msra.mxu0 0
    %2847 = vmatprep.subr.bf16.mxu0 0
    %2848 = vmatpush1.bf16.msra.mxu0 0
    %2849 = vmatprep.subr.bf16.mxu0 0
    %2850 = vmatpush1.bf16.msra.mxu0 0
    %2851 = vmatprep.subr.bf16.mxu0 0
    %2852 = vmatpush1.bf16.msra.mxu0 0
    %2853 = vmatprep.subr.bf16.mxu0 0
    %2854 = vmatpush1.bf16.msra.mxu0 0
    %2855 = vmatprep.subr.bf16.mxu0 0
    %2856 = vmatpush1.bf16.msra.mxu0 0
    %2857 = vmatprep.subr.bf16.mxu0 0
    %2858 = vmatpush1.bf16.msra.mxu0 0
    %2859 = vmatprep.subr.bf16.mxu0 0
    %2860 = vmatpush1.bf16.msra.mxu0 0
    %2861 = vmatprep.subr.bf16.mxu0 0
    %2862 = vmatpush1.bf16.msra.mxu0 0
    %2863 = vmatprep.subr.bf16.mxu0 0
    %2864 = vmatpush1.bf16.msra.mxu0 0
    %2865 = vmatprep.subr.bf16.mxu0 0
    %2866 = vmatpush1.bf16.msra.mxu0 0
    %2867 = vmatprep.mubr.bf16.mxu0 0
    %2868 = vmatmul.mubr.bf16.gmra.mrb[0].mxu0 %v2812
    %v2869 = vpop.f32.mrb[0].mxu0
    %v2870 = vadd.f32 0.0, %v2869
    %v2871 = vpop.f32.mrb[0].mxu0
    %v2872 = vpop.f32.mrb[0].mxu0
    %v2873 = vadd.f32 0.0, %v2872
    %v2874 = vpop.f32.mrb[0].mxu0
    %2875 = vmatprep.mubr.bf16.mxu0 0
    %2876 = vmatmul.mubr.bf16.gmra.mrb[0].mxu0 %v2815
    %v2877 = vpop.f32.mrb[0].mxu0
    %v2878 = vadd.f32 0.0, %v2877
    %v2879 = vpop.f32.mrb[0].mxu0
    %v2880 = vpop.f32.mrb[0].mxu0
    %v2881 = vadd.f32 0.0, %v2880
    %v2882 = vpop.f32.mrb[0].mxu0
    %2883 = vmatprep.mubr.bf16.mxu0 0
    %2884 = vmatmul.mubr.bf16.gmra.mrb[0].mxu0 %v2818
    %v2885 = vpop.f32.mrb[0].mxu0
    %v2886 = vadd.f32 0.0, %v2885
    %v2887 = vpop.f32.mrb[0].mxu0
    %v2888 = vpop.f32.mrb[0].mxu0
    %v2889 = vadd.f32 0.0, %v2888
    %v2890 = vpop.f32.mrb[0].mxu0
    %2891 = vmatprep.mubr.bf16.mxu0 0
    %2892 = vmatmul.mubr.bf16.gmra.mrb[0].mxu0 %v2821
    %v2893 = vpop.f32.mrb[0].mxu0
    %v2894 = vadd.f32 0.0, %v2893
    %v2895 = vpop.f32.mrb[0].mxu0
    %v2896 = vpop.f32.mrb[0].mxu0
    %v2897 = vadd.f32 0.0, %v2896
    %v2898 = vpop.f32.mrb[0].mxu0
    %2899 = vmatprep.mubr.bf16.mxu0 0
    %2900 = vmatmul.mubr.bf16.gmra.mrb[0].mxu0 %v2824
    %v2901 = vpop.f32.mrb[0].mxu0
    %v2902 = vadd.f32 0.0, %v2901
    %v2903 = vpop.f32.mrb[0].mxu0
    %v2904 = vpop.f32.mrb[0].mxu0
    %v2905 = vadd.f32 0.0, %v2904
    %v2906 = vpop.f32.mrb[0].mxu0
    %2907 = vmatprep.mubr.bf16.mxu0 0
    %2908 = vmatmul.mubr.bf16.gmra.mrb[0].mxu0 %v2827
    %v2909 = vpop.f32.mrb[0].mxu0
    %v2910 = vadd.f32 0.0, %v2909
    %v2911 = vpop.f32.mrb[0].mxu0
    %v2912 = vpop.f32.mrb[0].mxu0
    %v2913 = vadd.f32 0.0, %v2912
    %v2914 = vpop.f32.mrb[0].mxu0
    %2915 = vmatprep.mubr.bf16.mxu0 0
    %2916 = vmatmul.mubr.bf16.gmra.mrb[0].mxu0 %v2830
    %v2917 = vpop.f32.mrb[0].mxu0
    %v2918 = vadd.f32 0.0, %v2917
    %v2919 = vpop.f32.mrb[0].mxu0
    %v2920 = vpop.f32.mrb[0].mxu0
    %v2921 = vadd.f32 0.0, %v2920
    %v2922 = vpop.f32.mrb[0].mxu0
    %2923 = vmatprep.mubr.bf16.mxu0 0
    %2924 = vmatmul.mubr.bf16.gmra.mrb[0].mxu0 %v2833
    %v2925 = vpop.f32.mrb[0].mxu0
    %v2926 = vadd.f32 0.0, %v2925
    %v2927 = vpop.f32.mrb[0].mxu0
    %v2928 = vpop.f32.mrb[0].mxu0
    %v2929 = vadd.f32 0.0, %v2928
    %v2930 = vpop.f32.mrb[0].mxu0
    %2931 = vdwg.mxu0
    %v2934 = vunpack.c.l.b16 %v1460
    %v2935 = vunpack.c.l.b16 %v1461
    %v2936 = vpack.c.b16 %v2935, %v2934
    %v2939 = vsel %vm1880, %v2299, 0
    %v2942 = vsel %vm1880, %v2300, 0
    %v2945 = vsel %vm1880, %v2301, 0
    %v2948 = vsel %vm1880, %v2302, 0
    %v2951 = vsel %vm1880, %v2303, 0
    %v2954 = vsel %vm1880, %v2304, 0
    %v2957 = vsel %vm1880, %v2305, 0
    %v2960 = vsel %vm1880, %v2306, 0
    %2962 = vmatprep.subr.bf16.mxu0 0
    %2963 = vmatpush1.bf16.msra.mxu0 %v2936
    %2964 = vmatprep.subr.bf16.mxu0 0
    %2965 = vmatpush1.bf16.msra.mxu0 0
    %2966 = vmatprep.subr.bf16.mxu0 0
    %2967 = vmatpush1.bf16.msra.mxu0 0
    %2968 = vmatprep.subr.bf16.mxu0 0
    %2969 = vmatpush1.bf16.msra.mxu0 0
    %2970 = vmatprep.subr.bf16.mxu0 0
    %2971 = vmatpush1.bf16.msra.mxu0 0
    %2972 = vmatprep.subr.bf16.mxu0 0
    %2973 = vmatpush1.bf16.msra.mxu0 0
    %2974 = vmatprep.subr.bf16.mxu0 0
    %2975 = vmatpush1.bf16.msra.mxu0 0
    %2976 = vmatprep.subr.bf16.mxu0 0
    %2977 = vmatpush1.bf16.msra.mxu0 0
    %2978 = vmatprep.subr.bf16.mxu0 0
    %2979 = vmatpush1.bf16.msra.mxu0 0
    %2980 = vmatprep.subr.bf16.mxu0 0
    %2981 = vmatpush1.bf16.msra.mxu0 0
    %2982 = vmatprep.subr.bf16.mxu0 0
    %2983 = vmatpush1.bf16.msra.mxu0 0
    %2984 = vmatprep.subr.bf16.mxu0 0
    %2985 = vmatpush1.bf16.msra.mxu0 0
    %2986 = vmatprep.subr.bf16.mxu0 0
    %2987 = vmatpush1.bf16.msra.mxu0 0
    %2988 = vmatprep.subr.bf16.mxu0 0
    %2989 = vmatpush1.bf16.msra.mxu0 0
    %2990 = vmatprep.subr.bf16.mxu0 0
    %2991 = vmatpush1.bf16.msra.mxu0 0
    %2992 = vmatprep.subr.bf16.mxu0 0
    %2993 = vmatpush1.bf16.msra.mxu0 0
    %2994 = vmatprep.mubr.bf16.mxu0 0
    %2995 = vmatmul.mubr.bf16.gmra.mrb[0].mxu0 %v2939
    %v2996 = vpop.f32.mrb[0].mxu0
    %v2997 = vadd.f32 %v2870, %v2996
    %v2998 = vpop.f32.mrb[0].mxu0
    %v2999 = vpop.f32.mrb[0].mxu0
    %v3000 = vadd.f32 %v2873, %v2999
    %v3001 = vpop.f32.mrb[0].mxu0
    %3002 = vmatprep.mubr.bf16.mxu0 0
    %3003 = vmatmul.mubr.bf16.gmra.mrb[0].mxu0 %v2942
    %v3004 = vpop.f32.mrb[0].mxu0
    %v3005 = vadd.f32 %v2878, %v3004
    %v3006 = vpop.f32.mrb[0].mxu0
    %v3007 = vpop.f32.mrb[0].mxu0
    %v3008 = vadd.f32 %v2881, %v3007
    %v3009 = vpop.f32.mrb[0].mxu0
    %3010 = vmatprep.mubr.bf16.mxu0 0
    %3011 = vmatmul.mubr.bf16.gmra.mrb[0].mxu0 %v2945
    %v3012 = vpop.f32.mrb[0].mxu0
    %v3013 = vadd.f32 %v2886, %v3012
    %v3014 = vpop.f32.mrb[0].mxu0
    %v3015 = vpop.f32.mrb[0].mxu0
    %v3016 = vadd.f32 %v2889, %v3015
    %v3017 = vpop.f32.mrb[0].mxu0
    %3018 = vmatprep.mubr.bf16.mxu0 0
    %3019 = vmatmul.mubr.bf16.gmra.mrb[0].mxu0 %v2948
    %v3020 = vpop.f32.mrb[0].mxu0
    %v3021 = vadd.f32 %v2894, %v3020
    %v3022 = vpop.f32.mrb[0].mxu0
    %v3023 = vpop.f32.mrb[0].mxu0
    %v3024 = vadd.f32 %v2897, %v3023
    %v3025 = vpop.f32.mrb[0].mxu0
    %3026 = vmatprep.mubr.bf16.mxu0 0
    %3027 = vmatmul.mubr.bf16.gmra.mrb[0].mxu0 %v2951
    %v3028 = vpop.f32.mrb[0].mxu0
    %v3029 = vadd.f32 %v2902, %v3028
    %v3030 = vpop.f32.mrb[0].mxu0
    %v3031 = vpop.f32.mrb[0].mxu0
    %v3032 = vadd.f32 %v2905, %v3031
    %v3033 = vpop.f32.mrb[0].mxu0
    %3034 = vmatprep.mubr.bf16.mxu0 0
    %3035 = vmatmul.mubr.bf16.gmra.mrb[0].mxu0 %v2954
    %v3036 = vpop.f32.mrb[0].mxu0
    %v3037 = vadd.f32 %v2910, %v3036
    %v3038 = vpop.f32.mrb[0].mxu0
    %v3039 = vpop.f32.mrb[0].mxu0
    %v3040 = vadd.f32 %v2913, %v3039
    %v3041 = vpop.f32.mrb[0].mxu0
    %3042 = vmatprep.mubr.bf16.mxu0 0
    %3043 = vmatmul.mubr.bf16.gmra.mrb[0].mxu0 %v2957
    %v3044 = vpop.f32.mrb[0].mxu0
    %v3045 = vadd.f32 %v2918, %v3044
    %v3046 = vpop.f32.mrb[0].mxu0
    %v3047 = vpop.f32.mrb[0].mxu0
    %v3048 = vadd.f32 %v2921, %v3047
    %v3049 = vpop.f32.mrb[0].mxu0
    %3050 = vmatprep.mubr.bf16.mxu0 0
    %3051 = vmatmul.mubr.bf16.gmra.mrb[0].mxu0 %v2960
    %v3052 = vpop.f32.mrb[0].mxu0
    %v3053 = vadd.f32 %v2926, %v3052
    %v3054 = vpop.f32.mrb[0].mxu0
    %v3055 = vpop.f32.mrb[0].mxu0
    %v3056 = vadd.f32 %v2929, %v3055
    %v3057 = vpop.f32.mrb[0].mxu0
    %3058 = vdwg.mxu0
    %3059 = vrot.lane.b32.xlu0 %v1864, 96
    %v3060 = vpop.permute.xlu0 %3059
    %3061 = vrot.lane.b32.xlu0 %v1865, 96
    %v3062 = vpop.permute.xlu0 %3061
    %3063 = vrot.lane.b32.xlu0 %v1866, 96
    %v3064 = vpop.permute.xlu0 %3063
    %3065 = vrot.lane.b32.xlu0 %v1867, 96
    %v3066 = vpop.permute.xlu0 %3065
    %3067 = vrot.lane.b32.xlu0 %v1868, 96
    %v3068 = vpop.permute.xlu0 %3067
    %3069 = vrot.lane.b32.xlu0 %v1869, 96
    %v3070 = vpop.permute.xlu0 %3069
    %3071 = vrot.lane.b32.xlu0 %v1870, 96
    %v3072 = vpop.permute.xlu0 %3071
    %3073 = vrot.lane.b32.xlu0 %v1871, 96
    %v3074 = vpop.permute.xlu0 %3073
    %3075 = vrot.lane.b32.xlu0 %v1872, 96
    %v3076 = vpop.permute.xlu0 %3075
    %3077 = vrot.lane.b32.xlu0 %v1873, 96
    %v3078 = vpop.permute.xlu0 %3077
    %3079 = vrot.lane.b32.xlu0 %v1874, 96
    %v3080 = vpop.permute.xlu0 %3079
    %3081 = vrot.lane.b32.xlu0 %v1875, 96
    %v3082 = vpop.permute.xlu0 %3081
    %3083 = vrot.lane.b32.xlu0 %v1876, 96
    %v3084 = vpop.permute.xlu0 %3083
    %3085 = vrot.lane.b32.xlu0 %v1877, 96
    %v3086 = vpop.permute.xlu0 %3085
    %3087 = vrot.lane.b32.xlu0 %v1878, 96
    %v3088 = vpop.permute.xlu0 %3087
    %3089 = vrot.lane.b32.xlu0 %v1879, 96
    %v3090 = vpop.permute.xlu0 %3089
    %v3092 = vsel %vm1880, %v3060, 0
    %v3095 = vsel %vm1880, %v3062, 0
    %v3098 = vsel %vm1880, %v3064, 0
    %v3101 = vsel %vm1880, %v3066, 0
    %v3104 = vsel %vm1880, %v3068, 0
    %v3107 = vsel %vm1880, %v3070, 0
    %v3110 = vsel %vm1880, %v3072, 0
    %v3113 = vsel %vm1880, %v3074, 0
    %v3116 = vsel %vm1880, %v3076, 0
    %v3119 = vsel %vm1880, %v3078, 0
    %v3122 = vsel %vm1880, %v3080, 0
    %v3125 = vsel %vm1880, %v3082, 0
    %v3128 = vsel %vm1880, %v3084, 0
    %v3131 = vsel %vm1880, %v3086, 0
    %v3134 = vsel %vm1880, %v3088, 0
    %v3137 = vsel %vm1880, %v3090, 0
    %3139 = vmatprep.subr.bf16.mxu0 0
    %3140 = vmatpush1.bf16.xpose.msra.mxu0 %v3116
    %3141 = vmatprep.subr.bf16.mxu0 0
    %3142 = vmatpush1.bf16.xpose.msra.mxu0 %v3119
    %3143 = vmatprep.subr.bf16.mxu0 0
    %3144 = vmatpush1.bf16.xpose.msra.mxu0 %v3122
    %3145 = vmatprep.subr.bf16.mxu0 0
    %3146 = vmatpush1.bf16.xpose.msra.mxu0 %v3125
    %3147 = vmatprep.subr.bf16.mxu0 0
    %3148 = vmatpush1.bf16.xpose.msra.mxu0 %v3128
    %3149 = vmatprep.subr.bf16.mxu0 0
    %3150 = vmatpush1.bf16.xpose.msra.mxu0 %v3131
    %3151 = vmatprep.subr.bf16.mxu0 0
    %3152 = vmatpush1.bf16.xpose.msra.mxu0 %v3134
    %3153 = vmatprep.subr.bf16.mxu0 0
    %3154 = vmatpush1.bf16.xpose.msra.mxu0 %v3137
    %3155 = vmatprep.subr.bf16.mxu0 0
    %3156 = vmatpush1.bf16.xpose.msra.mxu0 0
    %3157 = vmatprep.subr.bf16.mxu0 0
    %3158 = vmatpush1.bf16.xpose.msra.mxu0 0
    %3159 = vmatprep.subr.bf16.mxu0 0
    %3160 = vmatpush1.bf16.xpose.msra.mxu0 0
    %3161 = vmatprep.subr.bf16.mxu0 0
    %3162 = vmatpush1.bf16.xpose.msra.mxu0 0
    %3163 = vmatprep.subr.bf16.mxu0 0
    %3164 = vmatpush1.bf16.xpose.msra.mxu0 0
    %3165 = vmatprep.subr.bf16.mxu0 0
    %3166 = vmatpush1.bf16.xpose.msra.mxu0 0
    %3167 = vmatprep.subr.bf16.mxu0 0
    %3168 = vmatpush1.bf16.xpose.msra.mxu0 0
    %3169 = vmatprep.subr.bf16.mxu0 0
    %3170 = vmatpush1.bf16.xpose.msra.mxu0 0
    %3171 = vmatprep.mubr.bf16.mxu0 0
    %3172 = vmatmul.mubr.bf16.gmra.mrb[0].mxu0 %v3092
    %v3173 = vpop.f32.mrb[0].mxu0
    %v3174 = vadd.f32 0.0, %v3173
    %v3175 = vpop.f32.mrb[0].mxu0
    %v3176 = vpop.f32.mrb[0].mxu0
    %v3177 = vadd.f32 0.0, %v3176
    %v3178 = vpop.f32.mrb[0].mxu0
    %3179 = vmatprep.mubr.bf16.mxu0 0
    %3180 = vmatmul.mubr.bf16.gmra.mrb[0].mxu0 %v3095
    %v3181 = vpop.f32.mrb[0].mxu0
    %v3182 = vadd.f32 0.0, %v3181
    %v3183 = vpop.f32.mrb[0].mxu0
    %v3184 = vpop.f32.mrb[0].mxu0
    %v3185 = vadd.f32 0.0, %v3184
    %v3186 = vpop.f32.mrb[0].mxu0
    %3187 = vmatprep.mubr.bf16.mxu0 0
    %3188 = vmatmul.mubr.bf16.gmra.mrb[0].mxu0 %v3098
    %v3189 = vpop.f32.mrb[0].mxu0
    %v3190 = vadd.f32 0.0, %v3189
    %v3191 = vpop.f32.mrb[0].mxu0
    %v3192 = vpop.f32.mrb[0].mxu0
    %v3193 = vadd.f32 0.0, %v3192
    %v3194 = vpop.f32.mrb[0].mxu0
    %3195 = vmatprep.mubr.bf16.mxu0 0
    %3196 = vmatmul.mubr.bf16.gmra.mrb[0].mxu0 %v3101
    %v3197 = vpop.f32.mrb[0].mxu0
    %v3198 = vadd.f32 0.0, %v3197
    %v3199 = vpop.f32.mrb[0].mxu0
    %v3200 = vpop.f32.mrb[0].mxu0
    %v3201 = vadd.f32 0.0, %v3200
    %v3202 = vpop.f32.mrb[0].mxu0
    %3203 = vmatprep.mubr.bf16.mxu0 0
    %3204 = vmatmul.mubr.bf16.gmra.mrb[0].mxu0 %v3104
    %v3205 = vpop.f32.mrb[0].mxu0
    %v3206 = vadd.f32 0.0, %v3205
    %v3207 = vpop.f32.mrb[0].mxu0
    %v3208 = vpop.f32.mrb[0].mxu0
    %v3209 = vadd.f32 0.0, %v3208
    %v3210 = vpop.f32.mrb[0].mxu0
    %3211 = vmatprep.mubr.bf16.mxu0 0
    %3212 = vmatmul.mubr.bf16.gmra.mrb[0].mxu0 %v3107
    %v3213 = vpop.f32.mrb[0].mxu0
    %v3214 = vadd.f32 0.0, %v3213
    %v3215 = vpop.f32.mrb[0].mxu0
    %v3216 = vpop.f32.mrb[0].mxu0
    %v3217 = vadd.f32 0.0, %v3216
    %v3218 = vpop.f32.mrb[0].mxu0
    %3219 = vmatprep.mubr.bf16.mxu0 0
    %3220 = vmatmul.mubr.bf16.gmra.mrb[0].mxu0 %v3110
    %v3221 = vpop.f32.mrb[0].mxu0
    %v3222 = vadd.f32 0.0, %v3221
    %v3223 = vpop.f32.mrb[0].mxu0
    %v3224 = vpop.f32.mrb[0].mxu0
    %v3225 = vadd.f32 0.0, %v3224
    %v3226 = vpop.f32.mrb[0].mxu0
    %3227 = vmatprep.mubr.bf16.mxu0 0
    %3228 = vmatmul.mubr.bf16.gmra.mrb[0].mxu0 %v3113
    %v3229 = vpop.f32.mrb[0].mxu0
    %v3230 = vadd.f32 0.0, %v3229
    %v3231 = vpop.f32.mrb[0].mxu0
    %v3232 = vpop.f32.mrb[0].mxu0
    %v3233 = vadd.f32 0.0, %v3232
    %v3234 = vpop.f32.mrb[0].mxu0
    %3235 = vdwg.mxu0
    %v3236 = vmul.f32 %v3174, 0.25
    %v3237 = vmul.f32 %v3177, 0.25
    %v3238 = vmul.f32 %v3182, 0.25
    %v3239 = vmul.f32 %v3185, 0.25
    %v3240 = vmul.f32 %v3190, 0.25
    %v3241 = vmul.f32 %v3193, 0.25
    %v3242 = vmul.f32 %v3198, 0.25
    %v3243 = vmul.f32 %v3201, 0.25
    %v3244 = vmul.f32 %v3206, 0.25
    %v3245 = vmul.f32 %v3209, 0.25
    %v3246 = vmul.f32 %v3214, 0.25
    %v3247 = vmul.f32 %v3217, 0.25
    %v3248 = vmul.f32 %v3222, 0.25
    %v3249 = vmul.f32 %v3225, 0.25
    %v3250 = vmul.f32 %v3230, 0.25
    %v3251 = vmul.f32 %v3233, 0.25
    %3252 = vmax.xlane.f32.xlu0 %v3236
    %v3253 = vpop.xlane.xlu0 %3252
    %3254 = vmax.xlane.f32.xlu0 %v3237
    %v3255 = vpop.xlane.xlu0 %3254
    %3256 = vmax.xlane.f32.xlu0 %v3238
    %v3257 = vpop.xlane.xlu0 %3256
    %3258 = vmax.xlane.f32.xlu0 %v3239
    %v3259 = vpop.xlane.xlu0 %3258
    %3260 = vmax.xlane.f32.xlu0 %v3240
    %v3261 = vpop.xlane.xlu0 %3260
    %3262 = vmax.xlane.f32.xlu0 %v3241
    %v3263 = vpop.xlane.xlu0 %3262
    %3264 = vmax.xlane.f32.xlu0 %v3242
    %v3265 = vpop.xlane.xlu0 %3264
    %3266 = vmax.xlane.f32.xlu0 %v3243
    %v3267 = vpop.xlane.xlu0 %3266
    %3268 = vmax.xlane.f32.xlu0 %v3244
    %v3269 = vpop.xlane.xlu0 %3268
    %3270 = vmax.xlane.f32.xlu0 %v3245
    %v3271 = vpop.xlane.xlu0 %3270
    %3272 = vmax.xlane.f32.xlu0 %v3246
    %v3273 = vpop.xlane.xlu0 %3272
    %3274 = vmax.xlane.f32.xlu0 %v3247
    %v3275 = vpop.xlane.xlu0 %3274
    %3276 = vmax.xlane.f32.xlu0 %v3248
    %v3277 = vpop.xlane.xlu0 %3276
    %3278 = vmax.xlane.f32.xlu0 %v3249
    %v3279 = vpop.xlane.xlu0 %3278
    %3280 = vmax.xlane.f32.xlu0 %v3250
    %v3281 = vpop.xlane.xlu0 %3280
    %3282 = vmax.xlane.f32.xlu0 %v3251
    %v3283 = vpop.xlane.xlu0 %3282
    %v3284 = vsub.f32 %v3236, %v3253
    %v3285 = vsub.f32 %v3237, %v3255
    %v3286 = vsub.f32 %v3238, %v3257
    %v3287 = vsub.f32 %v3239, %v3259
    %v3288 = vsub.f32 %v3240, %v3261
    %v3289 = vsub.f32 %v3241, %v3263
    %v3290 = vsub.f32 %v3242, %v3265
    %v3291 = vsub.f32 %v3243, %v3267
    %v3292 = vsub.f32 %v3244, %v3269
    %v3293 = vsub.f32 %v3245, %v3271
    %v3294 = vsub.f32 %v3246, %v3273
    %v3295 = vsub.f32 %v3247, %v3275
    %v3296 = vsub.f32 %v3248, %v3277
    %v3297 = vsub.f32 %v3249, %v3279
    %v3298 = vsub.f32 %v3250, %v3281
    %v3299 = vsub.f32 %v3251, %v3283
    %v3300 = vmul.f32 %v3284, 1.442695
    %v3301 = vpow.pop %v3300
    %v3302 = vmul.f32 %v3285, 1.442695
    %v3303 = vpow.pop %v3302
    %v3304 = vmul.f32 %v3286, 1.442695
    %v3305 = vpow.pop %v3304
    %v3306 = vmul.f32 %v3287, 1.442695
    %v3307 = vpow.pop %v3306
    %v3308 = vmul.f32 %v3288, 1.442695
    %v3309 = vpow.pop %v3308
    %v3310 = vmul.f32 %v3289, 1.442695
    %v3311 = vpow.pop %v3310
    %v3312 = vmul.f32 %v3290, 1.442695
    %v3313 = vpow.pop %v3312
    %v3314 = vmul.f32 %v3291, 1.442695
    %v3315 = vpow.pop %v3314
    %v3316 = vmul.f32 %v3292, 1.442695
    %v3317 = vpow.pop %v3316
    %v3318 = vmul.f32 %v3293, 1.442695
    %v3319 = vpow.pop %v3318
    %v3320 = vmul.f32 %v3294, 1.442695
    %v3321 = vpow.pop %v3320
    %v3322 = vmul.f32 %v3295, 1.442695
    %v3323 = vpow.pop %v3322
    %v3324 = vmul.f32 %v3296, 1.442695
    %v3325 = vpow.pop %v3324
    %v3326 = vmul.f32 %v3297, 1.442695
    %v3327 = vpow.pop %v3326
    %v3328 = vmul.f32 %v3298, 1.442695
    %v3329 = vpow.pop %v3328
    %v3330 = vmul.f32 %v3299, 1.442695
    %v3331 = vpow.pop %v3330
    %3332 = vadd.xlane.f32.xlu0 %v3301
    %v3333 = vpop.xlane.xlu0 %3332
    %3334 = vadd.xlane.f32.xlu0 %v3303
    %v3335 = vpop.xlane.xlu0 %3334
    %3336 = vadd.xlane.f32.xlu0 %v3305
    %v3337 = vpop.xlane.xlu0 %3336
    %3338 = vadd.xlane.f32.xlu0 %v3307
    %v3339 = vpop.xlane.xlu0 %3338
    %3340 = vadd.xlane.f32.xlu0 %v3309
    %v3341 = vpop.xlane.xlu0 %3340
    %3342 = vadd.xlane.f32.xlu0 %v3311
    %v3343 = vpop.xlane.xlu0 %3342
    %3344 = vadd.xlane.f32.xlu0 %v3313
    %v3345 = vpop.xlane.xlu0 %3344
    %3346 = vadd.xlane.f32.xlu0 %v3315
    %v3347 = vpop.xlane.xlu0 %3346
    %3348 = vadd.xlane.f32.xlu0 %v3317
    %v3349 = vpop.xlane.xlu0 %3348
    %3350 = vadd.xlane.f32.xlu0 %v3319
    %v3351 = vpop.xlane.xlu0 %3350
    %3352 = vadd.xlane.f32.xlu0 %v3321
    %v3353 = vpop.xlane.xlu0 %3352
    %3354 = vadd.xlane.f32.xlu0 %v3323
    %v3355 = vpop.xlane.xlu0 %3354
    %3356 = vadd.xlane.f32.xlu0 %v3325
    %v3357 = vpop.xlane.xlu0 %3356
    %3358 = vadd.xlane.f32.xlu0 %v3327
    %v3359 = vpop.xlane.xlu0 %3358
    %3360 = vadd.xlane.f32.xlu0 %v3329
    %v3361 = vpop.xlane.xlu0 %3360
    %3362 = vadd.xlane.f32.xlu0 %v3331
    %v3363 = vpop.xlane.xlu0 %3362
    %v3364 = vrcp.pop %v3333
    %v3365 = vrcp.pop %v3335
    %v3366 = vrcp.pop %v3337
    %v3367 = vrcp.pop %v3339
    %v3368 = vrcp.pop %v3341
    %v3369 = vrcp.pop %v3343
    %v3370 = vrcp.pop %v3345
    %v3371 = vrcp.pop %v3347
    %v3372 = vrcp.pop %v3349
    %v3373 = vrcp.pop %v3351
    %v3374 = vrcp.pop %v3353
    %v3375 = vrcp.pop %v3355
    %v3376 = vrcp.pop %v3357
    %v3377 = vrcp.pop %v3359
    %v3378 = vrcp.pop %v3361
    %v3379 = vrcp.pop %v3363
    %v3380 = vmul.f32 %v3301, %v3364
    %v3381 = vmul.f32 %v3303, %v3365
    %v3382 = vmul.f32 %v3305, %v3366
    %v3383 = vmul.f32 %v3307, %v3367
    %v3384 = vmul.f32 %v3309, %v3368
    %v3385 = vmul.f32 %v3311, %v3369
    %v3386 = vmul.f32 %v3313, %v3370
    %v3387 = vmul.f32 %v3315, %v3371
    %v3388 = vmul.f32 %v3317, %v3372
    %v3389 = vmul.f32 %v3319, %v3373
    %v3390 = vmul.f32 %v3321, %v3374
    %v3391 = vmul.f32 %v3323, %v3375
    %v3392 = vmul.f32 %v3325, %v3376
    %v3393 = vmul.f32 %v3327, %v3377
    %v3394 = vmul.f32 %v3329, %v3378
    %v3395 = vmul.f32 %v3331, %v3379
    %v3396 = vpack.c.bf16 %v3381, %v3380
    %v3397 = vpack.c.bf16 %v3383, %v3382
    %v3398 = vpack.c.bf16 %v3385, %v3384
    %v3399 = vpack.c.bf16 %v3387, %v3386
    %v3400 = vpack.c.bf16 %v3389, %v3388
    %v3401 = vpack.c.bf16 %v3391, %v3390
    %v3402 = vpack.c.bf16 %v3393, %v3392
    %v3403 = vpack.c.bf16 %v3395, %v3394
    %3404 = vrot.lane.b32.xlu0 %v2194, 96
    %v3405 = vpop.permute.xlu0 %3404
    %3406 = vrot.lane.b32.xlu0 %v2195, 96
    %v3407 = vpop.permute.xlu0 %3406
    %3408 = vrot.lane.b32.xlu0 %v2196, 96
    %v3409 = vpop.permute.xlu0 %3408
    %3410 = vrot.lane.b32.xlu0 %v2197, 96
    %v3411 = vpop.permute.xlu0 %3410
    %3412 = vrot.lane.b32.xlu0 %v2198, 96
    %v3413 = vpop.permute.xlu0 %3412
    %3414 = vrot.lane.b32.xlu0 %v2199, 96
    %v3415 = vpop.permute.xlu0 %3414
    %3416 = vrot.lane.b32.xlu0 %v2200, 96
    %v3417 = vpop.permute.xlu0 %3416
    %3418 = vrot.lane.b32.xlu0 %v2201, 96
    %v3419 = vpop.permute.xlu0 %3418
    %3428 = vmatprep.subr.bf16.mxu0 0
    %3429 = vmatpush1.bf16.msra.mxu0 %v3405
    %3430 = vmatprep.subr.bf16.mxu0 0
    %3431 = vmatpush1.bf16.msra.mxu0 %v3407
    %3432 = vmatprep.subr.bf16.mxu0 0
    %3433 = vmatpush1.bf16.msra.mxu0 %v3409
    %3434 = vmatprep.subr.bf16.mxu0 0
    %3435 = vmatpush1.bf16.msra.mxu0 %v3411
    %3436 = vmatprep.subr.bf16.mxu0 0
    %3437 = vmatpush1.bf16.msra.mxu0 %v3413
    %3438 = vmatprep.subr.bf16.mxu0 0
    %3439 = vmatpush1.bf16.msra.mxu0 %v3415
    %3440 = vmatprep.subr.bf16.mxu0 0
    %3441 = vmatpush1.bf16.msra.mxu0 %v3417
    %3442 = vmatprep.subr.bf16.mxu0 0
    %3443 = vmatpush1.bf16.msra.mxu0 %v3419
    %3444 = vmatprep.subr.bf16.mxu0 0
    %3445 = vmatpush1.bf16.msra.mxu0 0
    %3446 = vmatprep.subr.bf16.mxu0 0
    %3447 = vmatpush1.bf16.msra.mxu0 0
    %3448 = vmatprep.subr.bf16.mxu0 0
    %3449 = vmatpush1.bf16.msra.mxu0 0
    %3450 = vmatprep.subr.bf16.mxu0 0
    %3451 = vmatpush1.bf16.msra.mxu0 0
    %3452 = vmatprep.subr.bf16.mxu0 0
    %3453 = vmatpush1.bf16.msra.mxu0 0
    %3454 = vmatprep.subr.bf16.mxu0 0
    %3455 = vmatpush1.bf16.msra.mxu0 0
    %3456 = vmatprep.subr.bf16.mxu0 0
    %3457 = vmatpush1.bf16.msra.mxu0 0
    %3458 = vmatprep.subr.bf16.mxu0 0
    %3459 = vmatpush1.bf16.msra.mxu0 0
    %3460 = vmatprep.mubr.bf16.mxu0 0
    %3461 = vmatmul.mubr.bf16.gmra.mrb[0].mxu0 %v3396
    %v3462 = vpop.f32.mrb[0].mxu0
    %v3463 = vadd.f32 0.0, %v3462
    %v3464 = vpop.f32.mrb[0].mxu0
    %v3465 = vpop.f32.mrb[0].mxu0
    %v3466 = vadd.f32 0.0, %v3465
    %v3467 = vpop.f32.mrb[0].mxu0
    %3468 = vmatprep.mubr.bf16.mxu0 0
    %3469 = vmatmul.mubr.bf16.gmra.mrb[0].mxu0 %v3397
    %v3470 = vpop.f32.mrb[0].mxu0
    %v3471 = vadd.f32 0.0, %v3470
    %v3472 = vpop.f32.mrb[0].mxu0
    %v3473 = vpop.f32.mrb[0].mxu0
    %v3474 = vadd.f32 0.0, %v3473
    %v3475 = vpop.f32.mrb[0].mxu0
    %3476 = vmatprep.mubr.bf16.mxu0 0
    %3477 = vmatmul.mubr.bf16.gmra.mrb[0].mxu0 %v3398
    %v3478 = vpop.f32.mrb[0].mxu0
    %v3479 = vadd.f32 0.0, %v3478
    %v3480 = vpop.f32.mrb[0].mxu0
    %v3481 = vpop.f32.mrb[0].mxu0
    %v3482 = vadd.f32 0.0, %v3481
    %v3483 = vpop.f32.mrb[0].mxu0
    %3484 = vmatprep.mubr.bf16.mxu0 0
    %3485 = vmatmul.mubr.bf16.gmra.mrb[0].mxu0 %v3399
    %v3486 = vpop.f32.mrb[0].mxu0
    %v3487 = vadd.f32 0.0, %v3486
    %v3488 = vpop.f32.mrb[0].mxu0
    %v3489 = vpop.f32.mrb[0].mxu0
    %v3490 = vadd.f32 0.0, %v3489
    %v3491 = vpop.f32.mrb[0].mxu0
    %3492 = vmatprep.mubr.bf16.mxu0 0
    %3493 = vmatmul.mubr.bf16.gmra.mrb[0].mxu0 %v3400
    %v3494 = vpop.f32.mrb[0].mxu0
    %v3495 = vadd.f32 0.0, %v3494
    %v3496 = vpop.f32.mrb[0].mxu0
    %v3497 = vpop.f32.mrb[0].mxu0
    %v3498 = vadd.f32 0.0, %v3497
    %v3499 = vpop.f32.mrb[0].mxu0
    %3500 = vmatprep.mubr.bf16.mxu0 0
    %3501 = vmatmul.mubr.bf16.gmra.mrb[0].mxu0 %v3401
    %v3502 = vpop.f32.mrb[0].mxu0
    %v3503 = vadd.f32 0.0, %v3502
    %v3504 = vpop.f32.mrb[0].mxu0
    %v3505 = vpop.f32.mrb[0].mxu0
    %v3506 = vadd.f32 0.0, %v3505
    %v3507 = vpop.f32.mrb[0].mxu0
    %3508 = vmatprep.mubr.bf16.mxu0 0
    %3509 = vmatmul.mubr.bf16.gmra.mrb[0].mxu0 %v3402
    %v3510 = vpop.f32.mrb[0].mxu0
    %v3511 = vadd.f32 0.0, %v3510
    %v3512 = vpop.f32.mrb[0].mxu0
    %v3513 = vpop.f32.mrb[0].mxu0
    %v3514 = vadd.f32 0.0, %v3513
    %v3515 = vpop.f32.mrb[0].mxu0
    %3516 = vmatprep.mubr.bf16.mxu0 0
    %3517 = vmatmul.mubr.bf16.gmra.mrb[0].mxu0 %v3403
    %v3518 = vpop.f32.mrb[0].mxu0
    %v3519 = vadd.f32 0.0, %v3518
    %v3520 = vpop.f32.mrb[0].mxu0
    %v3521 = vpop.f32.mrb[0].mxu0
    %v3522 = vadd.f32 0.0, %v3521
    %v3523 = vpop.f32.mrb[0].mxu0
    %3524 = vdwg.mxu0
    %v3525 = vpack.c.bf16 %v3466, %v3463
    %v3526 = vpack.c.bf16 %v3474, %v3471
    %v3527 = vpack.c.bf16 %v3482, %v3479
    %v3528 = vpack.c.bf16 %v3490, %v3487
    %v3529 = vpack.c.bf16 %v3498, %v3495
    %v3530 = vpack.c.bf16 %v3506, %v3503
    %v3531 = vpack.c.bf16 %v3514, %v3511
    %v3532 = vpack.c.bf16 %v3522, %v3519
    %v3535 = vunpack.c.l.b16 %v1464
    %v3536 = vunpack.c.l.b16 %v1465
    %v3537 = vpack.c.b16 %v3536, %v3535
    %v3540 = vsel %vm1880, %v3525, 0
    %v3543 = vsel %vm1880, %v3526, 0
    %v3546 = vsel %vm1880, %v3527, 0
    %v3549 = vsel %vm1880, %v3528, 0
    %v3552 = vsel %vm1880, %v3529, 0
    %v3555 = vsel %vm1880, %v3530, 0
    %v3558 = vsel %vm1880, %v3531, 0
    %v3561 = vsel %vm1880, %v3532, 0
    %3563 = vmatprep.subr.bf16.mxu0 0
    %3564 = vmatpush1.bf16.msra.mxu0 %v3537
    %3565 = vmatprep.subr.bf16.mxu0 0
    %3566 = vmatpush1.bf16.msra.mxu0 0
    %3567 = vmatprep.subr.bf16.mxu0 0
    %3568 = vmatpush1.bf16.msra.mxu0 0
    %3569 = vmatprep.subr.bf16.mxu0 0
    %3570 = vmatpush1.bf16.msra.mxu0 0
    %3571 = vmatprep.subr.bf16.mxu0 0
    %3572 = vmatpush1.bf16.msra.mxu0 0
    %3573 = vmatprep.subr.bf16.mxu0 0
    %3574 = vmatpush1.bf16.msra.mxu0 0
    %3575 = vmatprep.subr.bf16.mxu0 0
    %3576 = vmatpush1.bf16.msra.mxu0 0
    %3577 = vmatprep.subr.bf16.mxu0 0
    %3578 = vmatpush1.bf16.msra.mxu0 0
    %3579 = vmatprep.subr.bf16.mxu0 0
    %3580 = vmatpush1.bf16.msra.mxu0 0
    %3581 = vmatprep.subr.bf16.mxu0 0
    %3582 = vmatpush1.bf16.msra.mxu0 0
    %3583 = vmatprep.subr.bf16.mxu0 0
    %3584 = vmatpush1.bf16.msra.mxu0 0
    %3585 = vmatprep.subr.bf16.mxu0 0
    %3586 = vmatpush1.bf16.msra.mxu0 0
    %3587 = vmatprep.subr.bf16.mxu0 0
    %3588 = vmatpush1.bf16.msra.mxu0 0
    %3589 = vmatprep.subr.bf16.mxu0 0
    %3590 = vmatpush1.bf16.msra.mxu0 0
    %3591 = vmatprep.subr.bf16.mxu0 0
    %3592 = vmatpush1.bf16.msra.mxu0 0
    %3593 = vmatprep.subr.bf16.mxu0 0
    %3594 = vmatpush1.bf16.msra.mxu0 0
    %3595 = vmatprep.mubr.bf16.mxu0 0
    %3596 = vmatmul.mubr.bf16.gmra.mrb[0].mxu0 %v3540
    %v3597 = vpop.f32.mrb[0].mxu0
    %v3598 = vadd.f32 0.0, %v3597
    %v3599 = vpop.f32.mrb[0].mxu0
    %v3600 = vpop.f32.mrb[0].mxu0
    %v3601 = vadd.f32 0.0, %v3600
    %v3602 = vpop.f32.mrb[0].mxu0
    %3603 = vmatprep.mubr.bf16.mxu0 0
    %3604 = vmatmul.mubr.bf16.gmra.mrb[0].mxu0 %v3543
    %v3605 = vpop.f32.mrb[0].mxu0
    %v3606 = vadd.f32 0.0, %v3605
    %v3607 = vpop.f32.mrb[0].mxu0
    %v3608 = vpop.f32.mrb[0].mxu0
    %v3609 = vadd.f32 0.0, %v3608
    %v3610 = vpop.f32.mrb[0].mxu0
    %3611 = vmatprep.mubr.bf16.mxu0 0
    %3612 = vmatmul.mubr.bf16.gmra.mrb[0].mxu0 %v3546
    %v3613 = vpop.f32.mrb[0].mxu0
    %v3614 = vadd.f32 0.0, %v3613
    %v3615 = vpop.f32.mrb[0].mxu0
    %v3616 = vpop.f32.mrb[0].mxu0
    %v3617 = vadd.f32 0.0, %v3616
    %v3618 = vpop.f32.mrb[0].mxu0
    %3619 = vmatprep.mubr.bf16.mxu0 0
    %3620 = vmatmul.mubr.bf16.gmra.mrb[0].mxu0 %v3549
    %v3621 = vpop.f32.mrb[0].mxu0
    %v3622 = vadd.f32 0.0, %v3621
    %v3623 = vpop.f32.mrb[0].mxu0
    %v3624 = vpop.f32.mrb[0].mxu0
    %v3625 = vadd.f32 0.0, %v3624
    %v3626 = vpop.f32.mrb[0].mxu0
    %3627 = vmatprep.mubr.bf16.mxu0 0
    %3628 = vmatmul.mubr.bf16.gmra.mrb[0].mxu0 %v3552
    %v3629 = vpop.f32.mrb[0].mxu0
    %v3630 = vadd.f32 0.0, %v3629
    %v3631 = vpop.f32.mrb[0].mxu0
    %v3632 = vpop.f32.mrb[0].mxu0
    %v3633 = vadd.f32 0.0, %v3632
    %v3634 = vpop.f32.mrb[0].mxu0
    %3635 = vmatprep.mubr.bf16.mxu0 0
    %3636 = vmatmul.mubr.bf16.gmra.mrb[0].mxu0 %v3555
    %v3637 = vpop.f32.mrb[0].mxu0
    %v3638 = vadd.f32 0.0, %v3637
    %v3639 = vpop.f32.mrb[0].mxu0
    %v3640 = vpop.f32.mrb[0].mxu0
    %v3641 = vadd.f32 0.0, %v3640
    %v3642 = vpop.f32.mrb[0].mxu0
    %3643 = vmatprep.mubr.bf16.mxu0 0
    %3644 = vmatmul.mubr.bf16.gmra.mrb[0].mxu0 %v3558
    %v3645 = vpop.f32.mrb[0].mxu0
    %v3646 = vadd.f32 0.0, %v3645
    %v3647 = vpop.f32.mrb[0].mxu0
    %v3648 = vpop.f32.mrb[0].mxu0
    %v3649 = vadd.f32 0.0, %v3648
    %v3650 = vpop.f32.mrb[0].mxu0
    %3651 = vmatprep.mubr.bf16.mxu0 0
    %3652 = vmatmul.mubr.bf16.gmra.mrb[0].mxu0 %v3561
    %v3653 = vpop.f32.mrb[0].mxu0
    %v3654 = vadd.f32 0.0, %v3653
    %v3655 = vpop.f32.mrb[0].mxu0
    %v3656 = vpop.f32.mrb[0].mxu0
    %v3657 = vadd.f32 0.0, %v3656
    %v3658 = vpop.f32.mrb[0].mxu0
    %3659 = vdwg.mxu0
    %v3660 = vadd.f32 %v2997, %v3598
    %v3661 = vadd.f32 %v3000, %v3601
    %v3662 = vadd.f32 %v3005, %v3606
    %v3663 = vadd.f32 %v3008, %v3609
    %v3664 = vadd.f32 %v3013, %v3614
    %v3665 = vadd.f32 %v3016, %v3617
    %v3666 = vadd.f32 %v3021, %v3622
    %v3667 = vadd.f32 %v3024, %v3625
    %v3668 = vadd.f32 %v3029, %v3630
    %v3669 = vadd.f32 %v3032, %v3633
    %v3670 = vadd.f32 %v3037, %v3638
    %v3671 = vadd.f32 %v3040, %v3641
    %v3672 = vadd.f32 %v3045, %v3646
    %v3673 = vadd.f32 %v3048, %v3649
    %v3674 = vadd.f32 %v3053, %v3654
    %v3675 = vadd.f32 %v3056, %v3657
    %3676 = vrot.lane.b32.xlu0 %v1864, 80
    %v3677 = vpop.permute.xlu0 %3676
    %3678 = vrot.lane.b32.xlu0 %v1865, 80
    %v3679 = vpop.permute.xlu0 %3678
    %3680 = vrot.lane.b32.xlu0 %v1866, 80
    %v3681 = vpop.permute.xlu0 %3680
    %3682 = vrot.lane.b32.xlu0 %v1867, 80
    %v3683 = vpop.permute.xlu0 %3682
    %3684 = vrot.lane.b32.xlu0 %v1868, 80
    %v3685 = vpop.permute.xlu0 %3684
    %3686 = vrot.lane.b32.xlu0 %v1869, 80
    %v3687 = vpop.permute.xlu0 %3686
    %3688 = vrot.lane.b32.xlu0 %v1870, 80
    %v3689 = vpop.permute.xlu0 %3688
    %3690 = vrot.lane.b32.xlu0 %v1871, 80
    %v3691 = vpop.permute.xlu0 %3690
    %3692 = vrot.lane.b32.xlu0 %v1872, 80
    %v3693 = vpop.permute.xlu0 %3692
    %3694 = vrot.lane.b32.xlu0 %v1873, 80
    %v3695 = vpop.permute.xlu0 %3694
    %3696 = vrot.lane.b32.xlu0 %v1874, 80
    %v3697 = vpop.permute.xlu0 %3696
    %3698 = vrot.lane.b32.xlu0 %v1875, 80
    %v3699 = vpop.permute.xlu0 %3698
    %3700 = vrot.lane.b32.xlu0 %v1876, 80
    %v3701 = vpop.permute.xlu0 %3700
    %3702 = vrot.lane.b32.xlu0 %v1877, 80
    %v3703 = vpop.permute.xlu0 %3702
    %3704 = vrot.lane.b32.xlu0 %v1878, 80
    %v3705 = vpop.permute.xlu0 %3704
    %3706 = vrot.lane.b32.xlu0 %v1879, 80
    %v3707 = vpop.permute.xlu0 %3706
    %v3709 = vsel %vm1880, %v3677, 0
    %v3712 = vsel %vm1880, %v3679, 0
    %v3715 = vsel %vm1880, %v3681, 0
    %v3718 = vsel %vm1880, %v3683, 0
    %v3721 = vsel %vm1880, %v3685, 0
    %v3724 = vsel %vm1880, %v3687, 0
    %v3727 = vsel %vm1880, %v3689, 0
    %v3730 = vsel %vm1880, %v3691, 0
    %v3733 = vsel %vm1880, %v3693, 0
    %v3736 = vsel %vm1880, %v3695, 0
    %v3739 = vsel %vm1880, %v3697, 0
    %v3742 = vsel %vm1880, %v3699, 0
    %v3745 = vsel %vm1880, %v3701, 0
    %v3748 = vsel %vm1880, %v3703, 0
    %v3751 = vsel %vm1880, %v3705, 0
    %v3754 = vsel %vm1880, %v3707, 0
    %3756 = vmatprep.subr.bf16.mxu0 0
    %3757 = vmatpush1.bf16.xpose.msra.mxu0 %v3733
    %3758 = vmatprep.subr.bf16.mxu0 0
    %3759 = vmatpush1.bf16.xpose.msra.mxu0 %v3736
    %3760 = vmatprep.subr.bf16.mxu0 0
    %3761 = vmatpush1.bf16.xpose.msra.mxu0 %v3739
    %3762 = vmatprep.subr.bf16.mxu0 0
    %3763 = vmatpush1.bf16.xpose.msra.mxu0 %v3742
    %3764 = vmatprep.subr.bf16.mxu0 0
    %3765 = vmatpush1.bf16.xpose.msra.mxu0 %v3745
    %3766 = vmatprep.subr.bf16.mxu0 0
    %3767 = vmatpush1.bf16.xpose.msra.mxu0 %v3748
    %3768 = vmatprep.subr.bf16.mxu0 0
    %3769 = vmatpush1.bf16.xpose.msra.mxu0 %v3751
    %3770 = vmatprep.subr.bf16.mxu0 0
    %3771 = vmatpush1.bf16.xpose.msra.mxu0 %v3754
    %3772 = vmatprep.subr.bf16.mxu0 0
    %3773 = vmatpush1.bf16.xpose.msra.mxu0 0
    %3774 = vmatprep.subr.bf16.mxu0 0
    %3775 = vmatpush1.bf16.xpose.msra.mxu0 0
    %3776 = vmatprep.subr.bf16.mxu0 0
    %3777 = vmatpush1.bf16.xpose.msra.mxu0 0
    %3778 = vmatprep.subr.bf16.mxu0 0
    %3779 = vmatpush1.bf16.xpose.msra.mxu0 0
    %3780 = vmatprep.subr.bf16.mxu0 0
    %3781 = vmatpush1.bf16.xpose.msra.mxu0 0
    %3782 = vmatprep.subr.bf16.mxu0 0
    %3783 = vmatpush1.bf16.xpose.msra.mxu0 0
    %3784 = vmatprep.subr.bf16.mxu0 0
    %3785 = vmatpush1.bf16.xpose.msra.mxu0 0
    %3786 = vmatprep.subr.bf16.mxu0 0
    %3787 = vmatpush1.bf16.xpose.msra.mxu0 0
    %3788 = vmatprep.mubr.bf16.mxu0 0
    %3789 = vmatmul.mubr.bf16.gmra.mrb[0].mxu0 %v3709
    %v3790 = vpop.f32.mrb[0].mxu0
    %v3791 = vadd.f32 0.0, %v3790
    %v3792 = vpop.f32.mrb[0].mxu0
    %v3793 = vpop.f32.mrb[0].mxu0
    %v3794 = vadd.f32 0.0, %v3793
    %v3795 = vpop.f32.mrb[0].mxu0
    %3796 = vmatprep.mubr.bf16.mxu0 0
    %3797 = vmatmul.mubr.bf16.gmra.mrb[0].mxu0 %v3712
    %v3798 = vpop.f32.mrb[0].mxu0
    %v3799 = vadd.f32 0.0, %v3798
    %v3800 = vpop.f32.mrb[0].mxu0
    %v3801 = vpop.f32.mrb[0].mxu0
    %v3802 = vadd.f32 0.0, %v3801
    %v3803 = vpop.f32.mrb[0].mxu0
    %3804 = vmatprep.mubr.bf16.mxu0 0
    %3805 = vmatmul.mubr.bf16.gmra.mrb[0].mxu0 %v3715
    %v3806 = vpop.f32.mrb[0].mxu0
    %v3807 = vadd.f32 0.0, %v3806
    %v3808 = vpop.f32.mrb[0].mxu0
    %v3809 = vpop.f32.mrb[0].mxu0
    %v3810 = vadd.f32 0.0, %v3809
    %v3811 = vpop.f32.mrb[0].mxu0
    %3812 = vmatprep.mubr.bf16.mxu0 0
    %3813 = vmatmul.mubr.bf16.gmra.mrb[0].mxu0 %v3718
    %v3814 = vpop.f32.mrb[0].mxu0
    %v3815 = vadd.f32 0.0, %v3814
    %v3816 = vpop.f32.mrb[0].mxu0
    %v3817 = vpop.f32.mrb[0].mxu0
    %v3818 = vadd.f32 0.0, %v3817
    %v3819 = vpop.f32.mrb[0].mxu0
    %3820 = vmatprep.mubr.bf16.mxu0 0
    %3821 = vmatmul.mubr.bf16.gmra.mrb[0].mxu0 %v3721
    %v3822 = vpop.f32.mrb[0].mxu0
    %v3823 = vadd.f32 0.0, %v3822
    %v3824 = vpop.f32.mrb[0].mxu0
    %v3825 = vpop.f32.mrb[0].mxu0
    %v3826 = vadd.f32 0.0, %v3825
    %v3827 = vpop.f32.mrb[0].mxu0
    %3828 = vmatprep.mubr.bf16.mxu0 0
    %3829 = vmatmul.mubr.bf16.gmra.mrb[0].mxu0 %v3724
    %v3830 = vpop.f32.mrb[0].mxu0
    %v3831 = vadd.f32 0.0, %v3830
    %v3832 = vpop.f32.mrb[0].mxu0
    %v3833 = vpop.f32.mrb[0].mxu0
    %v3834 = vadd.f32 0.0, %v3833
    %v3835 = vpop.f32.mrb[0].mxu0
    %3836 = vmatprep.mubr.bf16.mxu0 0
    %3837 = vmatmul.mubr.bf16.gmra.mrb[0].mxu0 %v3727
    %v3838 = vpop.f32.mrb[0].mxu0
    %v3839 = vadd.f32 0.0, %v3838
    %v3840 = vpop.f32.mrb[0].mxu0
    %v3841 = vpop.f32.mrb[0].mxu0
    %v3842 = vadd.f32 0.0, %v3841
    %v3843 = vpop.f32.mrb[0].mxu0
    %3844 = vmatprep.mubr.bf16.mxu0 0
    %3845 = vmatmul.mubr.bf16.gmra.mrb[0].mxu0 %v3730
    %v3846 = vpop.f32.mrb[0].mxu0
    %v3847 = vadd.f32 0.0, %v3846
    %v3848 = vpop.f32.mrb[0].mxu0
    %v3849 = vpop.f32.mrb[0].mxu0
    %v3850 = vadd.f32 0.0, %v3849
    %v3851 = vpop.f32.mrb[0].mxu0
    %3852 = vdwg.mxu0
    %v3853 = vmul.f32 %v3791, 0.25
    %v3854 = vmul.f32 %v3794, 0.25
    %v3855 = vmul.f32 %v3799, 0.25
    %v3856 = vmul.f32 %v3802, 0.25
    %v3857 = vmul.f32 %v3807, 0.25
    %v3858 = vmul.f32 %v3810, 0.25
    %v3859 = vmul.f32 %v3815, 0.25
    %v3860 = vmul.f32 %v3818, 0.25
    %v3861 = vmul.f32 %v3823, 0.25
    %v3862 = vmul.f32 %v3826, 0.25
    %v3863 = vmul.f32 %v3831, 0.25
    %v3864 = vmul.f32 %v3834, 0.25
    %v3865 = vmul.f32 %v3839, 0.25
    %v3866 = vmul.f32 %v3842, 0.25
    %v3867 = vmul.f32 %v3847, 0.25
    %v3868 = vmul.f32 %v3850, 0.25
    %3869 = vmax.xlane.f32.xlu0 %v3853
    %v3870 = vpop.xlane.xlu0 %3869
    %3871 = vmax.xlane.f32.xlu0 %v3854
    %v3872 = vpop.xlane.xlu0 %3871
    %3873 = vmax.xlane.f32.xlu0 %v3855
    %v3874 = vpop.xlane.xlu0 %3873
    %3875 = vmax.xlane.f32.xlu0 %v3856
    %v3876 = vpop.xlane.xlu0 %3875
    %3877 = vmax.xlane.f32.xlu0 %v3857
    %v3878 = vpop.xlane.xlu0 %3877
    %3879 = vmax.xlane.f32.xlu0 %v3858
    %v3880 = vpop.xlane.xlu0 %3879
    %3881 = vmax.xlane.f32.xlu0 %v3859
    %v3882 = vpop.xlane.xlu0 %3881
    %3883 = vmax.xlane.f32.xlu0 %v3860
    %v3884 = vpop.xlane.xlu0 %3883
    %3885 = vmax.xlane.f32.xlu0 %v3861
    %v3886 = vpop.xlane.xlu0 %3885
    %3887 = vmax.xlane.f32.xlu0 %v3862
    %v3888 = vpop.xlane.xlu0 %3887
    %3889 = vmax.xlane.f32.xlu0 %v3863
    %v3890 = vpop.xlane.xlu0 %3889
    %3891 = vmax.xlane.f32.xlu0 %v3864
    %v3892 = vpop.xlane.xlu0 %3891
    %3893 = vmax.xlane.f32.xlu0 %v3865
    %v3894 = vpop.xlane.xlu0 %3893
    %3895 = vmax.xlane.f32.xlu0 %v3866
    %v3896 = vpop.xlane.xlu0 %3895
    %3897 = vmax.xlane.f32.xlu0 %v3867
    %v3898 = vpop.xlane.xlu0 %3897
    %3899 = vmax.xlane.f32.xlu0 %v3868
    %v3900 = vpop.xlane.xlu0 %3899
    %v3901 = vsub.f32 %v3853, %v3870
    %v3902 = vsub.f32 %v3854, %v3872
    %v3903 = vsub.f32 %v3855, %v3874
    %v3904 = vsub.f32 %v3856, %v3876
    %v3905 = vsub.f32 %v3857, %v3878
    %v3906 = vsub.f32 %v3858, %v3880
    %v3907 = vsub.f32 %v3859, %v3882
    %v3908 = vsub.f32 %v3860, %v3884
    %v3909 = vsub.f32 %v3861, %v3886
    %v3910 = vsub.f32 %v3862, %v3888
    %v3911 = vsub.f32 %v3863, %v3890
    %v3912 = vsub.f32 %v3864, %v3892
    %v3913 = vsub.f32 %v3865, %v3894
    %v3914 = vsub.f32 %v3866, %v3896
    %v3915 = vsub.f32 %v3867, %v3898
    %v3916 = vsub.f32 %v3868, %v3900
    %v3917 = vmul.f32 %v3901, 1.442695
    %v3918 = vpow.pop %v3917
    %v3919 = vmul.f32 %v3902, 1.442695
    %v3920 = vpow.pop %v3919
    %v3921 = vmul.f32 %v3903, 1.442695
    %v3922 = vpow.pop %v3921
    %v3923 = vmul.f32 %v3904, 1.442695
    %v3924 = vpow.pop %v3923
    %v3925 = vmul.f32 %v3905, 1.442695
    %v3926 = vpow.pop %v3925
    %v3927 = vmul.f32 %v3906, 1.442695
    %v3928 = vpow.pop %v3927
    %v3929 = vmul.f32 %v3907, 1.442695
    %v3930 = vpow.pop %v3929
    %v3931 = vmul.f32 %v3908, 1.442695
    %v3932 = vpow.pop %v3931
    %v3933 = vmul.f32 %v3909, 1.442695
    %v3934 = vpow.pop %v3933
    %v3935 = vmul.f32 %v3910, 1.442695
    %v3936 = vpow.pop %v3935
    %v3937 = vmul.f32 %v3911, 1.442695
    %v3938 = vpow.pop %v3937
    %v3939 = vmul.f32 %v3912, 1.442695
    %v3940 = vpow.pop %v3939
    %v3941 = vmul.f32 %v3913, 1.442695
    %v3942 = vpow.pop %v3941
    %v3943 = vmul.f32 %v3914, 1.442695
    %v3944 = vpow.pop %v3943
    %v3945 = vmul.f32 %v3915, 1.442695
    %v3946 = vpow.pop %v3945
    %v3947 = vmul.f32 %v3916, 1.442695
    %v3948 = vpow.pop %v3947
    %3949 = vadd.xlane.f32.xlu0 %v3918
    %v3950 = vpop.xlane.xlu0 %3949
    %3951 = vadd.xlane.f32.xlu0 %v3920
    %v3952 = vpop.xlane.xlu0 %3951
    %3953 = vadd.xlane.f32.xlu0 %v3922
    %v3954 = vpop.xlane.xlu0 %3953
    %3955 = vadd.xlane.f32.xlu0 %v3924
    %v3956 = vpop.xlane.xlu0 %3955
    %3957 = vadd.xlane.f32.xlu0 %v3926
    %v3958 = vpop.xlane.xlu0 %3957
    %3959 = vadd.xlane.f32.xlu0 %v3928
    %v3960 = vpop.xlane.xlu0 %3959
    %3961 = vadd.xlane.f32.xlu0 %v3930
    %v3962 = vpop.xlane.xlu0 %3961
    %3963 = vadd.xlane.f32.xlu0 %v3932
    %v3964 = vpop.xlane.xlu0 %3963
    %3965 = vadd.xlane.f32.xlu0 %v3934
    %v3966 = vpop.xlane.xlu0 %3965
    %3967 = vadd.xlane.f32.xlu0 %v3936
    %v3968 = vpop.xlane.xlu0 %3967
    %3969 = vadd.xlane.f32.xlu0 %v3938
    %v3970 = vpop.xlane.xlu0 %3969
    %3971 = vadd.xlane.f32.xlu0 %v3940
    %v3972 = vpop.xlane.xlu0 %3971
    %3973 = vadd.xlane.f32.xlu0 %v3942
    %v3974 = vpop.xlane.xlu0 %3973
    %3975 = vadd.xlane.f32.xlu0 %v3944
    %v3976 = vpop.xlane.xlu0 %3975
    %3977 = vadd.xlane.f32.xlu0 %v3946
    %v3978 = vpop.xlane.xlu0 %3977
    %3979 = vadd.xlane.f32.xlu0 %v3948
    %v3980 = vpop.xlane.xlu0 %3979
    %v3981 = vrcp.pop %v3950
    %v3982 = vrcp.pop %v3952
    %v3983 = vrcp.pop %v3954
    %v3984 = vrcp.pop %v3956
    %v3985 = vrcp.pop %v3958
    %v3986 = vrcp.pop %v3960
    %v3987 = vrcp.pop %v3962
    %v3988 = vrcp.pop %v3964
    %v3989 = vrcp.pop %v3966
    %v3990 = vrcp.pop %v3968
    %v3991 = vrcp.pop %v3970
    %v3992 = vrcp.pop %v3972
    %v3993 = vrcp.pop %v3974
    %v3994 = vrcp.pop %v3976
    %v3995 = vrcp.pop %v3978
    %v3996 = vrcp.pop %v3980
    %v3997 = vmul.f32 %v3918, %v3981
    %v3998 = vmul.f32 %v3920, %v3982
    %v3999 = vmul.f32 %v3922, %v3983
    %v4000 = vmul.f32 %v3924, %v3984
    %v4001 = vmul.f32 %v3926, %v3985
    %v4002 = vmul.f32 %v3928, %v3986
    %v4003 = vmul.f32 %v3930, %v3987
    %v4004 = vmul.f32 %v3932, %v3988
    %v4005 = vmul.f32 %v3934, %v3989
    %v4006 = vmul.f32 %v3936, %v3990
    %v4007 = vmul.f32 %v3938, %v3991
    %v4008 = vmul.f32 %v3940, %v3992
    %v4009 = vmul.f32 %v3942, %v3993
    %v4010 = vmul.f32 %v3944, %v3994
    %v4011 = vmul.f32 %v3946, %v3995
    %v4012 = vmul.f32 %v3948, %v3996
    %v4013 = vpack.c.bf16 %v3998, %v3997
    %v4014 = vpack.c.bf16 %v4000, %v3999
    %v4015 = vpack.c.bf16 %v4002, %v4001
    %v4016 = vpack.c.bf16 %v4004, %v4003
    %v4017 = vpack.c.bf16 %v4006, %v4005
    %v4018 = vpack.c.bf16 %v4008, %v4007
    %v4019 = vpack.c.bf16 %v4010, %v4009
    %v4020 = vpack.c.bf16 %v4012, %v4011
    %4021 = vrot.lane.b32.xlu0 %v2194, 80
    %v4022 = vpop.permute.xlu0 %4021
    %4023 = vrot.lane.b32.xlu0 %v2195, 80
    %v4024 = vpop.permute.xlu0 %4023
    %4025 = vrot.lane.b32.xlu0 %v2196, 80
    %v4026 = vpop.permute.xlu0 %4025
    %4027 = vrot.lane.b32.xlu0 %v2197, 80
    %v4028 = vpop.permute.xlu0 %4027
    %4029 = vrot.lane.b32.xlu0 %v2198, 80
    %v4030 = vpop.permute.xlu0 %4029
    %4031 = vrot.lane.b32.xlu0 %v2199, 80
    %v4032 = vpop.permute.xlu0 %4031
    %4033 = vrot.lane.b32.xlu0 %v2200, 80
    %v4034 = vpop.permute.xlu0 %4033
    %4035 = vrot.lane.b32.xlu0 %v2201, 80
    %v4036 = vpop.permute.xlu0 %4035
    %4045 = vmatprep.subr.bf16.mxu0 0
    %4046 = vmatpush1.bf16.msra.mxu0 %v4022
    %4047 = vmatprep.subr.bf16.mxu0 0
    %4048 = vmatpush1.bf16.msra.mxu0 %v4024
    %4049 = vmatprep.subr.bf16.mxu0 0
    %4050 = vmatpush1.bf16.msra.mxu0 %v4026
    %4051 = vmatprep.subr.bf16.mxu0 0
    %4052 = vmatpush1.bf16.msra.mxu0 %v4028
    %4053 = vmatprep.subr.bf16.mxu0 0
    %4054 = vmatpush1.bf16.msra.mxu0 %v4030
    %4055 = vmatprep.subr.bf16.mxu0 0
    %4056 = vmatpush1.bf16.msra.mxu0 %v4032
    %4057 = vmatprep.subr.bf16.mxu0 0
    %4058 = vmatpush1.bf16.msra.mxu0 %v4034
    %4059 = vmatprep.subr.bf16.mxu0 0
    %4060 = vmatpush1.bf16.msra.mxu0 %v4036
    %4061 = vmatprep.subr.bf16.mxu0 0
    %4062 = vmatpush1.bf16.msra.mxu0 0
    %4063 = vmatprep.subr.bf16.mxu0 0
    %4064 = vmatpush1.bf16.msra.mxu0 0
    %4065 = vmatprep.subr.bf16.mxu0 0
    %4066 = vmatpush1.bf16.msra.mxu0 0
    %4067 = vmatprep.subr.bf16.mxu0 0
    %4068 = vmatpush1.bf16.msra.mxu0 0
    %4069 = vmatprep.subr.bf16.mxu0 0
    %4070 = vmatpush1.bf16.msra.mxu0 0
    %4071 = vmatprep.subr.bf16.mxu0 0
    %4072 = vmatpush1.bf16.msra.mxu0 0
    %4073 = vmatprep.subr.bf16.mxu0 0
    %4074 = vmatpush1.bf16.msra.mxu0 0
    %4075 = vmatprep.subr.bf16.mxu0 0
    %4076 = vmatpush1.bf16.msra.mxu0 0
    %4077 = vmatprep.mubr.bf16.mxu0 0
    %4078 = vmatmul.mubr.bf16.gmra.mrb[0].mxu0 %v4013
    %v4079 = vpop.f32.mrb[0].mxu0
    %v4080 = vadd.f32 0.0, %v4079
    %v4081 = vpop.f32.mrb[0].mxu0
    %v4082 = vpop.f32.mrb[0].mxu0
    %v4083 = vadd.f32 0.0, %v4082
    %v4084 = vpop.f32.mrb[0].mxu0
    %4085 = vmatprep.mubr.bf16.mxu0 0
    %4086 = vmatmul.mubr.bf16.gmra.mrb[0].mxu0 %v4014
    %v4087 = vpop.f32.mrb[0].mxu0
    %v4088 = vadd.f32 0.0, %v4087
    %v4089 = vpop.f32.mrb[0].mxu0
    %v4090 = vpop.f32.mrb[0].mxu0
    %v4091 = vadd.f32 0.0, %v4090
    %v4092 = vpop.f32.mrb[0].mxu0
    %4093 = vmatprep.mubr.bf16.mxu0 0
    %4094 = vmatmul.mubr.bf16.gmra.mrb[0].mxu0 %v4015
    %v4095 = vpop.f32.mrb[0].mxu0
    %v4096 = vadd.f32 0.0, %v4095
    %v4097 = vpop.f32.mrb[0].mxu0
    %v4098 = vpop.f32.mrb[0].mxu0
    %v4099 = vadd.f32 0.0, %v4098
    %v4100 = vpop.f32.mrb[0].mxu0
    %4101 = vmatprep.mubr.bf16.mxu0 0
    %4102 = vmatmul.mubr.bf16.gmra.mrb[0].mxu0 %v4016
    %v4103 = vpop.f32.mrb[0].mxu0
    %v4104 = vadd.f32 0.0, %v4103
    %v4105 = vpop.f32.mrb[0].mxu0
    %v4106 = vpop.f32.mrb[0].mxu0
    %v4107 = vadd.f32 0.0, %v4106
    %v4108 = vpop.f32.mrb[0].mxu0
    %4109 = vmatprep.mubr.bf16.mxu0 0
    %4110 = vmatmul.mubr.bf16.gmra.mrb[0].mxu0 %v4017
    %v4111 = vpop.f32.mrb[0].mxu0
    %v4112 = vadd.f32 0.0, %v4111
    %v4113 = vpop.f32.mrb[0].mxu0
    %v4114 = vpop.f32.mrb[0].mxu0
    %v4115 = vadd.f32 0.0, %v4114
    %v4116 = vpop.f32.mrb[0].mxu0
    %4117 = vmatprep.mubr.bf16.mxu0 0
    %4118 = vmatmul.mubr.bf16.gmra.mrb[0].mxu0 %v4018
    %v4119 = vpop.f32.mrb[0].mxu0
    %v4120 = vadd.f32 0.0, %v4119
    %v4121 = vpop.f32.mrb[0].mxu0
    %v4122 = vpop.f32.mrb[0].mxu0
    %v4123 = vadd.f32 0.0, %v4122
    %v4124 = vpop.f32.mrb[0].mxu0
    %4125 = vmatprep.mubr.bf16.mxu0 0
    %4126 = vmatmul.mubr.bf16.gmra.mrb[0].mxu0 %v4019
    %v4127 = vpop.f32.mrb[0].mxu0
    %v4128 = vadd.f32 0.0, %v4127
    %v4129 = vpop.f32.mrb[0].mxu0
    %v4130 = vpop.f32.mrb[0].mxu0
    %v4131 = vadd.f32 0.0, %v4130
    %v4132 = vpop.f32.mrb[0].mxu0
    %4133 = vmatprep.mubr.bf16.mxu0 0
    %4134 = vmatmul.mubr.bf16.gmra.mrb[0].mxu0 %v4020
    %v4135 = vpop.f32.mrb[0].mxu0
    %v4136 = vadd.f32 0.0, %v4135
    %v4137 = vpop.f32.mrb[0].mxu0
    %v4138 = vpop.f32.mrb[0].mxu0
    %v4139 = vadd.f32 0.0, %v4138
    %v4140 = vpop.f32.mrb[0].mxu0
    %4141 = vdwg.mxu0
    %v4142 = vpack.c.bf16 %v4083, %v4080
    %v4143 = vpack.c.bf16 %v4091, %v4088
    %v4144 = vpack.c.bf16 %v4099, %v4096
    %v4145 = vpack.c.bf16 %v4107, %v4104
    %v4146 = vpack.c.bf16 %v4115, %v4112
    %v4147 = vpack.c.bf16 %v4123, %v4120
    %v4148 = vpack.c.bf16 %v4131, %v4128
    %v4149 = vpack.c.bf16 %v4139, %v4136
    %v4152 = vunpack.c.l.b16 %v1466
    %v4153 = vunpack.c.l.b16 %v1467
    %v4154 = vpack.c.b16 %v4153, %v4152
    %v4157 = vsel %vm1880, %v4142, 0
    %v4160 = vsel %vm1880, %v4143, 0
    %v4163 = vsel %vm1880, %v4144, 0
    %v4166 = vsel %vm1880, %v4145, 0
    %v4169 = vsel %vm1880, %v4146, 0
    %v4172 = vsel %vm1880, %v4147, 0
    %v4175 = vsel %vm1880, %v4148, 0
    %v4178 = vsel %vm1880, %v4149, 0
    %4180 = vmatprep.subr.bf16.mxu0 0
    %4181 = vmatpush1.bf16.msra.mxu0 %v4154
    %4182 = vmatprep.subr.bf16.mxu0 0
    %4183 = vmatpush1.bf16.msra.mxu0 0
    %4184 = vmatprep.subr.bf16.mxu0 0
    %4185 = vmatpush1.bf16.msra.mxu0 0
    %4186 = vmatprep.subr.bf16.mxu0 0
    %4187 = vmatpush1.bf16.msra.mxu0 0
    %4188 = vmatprep.subr.bf16.mxu0 0
    %4189 = vmatpush1.bf16.msra.mxu0 0
    %4190 = vmatprep.subr.bf16.mxu0 0
    %4191 = vmatpush1.bf16.msra.mxu0 0
    %4192 = vmatprep.subr.bf16.mxu0 0
    %4193 = vmatpush1.bf16.msra.mxu0 0
    %4194 = vmatprep.subr.bf16.mxu0 0
    %4195 = vmatpush1.bf16.msra.mxu0 0
    %4196 = vmatprep.subr.bf16.mxu0 0
    %4197 = vmatpush1.bf16.msra.mxu0 0
    %4198 = vmatprep.subr.bf16.mxu0 0
    %4199 = vmatpush1.bf16.msra.mxu0 0
    %4200 = vmatprep.subr.bf16.mxu0 0
    %4201 = vmatpush1.bf16.msra.mxu0 0
    %4202 = vmatprep.subr.bf16.mxu0 0
    %4203 = vmatpush1.bf16.msra.mxu0 0
    %4204 = vmatprep.subr.bf16.mxu0 0
    %4205 = vmatpush1.bf16.msra.mxu0 0
    %4206 = vmatprep.subr.bf16.mxu0 0
    %4207 = vmatpush1.bf16.msra.mxu0 0
    %4208 = vmatprep.subr.bf16.mxu0 0
    %4209 = vmatpush1.bf16.msra.mxu0 0
    %4210 = vmatprep.subr.bf16.mxu0 0
    %4211 = vmatpush1.bf16.msra.mxu0 0
    %4212 = vmatprep.mubr.bf16.mxu0 0
    %4213 = vmatmul.mubr.bf16.gmra.mrb[0].mxu0 %v4157
    %v4214 = vpop.f32.mrb[0].mxu0
    %v4215 = vadd.f32 0.0, %v4214
    %v4216 = vpop.f32.mrb[0].mxu0
    %v4217 = vpop.f32.mrb[0].mxu0
    %v4218 = vadd.f32 0.0, %v4217
    %v4219 = vpop.f32.mrb[0].mxu0
    %4220 = vmatprep.mubr.bf16.mxu0 0
    %4221 = vmatmul.mubr.bf16.gmra.mrb[0].mxu0 %v4160
    %v4222 = vpop.f32.mrb[0].mxu0
    %v4223 = vadd.f32 0.0, %v4222
    %v4224 = vpop.f32.mrb[0].mxu0
    %v4225 = vpop.f32.mrb[0].mxu0
    %v4226 = vadd.f32 0.0, %v4225
    %v4227 = vpop.f32.mrb[0].mxu0
    %4228 = vmatprep.mubr.bf16.mxu0 0
    %4229 = vmatmul.mubr.bf16.gmra.mrb[0].mxu0 %v4163
    %v4230 = vpop.f32.mrb[0].mxu0
    %v4231 = vadd.f32 0.0, %v4230
    %v4232 = vpop.f32.mrb[0].mxu0
    %v4233 = vpop.f32.mrb[0].mxu0
    %v4234 = vadd.f32 0.0, %v4233
    %v4235 = vpop.f32.mrb[0].mxu0
    %4236 = vmatprep.mubr.bf16.mxu0 0
    %4237 = vmatmul.mubr.bf16.gmra.mrb[0].mxu0 %v4166
    %v4238 = vpop.f32.mrb[0].mxu0
    %v4239 = vadd.f32 0.0, %v4238
    %v4240 = vpop.f32.mrb[0].mxu0
    %v4241 = vpop.f32.mrb[0].mxu0
    %v4242 = vadd.f32 0.0, %v4241
    %v4243 = vpop.f32.mrb[0].mxu0
    %4244 = vmatprep.mubr.bf16.mxu0 0
    %4245 = vmatmul.mubr.bf16.gmra.mrb[0].mxu0 %v4169
    %v4246 = vpop.f32.mrb[0].mxu0
    %v4247 = vadd.f32 0.0, %v4246
    %v4248 = vpop.f32.mrb[0].mxu0
    %v4249 = vpop.f32.mrb[0].mxu0
    %v4250 = vadd.f32 0.0, %v4249
    %v4251 = vpop.f32.mrb[0].mxu0
    %4252 = vmatprep.mubr.bf16.mxu0 0
    %4253 = vmatmul.mubr.bf16.gmra.mrb[0].mxu0 %v4172
    %v4254 = vpop.f32.mrb[0].mxu0
    %v4255 = vadd.f32 0.0, %v4254
    %v4256 = vpop.f32.mrb[0].mxu0
    %v4257 = vpop.f32.mrb[0].mxu0
    %v4258 = vadd.f32 0.0, %v4257
    %v4259 = vpop.f32.mrb[0].mxu0
    %4260 = vmatprep.mubr.bf16.mxu0 0
    %4261 = vmatmul.mubr.bf16.gmra.mrb[0].mxu0 %v4175
    %v4262 = vpop.f32.mrb[0].mxu0
    %v4263 = vadd.f32 0.0, %v4262
    %v4264 = vpop.f32.mrb[0].mxu0
    %v4265 = vpop.f32.mrb[0].mxu0
    %v4266 = vadd.f32 0.0, %v4265
    %v4267 = vpop.f32.mrb[0].mxu0
    %4268 = vmatprep.mubr.bf16.mxu0 0
    %4269 = vmatmul.mubr.bf16.gmra.mrb[0].mxu0 %v4178
    %v4270 = vpop.f32.mrb[0].mxu0
    %v4271 = vadd.f32 0.0, %v4270
    %v4272 = vpop.f32.mrb[0].mxu0
    %v4273 = vpop.f32.mrb[0].mxu0
    %v4274 = vadd.f32 0.0, %v4273
    %v4275 = vpop.f32.mrb[0].mxu0
    %4276 = vdwg.mxu0
    %v4277 = vadd.f32 %v3660, %v4215
    %v4278 = vadd.f32 %v3661, %v4218
    %v4279 = vadd.f32 %v3662, %v4223
    %v4280 = vadd.f32 %v3663, %v4226
    %v4281 = vadd.f32 %v3664, %v4231
    %v4282 = vadd.f32 %v3665, %v4234
    %v4283 = vadd.f32 %v3666, %v4239
    %v4284 = vadd.f32 %v3667, %v4242
    %v4285 = vadd.f32 %v3668, %v4247
    %v4286 = vadd.f32 %v3669, %v4250
    %v4287 = vadd.f32 %v3670, %v4255
    %v4288 = vadd.f32 %v3671, %v4258
    %v4289 = vadd.f32 %v3672, %v4263
    %v4290 = vadd.f32 %v3673, %v4266
    %v4291 = vadd.f32 %v3674, %v4271
    %v4292 = vadd.f32 %v3675, %v4274
    %v4294 = vlaneseq
    %v4295 = vshrl.u32 %v4294, 7
    %v4296 = vsub.s32 0, %v4295
    %v4297 = vrot.slane %v1468, %v4296
    %v4299 = vadd.f32 %v4277, %v4297
    %v4300 = vadd.f32 %v4278, %v4297
    %v4301 = vadd.f32 %v4279, %v4297
    %v4302 = vadd.f32 %v4280, %v4297
    %v4303 = vadd.f32 %v4281, %v4297
    %v4304 = vadd.f32 %v4282, %v4297
    %v4305 = vadd.f32 %v4283, %v4297
    %v4306 = vadd.f32 %v4284, %v4297
    %v4307 = vadd.f32 %v4285, %v4297
    %v4308 = vadd.f32 %v4286, %v4297
    %v4309 = vadd.f32 %v4287, %v4297
    %v4310 = vadd.f32 %v4288, %v4297
    %v4311 = vadd.f32 %v4289, %v4297
    %v4312 = vadd.f32 %v4290, %v4297
    %v4313 = vadd.f32 %v4291, %v4297
    %v4314 = vadd.f32 %v4292, %v4297
    %v4315 = vadd.f32 %v4299, %v1420
    %v4316 = vadd.f32 %v4300, %v1421
    %v4317 = vadd.f32 %v4301, %v1422
    %v4318 = vadd.f32 %v4302, %v1423
    %v4319 = vadd.f32 %v4303, %v1424
    %v4320 = vadd.f32 %v4304, %v1425
    %v4321 = vadd.f32 %v4305, %v1426
    %v4322 = vadd.f32 %v4306, %v1427
    %v4323 = vadd.f32 %v4307, %v1428
    %v4324 = vadd.f32 %v4308, %v1429
    %v4325 = vadd.f32 %v4309, %v1430
    %v4326 = vadd.f32 %v4310, %v1431
    %v4327 = vadd.f32 %v4311, %v1432
    %v4328 = vadd.f32 %v4312, %v1433
    %v4329 = vadd.f32 %v4313, %v1434
    %v4330 = vadd.f32 %v4314, %v1435
    %v4331 = vld [vmem:[%s35] sm:$0xf]
    %v4332 = vld [vmem:[%s35 + $0x4] sm:$0xf]
    %v4333 = vld [vmem:[%s35 + $0x8] sm:$0xf]
    %v4334 = vld [vmem:[%s35 + $0xc] sm:$0xf]
    %v4335 = vld [vmem:[%s35 + $0x10] sm:$0xf]
    %v4336 = vld [vmem:[%s35 + $0x14] sm:$0xf]
    %v4337 = vld [vmem:[%s35 + $0x18] sm:$0xf]
    %v4338 = vld [vmem:[%s35 + $0x1c] sm:$0xf]
    %v4339 = vpack.c.bf16 %v4316, %v4315
    %v4340 = vpack.c.bf16 %v4318, %v4317
    %v4341 = vpack.c.bf16 %v4320, %v4319
    %v4342 = vpack.c.bf16 %v4322, %v4321
    %v4343 = vpack.c.bf16 %v4324, %v4323
    %v4344 = vpack.c.bf16 %v4326, %v4325
    %v4345 = vpack.c.bf16 %v4328, %v4327
    %v4346 = vpack.c.bf16 %v4330, %v4329
    %v4347 = vld [vmem:[%s37] sm:$0x1]
    %v4349 = vlaneseq
    %v4350 = vshrl.u32 %v4349, 7
    %v4351 = vsub.s32 0, %v4350
    %v4352 = vrot.slane %v4347, %v4351
    %v4362 = vunpack.c.l.b16 %v4331
    %v4363 = vunpack.c.l.b16 %v4332
    %v4364 = vunpack.c.l.b16 %v4333
    %v4365 = vunpack.c.l.b16 %v4334
    %v4366 = vunpack.c.l.b16 %v4335
    %v4367 = vunpack.c.l.b16 %v4336
    %v4368 = vunpack.c.l.b16 %v4337
    %v4369 = vunpack.c.l.b16 %v4338
    %v4370 = vpack.c.b16 %v4363, %v4362
    %v4371 = vpack.c.b16 %v4365, %v4364
    %v4372 = vpack.c.b16 %v4367, %v4366
    %v4373 = vpack.c.b16 %v4369, %v4368
    %v4379 = vsel %vm224, %v4339, 0
    %v4382 = vsel %vm224, %v4340, 0
    %v4385 = vsel %vm224, %v4341, 0
    %v4388 = vsel %vm224, %v4342, 0
    %v4391 = vsel %vm224, %v4343, 0
    %v4394 = vsel %vm224, %v4344, 0
    %v4397 = vsel %vm224, %v4345, 0
    %v4400 = vsel %vm224, %v4346, 0
    %4402 = vmatprep.subr.bf16.mxu0 0
    %4403 = vmatpush1.bf16.msra.mxu0 %v4370
    %4404 = vmatprep.subr.bf16.mxu0 0
    %4405 = vmatpush1.bf16.msra.mxu0 %v4371
    %4406 = vmatprep.subr.bf16.mxu0 0
    %4407 = vmatpush1.bf16.msra.mxu0 %v4372
    %4408 = vmatprep.subr.bf16.mxu0 0
    %4409 = vmatpush1.bf16.msra.mxu0 %v4373
    %4410 = vmatprep.subr.bf16.mxu0 0
    %4411 = vmatpush1.bf16.msra.mxu0 0
    %4412 = vmatprep.subr.bf16.mxu0 0
    %4413 = vmatpush1.bf16.msra.mxu0 0
    %4414 = vmatprep.subr.bf16.mxu0 0
    %4415 = vmatpush1.bf16.msra.mxu0 0
    %4416 = vmatprep.subr.bf16.mxu0 0
    %4417 = vmatpush1.bf16.msra.mxu0 0
    %4418 = vmatprep.subr.bf16.mxu0 0
    %4419 = vmatpush1.bf16.msra.mxu0 0
    %4420 = vmatprep.subr.bf16.mxu0 0
    %4421 = vmatpush1.bf16.msra.mxu0 0
    %4422 = vmatprep.subr.bf16.mxu0 0
    %4423 = vmatpush1.bf16.msra.mxu0 0
    %4424 = vmatprep.subr.bf16.mxu0 0
    %4425 = vmatpush1.bf16.msra.mxu0 0
    %4426 = vmatprep.subr.bf16.mxu0 0
    %4427 = vmatpush1.bf16.msra.mxu0 0
    %4428 = vmatprep.subr.bf16.mxu0 0
    %4429 = vmatpush1.bf16.msra.mxu0 0
    %4430 = vmatprep.subr.bf16.mxu0 0
    %4431 = vmatpush1.bf16.msra.mxu0 0
    %4432 = vmatprep.subr.bf16.mxu0 0
    %4433 = vmatpush1.bf16.msra.mxu0 0
    %4434 = vmatprep.mubr.bf16.mxu0 0
    %4435 = vmatmul.mubr.bf16.gmra.mrb[0].mxu0 %v4379
    %v4436 = vpop.f32.mrb[0].mxu0
    %v4437 = vadd.f32 %v4352, %v4436
    %v4438 = vpop.f32.mrb[0].mxu0
    %v4439 = vpop.f32.mrb[0].mxu0
    %v4440 = vadd.f32 %v4352, %v4439
    %v4441 = vpop.f32.mrb[0].mxu0
    %4442 = vmatprep.mubr.bf16.mxu0 0
    %4443 = vmatmul.mubr.bf16.gmra.mrb[0].mxu0 %v4382
    %v4444 = vpop.f32.mrb[0].mxu0
    %v4445 = vadd.f32 %v4352, %v4444
    %v4446 = vpop.f32.mrb[0].mxu0
    %v4447 = vpop.f32.mrb[0].mxu0
    %v4448 = vadd.f32 %v4352, %v4447
    %v4449 = vpop.f32.mrb[0].mxu0
    %4450 = vmatprep.mubr.bf16.mxu0 0
    %4451 = vmatmul.mubr.bf16.gmra.mrb[0].mxu0 %v4385
    %v4452 = vpop.f32.mrb[0].mxu0
    %v4453 = vadd.f32 %v4352, %v4452
    %v4454 = vpop.f32.mrb[0].mxu0
    %v4455 = vpop.f32.mrb[0].mxu0
    %v4456 = vadd.f32 %v4352, %v4455
    %v4457 = vpop.f32.mrb[0].mxu0
    %4458 = vmatprep.mubr.bf16.mxu0 0
    %4459 = vmatmul.mubr.bf16.gmra.mrb[0].mxu0 %v4388
    %v4460 = vpop.f32.mrb[0].mxu0
    %v4461 = vadd.f32 %v4352, %v4460
    %v4462 = vpop.f32.mrb[0].mxu0
    %v4463 = vpop.f32.mrb[0].mxu0
    %v4464 = vadd.f32 %v4352, %v4463
    %v4465 = vpop.f32.mrb[0].mxu0
    %4466 = vmatprep.mubr.bf16.mxu0 0
    %4467 = vmatmul.mubr.bf16.gmra.mrb[0].mxu0 %v4391
    %v4468 = vpop.f32.mrb[0].mxu0
    %v4469 = vadd.f32 %v4352, %v4468
    %v4470 = vpop.f32.mrb[0].mxu0
    %v4471 = vpop.f32.mrb[0].mxu0
    %v4472 = vadd.f32 %v4352, %v4471
    %v4473 = vpop.f32.mrb[0].mxu0
    %4474 = vmatprep.mubr.bf16.mxu0 0
    %4475 = vmatmul.mubr.bf16.gmra.mrb[0].mxu0 %v4394
    %v4476 = vpop.f32.mrb[0].mxu0
    %v4477 = vadd.f32 %v4352, %v4476
    %v4478 = vpop.f32.mrb[0].mxu0
    %v4479 = vpop.f32.mrb[0].mxu0
    %v4480 = vadd.f32 %v4352, %v4479
    %v4481 = vpop.f32.mrb[0].mxu0
    %4482 = vmatprep.mubr.bf16.mxu0 0
    %4483 = vmatmul.mubr.bf16.gmra.mrb[0].mxu0 %v4397
    %v4484 = vpop.f32.mrb[0].mxu0
    %v4485 = vadd.f32 %v4352, %v4484
    %v4486 = vpop.f32.mrb[0].mxu0
    %v4487 = vpop.f32.mrb[0].mxu0
    %v4488 = vadd.f32 %v4352, %v4487
    %v4489 = vpop.f32.mrb[0].mxu0
    %4490 = vmatprep.mubr.bf16.mxu0 0
    %4491 = vmatmul.mubr.bf16.gmra.mrb[0].mxu0 %v4400
    %v4492 = vpop.f32.mrb[0].mxu0
    %v4493 = vadd.f32 %v4352, %v4492
    %v4494 = vpop.f32.mrb[0].mxu0
    %v4495 = vpop.f32.mrb[0].mxu0
    %v4496 = vadd.f32 %v4352, %v4495
    %v4497 = vpop.f32.mrb[0].mxu0
    %4498 = vdwg.mxu0
    %v4499 = vld [vmem:[%s39] sm:$0xf]
    %v4500 = vld [vmem:[%s39 + $0x4] sm:$0xf]
    %v4501 = vld [vmem:[%s39 + $0x8] sm:$0xf]
    %v4502 = vld [vmem:[%s39 + $0xc] sm:$0xf]
    %v4503 = vld [vmem:[%s41] sm:$0xf]
    %v4504 = vld [vmem:[%s41 + $0x4] sm:$0xf]
    %v4505 = vld [vmem:[%s41 + $0x8] sm:$0xf]
    %v4506 = vld [vmem:[%s41 + $0xc] sm:$0xf]
    %v4507 = vld [vmem:[%s43] sm:$0xf]
    %v4508 = vld [vmem:[%s43 + $0x4] sm:$0xf]
    %v4509 = vld [vmem:[%s43 + $0x8] sm:$0xf]
    %v4510 = vld [vmem:[%s43 + $0xc] sm:$0xf]
    %v4511 = vld [vmem:[%s45] sm:$0xf]
    %v4512 = vld [vmem:[%s45 + $0x4] sm:$0xf]
    %v4513 = vld [vmem:[%s45 + $0x8] sm:$0xf]
    %v4514 = vld [vmem:[%s45 + $0xc] sm:$0xf]
    %v4515 = vld [vmem:[%s47] sm:$0x1]
    %v4520 = vunpack.c.l.b16 %v4499
    %v4521 = vunpack.c.l.b16 %v4500
    %v4522 = vunpack.c.l.b16 %v4501
    %v4523 = vunpack.c.l.b16 %v4502
    %v4524 = vpack.c.b16 %v4521, %v4520
    %v4525 = vpack.c.b16 %v4523, %v4522
    %4528 = vmatprep.subr.bf16.mxu0 0
    %4529 = vmatpush1.bf16.msra.mxu0 %v4524
    %4530 = vmatprep.subr.bf16.mxu0 0
    %4531 = vmatpush1.bf16.msra.mxu0 %v4525
    %4532 = vmatprep.subr.bf16.mxu0 0
    %4533 = vmatpush1.bf16.msra.mxu0 0
    %4534 = vmatprep.subr.bf16.mxu0 0
    %4535 = vmatpush1.bf16.msra.mxu0 0
    %4536 = vmatprep.subr.bf16.mxu0 0
    %4537 = vmatpush1.bf16.msra.mxu0 0
    %4538 = vmatprep.subr.bf16.mxu0 0
    %4539 = vmatpush1.bf16.msra.mxu0 0
    %4540 = vmatprep.subr.bf16.mxu0 0
    %4541 = vmatpush1.bf16.msra.mxu0 0
    %4542 = vmatprep.subr.bf16.mxu0 0
    %4543 = vmatpush1.bf16.msra.mxu0 0
    %4544 = vmatprep.subr.bf16.mxu0 0
    %4545 = vmatpush1.bf16.msra.mxu0 0
    %4546 = vmatprep.subr.bf16.mxu0 0
    %4547 = vmatpush1.bf16.msra.mxu0 0
    %4548 = vmatprep.subr.bf16.mxu0 0
    %4549 = vmatpush1.bf16.msra.mxu0 0
    %4550 = vmatprep.subr.bf16.mxu0 0
    %4551 = vmatpush1.bf16.msra.mxu0 0
    %4552 = vmatprep.subr.bf16.mxu0 0
    %4553 = vmatpush1.bf16.msra.mxu0 0
    %4554 = vmatprep.subr.bf16.mxu0 0
    %4555 = vmatpush1.bf16.msra.mxu0 0
    %4556 = vmatprep.subr.bf16.mxu0 0
    %4557 = vmatpush1.bf16.msra.mxu0 0
    %4558 = vmatprep.subr.bf16.mxu0 0
    %4559 = vmatpush1.bf16.msra.mxu0 0
    %4560 = vmatprep.mubr.bf16.mxu0 0
    %4561 = vmatmul.mubr.bf16.gmra.mrb[0].mxu0 %v990
    %v4562 = vpop.f32.mrb[0].mxu0
    %v4563 = vadd.f32 0.0, %v4562
    %v4564 = vpop.f32.mrb[0].mxu0
    %v4565 = vpop.f32.mrb[0].mxu0
    %v4566 = vadd.f32 0.0, %v4565
    %v4567 = vpop.f32.mrb[0].mxu0
    %4568 = vmatprep.mubr.bf16.mxu0 0
    %4569 = vmatmul.mubr.bf16.gmra.mrb[0].mxu0 %v993
    %v4570 = vpop.f32.mrb[0].mxu0
    %v4571 = vadd.f32 0.0, %v4570
    %v4572 = vpop.f32.mrb[0].mxu0
    %v4573 = vpop.f32.mrb[0].mxu0
    %v4574 = vadd.f32 0.0, %v4573
    %v4575 = vpop.f32.mrb[0].mxu0
    %4576 = vmatprep.mubr.bf16.mxu0 0
    %4577 = vmatmul.mubr.bf16.gmra.mrb[0].mxu0 %v996
    %v4578 = vpop.f32.mrb[0].mxu0
    %v4579 = vadd.f32 0.0, %v4578
    %v4580 = vpop.f32.mrb[0].mxu0
    %v4581 = vpop.f32.mrb[0].mxu0
    %v4582 = vadd.f32 0.0, %v4581
    %v4583 = vpop.f32.mrb[0].mxu0
    %4584 = vmatprep.mubr.bf16.mxu0 0
    %4585 = vmatmul.mubr.bf16.gmra.mrb[0].mxu0 %v999
    %v4586 = vpop.f32.mrb[0].mxu0
    %v4587 = vadd.f32 0.0, %v4586
    %v4588 = vpop.f32.mrb[0].mxu0
    %v4589 = vpop.f32.mrb[0].mxu0
    %v4590 = vadd.f32 0.0, %v4589
    %v4591 = vpop.f32.mrb[0].mxu0
    %4592 = vmatprep.mubr.bf16.mxu0 0
    %4593 = vmatmul.mubr.bf16.gmra.mrb[0].mxu0 %v1002
    %v4594 = vpop.f32.mrb[0].mxu0
    %v4595 = vadd.f32 0.0, %v4594
    %v4596 = vpop.f32.mrb[0].mxu0
    %v4597 = vpop.f32.mrb[0].mxu0
    %v4598 = vadd.f32 0.0, %v4597
    %v4599 = vpop.f32.mrb[0].mxu0
    %4600 = vmatprep.mubr.bf16.mxu0 0
    %4601 = vmatmul.mubr.bf16.gmra.mrb[0].mxu0 %v1005
    %v4602 = vpop.f32.mrb[0].mxu0
    %v4603 = vadd.f32 0.0, %v4602
    %v4604 = vpop.f32.mrb[0].mxu0
    %v4605 = vpop.f32.mrb[0].mxu0
    %v4606 = vadd.f32 0.0, %v4605
    %v4607 = vpop.f32.mrb[0].mxu0
    %4608 = vmatprep.mubr.bf16.mxu0 0
    %4609 = vmatmul.mubr.bf16.gmra.mrb[0].mxu0 %v1008
    %v4610 = vpop.f32.mrb[0].mxu0
    %v4611 = vadd.f32 0.0, %v4610
    %v4612 = vpop.f32.mrb[0].mxu0
    %v4613 = vpop.f32.mrb[0].mxu0
    %v4614 = vadd.f32 0.0, %v4613
    %v4615 = vpop.f32.mrb[0].mxu0
    %4616 = vmatprep.mubr.bf16.mxu0 0
    %4617 = vmatmul.mubr.bf16.gmra.mrb[0].mxu0 %v1011
    %v4618 = vpop.f32.mrb[0].mxu0
    %v4619 = vadd.f32 0.0, %v4618
    %v4620 = vpop.f32.mrb[0].mxu0
    %v4621 = vpop.f32.mrb[0].mxu0
    %v4622 = vadd.f32 0.0, %v4621
    %v4623 = vpop.f32.mrb[0].mxu0
    %4624 = vdwg.mxu0
    %v4625 = vpack.c.bf16 %v4440, %v4437
    %v4626 = vpack.c.bf16 %v4448, %v4445
    %v4627 = vpack.c.bf16 %v4456, %v4453
    %v4628 = vpack.c.bf16 %v4464, %v4461
    %v4629 = vpack.c.bf16 %v4472, %v4469
    %v4630 = vpack.c.bf16 %v4480, %v4477
    %v4631 = vpack.c.bf16 %v4488, %v4485
    %v4632 = vpack.c.bf16 %v4496, %v4493
    %v4637 = vunpack.c.l.b16 %v4503
    %v4638 = vunpack.c.l.b16 %v4504
    %v4639 = vunpack.c.l.b16 %v4505
    %v4640 = vunpack.c.l.b16 %v4506
    %v4641 = vpack.c.b16 %v4638, %v4637
    %v4642 = vpack.c.b16 %v4640, %v4639
    %v4646 = vsel %vm988, %v4625, 0
    %v4649 = vsel %vm988, %v4626, 0
    %v4652 = vsel %vm988, %v4627, 0
    %v4655 = vsel %vm988, %v4628, 0
    %v4658 = vsel %vm988, %v4629, 0
    %v4661 = vsel %vm988, %v4630, 0
    %v4664 = vsel %vm988, %v4631, 0
    %v4667 = vsel %vm988, %v4632, 0
    %4669 = vmatprep.subr.bf16.mxu0 0
    %4670 = vmatpush1.bf16.msra.mxu0 %v4641
    %4671 = vmatprep.subr.bf16.mxu0 0
    %4672 = vmatpush1.bf16.msra.mxu0 %v4642
    %4673 = vmatprep.subr.bf16.mxu0 0
    %4674 = vmatpush1.bf16.msra.mxu0 0
    %4675 = vmatprep.subr.bf16.mxu0 0
    %4676 = vmatpush1.bf16.msra.mxu0 0
    %4677 = vmatprep.subr.bf16.mxu0 0
    %4678 = vmatpush1.bf16.msra.mxu0 0
    %4679 = vmatprep.subr.bf16.mxu0 0
    %4680 = vmatpush1.bf16.msra.mxu0 0
    %4681 = vmatprep.subr.bf16.mxu0 0
    %4682 = vmatpush1.bf16.msra.mxu0 0
    %4683 = vmatprep.subr.bf16.mxu0 0
    %4684 = vmatpush1.bf16.msra.mxu0 0
    %4685 = vmatprep.subr.bf16.mxu0 0
    %4686 = vmatpush1.bf16.msra.mxu0 0
    %4687 = vmatprep.subr.bf16.mxu0 0
    %4688 = vmatpush1.bf16.msra.mxu0 0
    %4689 = vmatprep.subr.bf16.mxu0 0
    %4690 = vmatpush1.bf16.msra.mxu0 0
    %4691 = vmatprep.subr.bf16.mxu0 0
    %4692 = vmatpush1.bf16.msra.mxu0 0
    %4693 = vmatprep.subr.bf16.mxu0 0
    %4694 = vmatpush1.bf16.msra.mxu0 0
    %4695 = vmatprep.subr.bf16.mxu0 0
    %4696 = vmatpush1.bf16.msra.mxu0 0
    %4697 = vmatprep.subr.bf16.mxu0 0
    %4698 = vmatpush1.bf16.msra.mxu0 0
    %4699 = vmatprep.subr.bf16.mxu0 0
    %4700 = vmatpush1.bf16.msra.mxu0 0
    %4701 = vmatprep.mubr.bf16.mxu0 0
    %4702 = vmatmul.mubr.bf16.gmra.mrb[0].mxu0 %v4646
    %v4703 = vpop.f32.mrb[0].mxu0
    %v4704 = vadd.f32 0.0, %v4703
    %v4705 = vpop.f32.mrb[0].mxu0
    %v4706 = vpop.f32.mrb[0].mxu0
    %v4707 = vadd.f32 0.0, %v4706
    %v4708 = vpop.f32.mrb[0].mxu0
    %4709 = vmatprep.mubr.bf16.mxu0 0
    %4710 = vmatmul.mubr.bf16.gmra.mrb[0].mxu0 %v4649
    %v4711 = vpop.f32.mrb[0].mxu0
    %v4712 = vadd.f32 0.0, %v4711
    %v4713 = vpop.f32.mrb[0].mxu0
    %v4714 = vpop.f32.mrb[0].mxu0
    %v4715 = vadd.f32 0.0, %v4714
    %v4716 = vpop.f32.mrb[0].mxu0
    %4717 = vmatprep.mubr.bf16.mxu0 0
    %4718 = vmatmul.mubr.bf16.gmra.mrb[0].mxu0 %v4652
    %v4719 = vpop.f32.mrb[0].mxu0
    %v4720 = vadd.f32 0.0, %v4719
    %v4721 = vpop.f32.mrb[0].mxu0
    %v4722 = vpop.f32.mrb[0].mxu0
    %v4723 = vadd.f32 0.0, %v4722
    %v4724 = vpop.f32.mrb[0].mxu0
    %4725 = vmatprep.mubr.bf16.mxu0 0
    %4726 = vmatmul.mubr.bf16.gmra.mrb[0].mxu0 %v4655
    %v4727 = vpop.f32.mrb[0].mxu0
    %v4728 = vadd.f32 0.0, %v4727
    %v4729 = vpop.f32.mrb[0].mxu0
    %v4730 = vpop.f32.mrb[0].mxu0
    %v4731 = vadd.f32 0.0, %v4730
    %v4732 = vpop.f32.mrb[0].mxu0
    %4733 = vmatprep.mubr.bf16.mxu0 0
    %4734 = vmatmul.mubr.bf16.gmra.mrb[0].mxu0 %v4658
    %v4735 = vpop.f32.mrb[0].mxu0
    %v4736 = vadd.f32 0.0, %v4735
    %v4737 = vpop.f32.mrb[0].mxu0
    %v4738 = vpop.f32.mrb[0].mxu0
    %v4739 = vadd.f32 0.0, %v4738
    %v4740 = vpop.f32.mrb[0].mxu0
    %4741 = vmatprep.mubr.bf16.mxu0 0
    %4742 = vmatmul.mubr.bf16.gmra.mrb[0].mxu0 %v4661
    %v4743 = vpop.f32.mrb[0].mxu0
    %v4744 = vadd.f32 0.0, %v4743
    %v4745 = vpop.f32.mrb[0].mxu0
    %v4746 = vpop.f32.mrb[0].mxu0
    %v4747 = vadd.f32 0.0, %v4746
    %v4748 = vpop.f32.mrb[0].mxu0
    %4749 = vmatprep.mubr.bf16.mxu0 0
    %4750 = vmatmul.mubr.bf16.gmra.mrb[0].mxu0 %v4664
    %v4751 = vpop.f32.mrb[0].mxu0
    %v4752 = vadd.f32 0.0, %v4751
    %v4753 = vpop.f32.mrb[0].mxu0
    %v4754 = vpop.f32.mrb[0].mxu0
    %v4755 = vadd.f32 0.0, %v4754
    %v4756 = vpop.f32.mrb[0].mxu0
    %4757 = vmatprep.mubr.bf16.mxu0 0
    %4758 = vmatmul.mubr.bf16.gmra.mrb[0].mxu0 %v4667
    %v4759 = vpop.f32.mrb[0].mxu0
    %v4760 = vadd.f32 0.0, %v4759
    %v4761 = vpop.f32.mrb[0].mxu0
    %v4762 = vpop.f32.mrb[0].mxu0
    %v4763 = vadd.f32 0.0, %v4762
    %v4764 = vpop.f32.mrb[0].mxu0
    %4765 = vdwg.mxu0
    %v4770 = vunpack.c.l.b16 %v4507
    %v4771 = vunpack.c.l.b16 %v4508
    %v4772 = vunpack.c.l.b16 %v4509
    %v4773 = vunpack.c.l.b16 %v4510
    %v4774 = vpack.c.b16 %v4771, %v4770
    %v4775 = vpack.c.b16 %v4773, %v4772
    %4778 = vmatprep.subr.bf16.mxu0 0
    %4779 = vmatpush1.bf16.msra.mxu0 %v4774
    %4780 = vmatprep.subr.bf16.mxu0 0
    %4781 = vmatpush1.bf16.msra.mxu0 %v4775
    %4782 = vmatprep.subr.bf16.mxu0 0
    %4783 = vmatpush1.bf16.msra.mxu0 0
    %4784 = vmatprep.subr.bf16.mxu0 0
    %4785 = vmatpush1.bf16.msra.mxu0 0
    %4786 = vmatprep.subr.bf16.mxu0 0
    %4787 = vmatpush1.bf16.msra.mxu0 0
    %4788 = vmatprep.subr.bf16.mxu0 0
    %4789 = vmatpush1.bf16.msra.mxu0 0
    %4790 = vmatprep.subr.bf16.mxu0 0
    %4791 = vmatpush1.bf16.msra.mxu0 0
    %4792 = vmatprep.subr.bf16.mxu0 0
    %4793 = vmatpush1.bf16.msra.mxu0 0
    %4794 = vmatprep.subr.bf16.mxu0 0
    %4795 = vmatpush1.bf16.msra.mxu0 0
    %4796 = vmatprep.subr.bf16.mxu0 0
    %4797 = vmatpush1.bf16.msra.mxu0 0
    %4798 = vmatprep.subr.bf16.mxu0 0
    %4799 = vmatpush1.bf16.msra.mxu0 0
    %4800 = vmatprep.subr.bf16.mxu0 0
    %4801 = vmatpush1.bf16.msra.mxu0 0
    %4802 = vmatprep.subr.bf16.mxu0 0
    %4803 = vmatpush1.bf16.msra.mxu0 0
    %4804 = vmatprep.subr.bf16.mxu0 0
    %4805 = vmatpush1.bf16.msra.mxu0 0
    %4806 = vmatprep.subr.bf16.mxu0 0
    %4807 = vmatpush1.bf16.msra.mxu0 0
    %4808 = vmatprep.subr.bf16.mxu0 0
    %4809 = vmatpush1.bf16.msra.mxu0 0
    %4810 = vmatprep.mubr.bf16.mxu0 0
    %4811 = vmatmul.mubr.bf16.gmra.mrb[0].mxu0 %v4646
    %v4812 = vpop.f32.mrb[0].mxu0
    %v4813 = vadd.f32 0.0, %v4812
    %v4814 = vpop.f32.mrb[0].mxu0
    %v4815 = vpop.f32.mrb[0].mxu0
    %v4816 = vadd.f32 0.0, %v4815
    %v4817 = vpop.f32.mrb[0].mxu0
    %4818 = vmatprep.mubr.bf16.mxu0 0
    %4819 = vmatmul.mubr.bf16.gmra.mrb[0].mxu0 %v4649
    %v4820 = vpop.f32.mrb[0].mxu0
    %v4821 = vadd.f32 0.0, %v4820
    %v4822 = vpop.f32.mrb[0].mxu0
    %v4823 = vpop.f32.mrb[0].mxu0
    %v4824 = vadd.f32 0.0, %v4823
    %v4825 = vpop.f32.mrb[0].mxu0
    %4826 = vmatprep.mubr.bf16.mxu0 0
    %4827 = vmatmul.mubr.bf16.gmra.mrb[0].mxu0 %v4652
    %v4828 = vpop.f32.mrb[0].mxu0
    %v4829 = vadd.f32 0.0, %v4828
    %v4830 = vpop.f32.mrb[0].mxu0
    %v4831 = vpop.f32.mrb[0].mxu0
    %v4832 = vadd.f32 0.0, %v4831
    %v4833 = vpop.f32.mrb[0].mxu0
    %4834 = vmatprep.mubr.bf16.mxu0 0
    %4835 = vmatmul.mubr.bf16.gmra.mrb[0].mxu0 %v4655
    %v4836 = vpop.f32.mrb[0].mxu0
    %v4837 = vadd.f32 0.0, %v4836
    %v4838 = vpop.f32.mrb[0].mxu0
    %v4839 = vpop.f32.mrb[0].mxu0
    %v4840 = vadd.f32 0.0, %v4839
    %v4841 = vpop.f32.mrb[0].mxu0
    %4842 = vmatprep.mubr.bf16.mxu0 0
    %4843 = vmatmul.mubr.bf16.gmra.mrb[0].mxu0 %v4658
    %v4844 = vpop.f32.mrb[0].mxu0
    %v4845 = vadd.f32 0.0, %v4844
    %v4846 = vpop.f32.mrb[0].mxu0
    %v4847 = vpop.f32.mrb[0].mxu0
    %v4848 = vadd.f32 0.0, %v4847
    %v4849 = vpop.f32.mrb[0].mxu0
    %4850 = vmatprep.mubr.bf16.mxu0 0
    %4851 = vmatmul.mubr.bf16.gmra.mrb[0].mxu0 %v4661
    %v4852 = vpop.f32.mrb[0].mxu0
    %v4853 = vadd.f32 0.0, %v4852
    %v4854 = vpop.f32.mrb[0].mxu0
    %v4855 = vpop.f32.mrb[0].mxu0
    %v4856 = vadd.f32 0.0, %v4855
    %v4857 = vpop.f32.mrb[0].mxu0
    %4858 = vmatprep.mubr.bf16.mxu0 0
    %4859 = vmatmul.mubr.bf16.gmra.mrb[0].mxu0 %v4664
    %v4860 = vpop.f32.mrb[0].mxu0
    %v4861 = vadd.f32 0.0, %v4860
    %v4862 = vpop.f32.mrb[0].mxu0
    %v4863 = vpop.f32.mrb[0].mxu0
    %v4864 = vadd.f32 0.0, %v4863
    %v4865 = vpop.f32.mrb[0].mxu0
    %4866 = vmatprep.mubr.bf16.mxu0 0
    %4867 = vmatmul.mubr.bf16.gmra.mrb[0].mxu0 %v4667
    %v4868 = vpop.f32.mrb[0].mxu0
    %v4869 = vadd.f32 0.0, %v4868
    %v4870 = vpop.f32.mrb[0].mxu0
    %v4871 = vpop.f32.mrb[0].mxu0
    %v4872 = vadd.f32 0.0, %v4871
    %v4873 = vpop.f32.mrb[0].mxu0
    %4874 = vdwg.mxu0
    %v4875 = vpack.c.bf16 %v4566, %v4563
    %v4876 = vpack.c.bf16 %v4574, %v4571
    %v4877 = vpack.c.bf16 %v4582, %v4579
    %v4878 = vpack.c.bf16 %v4590, %v4587
    %v4879 = vpack.c.bf16 %v4598, %v4595
    %v4880 = vpack.c.bf16 %v4606, %v4603
    %v4881 = vpack.c.bf16 %v4614, %v4611
    %v4882 = vpack.c.bf16 %v4622, %v4619
    %v4883 = vpack.c.bf16 %v4707, %v4704
    %v4884 = vpack.c.bf16 %v4715, %v4712
    %v4885 = vpack.c.bf16 %v4723, %v4720
    %v4886 = vpack.c.bf16 %v4731, %v4728
    %v4887 = vpack.c.bf16 %v4739, %v4736
    %v4888 = vpack.c.bf16 %v4747, %v4744
    %v4889 = vpack.c.bf16 %v4755, %v4752
    %v4890 = vpack.c.bf16 %v4763, %v4760
    %vm4891 = vcmask 64512
    %v4893 = vsel %vm4891, %v4875, 0
    %v4896 = vsel %vm4891, %v4876, 0
    %v4899 = vsel %vm4891, %v4877, 0
    %v4902 = vsel %vm4891, %v4878, 0
    %v4905 = vsel %vm4891, %v4879, 0
    %v4908 = vsel %vm4891, %v4880, 0
    %v4911 = vsel %vm4891, %v4881, 0
    %v4914 = vsel %vm4891, %v4882, 0
    %v4917 = vsel %vm4891, %v4883, 0
    %v4920 = vsel %vm4891, %v4884, 0
    %v4923 = vsel %vm4891, %v4885, 0
    %v4926 = vsel %vm4891, %v4886, 0
    %v4929 = vsel %vm4891, %v4887, 0
    %v4932 = vsel %vm4891, %v4888, 0
    %v4935 = vsel %vm4891, %v4889, 0
    %v4938 = vsel %vm4891, %v4890, 0
    %4940 = vmatprep.subr.bf16.mxu0 0
    %4941 = vmatpush1.bf16.xpose.msra.mxu0 %v4917
    %4942 = vmatprep.subr.bf16.mxu0 0
    %4943 = vmatpush1.bf16.xpose.msra.mxu0 %v4920
    %4944 = vmatprep.subr.bf16.mxu0 0
    %4945 = vmatpush1.bf16.xpose.msra.mxu0 %v4923
    %4946 = vmatprep.subr.bf16.mxu0 0
    %4947 = vmatpush1.bf16.xpose.msra.mxu0 %v4926
    %4948 = vmatprep.subr.bf16.mxu0 0
    %4949 = vmatpush1.bf16.xpose.msra.mxu0 %v4929
    %4950 = vmatprep.subr.bf16.mxu0 0
    %4951 = vmatpush1.bf16.xpose.msra.mxu0 %v4932
    %4952 = vmatprep.subr.bf16.mxu0 0
    %4953 = vmatpush1.bf16.xpose.msra.mxu0 %v4935
    %4954 = vmatprep.subr.bf16.mxu0 0
    %4955 = vmatpush1.bf16.xpose.msra.mxu0 %v4938
    %4956 = vmatprep.subr.bf16.mxu0 0
    %4957 = vmatpush1.bf16.xpose.msra.mxu0 0
    %4958 = vmatprep.subr.bf16.mxu0 0
    %4959 = vmatpush1.bf16.xpose.msra.mxu0 0
    %4960 = vmatprep.subr.bf16.mxu0 0
    %4961 = vmatpush1.bf16.xpose.msra.mxu0 0
    %4962 = vmatprep.subr.bf16.mxu0 0
    %4963 = vmatpush1.bf16.xpose.msra.mxu0 0
    %4964 = vmatprep.subr.bf16.mxu0 0
    %4965 = vmatpush1.bf16.xpose.msra.mxu0 0
    %4966 = vmatprep.subr.bf16.mxu0 0
    %4967 = vmatpush1.bf16.xpose.msra.mxu0 0
    %4968 = vmatprep.subr.bf16.mxu0 0
    %4969 = vmatpush1.bf16.xpose.msra.mxu0 0
    %4970 = vmatprep.subr.bf16.mxu0 0
    %4971 = vmatpush1.bf16.xpose.msra.mxu0 0
    %4972 = vmatprep.mubr.bf16.mxu0 0
    %4973 = vmatmul.mubr.bf16.gmra.mrb[0].mxu0 %v4893
    %v4974 = vpop.f32.mrb[0].mxu0
    %v4975 = vadd.f32 0.0, %v4974
    %v4976 = vpop.f32.mrb[0].mxu0
    %v4977 = vpop.f32.mrb[0].mxu0
    %v4978 = vadd.f32 0.0, %v4977
    %v4979 = vpop.f32.mrb[0].mxu0
    %4980 = vmatprep.mubr.bf16.mxu0 0
    %4981 = vmatmul.mubr.bf16.gmra.mrb[0].mxu0 %v4896
    %v4982 = vpop.f32.mrb[0].mxu0
    %v4983 = vadd.f32 0.0, %v4982
    %v4984 = vpop.f32.mrb[0].mxu0
    %v4985 = vpop.f32.mrb[0].mxu0
    %v4986 = vadd.f32 0.0, %v4985
    %v4987 = vpop.f32.mrb[0].mxu0
    %4988 = vmatprep.mubr.bf16.mxu0 0
    %4989 = vmatmul.mubr.bf16.gmra.mrb[0].mxu0 %v4899
    %v4990 = vpop.f32.mrb[0].mxu0
    %v4991 = vadd.f32 0.0, %v4990
    %v4992 = vpop.f32.mrb[0].mxu0
    %v4993 = vpop.f32.mrb[0].mxu0
    %v4994 = vadd.f32 0.0, %v4993
    %v4995 = vpop.f32.mrb[0].mxu0
    %4996 = vmatprep.mubr.bf16.mxu0 0
    %4997 = vmatmul.mubr.bf16.gmra.mrb[0].mxu0 %v4902
    %v4998 = vpop.f32.mrb[0].mxu0
    %v4999 = vadd.f32 0.0, %v4998
    %v5000 = vpop.f32.mrb[0].mxu0
    %v5001 = vpop.f32.mrb[0].mxu0
    %v5002 = vadd.f32 0.0, %v5001
    %v5003 = vpop.f32.mrb[0].mxu0
    %5004 = vmatprep.mubr.bf16.mxu0 0
    %5005 = vmatmul.mubr.bf16.gmra.mrb[0].mxu0 %v4905
    %v5006 = vpop.f32.mrb[0].mxu0
    %v5007 = vadd.f32 0.0, %v5006
    %v5008 = vpop.f32.mrb[0].mxu0
    %v5009 = vpop.f32.mrb[0].mxu0
    %v5010 = vadd.f32 0.0, %v5009
    %v5011 = vpop.f32.mrb[0].mxu0
    %5012 = vmatprep.mubr.bf16.mxu0 0
    %5013 = vmatmul.mubr.bf16.gmra.mrb[0].mxu0 %v4908
    %v5014 = vpop.f32.mrb[0].mxu0
    %v5015 = vadd.f32 0.0, %v5014
    %v5016 = vpop.f32.mrb[0].mxu0
    %v5017 = vpop.f32.mrb[0].mxu0
    %v5018 = vadd.f32 0.0, %v5017
    %v5019 = vpop.f32.mrb[0].mxu0
    %5020 = vmatprep.mubr.bf16.mxu0 0
    %5021 = vmatmul.mubr.bf16.gmra.mrb[0].mxu0 %v4911
    %v5022 = vpop.f32.mrb[0].mxu0
    %v5023 = vadd.f32 0.0, %v5022
    %v5024 = vpop.f32.mrb[0].mxu0
    %v5025 = vpop.f32.mrb[0].mxu0
    %v5026 = vadd.f32 0.0, %v5025
    %v5027 = vpop.f32.mrb[0].mxu0
    %5028 = vmatprep.mubr.bf16.mxu0 0
    %5029 = vmatmul.mubr.bf16.gmra.mrb[0].mxu0 %v4914
    %v5030 = vpop.f32.mrb[0].mxu0
    %v5031 = vadd.f32 0.0, %v5030
    %v5032 = vpop.f32.mrb[0].mxu0
    %v5033 = vpop.f32.mrb[0].mxu0
    %v5034 = vadd.f32 0.0, %v5033
    %v5035 = vpop.f32.mrb[0].mxu0
    %5036 = vdwg.mxu0
    %v5037 = vmul.f32 %v4975, 0.35355338
    %v5038 = vmul.f32 %v4978, 0.35355338
    %v5039 = vmul.f32 %v4983, 0.35355338
    %v5040 = vmul.f32 %v4986, 0.35355338
    %v5041 = vmul.f32 %v4991, 0.35355338
    %v5042 = vmul.f32 %v4994, 0.35355338
    %v5043 = vmul.f32 %v4999, 0.35355338
    %v5044 = vmul.f32 %v5002, 0.35355338
    %v5045 = vmul.f32 %v5007, 0.35355338
    %v5046 = vmul.f32 %v5010, 0.35355338
    %v5047 = vmul.f32 %v5015, 0.35355338
    %v5048 = vmul.f32 %v5018, 0.35355338
    %v5049 = vmul.f32 %v5023, 0.35355338
    %v5050 = vmul.f32 %v5026, 0.35355338
    %v5051 = vmul.f32 %v5031, 0.35355338
    %v5052 = vmul.f32 %v5034, 0.35355338
    %5053 = vmax.xlane.f32.xlu0 %v5037
    %v5054 = vpop.xlane.xlu0 %5053
    %5055 = vmax.xlane.f32.xlu0 %v5038
    %v5056 = vpop.xlane.xlu0 %5055
    %5057 = vmax.xlane.f32.xlu0 %v5039
    %v5058 = vpop.xlane.xlu0 %5057
    %5059 = vmax.xlane.f32.xlu0 %v5040
    %v5060 = vpop.xlane.xlu0 %5059
    %5061 = vmax.xlane.f32.xlu0 %v5041
    %v5062 = vpop.xlane.xlu0 %5061
    %5063 = vmax.xlane.f32.xlu0 %v5042
    %v5064 = vpop.xlane.xlu0 %5063
    %5065 = vmax.xlane.f32.xlu0 %v5043
    %v5066 = vpop.xlane.xlu0 %5065
    %5067 = vmax.xlane.f32.xlu0 %v5044
    %v5068 = vpop.xlane.xlu0 %5067
    %5069 = vmax.xlane.f32.xlu0 %v5045
    %v5070 = vpop.xlane.xlu0 %5069
    %5071 = vmax.xlane.f32.xlu0 %v5046
    %v5072 = vpop.xlane.xlu0 %5071
    %5073 = vmax.xlane.f32.xlu0 %v5047
    %v5074 = vpop.xlane.xlu0 %5073
    %5075 = vmax.xlane.f32.xlu0 %v5048
    %v5076 = vpop.xlane.xlu0 %5075
    %5077 = vmax.xlane.f32.xlu0 %v5049
    %v5078 = vpop.xlane.xlu0 %5077
    %5079 = vmax.xlane.f32.xlu0 %v5050
    %v5080 = vpop.xlane.xlu0 %5079
    %5081 = vmax.xlane.f32.xlu0 %v5051
    %v5082 = vpop.xlane.xlu0 %5081
    %5083 = vmax.xlane.f32.xlu0 %v5052
    %v5084 = vpop.xlane.xlu0 %5083
    %v5085 = vsub.f32 %v5037, %v5054
    %v5086 = vsub.f32 %v5038, %v5056
    %v5087 = vsub.f32 %v5039, %v5058
    %v5088 = vsub.f32 %v5040, %v5060
    %v5089 = vsub.f32 %v5041, %v5062
    %v5090 = vsub.f32 %v5042, %v5064
    %v5091 = vsub.f32 %v5043, %v5066
    %v5092 = vsub.f32 %v5044, %v5068
    %v5093 = vsub.f32 %v5045, %v5070
    %v5094 = vsub.f32 %v5046, %v5072
    %v5095 = vsub.f32 %v5047, %v5074
    %v5096 = vsub.f32 %v5048, %v5076
    %v5097 = vsub.f32 %v5049, %v5078
    %v5098 = vsub.f32 %v5050, %v5080
    %v5099 = vsub.f32 %v5051, %v5082
    %v5100 = vsub.f32 %v5052, %v5084
    %v5101 = vmul.f32 %v5085, 1.442695
    %v5102 = vpow.pop %v5101
    %v5103 = vmul.f32 %v5086, 1.442695
    %v5104 = vpow.pop %v5103
    %v5105 = vmul.f32 %v5087, 1.442695
    %v5106 = vpow.pop %v5105
    %v5107 = vmul.f32 %v5088, 1.442695
    %v5108 = vpow.pop %v5107
    %v5109 = vmul.f32 %v5089, 1.442695
    %v5110 = vpow.pop %v5109
    %v5111 = vmul.f32 %v5090, 1.442695
    %v5112 = vpow.pop %v5111
    %v5113 = vmul.f32 %v5091, 1.442695
    %v5114 = vpow.pop %v5113
    %v5115 = vmul.f32 %v5092, 1.442695
    %v5116 = vpow.pop %v5115
    %v5117 = vmul.f32 %v5093, 1.442695
    %v5118 = vpow.pop %v5117
    %v5119 = vmul.f32 %v5094, 1.442695
    %v5120 = vpow.pop %v5119
    %v5121 = vmul.f32 %v5095, 1.442695
    %v5122 = vpow.pop %v5121
    %v5123 = vmul.f32 %v5096, 1.442695
    %v5124 = vpow.pop %v5123
    %v5125 = vmul.f32 %v5097, 1.442695
    %v5126 = vpow.pop %v5125
    %v5127 = vmul.f32 %v5098, 1.442695
    %v5128 = vpow.pop %v5127
    %v5129 = vmul.f32 %v5099, 1.442695
    %v5130 = vpow.pop %v5129
    %v5131 = vmul.f32 %v5100, 1.442695
    %v5132 = vpow.pop %v5131
    %5133 = vadd.xlane.f32.xlu0 %v5102
    %v5134 = vpop.xlane.xlu0 %5133
    %5135 = vadd.xlane.f32.xlu0 %v5104
    %v5136 = vpop.xlane.xlu0 %5135
    %5137 = vadd.xlane.f32.xlu0 %v5106
    %v5138 = vpop.xlane.xlu0 %5137
    %5139 = vadd.xlane.f32.xlu0 %v5108
    %v5140 = vpop.xlane.xlu0 %5139
    %5141 = vadd.xlane.f32.xlu0 %v5110
    %v5142 = vpop.xlane.xlu0 %5141
    %5143 = vadd.xlane.f32.xlu0 %v5112
    %v5144 = vpop.xlane.xlu0 %5143
    %5145 = vadd.xlane.f32.xlu0 %v5114
    %v5146 = vpop.xlane.xlu0 %5145
    %5147 = vadd.xlane.f32.xlu0 %v5116
    %v5148 = vpop.xlane.xlu0 %5147
    %5149 = vadd.xlane.f32.xlu0 %v5118
    %v5150 = vpop.xlane.xlu0 %5149
    %5151 = vadd.xlane.f32.xlu0 %v5120
    %v5152 = vpop.xlane.xlu0 %5151
    %5153 = vadd.xlane.f32.xlu0 %v5122
    %v5154 = vpop.xlane.xlu0 %5153
    %5155 = vadd.xlane.f32.xlu0 %v5124
    %v5156 = vpop.xlane.xlu0 %5155
    %5157 = vadd.xlane.f32.xlu0 %v5126
    %v5158 = vpop.xlane.xlu0 %5157
    %5159 = vadd.xlane.f32.xlu0 %v5128
    %v5160 = vpop.xlane.xlu0 %5159
    %5161 = vadd.xlane.f32.xlu0 %v5130
    %v5162 = vpop.xlane.xlu0 %5161
    %5163 = vadd.xlane.f32.xlu0 %v5132
    %v5164 = vpop.xlane.xlu0 %5163
    %v5165 = vrcp.pop %v5134
    %v5166 = vrcp.pop %v5136
    %v5167 = vrcp.pop %v5138
    %v5168 = vrcp.pop %v5140
    %v5169 = vrcp.pop %v5142
    %v5170 = vrcp.pop %v5144
    %v5171 = vrcp.pop %v5146
    %v5172 = vrcp.pop %v5148
    %v5173 = vrcp.pop %v5150
    %v5174 = vrcp.pop %v5152
    %v5175 = vrcp.pop %v5154
    %v5176 = vrcp.pop %v5156
    %v5177 = vrcp.pop %v5158
    %v5178 = vrcp.pop %v5160
    %v5179 = vrcp.pop %v5162
    %v5180 = vrcp.pop %v5164
    %v5181 = vmul.f32 %v5102, %v5165
    %v5182 = vmul.f32 %v5104, %v5166
    %v5183 = vmul.f32 %v5106, %v5167
    %v5184 = vmul.f32 %v5108, %v5168
    %v5185 = vmul.f32 %v5110, %v5169
    %v5186 = vmul.f32 %v5112, %v5170
    %v5187 = vmul.f32 %v5114, %v5171
    %v5188 = vmul.f32 %v5116, %v5172
    %v5189 = vmul.f32 %v5118, %v5173
    %v5190 = vmul.f32 %v5120, %v5174
    %v5191 = vmul.f32 %v5122, %v5175
    %v5192 = vmul.f32 %v5124, %v5176
    %v5193 = vmul.f32 %v5126, %v5177
    %v5194 = vmul.f32 %v5128, %v5178
    %v5195 = vmul.f32 %v5130, %v5179
    %v5196 = vmul.f32 %v5132, %v5180
    %v5197 = vpack.c.bf16 %v5182, %v5181
    %v5198 = vpack.c.bf16 %v5184, %v5183
    %v5199 = vpack.c.bf16 %v5186, %v5185
    %v5200 = vpack.c.bf16 %v5188, %v5187
    %v5201 = vpack.c.bf16 %v5190, %v5189
    %v5202 = vpack.c.bf16 %v5192, %v5191
    %v5203 = vpack.c.bf16 %v5194, %v5193
    %v5204 = vpack.c.bf16 %v5196, %v5195
    %v5205 = vpack.c.bf16 %v4816, %v4813
    %v5206 = vpack.c.bf16 %v4824, %v4821
    %v5207 = vpack.c.bf16 %v4832, %v4829
    %v5208 = vpack.c.bf16 %v4840, %v4837
    %v5209 = vpack.c.bf16 %v4848, %v4845
    %v5210 = vpack.c.bf16 %v4856, %v4853
    %v5211 = vpack.c.bf16 %v4864, %v4861
    %v5212 = vpack.c.bf16 %v4872, %v4869
    %5213 = vmatprep.subr.bf16.mxu0 0
    %5214 = vmatpush1.bf16.msra.mxu0 %v5205
    %5215 = vmatprep.subr.bf16.mxu0 0
    %5216 = vmatpush1.bf16.msra.mxu0 %v5206
    %5217 = vmatprep.subr.bf16.mxu0 0
    %5218 = vmatpush1.bf16.msra.mxu0 %v5207
    %5219 = vmatprep.subr.bf16.mxu0 0
    %5220 = vmatpush1.bf16.msra.mxu0 %v5208
    %5221 = vmatprep.subr.bf16.mxu0 0
    %5222 = vmatpush1.bf16.msra.mxu0 %v5209
    %5223 = vmatprep.subr.bf16.mxu0 0
    %5224 = vmatpush1.bf16.msra.mxu0 %v5210
    %5225 = vmatprep.subr.bf16.mxu0 0
    %5226 = vmatpush1.bf16.msra.mxu0 %v5211
    %5227 = vmatprep.subr.bf16.mxu0 0
    %5228 = vmatpush1.bf16.msra.mxu0 %v5212
    %5229 = vmatprep.subr.bf16.mxu0 0
    %5230 = vmatpush1.bf16.msra.mxu0 0
    %5231 = vmatprep.subr.bf16.mxu0 0
    %5232 = vmatpush1.bf16.msra.mxu0 0
    %5233 = vmatprep.subr.bf16.mxu0 0
    %5234 = vmatpush1.bf16.msra.mxu0 0
    %5235 = vmatprep.subr.bf16.mxu0 0
    %5236 = vmatpush1.bf16.msra.mxu0 0
    %5237 = vmatprep.subr.bf16.mxu0 0
    %5238 = vmatpush1.bf16.msra.mxu0 0
    %5239 = vmatprep.subr.bf16.mxu0 0
    %5240 = vmatpush1.bf16.msra.mxu0 0
    %5241 = vmatprep.subr.bf16.mxu0 0
    %5242 = vmatpush1.bf16.msra.mxu0 0
    %5243 = vmatprep.subr.bf16.mxu0 0
    %5244 = vmatpush1.bf16.msra.mxu0 0
    %5245 = vmatprep.mubr.bf16.mxu0 0
    %5246 = vmatmul.mubr.bf16.gmra.mrb[0].mxu0 %v5197
    %v5247 = vpop.f32.mrb[0].mxu0
    %v5248 = vadd.f32 0.0, %v5247
    %v5249 = vpop.f32.mrb[0].mxu0
    %v5250 = vpop.f32.mrb[0].mxu0
    %v5251 = vadd.f32 0.0, %v5250
    %v5252 = vpop.f32.mrb[0].mxu0
    %5253 = vmatprep.mubr.bf16.mxu0 0
    %5254 = vmatmul.mubr.bf16.gmra.mrb[0].mxu0 %v5198
    %v5255 = vpop.f32.mrb[0].mxu0
    %v5256 = vadd.f32 0.0, %v5255
    %v5257 = vpop.f32.mrb[0].mxu0
    %v5258 = vpop.f32.mrb[0].mxu0
    %v5259 = vadd.f32 0.0, %v5258
    %v5260 = vpop.f32.mrb[0].mxu0
    %5261 = vmatprep.mubr.bf16.mxu0 0
    %5262 = vmatmul.mubr.bf16.gmra.mrb[0].mxu0 %v5199
    %v5263 = vpop.f32.mrb[0].mxu0
    %v5264 = vadd.f32 0.0, %v5263
    %v5265 = vpop.f32.mrb[0].mxu0
    %v5266 = vpop.f32.mrb[0].mxu0
    %v5267 = vadd.f32 0.0, %v5266
    %v5268 = vpop.f32.mrb[0].mxu0
    %5269 = vmatprep.mubr.bf16.mxu0 0
    %5270 = vmatmul.mubr.bf16.gmra.mrb[0].mxu0 %v5200
    %v5271 = vpop.f32.mrb[0].mxu0
    %v5272 = vadd.f32 0.0, %v5271
    %v5273 = vpop.f32.mrb[0].mxu0
    %v5274 = vpop.f32.mrb[0].mxu0
    %v5275 = vadd.f32 0.0, %v5274
    %v5276 = vpop.f32.mrb[0].mxu0
    %5277 = vmatprep.mubr.bf16.mxu0 0
    %5278 = vmatmul.mubr.bf16.gmra.mrb[0].mxu0 %v5201
    %v5279 = vpop.f32.mrb[0].mxu0
    %v5280 = vadd.f32 0.0, %v5279
    %v5281 = vpop.f32.mrb[0].mxu0
    %v5282 = vpop.f32.mrb[0].mxu0
    %v5283 = vadd.f32 0.0, %v5282
    %v5284 = vpop.f32.mrb[0].mxu0
    %5285 = vmatprep.mubr.bf16.mxu0 0
    %5286 = vmatmul.mubr.bf16.gmra.mrb[0].mxu0 %v5202
    %v5287 = vpop.f32.mrb[0].mxu0
    %v5288 = vadd.f32 0.0, %v5287
    %v5289 = vpop.f32.mrb[0].mxu0
    %v5290 = vpop.f32.mrb[0].mxu0
    %v5291 = vadd.f32 0.0, %v5290
    %v5292 = vpop.f32.mrb[0].mxu0
    %5293 = vmatprep.mubr.bf16.mxu0 0
    %5294 = vmatmul.mubr.bf16.gmra.mrb[0].mxu0 %v5203
    %v5295 = vpop.f32.mrb[0].mxu0
    %v5296 = vadd.f32 0.0, %v5295
    %v5297 = vpop.f32.mrb[0].mxu0
    %v5298 = vpop.f32.mrb[0].mxu0
    %v5299 = vadd.f32 0.0, %v5298
    %v5300 = vpop.f32.mrb[0].mxu0
    %5301 = vmatprep.mubr.bf16.mxu0 0
    %5302 = vmatmul.mubr.bf16.gmra.mrb[0].mxu0 %v5204
    %v5303 = vpop.f32.mrb[0].mxu0
    %v5304 = vadd.f32 0.0, %v5303
    %v5305 = vpop.f32.mrb[0].mxu0
    %v5306 = vpop.f32.mrb[0].mxu0
    %v5307 = vadd.f32 0.0, %v5306
    %v5308 = vpop.f32.mrb[0].mxu0
    %5309 = vdwg.mxu0
    %v5310 = vpack.c.bf16 %v5251, %v5248
    %v5311 = vpack.c.bf16 %v5259, %v5256
    %v5312 = vpack.c.bf16 %v5267, %v5264
    %v5313 = vpack.c.bf16 %v5275, %v5272
    %v5314 = vpack.c.bf16 %v5283, %v5280
    %v5315 = vpack.c.bf16 %v5291, %v5288
    %v5316 = vpack.c.bf16 %v5299, %v5296
    %v5317 = vpack.c.bf16 %v5307, %v5304
    %5326 = vrot.lane.b32.xlu0 %v4875, 120
    %v5327 = vpop.permute.xlu0 %5326
    %5328 = vrot.lane.b32.xlu0 %v4876, 120
    %v5329 = vpop.permute.xlu0 %5328
    %5330 = vrot.lane.b32.xlu0 %v4877, 120
    %v5331 = vpop.permute.xlu0 %5330
    %5332 = vrot.lane.b32.xlu0 %v4878, 120
    %v5333 = vpop.permute.xlu0 %5332
    %5334 = vrot.lane.b32.xlu0 %v4879, 120
    %v5335 = vpop.permute.xlu0 %5334
    %5336 = vrot.lane.b32.xlu0 %v4880, 120
    %v5337 = vpop.permute.xlu0 %5336
    %5338 = vrot.lane.b32.xlu0 %v4881, 120
    %v5339 = vpop.permute.xlu0 %5338
    %5340 = vrot.lane.b32.xlu0 %v4882, 120
    %v5341 = vpop.permute.xlu0 %5340
    %5350 = vrot.lane.b32.xlu0 %v4883, 120
    %v5351 = vpop.permute.xlu0 %5350
    %5352 = vrot.lane.b32.xlu0 %v4884, 120
    %v5353 = vpop.permute.xlu0 %5352
    %5354 = vrot.lane.b32.xlu0 %v4885, 120
    %v5355 = vpop.permute.xlu0 %5354
    %5356 = vrot.lane.b32.xlu0 %v4886, 120
    %v5357 = vpop.permute.xlu0 %5356
    %5358 = vrot.lane.b32.xlu0 %v4887, 120
    %v5359 = vpop.permute.xlu0 %5358
    %5360 = vrot.lane.b32.xlu0 %v4888, 120
    %v5361 = vpop.permute.xlu0 %5360
    %5362 = vrot.lane.b32.xlu0 %v4889, 120
    %v5363 = vpop.permute.xlu0 %5362
    %5364 = vrot.lane.b32.xlu0 %v4890, 120
    %v5365 = vpop.permute.xlu0 %5364
    %v5367 = vsel %vm4891, %v5327, 0
    %v5370 = vsel %vm4891, %v5329, 0
    %v5373 = vsel %vm4891, %v5331, 0
    %v5376 = vsel %vm4891, %v5333, 0
    %v5379 = vsel %vm4891, %v5335, 0
    %v5382 = vsel %vm4891, %v5337, 0
    %v5385 = vsel %vm4891, %v5339, 0
    %v5388 = vsel %vm4891, %v5341, 0
    %v5391 = vsel %vm4891, %v5351, 0
    %v5394 = vsel %vm4891, %v5353, 0
    %v5397 = vsel %vm4891, %v5355, 0
    %v5400 = vsel %vm4891, %v5357, 0
    %v5403 = vsel %vm4891, %v5359, 0
    %v5406 = vsel %vm4891, %v5361, 0
    %v5409 = vsel %vm4891, %v5363, 0
    %v5412 = vsel %vm4891, %v5365, 0
    %5414 = vmatprep.subr.bf16.mxu0 0
    %5415 = vmatpush1.bf16.xpose.msra.mxu0 %v5391
    %5416 = vmatprep.subr.bf16.mxu0 0
    %5417 = vmatpush1.bf16.xpose.msra.mxu0 %v5394
    %5418 = vmatprep.subr.bf16.mxu0 0
    %5419 = vmatpush1.bf16.xpose.msra.mxu0 %v5397
    %5420 = vmatprep.subr.bf16.mxu0 0
    %5421 = vmatpush1.bf16.xpose.msra.mxu0 %v5400
    %5422 = vmatprep.subr.bf16.mxu0 0
    %5423 = vmatpush1.bf16.xpose.msra.mxu0 %v5403
    %5424 = vmatprep.subr.bf16.mxu0 0
    %5425 = vmatpush1.bf16.xpose.msra.mxu0 %v5406
    %5426 = vmatprep.subr.bf16.mxu0 0
    %5427 = vmatpush1.bf16.xpose.msra.mxu0 %v5409
    %5428 = vmatprep.subr.bf16.mxu0 0
    %5429 = vmatpush1.bf16.xpose.msra.mxu0 %v5412
    %5430 = vmatprep.subr.bf16.mxu0 0
    %5431 = vmatpush1.bf16.xpose.msra.mxu0 0
    %5432 = vmatprep.subr.bf16.mxu0 0
    %5433 = vmatpush1.bf16.xpose.msra.mxu0 0
    %5434 = vmatprep.subr.bf16.mxu0 0
    %5435 = vmatpush1.bf16.xpose.msra.mxu0 0
    %5436 = vmatprep.subr.bf16.mxu0 0
    %5437 = vmatpush1.bf16.xpose.msra.mxu0 0
    %5438 = vmatprep.subr.bf16.mxu0 0
    %5439 = vmatpush1.bf16.xpose.msra.mxu0 0
    %5440 = vmatprep.subr.bf16.mxu0 0
    %5441 = vmatpush1.bf16.xpose.msra.mxu0 0
    %5442 = vmatprep.subr.bf16.mxu0 0
    %5443 = vmatpush1.bf16.xpose.msra.mxu0 0
    %5444 = vmatprep.subr.bf16.mxu0 0
    %5445 = vmatpush1.bf16.xpose.msra.mxu0 0
    %5446 = vmatprep.mubr.bf16.mxu0 0
    %5447 = vmatmul.mubr.bf16.gmra.mrb[0].mxu0 %v5367
    %v5448 = vpop.f32.mrb[0].mxu0
    %v5449 = vadd.f32 0.0, %v5448
    %v5450 = vpop.f32.mrb[0].mxu0
    %v5451 = vpop.f32.mrb[0].mxu0
    %v5452 = vadd.f32 0.0, %v5451
    %v5453 = vpop.f32.mrb[0].mxu0
    %5454 = vmatprep.mubr.bf16.mxu0 0
    %5455 = vmatmul.mubr.bf16.gmra.mrb[0].mxu0 %v5370
    %v5456 = vpop.f32.mrb[0].mxu0
    %v5457 = vadd.f32 0.0, %v5456
    %v5458 = vpop.f32.mrb[0].mxu0
    %v5459 = vpop.f32.mrb[0].mxu0
    %v5460 = vadd.f32 0.0, %v5459
    %v5461 = vpop.f32.mrb[0].mxu0
    %5462 = vmatprep.mubr.bf16.mxu0 0
    %5463 = vmatmul.mubr.bf16.gmra.mrb[0].mxu0 %v5373
    %v5464 = vpop.f32.mrb[0].mxu0
    %v5465 = vadd.f32 0.0, %v5464
    %v5466 = vpop.f32.mrb[0].mxu0
    %v5467 = vpop.f32.mrb[0].mxu0
    %v5468 = vadd.f32 0.0, %v5467
    %v5469 = vpop.f32.mrb[0].mxu0
    %5470 = vmatprep.mubr.bf16.mxu0 0
    %5471 = vmatmul.mubr.bf16.gmra.mrb[0].mxu0 %v5376
    %v5472 = vpop.f32.mrb[0].mxu0
    %v5473 = vadd.f32 0.0, %v5472
    %v5474 = vpop.f32.mrb[0].mxu0
    %v5475 = vpop.f32.mrb[0].mxu0
    %v5476 = vadd.f32 0.0, %v5475
    %v5477 = vpop.f32.mrb[0].mxu0
    %5478 = vmatprep.mubr.bf16.mxu0 0
    %5479 = vmatmul.mubr.bf16.gmra.mrb[0].mxu0 %v5379
    %v5480 = vpop.f32.mrb[0].mxu0
    %v5481 = vadd.f32 0.0, %v5480
    %v5482 = vpop.f32.mrb[0].mxu0
    %v5483 = vpop.f32.mrb[0].mxu0
    %v5484 = vadd.f32 0.0, %v5483
    %v5485 = vpop.f32.mrb[0].mxu0
    %5486 = vmatprep.mubr.bf16.mxu0 0
    %5487 = vmatmul.mubr.bf16.gmra.mrb[0].mxu0 %v5382
    %v5488 = vpop.f32.mrb[0].mxu0
    %v5489 = vadd.f32 0.0, %v5488
    %v5490 = vpop.f32.mrb[0].mxu0
    %v5491 = vpop.f32.mrb[0].mxu0
    %v5492 = vadd.f32 0.0, %v5491
    %v5493 = vpop.f32.mrb[0].mxu0
    %5494 = vmatprep.mubr.bf16.mxu0 0
    %5495 = vmatmul.mubr.bf16.gmra.mrb[0].mxu0 %v5385
    %v5496 = vpop.f32.mrb[0].mxu0
    %v5497 = vadd.f32 0.0, %v5496
    %v5498 = vpop.f32.mrb[0].mxu0
    %v5499 = vpop.f32.mrb[0].mxu0
    %v5500 = vadd.f32 0.0, %v5499
    %v5501 = vpop.f32.mrb[0].mxu0
    %5502 = vmatprep.mubr.bf16.mxu0 0
    %5503 = vmatmul.mubr.bf16.gmra.mrb[0].mxu0 %v5388
    %v5504 = vpop.f32.mrb[0].mxu0
    %v5505 = vadd.f32 0.0, %v5504
    %v5506 = vpop.f32.mrb[0].mxu0
    %v5507 = vpop.f32.mrb[0].mxu0
    %v5508 = vadd.f32 0.0, %v5507
    %v5509 = vpop.f32.mrb[0].mxu0
    %5510 = vdwg.mxu0
    %v5511 = vmul.f32 %v5449, 0.35355338
    %v5512 = vmul.f32 %v5452, 0.35355338
    %v5513 = vmul.f32 %v5457, 0.35355338
    %v5514 = vmul.f32 %v5460, 0.35355338
    %v5515 = vmul.f32 %v5465, 0.35355338
    %v5516 = vmul.f32 %v5468, 0.35355338
    %v5517 = vmul.f32 %v5473, 0.35355338
    %v5518 = vmul.f32 %v5476, 0.35355338
    %v5519 = vmul.f32 %v5481, 0.35355338
    %v5520 = vmul.f32 %v5484, 0.35355338
    %v5521 = vmul.f32 %v5489, 0.35355338
    %v5522 = vmul.f32 %v5492, 0.35355338
    %v5523 = vmul.f32 %v5497, 0.35355338
    %v5524 = vmul.f32 %v5500, 0.35355338
    %v5525 = vmul.f32 %v5505, 0.35355338
    %v5526 = vmul.f32 %v5508, 0.35355338
    %5527 = vmax.xlane.f32.xlu0 %v5511
    %v5528 = vpop.xlane.xlu0 %5527
    %5529 = vmax.xlane.f32.xlu0 %v5512
    %v5530 = vpop.xlane.xlu0 %5529
    %5531 = vmax.xlane.f32.xlu0 %v5513
    %v5532 = vpop.xlane.xlu0 %5531
    %5533 = vmax.xlane.f32.xlu0 %v5514
    %v5534 = vpop.xlane.xlu0 %5533
    %5535 = vmax.xlane.f32.xlu0 %v5515
    %v5536 = vpop.xlane.xlu0 %5535
    %5537 = vmax.xlane.f32.xlu0 %v5516
    %v5538 = vpop.xlane.xlu0 %5537
    %5539 = vmax.xlane.f32.xlu0 %v5517
    %v5540 = vpop.xlane.xlu0 %5539
    %5541 = vmax.xlane.f32.xlu0 %v5518
    %v5542 = vpop.xlane.xlu0 %5541
    %5543 = vmax.xlane.f32.xlu0 %v5519
    %v5544 = vpop.xlane.xlu0 %5543
    %5545 = vmax.xlane.f32.xlu0 %v5520
    %v5546 = vpop.xlane.xlu0 %5545
    %5547 = vmax.xlane.f32.xlu0 %v5521
    %v5548 = vpop.xlane.xlu0 %5547
    %5549 = vmax.xlane.f32.xlu0 %v5522
    %v5550 = vpop.xlane.xlu0 %5549
    %5551 = vmax.xlane.f32.xlu0 %v5523
    %v5552 = vpop.xlane.xlu0 %5551
    %5553 = vmax.xlane.f32.xlu0 %v5524
    %v5554 = vpop.xlane.xlu0 %5553
    %5555 = vmax.xlane.f32.xlu0 %v5525
    %v5556 = vpop.xlane.xlu0 %5555
    %5557 = vmax.xlane.f32.xlu0 %v5526
    %v5558 = vpop.xlane.xlu0 %5557
    %v5559 = vsub.f32 %v5511, %v5528
    %v5560 = vsub.f32 %v5512, %v5530
    %v5561 = vsub.f32 %v5513, %v5532
    %v5562 = vsub.f32 %v5514, %v5534
    %v5563 = vsub.f32 %v5515, %v5536
    %v5564 = vsub.f32 %v5516, %v5538
    %v5565 = vsub.f32 %v5517, %v5540
    %v5566 = vsub.f32 %v5518, %v5542
    %v5567 = vsub.f32 %v5519, %v5544
    %v5568 = vsub.f32 %v5520, %v5546
    %v5569 = vsub.f32 %v5521, %v5548
    %v5570 = vsub.f32 %v5522, %v5550
    %v5571 = vsub.f32 %v5523, %v5552
    %v5572 = vsub.f32 %v5524, %v5554
    %v5573 = vsub.f32 %v5525, %v5556
    %v5574 = vsub.f32 %v5526, %v5558
    %v5575 = vmul.f32 %v5559, 1.442695
    %v5576 = vpow.pop %v5575
    %v5577 = vmul.f32 %v5560, 1.442695
    %v5578 = vpow.pop %v5577
    %v5579 = vmul.f32 %v5561, 1.442695
    %v5580 = vpow.pop %v5579
    %v5581 = vmul.f32 %v5562, 1.442695
    %v5582 = vpow.pop %v5581
    %v5583 = vmul.f32 %v5563, 1.442695
    %v5584 = vpow.pop %v5583
    %v5585 = vmul.f32 %v5564, 1.442695
    %v5586 = vpow.pop %v5585
    %v5587 = vmul.f32 %v5565, 1.442695
    %v5588 = vpow.pop %v5587
    %v5589 = vmul.f32 %v5566, 1.442695
    %v5590 = vpow.pop %v5589
    %v5591 = vmul.f32 %v5567, 1.442695
    %v5592 = vpow.pop %v5591
    %v5593 = vmul.f32 %v5568, 1.442695
    %v5594 = vpow.pop %v5593
    %v5595 = vmul.f32 %v5569, 1.442695
    %v5596 = vpow.pop %v5595
    %v5597 = vmul.f32 %v5570, 1.442695
    %v5598 = vpow.pop %v5597
    %v5599 = vmul.f32 %v5571, 1.442695
    %v5600 = vpow.pop %v5599
    %v5601 = vmul.f32 %v5572, 1.442695
    %v5602 = vpow.pop %v5601
    %v5603 = vmul.f32 %v5573, 1.442695
    %v5604 = vpow.pop %v5603
    %v5605 = vmul.f32 %v5574, 1.442695
    %v5606 = vpow.pop %v5605
    %5607 = vadd.xlane.f32.xlu0 %v5576
    %v5608 = vpop.xlane.xlu0 %5607
    %5609 = vadd.xlane.f32.xlu0 %v5578
    %v5610 = vpop.xlane.xlu0 %5609
    %5611 = vadd.xlane.f32.xlu0 %v5580
    %v5612 = vpop.xlane.xlu0 %5611
    %5613 = vadd.xlane.f32.xlu0 %v5582
    %v5614 = vpop.xlane.xlu0 %5613
    %5615 = vadd.xlane.f32.xlu0 %v5584
    %v5616 = vpop.xlane.xlu0 %5615
    %5617 = vadd.xlane.f32.xlu0 %v5586
    %v5618 = vpop.xlane.xlu0 %5617
    %5619 = vadd.xlane.f32.xlu0 %v5588
    %v5620 = vpop.xlane.xlu0 %5619
    %5621 = vadd.xlane.f32.xlu0 %v5590
    %v5622 = vpop.xlane.xlu0 %5621
    %5623 = vadd.xlane.f32.xlu0 %v5592
    %v5624 = vpop.xlane.xlu0 %5623
    %5625 = vadd.xlane.f32.xlu0 %v5594
    %v5626 = vpop.xlane.xlu0 %5625
    %5627 = vadd.xlane.f32.xlu0 %v5596
    %v5628 = vpop.xlane.xlu0 %5627
    %5629 = vadd.xlane.f32.xlu0 %v5598
    %v5630 = vpop.xlane.xlu0 %5629
    %5631 = vadd.xlane.f32.xlu0 %v5600
    %v5632 = vpop.xlane.xlu0 %5631
    %5633 = vadd.xlane.f32.xlu0 %v5602
    %v5634 = vpop.xlane.xlu0 %5633
    %5635 = vadd.xlane.f32.xlu0 %v5604
    %v5636 = vpop.xlane.xlu0 %5635
    %5637 = vadd.xlane.f32.xlu0 %v5606
    %v5638 = vpop.xlane.xlu0 %5637
    %v5639 = vrcp.pop %v5608
    %v5640 = vrcp.pop %v5610
    %v5641 = vrcp.pop %v5612
    %v5642 = vrcp.pop %v5614
    %v5643 = vrcp.pop %v5616
    %v5644 = vrcp.pop %v5618
    %v5645 = vrcp.pop %v5620
    %v5646 = vrcp.pop %v5622
    %v5647 = vrcp.pop %v5624
    %v5648 = vrcp.pop %v5626
    %v5649 = vrcp.pop %v5628
    %v5650 = vrcp.pop %v5630
    %v5651 = vrcp.pop %v5632
    %v5652 = vrcp.pop %v5634
    %v5653 = vrcp.pop %v5636
    %v5654 = vrcp.pop %v5638
    %v5655 = vmul.f32 %v5576, %v5639
    %v5656 = vmul.f32 %v5578, %v5640
    %v5657 = vmul.f32 %v5580, %v5641
    %v5658 = vmul.f32 %v5582, %v5642
    %v5659 = vmul.f32 %v5584, %v5643
    %v5660 = vmul.f32 %v5586, %v5644
    %v5661 = vmul.f32 %v5588, %v5645
    %v5662 = vmul.f32 %v5590, %v5646
    %v5663 = vmul.f32 %v5592, %v5647
    %v5664 = vmul.f32 %v5594, %v5648
    %v5665 = vmul.f32 %v5596, %v5649
    %v5666 = vmul.f32 %v5598, %v5650
    %v5667 = vmul.f32 %v5600, %v5651
    %v5668 = vmul.f32 %v5602, %v5652
    %v5669 = vmul.f32 %v5604, %v5653
    %v5670 = vmul.f32 %v5606, %v5654
    %v5671 = vpack.c.bf16 %v5656, %v5655
    %v5672 = vpack.c.bf16 %v5658, %v5657
    %v5673 = vpack.c.bf16 %v5660, %v5659
    %v5674 = vpack.c.bf16 %v5662, %v5661
    %v5675 = vpack.c.bf16 %v5664, %v5663
    %v5676 = vpack.c.bf16 %v5666, %v5665
    %v5677 = vpack.c.bf16 %v5668, %v5667
    %v5678 = vpack.c.bf16 %v5670, %v5669
    %5687 = vrot.lane.b32.xlu0 %v5205, 120
    %v5688 = vpop.permute.xlu0 %5687
    %5689 = vrot.lane.b32.xlu0 %v5206, 120
    %v5690 = vpop.permute.xlu0 %5689
    %5691 = vrot.lane.b32.xlu0 %v5207, 120
    %v5692 = vpop.permute.xlu0 %5691
    %5693 = vrot.lane.b32.xlu0 %v5208, 120
    %v5694 = vpop.permute.xlu0 %5693
    %5695 = vrot.lane.b32.xlu0 %v5209, 120
    %v5696 = vpop.permute.xlu0 %5695
    %5697 = vrot.lane.b32.xlu0 %v5210, 120
    %v5698 = vpop.permute.xlu0 %5697
    %5699 = vrot.lane.b32.xlu0 %v5211, 120
    %v5700 = vpop.permute.xlu0 %5699
    %5701 = vrot.lane.b32.xlu0 %v5212, 120
    %v5702 = vpop.permute.xlu0 %5701
    %5711 = vmatprep.subr.bf16.mxu0 0
    %5712 = vmatpush1.bf16.msra.mxu0 %v5688
    %5713 = vmatprep.subr.bf16.mxu0 0
    %5714 = vmatpush1.bf16.msra.mxu0 %v5690
    %5715 = vmatprep.subr.bf16.mxu0 0
    %5716 = vmatpush1.bf16.msra.mxu0 %v5692
    %5717 = vmatprep.subr.bf16.mxu0 0
    %5718 = vmatpush1.bf16.msra.mxu0 %v5694
    %5719 = vmatprep.subr.bf16.mxu0 0
    %5720 = vmatpush1.bf16.msra.mxu0 %v5696
    %5721 = vmatprep.subr.bf16.mxu0 0
    %5722 = vmatpush1.bf16.msra.mxu0 %v5698
    %5723 = vmatprep.subr.bf16.mxu0 0
    %5724 = vmatpush1.bf16.msra.mxu0 %v5700
    %5725 = vmatprep.subr.bf16.mxu0 0
    %5726 = vmatpush1.bf16.msra.mxu0 %v5702
    %5727 = vmatprep.subr.bf16.mxu0 0
    %5728 = vmatpush1.bf16.msra.mxu0 0
    %5729 = vmatprep.subr.bf16.mxu0 0
    %5730 = vmatpush1.bf16.msra.mxu0 0
    %5731 = vmatprep.subr.bf16.mxu0 0
    %5732 = vmatpush1.bf16.msra.mxu0 0
    %5733 = vmatprep.subr.bf16.mxu0 0
    %5734 = vmatpush1.bf16.msra.mxu0 0
    %5735 = vmatprep.subr.bf16.mxu0 0
    %5736 = vmatpush1.bf16.msra.mxu0 0
    %5737 = vmatprep.subr.bf16.mxu0 0
    %5738 = vmatpush1.bf16.msra.mxu0 0
    %5739 = vmatprep.subr.bf16.mxu0 0
    %5740 = vmatpush1.bf16.msra.mxu0 0
    %5741 = vmatprep.subr.bf16.mxu0 0
    %5742 = vmatpush1.bf16.msra.mxu0 0
    %5743 = vmatprep.mubr.bf16.mxu0 0
    %5744 = vmatmul.mubr.bf16.gmra.mrb[0].mxu0 %v5671
    %v5745 = vpop.f32.mrb[0].mxu0
    %v5746 = vadd.f32 0.0, %v5745
    %v5747 = vpop.f32.mrb[0].mxu0
    %v5748 = vpop.f32.mrb[0].mxu0
    %v5749 = vadd.f32 0.0, %v5748
    %v5750 = vpop.f32.mrb[0].mxu0
    %5751 = vmatprep.mubr.bf16.mxu0 0
    %5752 = vmatmul.mubr.bf16.gmra.mrb[0].mxu0 %v5672
    %v5753 = vpop.f32.mrb[0].mxu0
    %v5754 = vadd.f32 0.0, %v5753
    %v5755 = vpop.f32.mrb[0].mxu0
    %v5756 = vpop.f32.mrb[0].mxu0
    %v5757 = vadd.f32 0.0, %v5756
    %v5758 = vpop.f32.mrb[0].mxu0
    %5759 = vmatprep.mubr.bf16.mxu0 0
    %5760 = vmatmul.mubr.bf16.gmra.mrb[0].mxu0 %v5673
    %v5761 = vpop.f32.mrb[0].mxu0
    %v5762 = vadd.f32 0.0, %v5761
    %v5763 = vpop.f32.mrb[0].mxu0
    %v5764 = vpop.f32.mrb[0].mxu0
    %v5765 = vadd.f32 0.0, %v5764
    %v5766 = vpop.f32.mrb[0].mxu0
    %5767 = vmatprep.mubr.bf16.mxu0 0
    %5768 = vmatmul.mubr.bf16.gmra.mrb[0].mxu0 %v5674
    %v5769 = vpop.f32.mrb[0].mxu0
    %v5770 = vadd.f32 0.0, %v5769
    %v5771 = vpop.f32.mrb[0].mxu0
    %v5772 = vpop.f32.mrb[0].mxu0
    %v5773 = vadd.f32 0.0, %v5772
    %v5774 = vpop.f32.mrb[0].mxu0
    %5775 = vmatprep.mubr.bf16.mxu0 0
    %5776 = vmatmul.mubr.bf16.gmra.mrb[0].mxu0 %v5675
    %v5777 = vpop.f32.mrb[0].mxu0
    %v5778 = vadd.f32 0.0, %v5777
    %v5779 = vpop.f32.mrb[0].mxu0
    %v5780 = vpop.f32.mrb[0].mxu0
    %v5781 = vadd.f32 0.0, %v5780
    %v5782 = vpop.f32.mrb[0].mxu0
    %5783 = vmatprep.mubr.bf16.mxu0 0
    %5784 = vmatmul.mubr.bf16.gmra.mrb[0].mxu0 %v5676
    %v5785 = vpop.f32.mrb[0].mxu0
    %v5786 = vadd.f32 0.0, %v5785
    %v5787 = vpop.f32.mrb[0].mxu0
    %v5788 = vpop.f32.mrb[0].mxu0
    %v5789 = vadd.f32 0.0, %v5788
    %v5790 = vpop.f32.mrb[0].mxu0
    %5791 = vmatprep.mubr.bf16.mxu0 0
    %5792 = vmatmul.mubr.bf16.gmra.mrb[0].mxu0 %v5677
    %v5793 = vpop.f32.mrb[0].mxu0
    %v5794 = vadd.f32 0.0, %v5793
    %v5795 = vpop.f32.mrb[0].mxu0
    %v5796 = vpop.f32.mrb[0].mxu0
    %v5797 = vadd.f32 0.0, %v5796
    %v5798 = vpop.f32.mrb[0].mxu0
    %5799 = vmatprep.mubr.bf16.mxu0 0
    %5800 = vmatmul.mubr.bf16.gmra.mrb[0].mxu0 %v5678
    %v5801 = vpop.f32.mrb[0].mxu0
    %v5802 = vadd.f32 0.0, %v5801
    %v5803 = vpop.f32.mrb[0].mxu0
    %v5804 = vpop.f32.mrb[0].mxu0
    %v5805 = vadd.f32 0.0, %v5804
    %v5806 = vpop.f32.mrb[0].mxu0
    %5807 = vdwg.mxu0
    %v5808 = vpack.c.bf16 %v5749, %v5746
    %v5809 = vpack.c.bf16 %v5757, %v5754
    %v5810 = vpack.c.bf16 %v5765, %v5762
    %v5811 = vpack.c.bf16 %v5773, %v5770
    %v5812 = vpack.c.bf16 %v5781, %v5778
    %v5813 = vpack.c.bf16 %v5789, %v5786
    %v5814 = vpack.c.bf16 %v5797, %v5794
    %v5815 = vpack.c.bf16 %v5805, %v5802
    %v5817 = vsel %vm4891, %v5808, 0
    %v5820 = vsel %vm4891, %v5809, 0
    %v5823 = vsel %vm4891, %v5810, 0
    %v5826 = vsel %vm4891, %v5811, 0
    %v5829 = vsel %vm4891, %v5812, 0
    %v5832 = vsel %vm4891, %v5813, 0
    %v5835 = vsel %vm4891, %v5814, 0
    %v5838 = vsel %vm4891, %v5815, 0
    %vm5840 = vcmask 1043456
    %v5842 = vsel %vm5840, %v4512, 0
    %5844 = vmatprep.subr.bf16.mxu0 0
    %5845 = vmatpush1.bf16.msra.mxu0 %v5842
    %5846 = vmatprep.subr.bf16.mxu0 0
    %5847 = vmatpush1.bf16.msra.mxu0 0
    %5848 = vmatprep.subr.bf16.mxu0 0
    %5849 = vmatpush1.bf16.msra.mxu0 0
    %5850 = vmatprep.subr.bf16.mxu0 0
    %5851 = vmatpush1.bf16.msra.mxu0 0
    %5852 = vmatprep.subr.bf16.mxu0 0
    %5853 = vmatpush1.bf16.msra.mxu0 0
    %5854 = vmatprep.subr.bf16.mxu0 0
    %5855 = vmatpush1.bf16.msra.mxu0 0
    %5856 = vmatprep.subr.bf16.mxu0 0
    %5857 = vmatpush1.bf16.msra.mxu0 0
    %5858 = vmatprep.subr.bf16.mxu0 0
    %5859 = vmatpush1.bf16.msra.mxu0 0
    %5860 = vmatprep.subr.bf16.mxu0 0
    %5861 = vmatpush1.bf16.msra.mxu0 0
    %5862 = vmatprep.subr.bf16.mxu0 0
    %5863 = vmatpush1.bf16.msra.mxu0 0
    %5864 = vmatprep.subr.bf16.mxu0 0
    %5865 = vmatpush1.bf16.msra.mxu0 0
    %5866 = vmatprep.subr.bf16.mxu0 0
    %5867 = vmatpush1.bf16.msra.mxu0 0
    %5868 = vmatprep.subr.bf16.mxu0 0
    %5869 = vmatpush1.bf16.msra.mxu0 0
    %5870 = vmatprep.subr.bf16.mxu0 0
    %5871 = vmatpush1.bf16.msra.mxu0 0
    %5872 = vmatprep.subr.bf16.mxu0 0
    %5873 = vmatpush1.bf16.msra.mxu0 0
    %5874 = vmatprep.subr.bf16.mxu0 0
    %5875 = vmatpush1.bf16.msra.mxu0 0
    %5876 = vmatprep.mubr.bf16.mxu0 0
    %5877 = vmatmul.mubr.bf16.gmra.mrb[0].mxu0 %v5817
    %v5878 = vpop.f32.mrb[0].mxu0
    %v5879 = vadd.f32 0.0, %v5878
    %v5880 = vpop.f32.mrb[0].mxu0
    %v5881 = vpop.f32.mrb[0].mxu0
    %v5882 = vadd.f32 0.0, %v5881
    %v5883 = vpop.f32.mrb[0].mxu0
    %5884 = vmatprep.mubr.bf16.mxu0 0
    %5885 = vmatmul.mubr.bf16.gmra.mrb[0].mxu0 %v5820
    %v5886 = vpop.f32.mrb[0].mxu0
    %v5887 = vadd.f32 0.0, %v5886
    %v5888 = vpop.f32.mrb[0].mxu0
    %v5889 = vpop.f32.mrb[0].mxu0
    %v5890 = vadd.f32 0.0, %v5889
    %v5891 = vpop.f32.mrb[0].mxu0
    %5892 = vmatprep.mubr.bf16.mxu0 0
    %5893 = vmatmul.mubr.bf16.gmra.mrb[0].mxu0 %v5823
    %v5894 = vpop.f32.mrb[0].mxu0
    %v5895 = vadd.f32 0.0, %v5894
    %v5896 = vpop.f32.mrb[0].mxu0
    %v5897 = vpop.f32.mrb[0].mxu0
    %v5898 = vadd.f32 0.0, %v5897
    %v5899 = vpop.f32.mrb[0].mxu0
    %5900 = vmatprep.mubr.bf16.mxu0 0
    %5901 = vmatmul.mubr.bf16.gmra.mrb[0].mxu0 %v5826
    %v5902 = vpop.f32.mrb[0].mxu0
    %v5903 = vadd.f32 0.0, %v5902
    %v5904 = vpop.f32.mrb[0].mxu0
    %v5905 = vpop.f32.mrb[0].mxu0
    %v5906 = vadd.f32 0.0, %v5905
    %v5907 = vpop.f32.mrb[0].mxu0
    %5908 = vmatprep.mubr.bf16.mxu0 0
    %5909 = vmatmul.mubr.bf16.gmra.mrb[0].mxu0 %v5829
    %v5910 = vpop.f32.mrb[0].mxu0
    %v5911 = vadd.f32 0.0, %v5910
    %v5912 = vpop.f32.mrb[0].mxu0
    %v5913 = vpop.f32.mrb[0].mxu0
    %v5914 = vadd.f32 0.0, %v5913
    %v5915 = vpop.f32.mrb[0].mxu0
    %5916 = vmatprep.mubr.bf16.mxu0 0
    %5917 = vmatmul.mubr.bf16.gmra.mrb[0].mxu0 %v5832
    %v5918 = vpop.f32.mrb[0].mxu0
    %v5919 = vadd.f32 0.0, %v5918
    %v5920 = vpop.f32.mrb[0].mxu0
    %v5921 = vpop.f32.mrb[0].mxu0
    %v5922 = vadd.f32 0.0, %v5921
    %v5923 = vpop.f32.mrb[0].mxu0
    %5924 = vmatprep.mubr.bf16.mxu0 0
    %5925 = vmatmul.mubr.bf16.gmra.mrb[0].mxu0 %v5835
    %v5926 = vpop.f32.mrb[0].mxu0
    %v5927 = vadd.f32 0.0, %v5926
    %v5928 = vpop.f32.mrb[0].mxu0
    %v5929 = vpop.f32.mrb[0].mxu0
    %v5930 = vadd.f32 0.0, %v5929
    %v5931 = vpop.f32.mrb[0].mxu0
    %5932 = vmatprep.mubr.bf16.mxu0 0
    %5933 = vmatmul.mubr.bf16.gmra.mrb[0].mxu0 %v5838
    %v5934 = vpop.f32.mrb[0].mxu0
    %v5935 = vadd.f32 0.0, %v5934
    %v5936 = vpop.f32.mrb[0].mxu0
    %v5937 = vpop.f32.mrb[0].mxu0
    %v5938 = vadd.f32 0.0, %v5937
    %v5939 = vpop.f32.mrb[0].mxu0
    %5940 = vdwg.mxu0
    %v5942 = vsel %vm4891, %v5310, 0
    %v5945 = vsel %vm4891, %v5311, 0
    %v5948 = vsel %vm4891, %v5312, 0
    %v5951 = vsel %vm4891, %v5313, 0
    %v5954 = vsel %vm4891, %v5314, 0
    %v5957 = vsel %vm4891, %v5315, 0
    %v5960 = vsel %vm4891, %v5316, 0
    %v5963 = vsel %vm4891, %v5317, 0
    %v5966 = vsel %vm5840, %v4511, 0
    %5968 = vmatprep.subr.bf16.mxu0 0
    %5969 = vmatpush1.bf16.msra.mxu0 %v5966
    %5970 = vmatprep.subr.bf16.mxu0 0
    %5971 = vmatpush1.bf16.msra.mxu0 0
    %5972 = vmatprep.subr.bf16.mxu0 0
    %5973 = vmatpush1.bf16.msra.mxu0 0
    %5974 = vmatprep.subr.bf16.mxu0 0
    %5975 = vmatpush1.bf16.msra.mxu0 0
    %5976 = vmatprep.subr.bf16.mxu0 0
    %5977 = vmatpush1.bf16.msra.mxu0 0
    %5978 = vmatprep.subr.bf16.mxu0 0
    %5979 = vmatpush1.bf16.msra.mxu0 0
    %5980 = vmatprep.subr.bf16.mxu0 0
    %5981 = vmatpush1.bf16.msra.mxu0 0
    %5982 = vmatprep.subr.bf16.mxu0 0
    %5983 = vmatpush1.bf16.msra.mxu0 0
    %5984 = vmatprep.subr.bf16.mxu0 0
    %5985 = vmatpush1.bf16.msra.mxu0 0
    %5986 = vmatprep.subr.bf16.mxu0 0
    %5987 = vmatpush1.bf16.msra.mxu0 0
    %5988 = vmatprep.subr.bf16.mxu0 0
    %5989 = vmatpush1.bf16.msra.mxu0 0
    %5990 = vmatprep.subr.bf16.mxu0 0
    %5991 = vmatpush1.bf16.msra.mxu0 0
    %5992 = vmatprep.subr.bf16.mxu0 0
    %5993 = vmatpush1.bf16.msra.mxu0 0
    %5994 = vmatprep.subr.bf16.mxu0 0
    %5995 = vmatpush1.bf16.msra.mxu0 0
    %5996 = vmatprep.subr.bf16.mxu0 0
    %5997 = vmatpush1.bf16.msra.mxu0 0
    %5998 = vmatprep.subr.bf16.mxu0 0
    %5999 = vmatpush1.bf16.msra.mxu0 0
    %6000 = vmatprep.mubr.bf16.mxu0 0
    %6001 = vmatmul.mubr.bf16.gmra.mrb[0].mxu0 %v5942
    %v6002 = vpop.f32.mrb[0].mxu0
    %v6003 = vadd.f32 %v5879, %v6002
    %v6004 = vpop.f32.mrb[0].mxu0
    %v6005 = vpop.f32.mrb[0].mxu0
    %v6006 = vadd.f32 %v5882, %v6005
    %v6007 = vpop.f32.mrb[0].mxu0
    %6008 = vmatprep.mubr.bf16.mxu0 0
    %6009 = vmatmul.mubr.bf16.gmra.mrb[0].mxu0 %v5945
    %v6010 = vpop.f32.mrb[0].mxu0
    %v6011 = vadd.f32 %v5887, %v6010
    %v6012 = vpop.f32.mrb[0].mxu0
    %v6013 = vpop.f32.mrb[0].mxu0
    %v6014 = vadd.f32 %v5890, %v6013
    %v6015 = vpop.f32.mrb[0].mxu0
    %6016 = vmatprep.mubr.bf16.mxu0 0
    %6017 = vmatmul.mubr.bf16.gmra.mrb[0].mxu0 %v5948
    %v6018 = vpop.f32.mrb[0].mxu0
    %v6019 = vadd.f32 %v5895, %v6018
    %v6020 = vpop.f32.mrb[0].mxu0
    %v6021 = vpop.f32.mrb[0].mxu0
    %v6022 = vadd.f32 %v5898, %v6021
    %v6023 = vpop.f32.mrb[0].mxu0
    %6024 = vmatprep.mubr.bf16.mxu0 0
    %6025 = vmatmul.mubr.bf16.gmra.mrb[0].mxu0 %v5951
    %v6026 = vpop.f32.mrb[0].mxu0
    %v6027 = vadd.f32 %v5903, %v6026
    %v6028 = vpop.f32.mrb[0].mxu0
    %v6029 = vpop.f32.mrb[0].mxu0
    %v6030 = vadd.f32 %v5906, %v6029
    %v6031 = vpop.f32.mrb[0].mxu0
    %6032 = vmatprep.mubr.bf16.mxu0 0
    %6033 = vmatmul.mubr.bf16.gmra.mrb[0].mxu0 %v5954
    %v6034 = vpop.f32.mrb[0].mxu0
    %v6035 = vadd.f32 %v5911, %v6034
    %v6036 = vpop.f32.mrb[0].mxu0
    %v6037 = vpop.f32.mrb[0].mxu0
    %v6038 = vadd.f32 %v5914, %v6037
    %v6039 = vpop.f32.mrb[0].mxu0
    %6040 = vmatprep.mubr.bf16.mxu0 0
    %6041 = vmatmul.mubr.bf16.gmra.mrb[0].mxu0 %v5957
    %v6042 = vpop.f32.mrb[0].mxu0
    %v6043 = vadd.f32 %v5919, %v6042
    %v6044 = vpop.f32.mrb[0].mxu0
    %v6045 = vpop.f32.mrb[0].mxu0
    %v6046 = vadd.f32 %v5922, %v6045
    %v6047 = vpop.f32.mrb[0].mxu0
    %6048 = vmatprep.mubr.bf16.mxu0 0
    %6049 = vmatmul.mubr.bf16.gmra.mrb[0].mxu0 %v5960
    %v6050 = vpop.f32.mrb[0].mxu0
    %v6051 = vadd.f32 %v5927, %v6050
    %v6052 = vpop.f32.mrb[0].mxu0
    %v6053 = vpop.f32.mrb[0].mxu0
    %v6054 = vadd.f32 %v5930, %v6053
    %v6055 = vpop.f32.mrb[0].mxu0
    %6056 = vmatprep.mubr.bf16.mxu0 0
    %6057 = vmatmul.mubr.bf16.gmra.mrb[0].mxu0 %v5963
    %v6058 = vpop.f32.mrb[0].mxu0
    %v6059 = vadd.f32 %v5935, %v6058
    %v6060 = vpop.f32.mrb[0].mxu0
    %v6061 = vpop.f32.mrb[0].mxu0
    %v6062 = vadd.f32 %v5938, %v6061
    %v6063 = vpop.f32.mrb[0].mxu0
    %6064 = vdwg.mxu0
    %6065 = vrot.lane.b32.xlu0 %v4875, 112
    %v6066 = vpop.permute.xlu0 %6065
    %6067 = vrot.lane.b32.xlu0 %v4876, 112
    %v6068 = vpop.permute.xlu0 %6067
    %6069 = vrot.lane.b32.xlu0 %v4877, 112
    %v6070 = vpop.permute.xlu0 %6069
    %6071 = vrot.lane.b32.xlu0 %v4878, 112
    %v6072 = vpop.permute.xlu0 %6071
    %6073 = vrot.lane.b32.xlu0 %v4879, 112
    %v6074 = vpop.permute.xlu0 %6073
    %6075 = vrot.lane.b32.xlu0 %v4880, 112
    %v6076 = vpop.permute.xlu0 %6075
    %6077 = vrot.lane.b32.xlu0 %v4881, 112
    %v6078 = vpop.permute.xlu0 %6077
    %6079 = vrot.lane.b32.xlu0 %v4882, 112
    %v6080 = vpop.permute.xlu0 %6079
    %6081 = vrot.lane.b32.xlu0 %v4883, 112
    %v6082 = vpop.permute.xlu0 %6081
    %6083 = vrot.lane.b32.xlu0 %v4884, 112
    %v6084 = vpop.permute.xlu0 %6083
    %6085 = vrot.lane.b32.xlu0 %v4885, 112
    %v6086 = vpop.permute.xlu0 %6085
    %6087 = vrot.lane.b32.xlu0 %v4886, 112
    %v6088 = vpop.permute.xlu0 %6087
    %6089 = vrot.lane.b32.xlu0 %v4887, 112
    %v6090 = vpop.permute.xlu0 %6089
    %6091 = vrot.lane.b32.xlu0 %v4888, 112
    %v6092 = vpop.permute.xlu0 %6091
    %6093 = vrot.lane.b32.xlu0 %v4889, 112
    %v6094 = vpop.permute.xlu0 %6093
    %6095 = vrot.lane.b32.xlu0 %v4890, 112
    %v6096 = vpop.permute.xlu0 %6095
    %v6098 = vsel %vm4891, %v6066, 0
    %v6101 = vsel %vm4891, %v6068, 0
    %v6104 = vsel %vm4891, %v6070, 0
    %v6107 = vsel %vm4891, %v6072, 0
    %v6110 = vsel %vm4891, %v6074, 0
    %v6113 = vsel %vm4891, %v6076, 0
    %v6116 = vsel %vm4891, %v6078, 0
    %v6119 = vsel %vm4891, %v6080, 0
    %v6122 = vsel %vm4891, %v6082, 0
    %v6125 = vsel %vm4891, %v6084, 0
    %v6128 = vsel %vm4891, %v6086, 0
    %v6131 = vsel %vm4891, %v6088, 0
    %v6134 = vsel %vm4891, %v6090, 0
    %v6137 = vsel %vm4891, %v6092, 0
    %v6140 = vsel %vm4891, %v6094, 0
    %v6143 = vsel %vm4891, %v6096, 0
    %6145 = vmatprep.subr.bf16.mxu0 0
    %6146 = vmatpush1.bf16.xpose.msra.mxu0 %v6122
    %6147 = vmatprep.subr.bf16.mxu0 0
    %6148 = vmatpush1.bf16.xpose.msra.mxu0 %v6125
    %6149 = vmatprep.subr.bf16.mxu0 0
    %6150 = vmatpush1.bf16.xpose.msra.mxu0 %v6128
    %6151 = vmatprep.subr.bf16.mxu0 0
    %6152 = vmatpush1.bf16.xpose.msra.mxu0 %v6131
    %6153 = vmatprep.subr.bf16.mxu0 0
    %6154 = vmatpush1.bf16.xpose.msra.mxu0 %v6134
    %6155 = vmatprep.subr.bf16.mxu0 0
    %6156 = vmatpush1.bf16.xpose.msra.mxu0 %v6137
    %6157 = vmatprep.subr.bf16.mxu0 0
    %6158 = vmatpush1.bf16.xpose.msra.mxu0 %v6140
    %6159 = vmatprep.subr.bf16.mxu0 0
    %6160 = vmatpush1.bf16.xpose.msra.mxu0 %v6143
    %6161 = vmatprep.subr.bf16.mxu0 0
    %6162 = vmatpush1.bf16.xpose.msra.mxu0 0
    %6163 = vmatprep.subr.bf16.mxu0 0
    %6164 = vmatpush1.bf16.xpose.msra.mxu0 0
    %6165 = vmatprep.subr.bf16.mxu0 0
    %6166 = vmatpush1.bf16.xpose.msra.mxu0 0
    %6167 = vmatprep.subr.bf16.mxu0 0
    %6168 = vmatpush1.bf16.xpose.msra.mxu0 0
    %6169 = vmatprep.subr.bf16.mxu0 0
    %6170 = vmatpush1.bf16.xpose.msra.mxu0 0
    %6171 = vmatprep.subr.bf16.mxu0 0
    %6172 = vmatpush1.bf16.xpose.msra.mxu0 0
    %6173 = vmatprep.subr.bf16.mxu0 0
    %6174 = vmatpush1.bf16.xpose.msra.mxu0 0
    %6175 = vmatprep.subr.bf16.mxu0 0
    %6176 = vmatpush1.bf16.xpose.msra.mxu0 0
    %6177 = vmatprep.mubr.bf16.mxu0 0
    %6178 = vmatmul.mubr.bf16.gmra.mrb[0].mxu0 %v6098
    %v6179 = vpop.f32.mrb[0].mxu0
    %v6180 = vadd.f32 0.0, %v6179
    %v6181 = vpop.f32.mrb[0].mxu0
    %v6182 = vpop.f32.mrb[0].mxu0
    %v6183 = vadd.f32 0.0, %v6182
    %v6184 = vpop.f32.mrb[0].mxu0
    %6185 = vmatprep.mubr.bf16.mxu0 0
    %6186 = vmatmul.mubr.bf16.gmra.mrb[0].mxu0 %v6101
    %v6187 = vpop.f32.mrb[0].mxu0
    %v6188 = vadd.f32 0.0, %v6187
    %v6189 = vpop.f32.mrb[0].mxu0
    %v6190 = vpop.f32.mrb[0].mxu0
    %v6191 = vadd.f32 0.0, %v6190
    %v6192 = vpop.f32.mrb[0].mxu0
    %6193 = vmatprep.mubr.bf16.mxu0 0
    %6194 = vmatmul.mubr.bf16.gmra.mrb[0].mxu0 %v6104
    %v6195 = vpop.f32.mrb[0].mxu0
    %v6196 = vadd.f32 0.0, %v6195
    %v6197 = vpop.f32.mrb[0].mxu0
    %v6198 = vpop.f32.mrb[0].mxu0
    %v6199 = vadd.f32 0.0, %v6198
    %v6200 = vpop.f32.mrb[0].mxu0
    %6201 = vmatprep.mubr.bf16.mxu0 0
    %6202 = vmatmul.mubr.bf16.gmra.mrb[0].mxu0 %v6107
    %v6203 = vpop.f32.mrb[0].mxu0
    %v6204 = vadd.f32 0.0, %v6203
    %v6205 = vpop.f32.mrb[0].mxu0
    %v6206 = vpop.f32.mrb[0].mxu0
    %v6207 = vadd.f32 0.0, %v6206
    %v6208 = vpop.f32.mrb[0].mxu0
    %6209 = vmatprep.mubr.bf16.mxu0 0
    %6210 = vmatmul.mubr.bf16.gmra.mrb[0].mxu0 %v6110
    %v6211 = vpop.f32.mrb[0].mxu0
    %v6212 = vadd.f32 0.0, %v6211
    %v6213 = vpop.f32.mrb[0].mxu0
    %v6214 = vpop.f32.mrb[0].mxu0
    %v6215 = vadd.f32 0.0, %v6214
    %v6216 = vpop.f32.mrb[0].mxu0
    %6217 = vmatprep.mubr.bf16.mxu0 0
    %6218 = vmatmul.mubr.bf16.gmra.mrb[0].mxu0 %v6113
    %v6219 = vpop.f32.mrb[0].mxu0
    %v6220 = vadd.f32 0.0, %v6219
    %v6221 = vpop.f32.mrb[0].mxu0
    %v6222 = vpop.f32.mrb[0].mxu0
    %v6223 = vadd.f32 0.0, %v6222
    %v6224 = vpop.f32.mrb[0].mxu0
    %6225 = vmatprep.mubr.bf16.mxu0 0
    %6226 = vmatmul.mubr.bf16.gmra.mrb[0].mxu0 %v6116
    %v6227 = vpop.f32.mrb[0].mxu0
    %v6228 = vadd.f32 0.0, %v6227
    %v6229 = vpop.f32.mrb[0].mxu0
    %v6230 = vpop.f32.mrb[0].mxu0
    %v6231 = vadd.f32 0.0, %v6230
    %v6232 = vpop.f32.mrb[0].mxu0
    %6233 = vmatprep.mubr.bf16.mxu0 0
    %6234 = vmatmul.mubr.bf16.gmra.mrb[0].mxu0 %v6119
    %v6235 = vpop.f32.mrb[0].mxu0
    %v6236 = vadd.f32 0.0, %v6235
    %v6237 = vpop.f32.mrb[0].mxu0
    %v6238 = vpop.f32.mrb[0].mxu0
    %v6239 = vadd.f32 0.0, %v6238
    %v6240 = vpop.f32.mrb[0].mxu0
    %6241 = vdwg.mxu0
    %v6242 = vmul.f32 %v6180, 0.35355338
    %v6243 = vmul.f32 %v6183, 0.35355338
    %v6244 = vmul.f32 %v6188, 0.35355338
    %v6245 = vmul.f32 %v6191, 0.35355338
    %v6246 = vmul.f32 %v6196, 0.35355338
    %v6247 = vmul.f32 %v6199, 0.35355338
    %v6248 = vmul.f32 %v6204, 0.35355338
    %v6249 = vmul.f32 %v6207, 0.35355338
    %v6250 = vmul.f32 %v6212, 0.35355338
    %v6251 = vmul.f32 %v6215, 0.35355338
    %v6252 = vmul.f32 %v6220, 0.35355338
    %v6253 = vmul.f32 %v6223, 0.35355338
    %v6254 = vmul.f32 %v6228, 0.35355338
    %v6255 = vmul.f32 %v6231, 0.35355338
    %v6256 = vmul.f32 %v6236, 0.35355338
    %v6257 = vmul.f32 %v6239, 0.35355338
    %6258 = vmax.xlane.f32.xlu0 %v6242
    %v6259 = vpop.xlane.xlu0 %6258
    %6260 = vmax.xlane.f32.xlu0 %v6243
    %v6261 = vpop.xlane.xlu0 %6260
    %6262 = vmax.xlane.f32.xlu0 %v6244
    %v6263 = vpop.xlane.xlu0 %6262
    %6264 = vmax.xlane.f32.xlu0 %v6245
    %v6265 = vpop.xlane.xlu0 %6264
    %6266 = vmax.xlane.f32.xlu0 %v6246
    %v6267 = vpop.xlane.xlu0 %6266
    %6268 = vmax.xlane.f32.xlu0 %v6247
    %v6269 = vpop.xlane.xlu0 %6268
    %6270 = vmax.xlane.f32.xlu0 %v6248
    %v6271 = vpop.xlane.xlu0 %6270
    %6272 = vmax.xlane.f32.xlu0 %v6249
    %v6273 = vpop.xlane.xlu0 %6272
    %6274 = vmax.xlane.f32.xlu0 %v6250
    %v6275 = vpop.xlane.xlu0 %6274
    %6276 = vmax.xlane.f32.xlu0 %v6251
    %v6277 = vpop.xlane.xlu0 %6276
    %6278 = vmax.xlane.f32.xlu0 %v6252
    %v6279 = vpop.xlane.xlu0 %6278
    %6280 = vmax.xlane.f32.xlu0 %v6253
    %v6281 = vpop.xlane.xlu0 %6280
    %6282 = vmax.xlane.f32.xlu0 %v6254
    %v6283 = vpop.xlane.xlu0 %6282
    %6284 = vmax.xlane.f32.xlu0 %v6255
    %v6285 = vpop.xlane.xlu0 %6284
    %6286 = vmax.xlane.f32.xlu0 %v6256
    %v6287 = vpop.xlane.xlu0 %6286
    %6288 = vmax.xlane.f32.xlu0 %v6257
    %v6289 = vpop.xlane.xlu0 %6288
    %v6290 = vsub.f32 %v6242, %v6259
    %v6291 = vsub.f32 %v6243, %v6261
    %v6292 = vsub.f32 %v6244, %v6263
    %v6293 = vsub.f32 %v6245, %v6265
    %v6294 = vsub.f32 %v6246, %v6267
    %v6295 = vsub.f32 %v6247, %v6269
    %v6296 = vsub.f32 %v6248, %v6271
    %v6297 = vsub.f32 %v6249, %v6273
    %v6298 = vsub.f32 %v6250, %v6275
    %v6299 = vsub.f32 %v6251, %v6277
    %v6300 = vsub.f32 %v6252, %v6279
    %v6301 = vsub.f32 %v6253, %v6281
    %v6302 = vsub.f32 %v6254, %v6283
    %v6303 = vsub.f32 %v6255, %v6285
    %v6304 = vsub.f32 %v6256, %v6287
    %v6305 = vsub.f32 %v6257, %v6289
    %v6306 = vmul.f32 %v6290, 1.442695
    %v6307 = vpow.pop %v6306
    %v6308 = vmul.f32 %v6291, 1.442695
    %v6309 = vpow.pop %v6308
    %v6310 = vmul.f32 %v6292, 1.442695
    %v6311 = vpow.pop %v6310
    %v6312 = vmul.f32 %v6293, 1.442695
    %v6313 = vpow.pop %v6312
    %v6314 = vmul.f32 %v6294, 1.442695
    %v6315 = vpow.pop %v6314
    %v6316 = vmul.f32 %v6295, 1.442695
    %v6317 = vpow.pop %v6316
    %v6318 = vmul.f32 %v6296, 1.442695
    %v6319 = vpow.pop %v6318
    %v6320 = vmul.f32 %v6297, 1.442695
    %v6321 = vpow.pop %v6320
    %v6322 = vmul.f32 %v6298, 1.442695
    %v6323 = vpow.pop %v6322
    %v6324 = vmul.f32 %v6299, 1.442695
    %v6325 = vpow.pop %v6324
    %v6326 = vmul.f32 %v6300, 1.442695
    %v6327 = vpow.pop %v6326
    %v6328 = vmul.f32 %v6301, 1.442695
    %v6329 = vpow.pop %v6328
    %v6330 = vmul.f32 %v6302, 1.442695
    %v6331 = vpow.pop %v6330
    %v6332 = vmul.f32 %v6303, 1.442695
    %v6333 = vpow.pop %v6332
    %v6334 = vmul.f32 %v6304, 1.442695
    %v6335 = vpow.pop %v6334
    %v6336 = vmul.f32 %v6305, 1.442695
    %v6337 = vpow.pop %v6336
    %6338 = vadd.xlane.f32.xlu0 %v6307
    %v6339 = vpop.xlane.xlu0 %6338
    %6340 = vadd.xlane.f32.xlu0 %v6309
    %v6341 = vpop.xlane.xlu0 %6340
    %6342 = vadd.xlane.f32.xlu0 %v6311
    %v6343 = vpop.xlane.xlu0 %6342
    %6344 = vadd.xlane.f32.xlu0 %v6313
    %v6345 = vpop.xlane.xlu0 %6344
    %6346 = vadd.xlane.f32.xlu0 %v6315
    %v6347 = vpop.xlane.xlu0 %6346
    %6348 = vadd.xlane.f32.xlu0 %v6317
    %v6349 = vpop.xlane.xlu0 %6348
    %6350 = vadd.xlane.f32.xlu0 %v6319
    %v6351 = vpop.xlane.xlu0 %6350
    %6352 = vadd.xlane.f32.xlu0 %v6321
    %v6353 = vpop.xlane.xlu0 %6352
    %6354 = vadd.xlane.f32.xlu0 %v6323
    %v6355 = vpop.xlane.xlu0 %6354
    %6356 = vadd.xlane.f32.xlu0 %v6325
    %v6357 = vpop.xlane.xlu0 %6356
    %6358 = vadd.xlane.f32.xlu0 %v6327
    %v6359 = vpop.xlane.xlu0 %6358
    %6360 = vadd.xlane.f32.xlu0 %v6329
    %v6361 = vpop.xlane.xlu0 %6360
    %6362 = vadd.xlane.f32.xlu0 %v6331
    %v6363 = vpop.xlane.xlu0 %6362
    %6364 = vadd.xlane.f32.xlu0 %v6333
    %v6365 = vpop.xlane.xlu0 %6364
    %6366 = vadd.xlane.f32.xlu0 %v6335
    %v6367 = vpop.xlane.xlu0 %6366
    %6368 = vadd.xlane.f32.xlu0 %v6337
    %v6369 = vpop.xlane.xlu0 %6368
    %v6370 = vrcp.pop %v6339
    %v6371 = vrcp.pop %v6341
    %v6372 = vrcp.pop %v6343
    %v6373 = vrcp.pop %v6345
    %v6374 = vrcp.pop %v6347
    %v6375 = vrcp.pop %v6349
    %v6376 = vrcp.pop %v6351
    %v6377 = vrcp.pop %v6353
    %v6378 = vrcp.pop %v6355
    %v6379 = vrcp.pop %v6357
    %v6380 = vrcp.pop %v6359
    %v6381 = vrcp.pop %v6361
    %v6382 = vrcp.pop %v6363
    %v6383 = vrcp.pop %v6365
    %v6384 = vrcp.pop %v6367
    %v6385 = vrcp.pop %v6369
    %v6386 = vmul.f32 %v6307, %v6370
    %v6387 = vmul.f32 %v6309, %v6371
    %v6388 = vmul.f32 %v6311, %v6372
    %v6389 = vmul.f32 %v6313, %v6373
    %v6390 = vmul.f32 %v6315, %v6374
    %v6391 = vmul.f32 %v6317, %v6375
    %v6392 = vmul.f32 %v6319, %v6376
    %v6393 = vmul.f32 %v6321, %v6377
    %v6394 = vmul.f32 %v6323, %v6378
    %v6395 = vmul.f32 %v6325, %v6379
    %v6396 = vmul.f32 %v6327, %v6380
    %v6397 = vmul.f32 %v6329, %v6381
    %v6398 = vmul.f32 %v6331, %v6382
    %v6399 = vmul.f32 %v6333, %v6383
    %v6400 = vmul.f32 %v6335, %v6384
    %v6401 = vmul.f32 %v6337, %v6385
    %v6402 = vpack.c.bf16 %v6387, %v6386
    %v6403 = vpack.c.bf16 %v6389, %v6388
    %v6404 = vpack.c.bf16 %v6391, %v6390
    %v6405 = vpack.c.bf16 %v6393, %v6392
    %v6406 = vpack.c.bf16 %v6395, %v6394
    %v6407 = vpack.c.bf16 %v6397, %v6396
    %v6408 = vpack.c.bf16 %v6399, %v6398
    %v6409 = vpack.c.bf16 %v6401, %v6400
    %6410 = vrot.lane.b32.xlu0 %v5205, 112
    %v6411 = vpop.permute.xlu0 %6410
    %6412 = vrot.lane.b32.xlu0 %v5206, 112
    %v6413 = vpop.permute.xlu0 %6412
    %6414 = vrot.lane.b32.xlu0 %v5207, 112
    %v6415 = vpop.permute.xlu0 %6414
    %6416 = vrot.lane.b32.xlu0 %v5208, 112
    %v6417 = vpop.permute.xlu0 %6416
    %6418 = vrot.lane.b32.xlu0 %v5209, 112
    %v6419 = vpop.permute.xlu0 %6418
    %6420 = vrot.lane.b32.xlu0 %v5210, 112
    %v6421 = vpop.permute.xlu0 %6420
    %6422 = vrot.lane.b32.xlu0 %v5211, 112
    %v6423 = vpop.permute.xlu0 %6422
    %6424 = vrot.lane.b32.xlu0 %v5212, 112
    %v6425 = vpop.permute.xlu0 %6424
    %6434 = vmatprep.subr.bf16.mxu0 0
    %6435 = vmatpush1.bf16.msra.mxu0 %v6411
    %6436 = vmatprep.subr.bf16.mxu0 0
    %6437 = vmatpush1.bf16.msra.mxu0 %v6413
    %6438 = vmatprep.subr.bf16.mxu0 0
    %6439 = vmatpush1.bf16.msra.mxu0 %v6415
    %6440 = vmatprep.subr.bf16.mxu0 0
    %6441 = vmatpush1.bf16.msra.mxu0 %v6417
    %6442 = vmatprep.subr.bf16.mxu0 0
    %6443 = vmatpush1.bf16.msra.mxu0 %v6419
    %6444 = vmatprep.subr.bf16.mxu0 0
    %6445 = vmatpush1.bf16.msra.mxu0 %v6421
    %6446 = vmatprep.subr.bf16.mxu0 0
    %6447 = vmatpush1.bf16.msra.mxu0 %v6423
    %6448 = vmatprep.subr.bf16.mxu0 0
    %6449 = vmatpush1.bf16.msra.mxu0 %v6425
    %6450 = vmatprep.subr.bf16.mxu0 0
    %6451 = vmatpush1.bf16.msra.mxu0 0
    %6452 = vmatprep.subr.bf16.mxu0 0
    %6453 = vmatpush1.bf16.msra.mxu0 0
    %6454 = vmatprep.subr.bf16.mxu0 0
    %6455 = vmatpush1.bf16.msra.mxu0 0
    %6456 = vmatprep.subr.bf16.mxu0 0
    %6457 = vmatpush1.bf16.msra.mxu0 0
    %6458 = vmatprep.subr.bf16.mxu0 0
    %6459 = vmatpush1.bf16.msra.mxu0 0
    %6460 = vmatprep.subr.bf16.mxu0 0
    %6461 = vmatpush1.bf16.msra.mxu0 0
    %6462 = vmatprep.subr.bf16.mxu0 0
    %6463 = vmatpush1.bf16.msra.mxu0 0
    %6464 = vmatprep.subr.bf16.mxu0 0
    %6465 = vmatpush1.bf16.msra.mxu0 0
    %6466 = vmatprep.mubr.bf16.mxu0 0
    %6467 = vmatmul.mubr.bf16.gmra.mrb[0].mxu0 %v6402
    %v6468 = vpop.f32.mrb[0].mxu0
    %v6469 = vadd.f32 0.0, %v6468
    %v6470 = vpop.f32.mrb[0].mxu0
    %v6471 = vpop.f32.mrb[0].mxu0
    %v6472 = vadd.f32 0.0, %v6471
    %v6473 = vpop.f32.mrb[0].mxu0
    %6474 = vmatprep.mubr.bf16.mxu0 0
    %6475 = vmatmul.mubr.bf16.gmra.mrb[0].mxu0 %v6403
    %v6476 = vpop.f32.mrb[0].mxu0
    %v6477 = vadd.f32 0.0, %v6476
    %v6478 = vpop.f32.mrb[0].mxu0
    %v6479 = vpop.f32.mrb[0].mxu0
    %v6480 = vadd.f32 0.0, %v6479
    %v6481 = vpop.f32.mrb[0].mxu0
    %6482 = vmatprep.mubr.bf16.mxu0 0
    %6483 = vmatmul.mubr.bf16.gmra.mrb[0].mxu0 %v6404
    %v6484 = vpop.f32.mrb[0].mxu0
    %v6485 = vadd.f32 0.0, %v6484
    %v6486 = vpop.f32.mrb[0].mxu0
    %v6487 = vpop.f32.mrb[0].mxu0
    %v6488 = vadd.f32 0.0, %v6487
    %v6489 = vpop.f32.mrb[0].mxu0
    %6490 = vmatprep.mubr.bf16.mxu0 0
    %6491 = vmatmul.mubr.bf16.gmra.mrb[0].mxu0 %v6405
    %v6492 = vpop.f32.mrb[0].mxu0
    %v6493 = vadd.f32 0.0, %v6492
    %v6494 = vpop.f32.mrb[0].mxu0
    %v6495 = vpop.f32.mrb[0].mxu0
    %v6496 = vadd.f32 0.0, %v6495
    %v6497 = vpop.f32.mrb[0].mxu0
    %6498 = vmatprep.mubr.bf16.mxu0 0
    %6499 = vmatmul.mubr.bf16.gmra.mrb[0].mxu0 %v6406
    %v6500 = vpop.f32.mrb[0].mxu0
    %v6501 = vadd.f32 0.0, %v6500
    %v6502 = vpop.f32.mrb[0].mxu0
    %v6503 = vpop.f32.mrb[0].mxu0
    %v6504 = vadd.f32 0.0, %v6503
    %v6505 = vpop.f32.mrb[0].mxu0
    %6506 = vmatprep.mubr.bf16.mxu0 0
    %6507 = vmatmul.mubr.bf16.gmra.mrb[0].mxu0 %v6407
    %v6508 = vpop.f32.mrb[0].mxu0
    %v6509 = vadd.f32 0.0, %v6508
    %v6510 = vpop.f32.mrb[0].mxu0
    %v6511 = vpop.f32.mrb[0].mxu0
    %v6512 = vadd.f32 0.0, %v6511
    %v6513 = vpop.f32.mrb[0].mxu0
    %6514 = vmatprep.mubr.bf16.mxu0 0
    %6515 = vmatmul.mubr.bf16.gmra.mrb[0].mxu0 %v6408
    %v6516 = vpop.f32.mrb[0].mxu0
    %v6517 = vadd.f32 0.0, %v6516
    %v6518 = vpop.f32.mrb[0].mxu0
    %v6519 = vpop.f32.mrb[0].mxu0
    %v6520 = vadd.f32 0.0, %v6519
    %v6521 = vpop.f32.mrb[0].mxu0
    %6522 = vmatprep.mubr.bf16.mxu0 0
    %6523 = vmatmul.mubr.bf16.gmra.mrb[0].mxu0 %v6409
    %v6524 = vpop.f32.mrb[0].mxu0
    %v6525 = vadd.f32 0.0, %v6524
    %v6526 = vpop.f32.mrb[0].mxu0
    %v6527 = vpop.f32.mrb[0].mxu0
    %v6528 = vadd.f32 0.0, %v6527
    %v6529 = vpop.f32.mrb[0].mxu0
    %6530 = vdwg.mxu0
    %v6531 = vpack.c.bf16 %v6472, %v6469
    %v6532 = vpack.c.bf16 %v6480, %v6477
    %v6533 = vpack.c.bf16 %v6488, %v6485
    %v6534 = vpack.c.bf16 %v6496, %v6493
    %v6535 = vpack.c.bf16 %v6504, %v6501
    %v6536 = vpack.c.bf16 %v6512, %v6509
    %v6537 = vpack.c.bf16 %v6520, %v6517
    %v6538 = vpack.c.bf16 %v6528, %v6525
    %v6540 = vsel %vm4891, %v6531, 0
    %v6543 = vsel %vm4891, %v6532, 0
    %v6546 = vsel %vm4891, %v6533, 0
    %v6549 = vsel %vm4891, %v6534, 0
    %v6552 = vsel %vm4891, %v6535, 0
    %v6555 = vsel %vm4891, %v6536, 0
    %v6558 = vsel %vm4891, %v6537, 0
    %v6561 = vsel %vm4891, %v6538, 0
    %v6564 = vsel %vm5840, %v4513, 0
    %6566 = vmatprep.subr.bf16.mxu0 0
    %6567 = vmatpush1.bf16.msra.mxu0 %v6564
    %6568 = vmatprep.subr.bf16.mxu0 0
    %6569 = vmatpush1.bf16.msra.mxu0 0
    %6570 = vmatprep.subr.bf16.mxu0 0
    %6571 = vmatpush1.bf16.msra.mxu0 0
    %6572 = vmatprep.subr.bf16.mxu0 0
    %6573 = vmatpush1.bf16.msra.mxu0 0
    %6574 = vmatprep.subr.bf16.mxu0 0
    %6575 = vmatpush1.bf16.msra.mxu0 0
    %6576 = vmatprep.subr.bf16.mxu0 0
    %6577 = vmatpush1.bf16.msra.mxu0 0
    %6578 = vmatprep.subr.bf16.mxu0 0
    %6579 = vmatpush1.bf16.msra.mxu0 0
    %6580 = vmatprep.subr.bf16.mxu0 0
    %6581 = vmatpush1.bf16.msra.mxu0 0
    %6582 = vmatprep.subr.bf16.mxu0 0
    %6583 = vmatpush1.bf16.msra.mxu0 0
    %6584 = vmatprep.subr.bf16.mxu0 0
    %6585 = vmatpush1.bf16.msra.mxu0 0
    %6586 = vmatprep.subr.bf16.mxu0 0
    %6587 = vmatpush1.bf16.msra.mxu0 0
    %6588 = vmatprep.subr.bf16.mxu0 0
    %6589 = vmatpush1.bf16.msra.mxu0 0
    %6590 = vmatprep.subr.bf16.mxu0 0
    %6591 = vmatpush1.bf16.msra.mxu0 0
    %6592 = vmatprep.subr.bf16.mxu0 0
    %6593 = vmatpush1.bf16.msra.mxu0 0
    %6594 = vmatprep.subr.bf16.mxu0 0
    %6595 = vmatpush1.bf16.msra.mxu0 0
    %6596 = vmatprep.subr.bf16.mxu0 0
    %6597 = vmatpush1.bf16.msra.mxu0 0
    %6598 = vmatprep.mubr.bf16.mxu0 0
    %6599 = vmatmul.mubr.bf16.gmra.mrb[0].mxu0 %v6540
    %v6600 = vpop.f32.mrb[0].mxu0
    %v6601 = vadd.f32 0.0, %v6600
    %v6602 = vpop.f32.mrb[0].mxu0
    %v6603 = vpop.f32.mrb[0].mxu0
    %v6604 = vadd.f32 0.0, %v6603
    %v6605 = vpop.f32.mrb[0].mxu0
    %6606 = vmatprep.mubr.bf16.mxu0 0
    %6607 = vmatmul.mubr.bf16.gmra.mrb[0].mxu0 %v6543
    %v6608 = vpop.f32.mrb[0].mxu0
    %v6609 = vadd.f32 0.0, %v6608
    %v6610 = vpop.f32.mrb[0].mxu0
    %v6611 = vpop.f32.mrb[0].mxu0
    %v6612 = vadd.f32 0.0, %v6611
    %v6613 = vpop.f32.mrb[0].mxu0
    %6614 = vmatprep.mubr.bf16.mxu0 0
    %6615 = vmatmul.mubr.bf16.gmra.mrb[0].mxu0 %v6546
    %v6616 = vpop.f32.mrb[0].mxu0
    %v6617 = vadd.f32 0.0, %v6616
    %v6618 = vpop.f32.mrb[0].mxu0
    %v6619 = vpop.f32.mrb[0].mxu0
    %v6620 = vadd.f32 0.0, %v6619
    %v6621 = vpop.f32.mrb[0].mxu0
    %6622 = vmatprep.mubr.bf16.mxu0 0
    %6623 = vmatmul.mubr.bf16.gmra.mrb[0].mxu0 %v6549
    %v6624 = vpop.f32.mrb[0].mxu0
    %v6625 = vadd.f32 0.0, %v6624
    %v6626 = vpop.f32.mrb[0].mxu0
    %v6627 = vpop.f32.mrb[0].mxu0
    %v6628 = vadd.f32 0.0, %v6627
    %v6629 = vpop.f32.mrb[0].mxu0
    %6630 = vmatprep.mubr.bf16.mxu0 0
    %6631 = vmatmul.mubr.bf16.gmra.mrb[0].mxu0 %v6552
    %v6632 = vpop.f32.mrb[0].mxu0
    %v6633 = vadd.f32 0.0, %v6632
    %v6634 = vpop.f32.mrb[0].mxu0
    %v6635 = vpop.f32.mrb[0].mxu0
    %v6636 = vadd.f32 0.0, %v6635
    %v6637 = vpop.f32.mrb[0].mxu0
    %6638 = vmatprep.mubr.bf16.mxu0 0
    %6639 = vmatmul.mubr.bf16.gmra.mrb[0].mxu0 %v6555
    %v6640 = vpop.f32.mrb[0].mxu0
    %v6641 = vadd.f32 0.0, %v6640
    %v6642 = vpop.f32.mrb[0].mxu0
    %v6643 = vpop.f32.mrb[0].mxu0
    %v6644 = vadd.f32 0.0, %v6643
    %v6645 = vpop.f32.mrb[0].mxu0
    %6646 = vmatprep.mubr.bf16.mxu0 0
    %6647 = vmatmul.mubr.bf16.gmra.mrb[0].mxu0 %v6558
    %v6648 = vpop.f32.mrb[0].mxu0
    %v6649 = vadd.f32 0.0, %v6648
    %v6650 = vpop.f32.mrb[0].mxu0
    %v6651 = vpop.f32.mrb[0].mxu0
    %v6652 = vadd.f32 0.0, %v6651
    %v6653 = vpop.f32.mrb[0].mxu0
    %6654 = vmatprep.mubr.bf16.mxu0 0
    %6655 = vmatmul.mubr.bf16.gmra.mrb[0].mxu0 %v6561
    %v6656 = vpop.f32.mrb[0].mxu0
    %v6657 = vadd.f32 0.0, %v6656
    %v6658 = vpop.f32.mrb[0].mxu0
    %v6659 = vpop.f32.mrb[0].mxu0
    %v6660 = vadd.f32 0.0, %v6659
    %v6661 = vpop.f32.mrb[0].mxu0
    %6662 = vdwg.mxu0
    %v6663 = vadd.f32 %v6003, %v6601
    %v6664 = vadd.f32 %v6006, %v6604
    %v6665 = vadd.f32 %v6011, %v6609
    %v6666 = vadd.f32 %v6014, %v6612
    %v6667 = vadd.f32 %v6019, %v6617
    %v6668 = vadd.f32 %v6022, %v6620
    %v6669 = vadd.f32 %v6027, %v6625
    %v6670 = vadd.f32 %v6030, %v6628
    %v6671 = vadd.f32 %v6035, %v6633
    %v6672 = vadd.f32 %v6038, %v6636
    %v6673 = vadd.f32 %v6043, %v6641
    %v6674 = vadd.f32 %v6046, %v6644
    %v6675 = vadd.f32 %v6051, %v6649
    %v6676 = vadd.f32 %v6054, %v6652
    %v6677 = vadd.f32 %v6059, %v6657
    %v6678 = vadd.f32 %v6062, %v6660
    %6679 = vrot.lane.b32.xlu0 %v4875, 104
    %v6680 = vpop.permute.xlu0 %6679
    %6681 = vrot.lane.b32.xlu0 %v4876, 104
    %v6682 = vpop.permute.xlu0 %6681
    %6683 = vrot.lane.b32.xlu0 %v4877, 104
    %v6684 = vpop.permute.xlu0 %6683
    %6685 = vrot.lane.b32.xlu0 %v4878, 104
    %v6686 = vpop.permute.xlu0 %6685
    %6687 = vrot.lane.b32.xlu0 %v4879, 104
    %v6688 = vpop.permute.xlu0 %6687
    %6689 = vrot.lane.b32.xlu0 %v4880, 104
    %v6690 = vpop.permute.xlu0 %6689
    %6691 = vrot.lane.b32.xlu0 %v4881, 104
    %v6692 = vpop.permute.xlu0 %6691
    %6693 = vrot.lane.b32.xlu0 %v4882, 104
    %v6694 = vpop.permute.xlu0 %6693
    %6695 = vrot.lane.b32.xlu0 %v4883, 104
    %v6696 = vpop.permute.xlu0 %6695
    %6697 = vrot.lane.b32.xlu0 %v4884, 104
    %v6698 = vpop.permute.xlu0 %6697
    %6699 = vrot.lane.b32.xlu0 %v4885, 104
    %v6700 = vpop.permute.xlu0 %6699
    %6701 = vrot.lane.b32.xlu0 %v4886, 104
    %v6702 = vpop.permute.xlu0 %6701
    %6703 = vrot.lane.b32.xlu0 %v4887, 104
    %v6704 = vpop.permute.xlu0 %6703
    %6705 = vrot.lane.b32.xlu0 %v4888, 104
    %v6706 = vpop.permute.xlu0 %6705
    %6707 = vrot.lane.b32.xlu0 %v4889, 104
    %v6708 = vpop.permute.xlu0 %6707
    %6709 = vrot.lane.b32.xlu0 %v4890, 104
    %v6710 = vpop.permute.xlu0 %6709
    %v6712 = vsel %vm4891, %v6680, 0
    %v6715 = vsel %vm4891, %v6682, 0
    %v6718 = vsel %vm4891, %v6684, 0
    %v6721 = vsel %vm4891, %v6686, 0
    %v6724 = vsel %vm4891, %v6688, 0
    %v6727 = vsel %vm4891, %v6690, 0
    %v6730 = vsel %vm4891, %v6692, 0
    %v6733 = vsel %vm4891, %v6694, 0
    %v6736 = vsel %vm4891, %v6696, 0
    %v6739 = vsel %vm4891, %v6698, 0
    %v6742 = vsel %vm4891, %v6700, 0
    %v6745 = vsel %vm4891, %v6702, 0
    %v6748 = vsel %vm4891, %v6704, 0
    %v6751 = vsel %vm4891, %v6706, 0
    %v6754 = vsel %vm4891, %v6708, 0
    %v6757 = vsel %vm4891, %v6710, 0
    %6759 = vmatprep.subr.bf16.mxu0 0
    %6760 = vmatpush1.bf16.xpose.msra.mxu0 %v6736
    %6761 = vmatprep.subr.bf16.mxu0 0
    %6762 = vmatpush1.bf16.xpose.msra.mxu0 %v6739
    %6763 = vmatprep.subr.bf16.mxu0 0
    %6764 = vmatpush1.bf16.xpose.msra.mxu0 %v6742
    %6765 = vmatprep.subr.bf16.mxu0 0
    %6766 = vmatpush1.bf16.xpose.msra.mxu0 %v6745
    %6767 = vmatprep.subr.bf16.mxu0 0
    %6768 = vmatpush1.bf16.xpose.msra.mxu0 %v6748
    %6769 = vmatprep.subr.bf16.mxu0 0
    %6770 = vmatpush1.bf16.xpose.msra.mxu0 %v6751
    %6771 = vmatprep.subr.bf16.mxu0 0
    %6772 = vmatpush1.bf16.xpose.msra.mxu0 %v6754
    %6773 = vmatprep.subr.bf16.mxu0 0
    %6774 = vmatpush1.bf16.xpose.msra.mxu0 %v6757
    %6775 = vmatprep.subr.bf16.mxu0 0
    %6776 = vmatpush1.bf16.xpose.msra.mxu0 0
    %6777 = vmatprep.subr.bf16.mxu0 0
    %6778 = vmatpush1.bf16.xpose.msra.mxu0 0
    %6779 = vmatprep.subr.bf16.mxu0 0
    %6780 = vmatpush1.bf16.xpose.msra.mxu0 0
    %6781 = vmatprep.subr.bf16.mxu0 0
    %6782 = vmatpush1.bf16.xpose.msra.mxu0 0
    %6783 = vmatprep.subr.bf16.mxu0 0
    %6784 = vmatpush1.bf16.xpose.msra.mxu0 0
    %6785 = vmatprep.subr.bf16.mxu0 0
    %6786 = vmatpush1.bf16.xpose.msra.mxu0 0
    %6787 = vmatprep.subr.bf16.mxu0 0
    %6788 = vmatpush1.bf16.xpose.msra.mxu0 0
    %6789 = vmatprep.subr.bf16.mxu0 0
    %6790 = vmatpush1.bf16.xpose.msra.mxu0 0
    %6791 = vmatprep.mubr.bf16.mxu0 0
    %6792 = vmatmul.mubr.bf16.gmra.mrb[0].mxu0 %v6712
    %v6793 = vpop.f32.mrb[0].mxu0
    %v6794 = vadd.f32 0.0, %v6793
    %v6795 = vpop.f32.mrb[0].mxu0
    %v6796 = vpop.f32.mrb[0].mxu0
    %v6797 = vadd.f32 0.0, %v6796
    %v6798 = vpop.f32.mrb[0].mxu0
    %6799 = vmatprep.mubr.bf16.mxu0 0
    %6800 = vmatmul.mubr.bf16.gmra.mrb[0].mxu0 %v6715
    %v6801 = vpop.f32.mrb[0].mxu0
    %v6802 = vadd.f32 0.0, %v6801
    %v6803 = vpop.f32.mrb[0].mxu0
    %v6804 = vpop.f32.mrb[0].mxu0
    %v6805 = vadd.f32 0.0, %v6804
    %v6806 = vpop.f32.mrb[0].mxu0
    %6807 = vmatprep.mubr.bf16.mxu0 0
    %6808 = vmatmul.mubr.bf16.gmra.mrb[0].mxu0 %v6718
    %v6809 = vpop.f32.mrb[0].mxu0
    %v6810 = vadd.f32 0.0, %v6809
    %v6811 = vpop.f32.mrb[0].mxu0
    %v6812 = vpop.f32.mrb[0].mxu0
    %v6813 = vadd.f32 0.0, %v6812
    %v6814 = vpop.f32.mrb[0].mxu0
    %6815 = vmatprep.mubr.bf16.mxu0 0
    %6816 = vmatmul.mubr.bf16.gmra.mrb[0].mxu0 %v6721
    %v6817 = vpop.f32.mrb[0].mxu0
    %v6818 = vadd.f32 0.0, %v6817
    %v6819 = vpop.f32.mrb[0].mxu0
    %v6820 = vpop.f32.mrb[0].mxu0
    %v6821 = vadd.f32 0.0, %v6820
    %v6822 = vpop.f32.mrb[0].mxu0
    %6823 = vmatprep.mubr.bf16.mxu0 0
    %6824 = vmatmul.mubr.bf16.gmra.mrb[0].mxu0 %v6724
    %v6825 = vpop.f32.mrb[0].mxu0
    %v6826 = vadd.f32 0.0, %v6825
    %v6827 = vpop.f32.mrb[0].mxu0
    %v6828 = vpop.f32.mrb[0].mxu0
    %v6829 = vadd.f32 0.0, %v6828
    %v6830 = vpop.f32.mrb[0].mxu0
    %6831 = vmatprep.mubr.bf16.mxu0 0
    %6832 = vmatmul.mubr.bf16.gmra.mrb[0].mxu0 %v6727
    %v6833 = vpop.f32.mrb[0].mxu0
    %v6834 = vadd.f32 0.0, %v6833
    %v6835 = vpop.f32.mrb[0].mxu0
    %v6836 = vpop.f32.mrb[0].mxu0
    %v6837 = vadd.f32 0.0, %v6836
    %v6838 = vpop.f32.mrb[0].mxu0
    %6839 = vmatprep.mubr.bf16.mxu0 0
    %6840 = vmatmul.mubr.bf16.gmra.mrb[0].mxu0 %v6730
    %v6841 = vpop.f32.mrb[0].mxu0
    %v6842 = vadd.f32 0.0, %v6841
    %v6843 = vpop.f32.mrb[0].mxu0
    %v6844 = vpop.f32.mrb[0].mxu0
    %v6845 = vadd.f32 0.0, %v6844
    %v6846 = vpop.f32.mrb[0].mxu0
    %6847 = vmatprep.mubr.bf16.mxu0 0
    %6848 = vmatmul.mubr.bf16.gmra.mrb[0].mxu0 %v6733
    %v6849 = vpop.f32.mrb[0].mxu0
    %v6850 = vadd.f32 0.0, %v6849
    %v6851 = vpop.f32.mrb[0].mxu0
    %v6852 = vpop.f32.mrb[0].mxu0
    %v6853 = vadd.f32 0.0, %v6852
    %v6854 = vpop.f32.mrb[0].mxu0
    %6855 = vdwg.mxu0
    %v6856 = vmul.f32 %v6794, 0.35355338
    %v6857 = vmul.f32 %v6797, 0.35355338
    %v6858 = vmul.f32 %v6802, 0.35355338
    %v6859 = vmul.f32 %v6805, 0.35355338
    %v6860 = vmul.f32 %v6810, 0.35355338
    %v6861 = vmul.f32 %v6813, 0.35355338
    %v6862 = vmul.f32 %v6818, 0.35355338
    %v6863 = vmul.f32 %v6821, 0.35355338
    %v6864 = vmul.f32 %v6826, 0.35355338
    %v6865 = vmul.f32 %v6829, 0.35355338
    %v6866 = vmul.f32 %v6834, 0.35355338
    %v6867 = vmul.f32 %v6837, 0.35355338
    %v6868 = vmul.f32 %v6842, 0.35355338
    %v6869 = vmul.f32 %v6845, 0.35355338
    %v6870 = vmul.f32 %v6850, 0.35355338
    %v6871 = vmul.f32 %v6853, 0.35355338
    %6872 = vmax.xlane.f32.xlu0 %v6856
    %v6873 = vpop.xlane.xlu0 %6872
    %6874 = vmax.xlane.f32.xlu0 %v6857
    %v6875 = vpop.xlane.xlu0 %6874
    %6876 = vmax.xlane.f32.xlu0 %v6858
    %v6877 = vpop.xlane.xlu0 %6876
    %6878 = vmax.xlane.f32.xlu0 %v6859
    %v6879 = vpop.xlane.xlu0 %6878
    %6880 = vmax.xlane.f32.xlu0 %v6860
    %v6881 = vpop.xlane.xlu0 %6880
    %6882 = vmax.xlane.f32.xlu0 %v6861
    %v6883 = vpop.xlane.xlu0 %6882
    %6884 = vmax.xlane.f32.xlu0 %v6862
    %v6885 = vpop.xlane.xlu0 %6884
    %6886 = vmax.xlane.f32.xlu0 %v6863
    %v6887 = vpop.xlane.xlu0 %6886
    %6888 = vmax.xlane.f32.xlu0 %v6864
    %v6889 = vpop.xlane.xlu0 %6888
    %6890 = vmax.xlane.f32.xlu0 %v6865
    %v6891 = vpop.xlane.xlu0 %6890
    %6892 = vmax.xlane.f32.xlu0 %v6866
    %v6893 = vpop.xlane.xlu0 %6892
    %6894 = vmax.xlane.f32.xlu0 %v6867
    %v6895 = vpop.xlane.xlu0 %6894
    %6896 = vmax.xlane.f32.xlu0 %v6868
    %v6897 = vpop.xlane.xlu0 %6896
    %6898 = vmax.xlane.f32.xlu0 %v6869
    %v6899 = vpop.xlane.xlu0 %6898
    %6900 = vmax.xlane.f32.xlu0 %v6870
    %v6901 = vpop.xlane.xlu0 %6900
    %6902 = vmax.xlane.f32.xlu0 %v6871
    %v6903 = vpop.xlane.xlu0 %6902
    %v6904 = vsub.f32 %v6856, %v6873
    %v6905 = vsub.f32 %v6857, %v6875
    %v6906 = vsub.f32 %v6858, %v6877
    %v6907 = vsub.f32 %v6859, %v6879
    %v6908 = vsub.f32 %v6860, %v6881
    %v6909 = vsub.f32 %v6861, %v6883
    %v6910 = vsub.f32 %v6862, %v6885
    %v6911 = vsub.f32 %v6863, %v6887
    %v6912 = vsub.f32 %v6864, %v6889
    %v6913 = vsub.f32 %v6865, %v6891
    %v6914 = vsub.f32 %v6866, %v6893
    %v6915 = vsub.f32 %v6867, %v6895
    %v6916 = vsub.f32 %v6868, %v6897
    %v6917 = vsub.f32 %v6869, %v6899
    %v6918 = vsub.f32 %v6870, %v6901
    %v6919 = vsub.f32 %v6871, %v6903
    %v6920 = vmul.f32 %v6904, 1.442695
    %v6921 = vpow.pop %v6920
    %v6922 = vmul.f32 %v6905, 1.442695
    %v6923 = vpow.pop %v6922
    %v6924 = vmul.f32 %v6906, 1.442695
    %v6925 = vpow.pop %v6924
    %v6926 = vmul.f32 %v6907, 1.442695
    %v6927 = vpow.pop %v6926
    %v6928 = vmul.f32 %v6908, 1.442695
    %v6929 = vpow.pop %v6928
    %v6930 = vmul.f32 %v6909, 1.442695
    %v6931 = vpow.pop %v6930
    %v6932 = vmul.f32 %v6910, 1.442695
    %v6933 = vpow.pop %v6932
    %v6934 = vmul.f32 %v6911, 1.442695
    %v6935 = vpow.pop %v6934
    %v6936 = vmul.f32 %v6912, 1.442695
    %v6937 = vpow.pop %v6936
    %v6938 = vmul.f32 %v6913, 1.442695
    %v6939 = vpow.pop %v6938
    %v6940 = vmul.f32 %v6914, 1.442695
    %v6941 = vpow.pop %v6940
    %v6942 = vmul.f32 %v6915, 1.442695
    %v6943 = vpow.pop %v6942
    %v6944 = vmul.f32 %v6916, 1.442695
    %v6945 = vpow.pop %v6944
    %v6946 = vmul.f32 %v6917, 1.442695
    %v6947 = vpow.pop %v6946
    %v6948 = vmul.f32 %v6918, 1.442695
    %v6949 = vpow.pop %v6948
    %v6950 = vmul.f32 %v6919, 1.442695
    %v6951 = vpow.pop %v6950
    %6952 = vadd.xlane.f32.xlu0 %v6921
    %v6953 = vpop.xlane.xlu0 %6952
    %6954 = vadd.xlane.f32.xlu0 %v6923
    %v6955 = vpop.xlane.xlu0 %6954
    %6956 = vadd.xlane.f32.xlu0 %v6925
    %v6957 = vpop.xlane.xlu0 %6956
    %6958 = vadd.xlane.f32.xlu0 %v6927
    %v6959 = vpop.xlane.xlu0 %6958
    %6960 = vadd.xlane.f32.xlu0 %v6929
    %v6961 = vpop.xlane.xlu0 %6960
    %6962 = vadd.xlane.f32.xlu0 %v6931
    %v6963 = vpop.xlane.xlu0 %6962
    %6964 = vadd.xlane.f32.xlu0 %v6933
    %v6965 = vpop.xlane.xlu0 %6964
    %6966 = vadd.xlane.f32.xlu0 %v6935
    %v6967 = vpop.xlane.xlu0 %6966
    %6968 = vadd.xlane.f32.xlu0 %v6937
    %v6969 = vpop.xlane.xlu0 %6968
    %6970 = vadd.xlane.f32.xlu0 %v6939
    %v6971 = vpop.xlane.xlu0 %6970
    %6972 = vadd.xlane.f32.xlu0 %v6941
    %v6973 = vpop.xlane.xlu0 %6972
    %6974 = vadd.xlane.f32.xlu0 %v6943
    %v6975 = vpop.xlane.xlu0 %6974
    %6976 = vadd.xlane.f32.xlu0 %v6945
    %v6977 = vpop.xlane.xlu0 %6976
    %6978 = vadd.xlane.f32.xlu0 %v6947
    %v6979 = vpop.xlane.xlu0 %6978
    %6980 = vadd.xlane.f32.xlu0 %v6949
    %v6981 = vpop.xlane.xlu0 %6980
    %6982 = vadd.xlane.f32.xlu0 %v6951
    %v6983 = vpop.xlane.xlu0 %6982
    %v6984 = vrcp.pop %v6953
    %v6985 = vrcp.pop %v6955
    %v6986 = vrcp.pop %v6957
    %v6987 = vrcp.pop %v6959
    %v6988 = vrcp.pop %v6961
    %v6989 = vrcp.pop %v6963
    %v6990 = vrcp.pop %v6965
    %v6991 = vrcp.pop %v6967
    %v6992 = vrcp.pop %v6969
    %v6993 = vrcp.pop %v6971
    %v6994 = vrcp.pop %v6973
    %v6995 = vrcp.pop %v6975
    %v6996 = vrcp.pop %v6977
    %v6997 = vrcp.pop %v6979
    %v6998 = vrcp.pop %v6981
    %v6999 = vrcp.pop %v6983
    %v7000 = vmul.f32 %v6921, %v6984
    %v7001 = vmul.f32 %v6923, %v6985
    %v7002 = vmul.f32 %v6925, %v6986
    %v7003 = vmul.f32 %v6927, %v6987
    %v7004 = vmul.f32 %v6929, %v6988
    %v7005 = vmul.f32 %v6931, %v6989
    %v7006 = vmul.f32 %v6933, %v6990
    %v7007 = vmul.f32 %v6935, %v6991
    %v7008 = vmul.f32 %v6937, %v6992
    %v7009 = vmul.f32 %v6939, %v6993
    %v7010 = vmul.f32 %v6941, %v6994
    %v7011 = vmul.f32 %v6943, %v6995
    %v7012 = vmul.f32 %v6945, %v6996
    %v7013 = vmul.f32 %v6947, %v6997
    %v7014 = vmul.f32 %v6949, %v6998
    %v7015 = vmul.f32 %v6951, %v6999
    %v7016 = vpack.c.bf16 %v7001, %v7000
    %v7017 = vpack.c.bf16 %v7003, %v7002
    %v7018 = vpack.c.bf16 %v7005, %v7004
    %v7019 = vpack.c.bf16 %v7007, %v7006
    %v7020 = vpack.c.bf16 %v7009, %v7008
    %v7021 = vpack.c.bf16 %v7011, %v7010
    %v7022 = vpack.c.bf16 %v7013, %v7012
    %v7023 = vpack.c.bf16 %v7015, %v7014
    %7024 = vrot.lane.b32.xlu0 %v5205, 104
    %v7025 = vpop.permute.xlu0 %7024
    %7026 = vrot.lane.b32.xlu0 %v5206, 104
    %v7027 = vpop.permute.xlu0 %7026
    %7028 = vrot.lane.b32.xlu0 %v5207, 104
    %v7029 = vpop.permute.xlu0 %7028
    %7030 = vrot.lane.b32.xlu0 %v5208, 104
    %v7031 = vpop.permute.xlu0 %7030
    %7032 = vrot.lane.b32.xlu0 %v5209, 104
    %v7033 = vpop.permute.xlu0 %7032
    %7034 = vrot.lane.b32.xlu0 %v5210, 104
    %v7035 = vpop.permute.xlu0 %7034
    %7036 = vrot.lane.b32.xlu0 %v5211, 104
    %v7037 = vpop.permute.xlu0 %7036
    %7038 = vrot.lane.b32.xlu0 %v5212, 104
    %v7039 = vpop.permute.xlu0 %7038
    %7048 = vmatprep.subr.bf16.mxu0 0
    %7049 = vmatpush1.bf16.msra.mxu0 %v7025
    %7050 = vmatprep.subr.bf16.mxu0 0
    %7051 = vmatpush1.bf16.msra.mxu0 %v7027
    %7052 = vmatprep.subr.bf16.mxu0 0
    %7053 = vmatpush1.bf16.msra.mxu0 %v7029
    %7054 = vmatprep.subr.bf16.mxu0 0
    %7055 = vmatpush1.bf16.msra.mxu0 %v7031
    %7056 = vmatprep.subr.bf16.mxu0 0
    %7057 = vmatpush1.bf16.msra.mxu0 %v7033
    %7058 = vmatprep.subr.bf16.mxu0 0
    %7059 = vmatpush1.bf16.msra.mxu0 %v7035
    %7060 = vmatprep.subr.bf16.mxu0 0
    %7061 = vmatpush1.bf16.msra.mxu0 %v7037
    %7062 = vmatprep.subr.bf16.mxu0 0
    %7063 = vmatpush1.bf16.msra.mxu0 %v7039
    %7064 = vmatprep.subr.bf16.mxu0 0
    %7065 = vmatpush1.bf16.msra.mxu0 0
    %7066 = vmatprep.subr.bf16.mxu0 0
    %7067 = vmatpush1.bf16.msra.mxu0 0
    %7068 = vmatprep.subr.bf16.mxu0 0
    %7069 = vmatpush1.bf16.msra.mxu0 0
    %7070 = vmatprep.subr.bf16.mxu0 0
    %7071 = vmatpush1.bf16.msra.mxu0 0
    %7072 = vmatprep.subr.bf16.mxu0 0
    %7073 = vmatpush1.bf16.msra.mxu0 0
    %7074 = vmatprep.subr.bf16.mxu0 0
    %7075 = vmatpush1.bf16.msra.mxu0 0
    %7076 = vmatprep.subr.bf16.mxu0 0
    %7077 = vmatpush1.bf16.msra.mxu0 0
    %7078 = vmatprep.subr.bf16.mxu0 0
    %7079 = vmatpush1.bf16.msra.mxu0 0
    %7080 = vmatprep.mubr.bf16.mxu0 0
    %7081 = vmatmul.mubr.bf16.gmra.mrb[0].mxu0 %v7016
    %v7082 = vpop.f32.mrb[0].mxu0
    %v7083 = vadd.f32 0.0, %v7082
    %v7084 = vpop.f32.mrb[0].mxu0
    %v7085 = vpop.f32.mrb[0].mxu0
    %v7086 = vadd.f32 0.0, %v7085
    %v7087 = vpop.f32.mrb[0].mxu0
    %7088 = vmatprep.mubr.bf16.mxu0 0
    %7089 = vmatmul.mubr.bf16.gmra.mrb[0].mxu0 %v7017
    %v7090 = vpop.f32.mrb[0].mxu0
    %v7091 = vadd.f32 0.0, %v7090
    %v7092 = vpop.f32.mrb[0].mxu0
    %v7093 = vpop.f32.mrb[0].mxu0
    %v7094 = vadd.f32 0.0, %v7093
    %v7095 = vpop.f32.mrb[0].mxu0
    %7096 = vmatprep.mubr.bf16.mxu0 0
    %7097 = vmatmul.mubr.bf16.gmra.mrb[0].mxu0 %v7018
    %v7098 = vpop.f32.mrb[0].mxu0
    %v7099 = vadd.f32 0.0, %v7098
    %v7100 = vpop.f32.mrb[0].mxu0
    %v7101 = vpop.f32.mrb[0].mxu0
    %v7102 = vadd.f32 0.0, %v7101
    %v7103 = vpop.f32.mrb[0].mxu0
    %7104 = vmatprep.mubr.bf16.mxu0 0
    %7105 = vmatmul.mubr.bf16.gmra.mrb[0].mxu0 %v7019
    %v7106 = vpop.f32.mrb[0].mxu0
    %v7107 = vadd.f32 0.0, %v7106
    %v7108 = vpop.f32.mrb[0].mxu0
    %v7109 = vpop.f32.mrb[0].mxu0
    %v7110 = vadd.f32 0.0, %v7109
    %v7111 = vpop.f32.mrb[0].mxu0
    %7112 = vmatprep.mubr.bf16.mxu0 0
    %7113 = vmatmul.mubr.bf16.gmra.mrb[0].mxu0 %v7020
    %v7114 = vpop.f32.mrb[0].mxu0
    %v7115 = vadd.f32 0.0, %v7114
    %v7116 = vpop.f32.mrb[0].mxu0
    %v7117 = vpop.f32.mrb[0].mxu0
    %v7118 = vadd.f32 0.0, %v7117
    %v7119 = vpop.f32.mrb[0].mxu0
    %7120 = vmatprep.mubr.bf16.mxu0 0
    %7121 = vmatmul.mubr.bf16.gmra.mrb[0].mxu0 %v7021
    %v7122 = vpop.f32.mrb[0].mxu0
    %v7123 = vadd.f32 0.0, %v7122
    %v7124 = vpop.f32.mrb[0].mxu0
    %v7125 = vpop.f32.mrb[0].mxu0
    %v7126 = vadd.f32 0.0, %v7125
    %v7127 = vpop.f32.mrb[0].mxu0
    %7128 = vmatprep.mubr.bf16.mxu0 0
    %7129 = vmatmul.mubr.bf16.gmra.mrb[0].mxu0 %v7022
    %v7130 = vpop.f32.mrb[0].mxu0
    %v7131 = vadd.f32 0.0, %v7130
    %v7132 = vpop.f32.mrb[0].mxu0
    %v7133 = vpop.f32.mrb[0].mxu0
    %v7134 = vadd.f32 0.0, %v7133
    %v7135 = vpop.f32.mrb[0].mxu0
    %7136 = vmatprep.mubr.bf16.mxu0 0
    %7137 = vmatmul.mubr.bf16.gmra.mrb[0].mxu0 %v7023
    %v7138 = vpop.f32.mrb[0].mxu0
    %v7139 = vadd.f32 0.0, %v7138
    %v7140 = vpop.f32.mrb[0].mxu0
    %v7141 = vpop.f32.mrb[0].mxu0
    %v7142 = vadd.f32 0.0, %v7141
    %v7143 = vpop.f32.mrb[0].mxu0
    %7144 = vdwg.mxu0
    %v7145 = vpack.c.bf16 %v7086, %v7083
    %v7146 = vpack.c.bf16 %v7094, %v7091
    %v7147 = vpack.c.bf16 %v7102, %v7099
    %v7148 = vpack.c.bf16 %v7110, %v7107
    %v7149 = vpack.c.bf16 %v7118, %v7115
    %v7150 = vpack.c.bf16 %v7126, %v7123
    %v7151 = vpack.c.bf16 %v7134, %v7131
    %v7152 = vpack.c.bf16 %v7142, %v7139
    %v7154 = vsel %vm4891, %v7145, 0
    %v7157 = vsel %vm4891, %v7146, 0
    %v7160 = vsel %vm4891, %v7147, 0
    %v7163 = vsel %vm4891, %v7148, 0
    %v7166 = vsel %vm4891, %v7149, 0
    %v7169 = vsel %vm4891, %v7150, 0
    %v7172 = vsel %vm4891, %v7151, 0
    %v7175 = vsel %vm4891, %v7152, 0
    %v7178 = vsel %vm5840, %v4514, 0
    %7180 = vmatprep.subr.bf16.mxu0 0
    %7181 = vmatpush1.bf16.msra.mxu0 %v7178
    %7182 = vmatprep.subr.bf16.mxu0 0
    %7183 = vmatpush1.bf16.msra.mxu0 0
    %7184 = vmatprep.subr.bf16.mxu0 0
    %7185 = vmatpush1.bf16.msra.mxu0 0
    %7186 = vmatprep.subr.bf16.mxu0 0
    %7187 = vmatpush1.bf16.msra.mxu0 0
    %7188 = vmatprep.subr.bf16.mxu0 0
    %7189 = vmatpush1.bf16.msra.mxu0 0
    %7190 = vmatprep.subr.bf16.mxu0 0
    %7191 = vmatpush1.bf16.msra.mxu0 0
    %7192 = vmatprep.subr.bf16.mxu0 0
    %7193 = vmatpush1.bf16.msra.mxu0 0
    %7194 = vmatprep.subr.bf16.mxu0 0
    %7195 = vmatpush1.bf16.msra.mxu0 0
    %7196 = vmatprep.subr.bf16.mxu0 0
    %7197 = vmatpush1.bf16.msra.mxu0 0
    %7198 = vmatprep.subr.bf16.mxu0 0
    %7199 = vmatpush1.bf16.msra.mxu0 0
    %7200 = vmatprep.subr.bf16.mxu0 0
    %7201 = vmatpush1.bf16.msra.mxu0 0
    %7202 = vmatprep.subr.bf16.mxu0 0
    %7203 = vmatpush1.bf16.msra.mxu0 0
    %7204 = vmatprep.subr.bf16.mxu0 0
    %7205 = vmatpush1.bf16.msra.mxu0 0
    %7206 = vmatprep.subr.bf16.mxu0 0
    %7207 = vmatpush1.bf16.msra.mxu0 0
    %7208 = vmatprep.subr.bf16.mxu0 0
    %7209 = vmatpush1.bf16.msra.mxu0 0
    %7210 = vmatprep.subr.bf16.mxu0 0
    %7211 = vmatpush1.bf16.msra.mxu0 0
    %7212 = vmatprep.mubr.bf16.mxu0 0
    %7213 = vmatmul.mubr.bf16.gmra.mrb[0].mxu0 %v7154
    %v7214 = vpop.f32.mrb[0].mxu0
    %v7215 = vadd.f32 0.0, %v7214
    %v7216 = vpop.f32.mrb[0].mxu0
    %v7217 = vpop.f32.mrb[0].mxu0
    %v7218 = vadd.f32 0.0, %v7217
    %v7219 = vpop.f32.mrb[0].mxu0
    %7220 = vmatprep.mubr.bf16.mxu0 0
    %7221 = vmatmul.mubr.bf16.gmra.mrb[0].mxu0 %v7157
    %v7222 = vpop.f32.mrb[0].mxu0
    %v7223 = vadd.f32 0.0, %v7222
    %v7224 = vpop.f32.mrb[0].mxu0
    %v7225 = vpop.f32.mrb[0].mxu0
    %v7226 = vadd.f32 0.0, %v7225
    %v7227 = vpop.f32.mrb[0].mxu0
    %7228 = vmatprep.mubr.bf16.mxu0 0
    %7229 = vmatmul.mubr.bf16.gmra.mrb[0].mxu0 %v7160
    %v7230 = vpop.f32.mrb[0].mxu0
    %v7231 = vadd.f32 0.0, %v7230
    %v7232 = vpop.f32.mrb[0].mxu0
    %v7233 = vpop.f32.mrb[0].mxu0
    %v7234 = vadd.f32 0.0, %v7233
    %v7235 = vpop.f32.mrb[0].mxu0
    %7236 = vmatprep.mubr.bf16.mxu0 0
    %7237 = vmatmul.mubr.bf16.gmra.mrb[0].mxu0 %v7163
    %v7238 = vpop.f32.mrb[0].mxu0
    %v7239 = vadd.f32 0.0, %v7238
    %v7240 = vpop.f32.mrb[0].mxu0
    %v7241 = vpop.f32.mrb[0].mxu0
    %v7242 = vadd.f32 0.0, %v7241
    %v7243 = vpop.f32.mrb[0].mxu0
    %7244 = vmatprep.mubr.bf16.mxu0 0
    %7245 = vmatmul.mubr.bf16.gmra.mrb[0].mxu0 %v7166
    %v7246 = vpop.f32.mrb[0].mxu0
    %v7247 = vadd.f32 0.0, %v7246
    %v7248 = vpop.f32.mrb[0].mxu0
    %v7249 = vpop.f32.mrb[0].mxu0
    %v7250 = vadd.f32 0.0, %v7249
    %v7251 = vpop.f32.mrb[0].mxu0
    %7252 = vmatprep.mubr.bf16.mxu0 0
    %7253 = vmatmul.mubr.bf16.gmra.mrb[0].mxu0 %v7169
    %v7254 = vpop.f32.mrb[0].mxu0
    %v7255 = vadd.f32 0.0, %v7254
    %v7256 = vpop.f32.mrb[0].mxu0
    %v7257 = vpop.f32.mrb[0].mxu0
    %v7258 = vadd.f32 0.0, %v7257
    %v7259 = vpop.f32.mrb[0].mxu0
    %7260 = vmatprep.mubr.bf16.mxu0 0
    %7261 = vmatmul.mubr.bf16.gmra.mrb[0].mxu0 %v7172
    %v7262 = vpop.f32.mrb[0].mxu0
    %v7263 = vadd.f32 0.0, %v7262
    %v7264 = vpop.f32.mrb[0].mxu0
    %v7265 = vpop.f32.mrb[0].mxu0
    %v7266 = vadd.f32 0.0, %v7265
    %v7267 = vpop.f32.mrb[0].mxu0
    %7268 = vmatprep.mubr.bf16.mxu0 0
    %7269 = vmatmul.mubr.bf16.gmra.mrb[0].mxu0 %v7175
    %v7270 = vpop.f32.mrb[0].mxu0
    %v7271 = vadd.f32 0.0, %v7270
    %v7272 = vpop.f32.mrb[0].mxu0
    %v7273 = vpop.f32.mrb[0].mxu0
    %v7274 = vadd.f32 0.0, %v7273
    %v7275 = vpop.f32.mrb[0].mxu0
    %7276 = vdwg.mxu0
    %v7277 = vadd.f32 %v6663, %v7215
    %v7278 = vadd.f32 %v6664, %v7218
    %v7279 = vadd.f32 %v6665, %v7223
    %v7280 = vadd.f32 %v6666, %v7226
    %v7281 = vadd.f32 %v6667, %v7231
    %v7282 = vadd.f32 %v6668, %v7234
    %v7283 = vadd.f32 %v6669, %v7239
    %v7284 = vadd.f32 %v6670, %v7242
    %v7285 = vadd.f32 %v6671, %v7247
    %v7286 = vadd.f32 %v6672, %v7250
    %v7287 = vadd.f32 %v6673, %v7255
    %v7288 = vadd.f32 %v6674, %v7258
    %v7289 = vadd.f32 %v6675, %v7263
    %v7290 = vadd.f32 %v6676, %v7266
    %v7291 = vadd.f32 %v6677, %v7271
    %v7292 = vadd.f32 %v6678, %v7274
    %v7294 = vlaneseq
    %v7295 = vshrl.u32 %v7294, 7
    %v7296 = vsub.s32 0, %v7295
    %v7297 = vrot.slane %v4515, %v7296
    %v7299 = vadd.f32 %v7277, %v7297
    %v7300 = vadd.f32 %v7278, %v7297
    %v7301 = vadd.f32 %v7279, %v7297
    %v7302 = vadd.f32 %v7280, %v7297
    %v7303 = vadd.f32 %v7281, %v7297
    %v7304 = vadd.f32 %v7282, %v7297
    %v7305 = vadd.f32 %v7283, %v7297
    %v7306 = vadd.f32 %v7284, %v7297
    %v7307 = vadd.f32 %v7285, %v7297
    %v7308 = vadd.f32 %v7286, %v7297
    %v7309 = vadd.f32 %v7287, %v7297
    %v7310 = vadd.f32 %v7288, %v7297
    %v7311 = vadd.f32 %v7289, %v7297
    %v7312 = vadd.f32 %v7290, %v7297
    %v7313 = vadd.f32 %v7291, %v7297
    %v7314 = vadd.f32 %v7292, %v7297
    %v7315 = vadd.f32 %v7299, %v4437
    %v7316 = vadd.f32 %v7300, %v4440
    %v7317 = vadd.f32 %v7301, %v4445
    %v7318 = vadd.f32 %v7302, %v4448
    %v7319 = vadd.f32 %v7303, %v4453
    %v7320 = vadd.f32 %v7304, %v4456
    %v7321 = vadd.f32 %v7305, %v4461
    %v7322 = vadd.f32 %v7306, %v4464
    %v7323 = vadd.f32 %v7307, %v4469
    %v7324 = vadd.f32 %v7308, %v4472
    %v7325 = vadd.f32 %v7309, %v4477
    %v7326 = vadd.f32 %v7310, %v4480
    %v7327 = vadd.f32 %v7311, %v4485
    %v7328 = vadd.f32 %v7312, %v4488
    %v7329 = vadd.f32 %v7313, %v4493
    %v7330 = vadd.f32 %v7314, %v4496
    %7331 = vst.msk [vmem:[%s61] sm:$0xff] %vm988, %v7315
    %7332 = vst.msk [vmem:[%s61 + $0x8] sm:$0xff] %vm988, %v7316
    %7333 = vst.msk [vmem:[%s61 + $0x10] sm:$0xff] %vm988, %v7317
    %7334 = vst.msk [vmem:[%s61 + $0x18] sm:$0xff] %vm988, %v7318
    %7335 = vst.msk [vmem:[%s61 + $0x20] sm:$0xff] %vm988, %v7319
    %7336 = vst.msk [vmem:[%s61 + $0x28] sm:$0xff] %vm988, %v7320
    %7337 = vst.msk [vmem:[%s61 + $0x30] sm:$0xff] %vm988, %v7321
    %7338 = vst.msk [vmem:[%s61 + $0x38] sm:$0xff] %vm988, %v7322
    %7339 = vst.msk [vmem:[%s61 + $0x40] sm:$0xff] %vm988, %v7323
    %7340 = vst.msk [vmem:[%s61 + $0x48] sm:$0xff] %vm988, %v7324
    %7341 = vst.msk [vmem:[%s61 + $0x50] sm:$0xff] %vm988, %v7325
    %7342 = vst.msk [vmem:[%s61 + $0x58] sm:$0xff] %vm988, %v7326
    %7343 = vst.msk [vmem:[%s61 + $0x60] sm:$0xff] %vm988, %v7327
    %7344 = vst.msk [vmem:[%s61 + $0x68] sm:$0xff] %vm988, %v7328
    %7345 = vst.msk [vmem:[%s61 + $0x70] sm:$0xff] %vm988, %v7329
    %7346 = vst.msk [vmem:[%s61 + $0x78] sm:$0xff] %vm988, %v7330
    %v7347 = vld [vmem:[%s49] sm:$0xf]
    %v7348 = vld [vmem:[%s49 + $0x4] sm:$0xf]
    %v7349 = vld [vmem:[%s49 + $0x8] sm:$0xf]
    %v7350 = vld [vmem:[%s49 + $0xc] sm:$0xf]
    %v7351 = vpack.c.bf16 %v7316, %v7315
    %v7352 = vpack.c.bf16 %v7318, %v7317
    %v7353 = vpack.c.bf16 %v7320, %v7319
    %v7354 = vpack.c.bf16 %v7322, %v7321
    %v7355 = vpack.c.bf16 %v7324, %v7323
    %v7356 = vpack.c.bf16 %v7326, %v7325
    %v7357 = vpack.c.bf16 %v7328, %v7327
    %v7358 = vpack.c.bf16 %v7330, %v7329
    %v7359 = vld [vmem:[%s51] sm:$0x1]
    %v7361 = vlaneseq
    %v7362 = vshrl.u32 %v7361, 7
    %v7363 = vsub.s32 0, %v7362
    %v7364 = vrot.slane %v7359, %v7363
    %v7370 = vunpack.c.l.b16 %v7347
    %v7371 = vunpack.c.l.b16 %v7348
    %v7372 = vunpack.c.l.b16 %v7349
    %v7373 = vunpack.c.l.b16 %v7350
    %v7374 = vpack.c.b16 %v7371, %v7370
    %v7375 = vpack.c.b16 %v7373, %v7372
    %v7379 = vsel %vm988, %v7351, 0
    %v7382 = vsel %vm988, %v7352, 0
    %v7385 = vsel %vm988, %v7353, 0
    %v7388 = vsel %vm988, %v7354, 0
    %v7391 = vsel %vm988, %v7355, 0
    %v7394 = vsel %vm988, %v7356, 0
    %v7397 = vsel %vm988, %v7357, 0
    %v7400 = vsel %vm988, %v7358, 0
    %7402 = vmatprep.subr.bf16.mxu0 0
    %7403 = vmatpush1.bf16.msra.mxu0 %v7374
    %7404 = vmatprep.subr.bf16.mxu0 0
    %7405 = vmatpush1.bf16.msra.mxu0 %v7375
    %7406 = vmatprep.subr.bf16.mxu0 0
    %7407 = vmatpush1.bf16.msra.mxu0 0
    %7408 = vmatprep.subr.bf16.mxu0 0
    %7409 = vmatpush1.bf16.msra.mxu0 0
    %7410 = vmatprep.subr.bf16.mxu0 0
    %7411 = vmatpush1.bf16.msra.mxu0 0
    %7412 = vmatprep.subr.bf16.mxu0 0
    %7413 = vmatpush1.bf16.msra.mxu0 0
    %7414 = vmatprep.subr.bf16.mxu0 0
    %7415 = vmatpush1.bf16.msra.mxu0 0
    %7416 = vmatprep.subr.bf16.mxu0 0
    %7417 = vmatpush1.bf16.msra.mxu0 0
    %7418 = vmatprep.subr.bf16.mxu0 0
    %7419 = vmatpush1.bf16.msra.mxu0 0
    %7420 = vmatprep.subr.bf16.mxu0 0
    %7421 = vmatpush1.bf16.msra.mxu0 0
    %7422 = vmatprep.subr.bf16.mxu0 0
    %7423 = vmatpush1.bf16.msra.mxu0 0
    %7424 = vmatprep.subr.bf16.mxu0 0
    %7425 = vmatpush1.bf16.msra.mxu0 0
    %7426 = vmatprep.subr.bf16.mxu0 0
    %7427 = vmatpush1.bf16.msra.mxu0 0
    %7428 = vmatprep.subr.bf16.mxu0 0
    %7429 = vmatpush1.bf16.msra.mxu0 0
    %7430 = vmatprep.subr.bf16.mxu0 0
    %7431 = vmatpush1.bf16.msra.mxu0 0
    %7432 = vmatprep.subr.bf16.mxu0 0
    %7433 = vmatpush1.bf16.msra.mxu0 0
    %7434 = vmatprep.mubr.bf16.mxu0 0
    %7435 = vmatmul.mubr.bf16.gmra.mrb[0].mxu0 %v7379
    %v7436 = vpop.f32.mrb[0].mxu0
    %v7437 = vadd.f32 %v7364, %v7436
    %v7438 = vpop.f32.mrb[0].mxu0
    %v7439 = vpop.f32.mrb[0].mxu0
    %v7440 = vadd.f32 %v7364, %v7439
    %v7441 = vpop.f32.mrb[0].mxu0
    %7442 = vmatprep.mubr.bf16.mxu0 0
    %7443 = vmatmul.mubr.bf16.gmra.mrb[0].mxu0 %v7382
    %v7444 = vpop.f32.mrb[0].mxu0
    %v7445 = vadd.f32 %v7364, %v7444
    %v7446 = vpop.f32.mrb[0].mxu0
    %v7447 = vpop.f32.mrb[0].mxu0
    %v7448 = vadd.f32 %v7364, %v7447
    %v7449 = vpop.f32.mrb[0].mxu0
    %7450 = vmatprep.mubr.bf16.mxu0 0
    %7451 = vmatmul.mubr.bf16.gmra.mrb[0].mxu0 %v7385
    %v7452 = vpop.f32.mrb[0].mxu0
    %v7453 = vadd.f32 %v7364, %v7452
    %v7454 = vpop.f32.mrb[0].mxu0
    %v7455 = vpop.f32.mrb[0].mxu0
    %v7456 = vadd.f32 %v7364, %v7455
    %v7457 = vpop.f32.mrb[0].mxu0
    %7458 = vmatprep.mubr.bf16.mxu0 0
    %7459 = vmatmul.mubr.bf16.gmra.mrb[0].mxu0 %v7388
    %v7460 = vpop.f32.mrb[0].mxu0
    %v7461 = vadd.f32 %v7364, %v7460
    %v7462 = vpop.f32.mrb[0].mxu0
    %v7463 = vpop.f32.mrb[0].mxu0
    %v7464 = vadd.f32 %v7364, %v7463
    %v7465 = vpop.f32.mrb[0].mxu0
    %7466 = vmatprep.mubr.bf16.mxu0 0
    %7467 = vmatmul.mubr.bf16.gmra.mrb[0].mxu0 %v7391
    %v7468 = vpop.f32.mrb[0].mxu0
    %v7469 = vadd.f32 %v7364, %v7468
    %v7470 = vpop.f32.mrb[0].mxu0
    %v7471 = vpop.f32.mrb[0].mxu0
    %v7472 = vadd.f32 %v7364, %v7471
    %v7473 = vpop.f32.mrb[0].mxu0
    %7474 = vmatprep.mubr.bf16.mxu0 0
    %7475 = vmatmul.mubr.bf16.gmra.mrb[0].mxu0 %v7394
    %v7476 = vpop.f32.mrb[0].mxu0
    %v7477 = vadd.f32 %v7364, %v7476
    %v7478 = vpop.f32.mrb[0].mxu0
    %v7479 = vpop.f32.mrb[0].mxu0
    %v7480 = vadd.f32 %v7364, %v7479
    %v7481 = vpop.f32.mrb[0].mxu0
    %7482 = vmatprep.mubr.bf16.mxu0 0
    %7483 = vmatmul.mubr.bf16.gmra.mrb[0].mxu0 %v7397
    %v7484 = vpop.f32.mrb[0].mxu0
    %v7485 = vadd.f32 %v7364, %v7484
    %v7486 = vpop.f32.mrb[0].mxu0
    %v7487 = vpop.f32.mrb[0].mxu0
    %v7488 = vadd.f32 %v7364, %v7487
    %v7489 = vpop.f32.mrb[0].mxu0
    %7490 = vmatprep.mubr.bf16.mxu0 0
    %7491 = vmatmul.mubr.bf16.gmra.mrb[0].mxu0 %v7400
    %v7492 = vpop.f32.mrb[0].mxu0
    %v7493 = vadd.f32 %v7364, %v7492
    %v7494 = vpop.f32.mrb[0].mxu0
    %v7495 = vpop.f32.mrb[0].mxu0
    %v7496 = vadd.f32 %v7364, %v7495
    %v7497 = vpop.f32.mrb[0].mxu0
    %7498 = vdwg.mxu0
    %v7499 = vmax.f32 %v7437, 0.0
    %v7500 = vmax.f32 %v7440, 0.0
    %v7501 = vmax.f32 %v7445, 0.0
    %v7502 = vmax.f32 %v7448, 0.0
    %v7503 = vmax.f32 %v7453, 0.0
    %v7504 = vmax.f32 %v7456, 0.0
    %v7505 = vmax.f32 %v7461, 0.0
    %v7506 = vmax.f32 %v7464, 0.0
    %v7507 = vmax.f32 %v7469, 0.0
    %v7508 = vmax.f32 %v7472, 0.0
    %v7509 = vmax.f32 %v7477, 0.0
    %v7510 = vmax.f32 %v7480, 0.0
    %v7511 = vmax.f32 %v7485, 0.0
    %v7512 = vmax.f32 %v7488, 0.0
    %v7513 = vmax.f32 %v7493, 0.0
    %v7514 = vmax.f32 %v7496, 0.0
    %v7515 = vld [vmem:[%s53] sm:$0xf]
    %v7516 = vld [vmem:[%s53 + $0x4] sm:$0xf]
    %v7517 = vld [vmem:[%s53 + $0x8] sm:$0xf]
    %v7518 = vld [vmem:[%s53 + $0xc] sm:$0xf]
    %v7519 = vld [vmem:[%s53 + $0x10] sm:$0xf]
    %v7520 = vld [vmem:[%s53 + $0x14] sm:$0xf]
    %v7521 = vld [vmem:[%s53 + $0x18] sm:$0xf]
    %v7522 = vld [vmem:[%s53 + $0x1c] sm:$0xf]
    %v7523 = vpack.c.bf16 %v7500, %v7499
    %v7524 = vpack.c.bf16 %v7502, %v7501
    %v7525 = vpack.c.bf16 %v7504, %v7503
    %v7526 = vpack.c.bf16 %v7506, %v7505
    %v7527 = vpack.c.bf16 %v7508, %v7507
    %v7528 = vpack.c.bf16 %v7510, %v7509
    %v7529 = vpack.c.bf16 %v7512, %v7511
    %v7530 = vpack.c.bf16 %v7514, %v7513
    %v7531 = vld [vmem:[%s55] sm:$0x1]
    %v7533 = vlaneseq
    %v7534 = vshrl.u32 %v7533, 7
    %v7535 = vsub.s32 0, %v7534
    %v7536 = vrot.slane %v7531, %v7535
    %v7546 = vunpack.c.l.b16 %v7515
    %v7547 = vunpack.c.l.b16 %v7516
    %v7548 = vunpack.c.l.b16 %v7517
    %v7549 = vunpack.c.l.b16 %v7518
    %v7550 = vunpack.c.l.b16 %v7519
    %v7551 = vunpack.c.l.b16 %v7520
    %v7552 = vunpack.c.l.b16 %v7521
    %v7553 = vunpack.c.l.b16 %v7522
    %v7554 = vpack.c.b16 %v7547, %v7546
    %v7555 = vpack.c.b16 %v7549, %v7548
    %v7556 = vpack.c.b16 %v7551, %v7550
    %v7557 = vpack.c.b16 %v7553, %v7552
    %v7563 = vsel %vm224, %v7523, 0
    %v7566 = vsel %vm224, %v7524, 0
    %v7569 = vsel %vm224, %v7525, 0
    %v7572 = vsel %vm224, %v7526, 0
    %v7575 = vsel %vm224, %v7527, 0
    %v7578 = vsel %vm224, %v7528, 0
    %v7581 = vsel %vm224, %v7529, 0
    %v7584 = vsel %vm224, %v7530, 0
    %7586 = vmatprep.subr.bf16.mxu0 0
    %7587 = vmatpush1.bf16.msra.mxu0 %v7554
    %7588 = vmatprep.subr.bf16.mxu0 0
    %7589 = vmatpush1.bf16.msra.mxu0 %v7555
    %7590 = vmatprep.subr.bf16.mxu0 0
    %7591 = vmatpush1.bf16.msra.mxu0 %v7556
    %7592 = vmatprep.subr.bf16.mxu0 0
    %7593 = vmatpush1.bf16.msra.mxu0 %v7557
    %7594 = vmatprep.subr.bf16.mxu0 0
    %7595 = vmatpush1.bf16.msra.mxu0 0
    %7596 = vmatprep.subr.bf16.mxu0 0
    %7597 = vmatpush1.bf16.msra.mxu0 0
    %7598 = vmatprep.subr.bf16.mxu0 0
    %7599 = vmatpush1.bf16.msra.mxu0 0
    %7600 = vmatprep.subr.bf16.mxu0 0
    %7601 = vmatpush1.bf16.msra.mxu0 0
    %7602 = vmatprep.subr.bf16.mxu0 0
    %7603 = vmatpush1.bf16.msra.mxu0 0
    %7604 = vmatprep.subr.bf16.mxu0 0
    %7605 = vmatpush1.bf16.msra.mxu0 0
    %7606 = vmatprep.subr.bf16.mxu0 0
    %7607 = vmatpush1.bf16.msra.mxu0 0
    %7608 = vmatprep.subr.bf16.mxu0 0
    %7609 = vmatpush1.bf16.msra.mxu0 0
    %7610 = vmatprep.subr.bf16.mxu0 0
    %7611 = vmatpush1.bf16.msra.mxu0 0
    %7612 = vmatprep.subr.bf16.mxu0 0
    %7613 = vmatpush1.bf16.msra.mxu0 0
    %7614 = vmatprep.subr.bf16.mxu0 0
    %7615 = vmatpush1.bf16.msra.mxu0 0
    %7616 = vmatprep.subr.bf16.mxu0 0
    %7617 = vmatpush1.bf16.msra.mxu0 0
    %7618 = vmatprep.mubr.bf16.mxu0 0
    %7619 = vmatmul.mubr.bf16.gmra.mrb[0].mxu0 %v7563
    %v7620 = vpop.f32.mrb[0].mxu0
    %v7621 = vadd.f32 %v7536, %v7620
    %v7622 = vpop.f32.mrb[0].mxu0
    %v7623 = vpop.f32.mrb[0].mxu0
    %v7624 = vadd.f32 %v7536, %v7623
    %v7625 = vpop.f32.mrb[0].mxu0
    %7626 = vmatprep.mubr.bf16.mxu0 0
    %7627 = vmatmul.mubr.bf16.gmra.mrb[0].mxu0 %v7566
    %v7628 = vpop.f32.mrb[0].mxu0
    %v7629 = vadd.f32 %v7536, %v7628
    %v7630 = vpop.f32.mrb[0].mxu0
    %v7631 = vpop.f32.mrb[0].mxu0
    %v7632 = vadd.f32 %v7536, %v7631
    %v7633 = vpop.f32.mrb[0].mxu0
    %7634 = vmatprep.mubr.bf16.mxu0 0
    %7635 = vmatmul.mubr.bf16.gmra.mrb[0].mxu0 %v7569
    %v7636 = vpop.f32.mrb[0].mxu0
    %v7637 = vadd.f32 %v7536, %v7636
    %v7638 = vpop.f32.mrb[0].mxu0
    %v7639 = vpop.f32.mrb[0].mxu0
    %v7640 = vadd.f32 %v7536, %v7639
    %v7641 = vpop.f32.mrb[0].mxu0
    %7642 = vmatprep.mubr.bf16.mxu0 0
    %7643 = vmatmul.mubr.bf16.gmra.mrb[0].mxu0 %v7572
    %v7644 = vpop.f32.mrb[0].mxu0
    %v7645 = vadd.f32 %v7536, %v7644
    %v7646 = vpop.f32.mrb[0].mxu0
    %v7647 = vpop.f32.mrb[0].mxu0
    %v7648 = vadd.f32 %v7536, %v7647
    %v7649 = vpop.f32.mrb[0].mxu0
    %7650 = vmatprep.mubr.bf16.mxu0 0
    %7651 = vmatmul.mubr.bf16.gmra.mrb[0].mxu0 %v7575
    %v7652 = vpop.f32.mrb[0].mxu0
    %v7653 = vadd.f32 %v7536, %v7652
    %v7654 = vpop.f32.mrb[0].mxu0
    %v7655 = vpop.f32.mrb[0].mxu0
    %v7656 = vadd.f32 %v7536, %v7655
    %v7657 = vpop.f32.mrb[0].mxu0
    %7658 = vmatprep.mubr.bf16.mxu0 0
    %7659 = vmatmul.mubr.bf16.gmra.mrb[0].mxu0 %v7578
    %v7660 = vpop.f32.mrb[0].mxu0
    %v7661 = vadd.f32 %v7536, %v7660
    %v7662 = vpop.f32.mrb[0].mxu0
    %v7663 = vpop.f32.mrb[0].mxu0
    %v7664 = vadd.f32 %v7536, %v7663
    %v7665 = vpop.f32.mrb[0].mxu0
    %7666 = vmatprep.mubr.bf16.mxu0 0
    %7667 = vmatmul.mubr.bf16.gmra.mrb[0].mxu0 %v7581
    %v7668 = vpop.f32.mrb[0].mxu0
    %v7669 = vadd.f32 %v7536, %v7668
    %v7670 = vpop.f32.mrb[0].mxu0
    %v7671 = vpop.f32.mrb[0].mxu0
    %v7672 = vadd.f32 %v7536, %v7671
    %v7673 = vpop.f32.mrb[0].mxu0
    %7674 = vmatprep.mubr.bf16.mxu0 0
    %7675 = vmatmul.mubr.bf16.gmra.mrb[0].mxu0 %v7584
    %v7676 = vpop.f32.mrb[0].mxu0
    %v7677 = vadd.f32 %v7536, %v7676
    %v7678 = vpop.f32.mrb[0].mxu0
    %v7679 = vpop.f32.mrb[0].mxu0
    %v7680 = vadd.f32 %v7536, %v7679
    %v7681 = vpop.f32.mrb[0].mxu0
    %7682 = vdwg.mxu0
    %v7683 = vmax.f32 %v7621, 0.0
    %v7684 = vmax.f32 %v7624, 0.0
    %v7685 = vmax.f32 %v7629, 0.0
    %v7686 = vmax.f32 %v7632, 0.0
    %v7687 = vmax.f32 %v7637, 0.0
    %v7688 = vmax.f32 %v7640, 0.0
    %v7689 = vmax.f32 %v7645, 0.0
    %v7690 = vmax.f32 %v7648, 0.0
    %v7691 = vmax.f32 %v7653, 0.0
    %v7692 = vmax.f32 %v7656, 0.0
    %v7693 = vmax.f32 %v7661, 0.0
    %v7694 = vmax.f32 %v7664, 0.0
    %v7695 = vmax.f32 %v7669, 0.0
    %v7696 = vmax.f32 %v7672, 0.0
    %v7697 = vmax.f32 %v7677, 0.0
    %v7698 = vmax.f32 %v7680, 0.0
    %v7699 = vld [vmem:[%s57] sm:$0xff]
    %v7700 = vld [vmem:[%s57 + $0x8] sm:$0xff]
    %v7701 = vld [vmem:[%s57 + $0x10] sm:$0xff]
    %v7702 = vld [vmem:[%s57 + $0x18] sm:$0xff]
    %v7703 = vld [vmem:[%s57 + $0x20] sm:$0xff]
    %v7704 = vld [vmem:[%s57 + $0x28] sm:$0xff]
    %v7705 = vld [vmem:[%s57 + $0x30] sm:$0xff]
    %v7706 = vld [vmem:[%s57 + $0x38] sm:$0xff]
    %v7707 = vld [vmem:[%s57 + $0x40] sm:$0xff]
    %v7708 = vld [vmem:[%s57 + $0x48] sm:$0xff]
    %v7709 = vld [vmem:[%s57 + $0x50] sm:$0xff]
    %v7710 = vld [vmem:[%s57 + $0x58] sm:$0xff]
    %v7711 = vld [vmem:[%s57 + $0x60] sm:$0xff]
    %v7712 = vld [vmem:[%s57 + $0x68] sm:$0xff]
    %v7713 = vld [vmem:[%s57 + $0x70] sm:$0xff]
    %v7714 = vld [vmem:[%s57 + $0x78] sm:$0xff]
    %v7715 = vpack.c.bf16 %v7684, %v7683
    %v7716 = vpack.c.bf16 %v7686, %v7685
    %v7717 = vpack.c.bf16 %v7688, %v7687
    %v7718 = vpack.c.bf16 %v7690, %v7689
    %v7719 = vpack.c.bf16 %v7692, %v7691
    %v7720 = vpack.c.bf16 %v7694, %v7693
    %v7721 = vpack.c.bf16 %v7696, %v7695
    %v7722 = vpack.c.bf16 %v7698, %v7697
    %v7723 = vld [vmem:[%s59] sm:$0x3]
    %v7725 = vlaneseq
    %v7726 = vshrl.u32 %v7725, 7
    %v7727 = vsub.s32 0, %v7726
    %v7728 = vrot.slane %v7723, %v7727
    %v7729 = vlaneseq
    %v7730 = vshrl.u32 %v7729, 7
    %v7731 = vsub.s32 1, %v7730
    %v7732 = vrot.slane %v7723, %v7731
    %v7751 = vunpack.c.l.b16 %v7699
    %v7752 = vunpack.c.h.b16 %v7699
    %v7753 = vunpack.c.l.b16 %v7700
    %v7754 = vunpack.c.h.b16 %v7700
    %v7755 = vunpack.c.l.b16 %v7701
    %v7756 = vunpack.c.h.b16 %v7701
    %v7757 = vunpack.c.l.b16 %v7702
    %v7758 = vunpack.c.h.b16 %v7702
    %v7759 = vunpack.c.l.b16 %v7703
    %v7760 = vunpack.c.h.b16 %v7703
    %v7761 = vunpack.c.l.b16 %v7704
    %v7762 = vunpack.c.h.b16 %v7704
    %v7763 = vunpack.c.l.b16 %v7705
    %v7764 = vunpack.c.h.b16 %v7705
    %v7765 = vunpack.c.l.b16 %v7706
    %v7766 = vunpack.c.h.b16 %v7706
    %v7767 = vunpack.c.l.b16 %v7707
    %v7768 = vunpack.c.h.b16 %v7707
    %v7769 = vunpack.c.l.b16 %v7708
    %v7770 = vunpack.c.h.b16 %v7708
    %v7771 = vunpack.c.l.b16 %v7709
    %v7772 = vunpack.c.h.b16 %v7709
    %v7773 = vunpack.c.l.b16 %v7710
    %v7774 = vunpack.c.h.b16 %v7710
    %v7775 = vunpack.c.l.b16 %v7711
    %v7776 = vunpack.c.h.b16 %v7711
    %v7777 = vunpack.c.l.b16 %v7712
    %v7778 = vunpack.c.h.b16 %v7712
    %v7779 = vunpack.c.l.b16 %v7713
    %v7780 = vunpack.c.h.b16 %v7713
    %v7781 = vunpack.c.l.b16 %v7714
    %v7782 = vunpack.c.h.b16 %v7714
    %v7783 = vpack.c.b16 %v7753, %v7751
    %v7784 = vpack.c.b16 %v7754, %v7752
    %v7785 = vpack.c.b16 %v7757, %v7755
    %v7786 = vpack.c.b16 %v7758, %v7756
    %v7787 = vpack.c.b16 %v7761, %v7759
    %v7788 = vpack.c.b16 %v7762, %v7760
    %v7789 = vpack.c.b16 %v7765, %v7763
    %v7790 = vpack.c.b16 %v7766, %v7764
    %v7791 = vpack.c.b16 %v7769, %v7767
    %v7792 = vpack.c.b16 %v7770, %v7768
    %v7793 = vpack.c.b16 %v7773, %v7771
    %v7794 = vpack.c.b16 %v7774, %v7772
    %v7795 = vpack.c.b16 %v7777, %v7775
    %v7796 = vpack.c.b16 %v7778, %v7776
    %v7797 = vpack.c.b16 %v7781, %v7779
    %v7798 = vpack.c.b16 %v7782, %v7780
    %7815 = vmatprep.subr.bf16.mxu0 %v7784
    %7816 = vmatpush1.bf16.msra.mxu0 %v7783
    %7817 = vmatprep.subr.bf16.mxu0 %v7786
    %7818 = vmatpush1.bf16.msra.mxu0 %v7785
    %7819 = vmatprep.subr.bf16.mxu0 %v7788
    %7820 = vmatpush1.bf16.msra.mxu0 %v7787
    %7821 = vmatprep.subr.bf16.mxu0 %v7790
    %7822 = vmatpush1.bf16.msra.mxu0 %v7789
    %7823 = vmatprep.subr.bf16.mxu0 %v7792
    %7824 = vmatpush1.bf16.msra.mxu0 %v7791
    %7825 = vmatprep.subr.bf16.mxu0 %v7794
    %7826 = vmatpush1.bf16.msra.mxu0 %v7793
    %7827 = vmatprep.subr.bf16.mxu0 %v7796
    %7828 = vmatpush1.bf16.msra.mxu0 %v7795
    %7829 = vmatprep.subr.bf16.mxu0 %v7798
    %7830 = vmatpush1.bf16.msra.mxu0 %v7797
    %7831 = vmatprep.subr.bf16.mxu0 0
    %7832 = vmatpush1.bf16.msra.mxu0 0
    %7833 = vmatprep.subr.bf16.mxu0 0
    %7834 = vmatpush1.bf16.msra.mxu0 0
    %7835 = vmatprep.subr.bf16.mxu0 0
    %7836 = vmatpush1.bf16.msra.mxu0 0
    %7837 = vmatprep.subr.bf16.mxu0 0
    %7838 = vmatpush1.bf16.msra.mxu0 0
    %7839 = vmatprep.subr.bf16.mxu0 0
    %7840 = vmatpush1.bf16.msra.mxu0 0
    %7841 = vmatprep.subr.bf16.mxu0 0
    %7842 = vmatpush1.bf16.msra.mxu0 0
    %7843 = vmatprep.subr.bf16.mxu0 0
    %7844 = vmatpush1.bf16.msra.mxu0 0
    %7845 = vmatprep.subr.bf16.mxu0 0
    %7846 = vmatpush1.bf16.msra.mxu0 0
    %7847 = vmatprep.mubr.bf16.mxu0 0
    %7848 = vmatmul.mubr.bf16.gmra.mrb[0].mxu0 %v7715
    %v7849 = vpop.f32.mrb[0].mxu0
    %v7850 = vadd.f32 %v7728, %v7849
    %v7851 = vpop.f32.mrb[0].mxu0
    %v7852 = vadd.f32 %v7732, %v7851
    %v7853 = vpop.f32.mrb[0].mxu0
    %v7854 = vadd.f32 %v7728, %v7853
    %v7855 = vpop.f32.mrb[0].mxu0
    %v7856 = vadd.f32 %v7732, %v7855
    %7857 = vmatprep.mubr.bf16.mxu0 0
    %7858 = vmatmul.mubr.bf16.gmra.mrb[0].mxu0 %v7716
    %v7859 = vpop.f32.mrb[0].mxu0
    %v7860 = vadd.f32 %v7728, %v7859
    %v7861 = vpop.f32.mrb[0].mxu0
    %v7862 = vadd.f32 %v7732, %v7861
    %v7863 = vpop.f32.mrb[0].mxu0
    %v7864 = vadd.f32 %v7728, %v7863
    %v7865 = vpop.f32.mrb[0].mxu0
    %v7866 = vadd.f32 %v7732, %v7865
    %7867 = vmatprep.mubr.bf16.mxu0 0
    %7868 = vmatmul.mubr.bf16.gmra.mrb[0].mxu0 %v7717
    %v7869 = vpop.f32.mrb[0].mxu0
    %v7870 = vadd.f32 %v7728, %v7869
    %v7871 = vpop.f32.mrb[0].mxu0
    %v7872 = vadd.f32 %v7732, %v7871
    %v7873 = vpop.f32.mrb[0].mxu0
    %v7874 = vadd.f32 %v7728, %v7873
    %v7875 = vpop.f32.mrb[0].mxu0
    %v7876 = vadd.f32 %v7732, %v7875
    %7877 = vmatprep.mubr.bf16.mxu0 0
    %7878 = vmatmul.mubr.bf16.gmra.mrb[0].mxu0 %v7718
    %v7879 = vpop.f32.mrb[0].mxu0
    %v7880 = vadd.f32 %v7728, %v7879
    %v7881 = vpop.f32.mrb[0].mxu0
    %v7882 = vadd.f32 %v7732, %v7881
    %v7883 = vpop.f32.mrb[0].mxu0
    %v7884 = vadd.f32 %v7728, %v7883
    %v7885 = vpop.f32.mrb[0].mxu0
    %v7886 = vadd.f32 %v7732, %v7885
    %7887 = vmatprep.mubr.bf16.mxu0 0
    %7888 = vmatmul.mubr.bf16.gmra.mrb[0].mxu0 %v7719
    %v7889 = vpop.f32.mrb[0].mxu0
    %v7890 = vadd.f32 %v7728, %v7889
    %v7891 = vpop.f32.mrb[0].mxu0
    %v7892 = vadd.f32 %v7732, %v7891
    %v7893 = vpop.f32.mrb[0].mxu0
    %v7894 = vadd.f32 %v7728, %v7893
    %v7895 = vpop.f32.mrb[0].mxu0
    %v7896 = vadd.f32 %v7732, %v7895
    %7897 = vmatprep.mubr.bf16.mxu0 0
    %7898 = vmatmul.mubr.bf16.gmra.mrb[0].mxu0 %v7720
    %v7899 = vpop.f32.mrb[0].mxu0
    %v7900 = vadd.f32 %v7728, %v7899
    %v7901 = vpop.f32.mrb[0].mxu0
    %v7902 = vadd.f32 %v7732, %v7901
    %v7903 = vpop.f32.mrb[0].mxu0
    %v7904 = vadd.f32 %v7728, %v7903
    %v7905 = vpop.f32.mrb[0].mxu0
    %v7906 = vadd.f32 %v7732, %v7905
    %7907 = vmatprep.mubr.bf16.mxu0 0
    %7908 = vmatmul.mubr.bf16.gmra.mrb[0].mxu0 %v7721
    %v7909 = vpop.f32.mrb[0].mxu0
    %v7910 = vadd.f32 %v7728, %v7909
    %v7911 = vpop.f32.mrb[0].mxu0
    %v7912 = vadd.f32 %v7732, %v7911
    %v7913 = vpop.f32.mrb[0].mxu0
    %v7914 = vadd.f32 %v7728, %v7913
    %v7915 = vpop.f32.mrb[0].mxu0
    %v7916 = vadd.f32 %v7732, %v7915
    %7917 = vmatprep.mubr.bf16.mxu0 0
    %7918 = vmatmul.mubr.bf16.gmra.mrb[0].mxu0 %v7722
    %v7919 = vpop.f32.mrb[0].mxu0
    %v7920 = vadd.f32 %v7728, %v7919
    %v7921 = vpop.f32.mrb[0].mxu0
    %v7922 = vadd.f32 %v7732, %v7921
    %v7923 = vpop.f32.mrb[0].mxu0
    %v7924 = vadd.f32 %v7728, %v7923
    %v7925 = vpop.f32.mrb[0].mxu0
    %v7926 = vadd.f32 %v7732, %v7925
    %7927 = vdwg.mxu0
    %v7928 = vsub.f32 0.0, %v7850
    %v7929 = vsub.f32 0.0, %v7854
    %v7930 = vsub.f32 0.0, %v7860
    %v7931 = vsub.f32 0.0, %v7864
    %v7932 = vsub.f32 0.0, %v7870
    %v7933 = vsub.f32 0.0, %v7874
    %v7934 = vsub.f32 0.0, %v7880
    %v7935 = vsub.f32 0.0, %v7884
    %v7936 = vsub.f32 0.0, %v7890
    %v7937 = vsub.f32 0.0, %v7894
    %v7938 = vsub.f32 0.0, %v7900
    %v7939 = vsub.f32 0.0, %v7904
    %v7940 = vsub.f32 0.0, %v7910
    %v7941 = vsub.f32 0.0, %v7914
    %v7942 = vsub.f32 0.0, %v7920
    %v7943 = vsub.f32 0.0, %v7924
    %v7944 = vmul.f32 %v7928, 1.442695
    %v7945 = vpow.pop %v7944
    %v7946 = vmul.f32 %v7929, 1.442695
    %v7947 = vpow.pop %v7946
    %v7948 = vmul.f32 %v7930, 1.442695
    %v7949 = vpow.pop %v7948
    %v7950 = vmul.f32 %v7931, 1.442695
    %v7951 = vpow.pop %v7950
    %v7952 = vmul.f32 %v7932, 1.442695
    %v7953 = vpow.pop %v7952
    %v7954 = vmul.f32 %v7933, 1.442695
    %v7955 = vpow.pop %v7954
    %v7956 = vmul.f32 %v7934, 1.442695
    %v7957 = vpow.pop %v7956
    %v7958 = vmul.f32 %v7935, 1.442695
    %v7959 = vpow.pop %v7958
    %v7960 = vmul.f32 %v7936, 1.442695
    %v7961 = vpow.pop %v7960
    %v7962 = vmul.f32 %v7937, 1.442695
    %v7963 = vpow.pop %v7962
    %v7964 = vmul.f32 %v7938, 1.442695
    %v7965 = vpow.pop %v7964
    %v7966 = vmul.f32 %v7939, 1.442695
    %v7967 = vpow.pop %v7966
    %v7968 = vmul.f32 %v7940, 1.442695
    %v7969 = vpow.pop %v7968
    %v7970 = vmul.f32 %v7941, 1.442695
    %v7971 = vpow.pop %v7970
    %v7972 = vmul.f32 %v7942, 1.442695
    %v7973 = vpow.pop %v7972
    %v7974 = vmul.f32 %v7943, 1.442695
    %v7975 = vpow.pop %v7974
    %v7976 = vadd.f32 %v7945, 1.0
    %v7977 = vadd.f32 %v7947, 1.0
    %v7978 = vadd.f32 %v7949, 1.0
    %v7979 = vadd.f32 %v7951, 1.0
    %v7980 = vadd.f32 %v7953, 1.0
    %v7981 = vadd.f32 %v7955, 1.0
    %v7982 = vadd.f32 %v7957, 1.0
    %v7983 = vadd.f32 %v7959, 1.0
    %v7984 = vadd.f32 %v7961, 1.0
    %v7985 = vadd.f32 %v7963, 1.0
    %v7986 = vadd.f32 %v7965, 1.0
    %v7987 = vadd.f32 %v7967, 1.0
    %v7988 = vadd.f32 %v7969, 1.0
    %v7989 = vadd.f32 %v7971, 1.0
    %v7990 = vadd.f32 %v7973, 1.0
    %v7991 = vadd.f32 %v7975, 1.0
    %v7992 = vrcp.pop %v7976
    %v7993 = vrcp.pop %v7977
    %v7994 = vrcp.pop %v7978
    %v7995 = vrcp.pop %v7979
    %v7996 = vrcp.pop %v7980
    %v7997 = vrcp.pop %v7981
    %v7998 = vrcp.pop %v7982
    %v7999 = vrcp.pop %v7983
    %v8000 = vrcp.pop %v7984
    %v8001 = vrcp.pop %v7985
    %v8002 = vrcp.pop %v7986
    %v8003 = vrcp.pop %v7987
    %v8004 = vrcp.pop %v7988
    %v8005 = vrcp.pop %v7989
    %v8006 = vrcp.pop %v7990
    %v8007 = vrcp.pop %v7991
    %8008 = vst.msk [vmem:[%s65] sm:$0xff] %vm224, %v7992
    %8009 = vst.msk [vmem:[%s65 + $0x8] sm:$0xff] %vm224, %v7993
    %8010 = vst.msk [vmem:[%s65 + $0x10] sm:$0xff] %vm224, %v7994
    %8011 = vst.msk [vmem:[%s65 + $0x18] sm:$0xff] %vm224, %v7995
    %8012 = vst.msk [vmem:[%s65 + $0x20] sm:$0xff] %vm224, %v7996
    %8013 = vst.msk [vmem:[%s65 + $0x28] sm:$0xff] %vm224, %v7997
    %8014 = vst.msk [vmem:[%s65 + $0x30] sm:$0xff] %vm224, %v7998
    %8015 = vst.msk [vmem:[%s65 + $0x38] sm:$0xff] %vm224, %v7999
    %8016 = vst.msk [vmem:[%s65 + $0x40] sm:$0xff] %vm224, %v8000
    %8017 = vst.msk [vmem:[%s65 + $0x48] sm:$0xff] %vm224, %v8001
    %8018 = vst.msk [vmem:[%s65 + $0x50] sm:$0xff] %vm224, %v8002
    %8019 = vst.msk [vmem:[%s65 + $0x58] sm:$0xff] %vm224, %v8003
    %8020 = vst.msk [vmem:[%s65 + $0x60] sm:$0xff] %vm224, %v8004
    %8021 = vst.msk [vmem:[%s65 + $0x68] sm:$0xff] %vm224, %v8005
    %8022 = vst.msk [vmem:[%s65 + $0x70] sm:$0xff] %vm224, %v8006
    %8023 = vst.msk [vmem:[%s65 + $0x78] sm:$0xff] %vm224, %v8007
    %v8024 = vmul.f32 %v7850, 1.442695
    %v8025 = vpow.pop %v8024
    %v8026 = vmul.f32 %v7854, 1.442695
    %v8027 = vpow.pop %v8026
    %v8028 = vmul.f32 %v7860, 1.442695
    %v8029 = vpow.pop %v8028
    %v8030 = vmul.f32 %v7864, 1.442695
    %v8031 = vpow.pop %v8030
    %v8032 = vmul.f32 %v7870, 1.442695
    %v8033 = vpow.pop %v8032
    %v8034 = vmul.f32 %v7874, 1.442695
    %v8035 = vpow.pop %v8034
    %v8036 = vmul.f32 %v7880, 1.442695
    %v8037 = vpow.pop %v8036
    %v8038 = vmul.f32 %v7884, 1.442695
    %v8039 = vpow.pop %v8038
    %v8040 = vmul.f32 %v7890, 1.442695
    %v8041 = vpow.pop %v8040
    %v8042 = vmul.f32 %v7894, 1.442695
    %v8043 = vpow.pop %v8042
    %v8044 = vmul.f32 %v7900, 1.442695
    %v8045 = vpow.pop %v8044
    %v8046 = vmul.f32 %v7904, 1.442695
    %v8047 = vpow.pop %v8046
    %v8048 = vmul.f32 %v7910, 1.442695
    %v8049 = vpow.pop %v8048
    %v8050 = vmul.f32 %v7914, 1.442695
    %v8051 = vpow.pop %v8050
    %v8052 = vmul.f32 %v7920, 1.442695
    %v8053 = vpow.pop %v8052
    %v8054 = vmul.f32 %v7924, 1.442695
    %v8055 = vpow.pop %v8054
    %v8056 = vmax.f32 %v8025, 1e-05
    %v8057 = vmax.f32 %v8027, 1e-05
    %v8058 = vmax.f32 %v8029, 1e-05
    %v8059 = vmax.f32 %v8031, 1e-05
    %v8060 = vmax.f32 %v8033, 1e-05
    %v8061 = vmax.f32 %v8035, 1e-05
    %v8062 = vmax.f32 %v8037, 1e-05
    %v8063 = vmax.f32 %v8039, 1e-05
    %v8064 = vmax.f32 %v8041, 1e-05
    %v8065 = vmax.f32 %v8043, 1e-05
    %v8066 = vmax.f32 %v8045, 1e-05
    %v8067 = vmax.f32 %v8047, 1e-05
    %v8068 = vmax.f32 %v8049, 1e-05
    %v8069 = vmax.f32 %v8051, 1e-05
    %v8070 = vmax.f32 %v8053, 1e-05
    %v8071 = vmax.f32 %v8055, 1e-05
    %v8072 = vmin.f32 %v8056, 10000.0
    %v8073 = vmin.f32 %v8057, 10000.0
    %v8074 = vmin.f32 %v8058, 10000.0
    %v8075 = vmin.f32 %v8059, 10000.0
    %v8076 = vmin.f32 %v8060, 10000.0
    %v8077 = vmin.f32 %v8061, 10000.0
    %v8078 = vmin.f32 %v8062, 10000.0
    %v8079 = vmin.f32 %v8063, 10000.0
    %v8080 = vmin.f32 %v8064, 10000.0
    %v8081 = vmin.f32 %v8065, 10000.0
    %v8082 = vmin.f32 %v8066, 10000.0
    %v8083 = vmin.f32 %v8067, 10000.0
    %v8084 = vmin.f32 %v8068, 10000.0
    %v8085 = vmin.f32 %v8069, 10000.0
    %v8086 = vmin.f32 %v8070, 10000.0
    %v8087 = vmin.f32 %v8071, 10000.0
    %8104 = vrot.lane.b32.xlu0 %v8072, 64
    %v8105 = vpop.permute.xlu0 %8104
    %8106 = vrot.lane.b32.xlu0 %v8073, 64
    %v8107 = vpop.permute.xlu0 %8106
    %8108 = vrot.lane.b32.xlu0 %v8074, 64
    %v8109 = vpop.permute.xlu0 %8108
    %8110 = vrot.lane.b32.xlu0 %v8075, 64
    %v8111 = vpop.permute.xlu0 %8110
    %8112 = vrot.lane.b32.xlu0 %v8076, 64
    %v8113 = vpop.permute.xlu0 %8112
    %8114 = vrot.lane.b32.xlu0 %v8077, 64
    %v8115 = vpop.permute.xlu0 %8114
    %8116 = vrot.lane.b32.xlu0 %v8078, 64
    %v8117 = vpop.permute.xlu0 %8116
    %8118 = vrot.lane.b32.xlu0 %v8079, 64
    %v8119 = vpop.permute.xlu0 %8118
    %8120 = vrot.lane.b32.xlu0 %v8080, 64
    %v8121 = vpop.permute.xlu0 %8120
    %8122 = vrot.lane.b32.xlu0 %v8081, 64
    %v8123 = vpop.permute.xlu0 %8122
    %8124 = vrot.lane.b32.xlu0 %v8082, 64
    %v8125 = vpop.permute.xlu0 %8124
    %8126 = vrot.lane.b32.xlu0 %v8083, 64
    %v8127 = vpop.permute.xlu0 %8126
    %8128 = vrot.lane.b32.xlu0 %v8084, 64
    %v8129 = vpop.permute.xlu0 %8128
    %8130 = vrot.lane.b32.xlu0 %v8085, 64
    %v8131 = vpop.permute.xlu0 %8130
    %8132 = vrot.lane.b32.xlu0 %v8086, 64
    %v8133 = vpop.permute.xlu0 %8132
    %8134 = vrot.lane.b32.xlu0 %v8087, 64
    %v8135 = vpop.permute.xlu0 %8134
    %8152 = vst.msk [vmem:[%s67] sm:$0xff] %vm224, %v8105
    %8153 = vst.msk [vmem:[%s67 + $0x8] sm:$0xff] %vm224, %v8107
    %8154 = vst.msk [vmem:[%s67 + $0x10] sm:$0xff] %vm224, %v8109
    %8155 = vst.msk [vmem:[%s67 + $0x18] sm:$0xff] %vm224, %v8111
    %8156 = vst.msk [vmem:[%s67 + $0x20] sm:$0xff] %vm224, %v8113
    %8157 = vst.msk [vmem:[%s67 + $0x28] sm:$0xff] %vm224, %v8115
    %8158 = vst.msk [vmem:[%s67 + $0x30] sm:$0xff] %vm224, %v8117
    %8159 = vst.msk [vmem:[%s67 + $0x38] sm:$0xff] %vm224, %v8119
    %8160 = vst.msk [vmem:[%s67 + $0x40] sm:$0xff] %vm224, %v8121
    %8161 = vst.msk [vmem:[%s67 + $0x48] sm:$0xff] %vm224, %v8123
    %8162 = vst.msk [vmem:[%s67 + $0x50] sm:$0xff] %vm224, %v8125
    %8163 = vst.msk [vmem:[%s67 + $0x58] sm:$0xff] %vm224, %v8127
    %8164 = vst.msk [vmem:[%s67 + $0x60] sm:$0xff] %vm224, %v8129
    %8165 = vst.msk [vmem:[%s67 + $0x68] sm:$0xff] %vm224, %v8131
    %8166 = vst.msk [vmem:[%s67 + $0x70] sm:$0xff] %vm224, %v8133
    %8167 = vst.msk [vmem:[%s67 + $0x78] sm:$0xff] %vm224, %v8135
    %vm8168 = vcmp.gt.f32.partialorder %v7852, 20.0
    %vm8169 = vcmp.gt.f32.partialorder %v7856, 20.0
    %vm8170 = vcmp.gt.f32.partialorder %v7862, 20.0
    %vm8171 = vcmp.gt.f32.partialorder %v7866, 20.0
    %vm8172 = vcmp.gt.f32.partialorder %v7872, 20.0
    %vm8173 = vcmp.gt.f32.partialorder %v7876, 20.0
    %vm8174 = vcmp.gt.f32.partialorder %v7882, 20.0
    %vm8175 = vcmp.gt.f32.partialorder %v7886, 20.0
    %vm8176 = vcmp.gt.f32.partialorder %v7892, 20.0
    %vm8177 = vcmp.gt.f32.partialorder %v7896, 20.0
    %vm8178 = vcmp.gt.f32.partialorder %v7902, 20.0
    %vm8179 = vcmp.gt.f32.partialorder %v7906, 20.0
    %vm8180 = vcmp.gt.f32.partialorder %v7912, 20.0
    %vm8181 = vcmp.gt.f32.partialorder %v7916, 20.0
    %vm8182 = vcmp.gt.f32.partialorder %v7922, 20.0
    %vm8183 = vcmp.gt.f32.partialorder %v7926, 20.0
    %v8184 = vmin.f32 %v7852, 20.0
    %v8185 = vmin.f32 %v7856, 20.0
    %v8186 = vmin.f32 %v7862, 20.0
    %v8187 = vmin.f32 %v7866, 20.0
    %v8188 = vmin.f32 %v7872, 20.0
    %v8189 = vmin.f32 %v7876, 20.0
    %v8190 = vmin.f32 %v7882, 20.0
    %v8191 = vmin.f32 %v7886, 20.0
    %v8192 = vmin.f32 %v7892, 20.0
    %v8193 = vmin.f32 %v7896, 20.0
    %v8194 = vmin.f32 %v7902, 20.0
    %v8195 = vmin.f32 %v7906, 20.0
    %v8196 = vmin.f32 %v7912, 20.0
    %v8197 = vmin.f32 %v7916, 20.0
    %v8198 = vmin.f32 %v7922, 20.0
    %v8199 = vmin.f32 %v7926, 20.0
    %v8200 = vmul.f32 %v8184, 1.442695
    %v8201 = vpow.pop %v8200
    %v8202 = vmul.f32 %v8185, 1.442695
    %v8203 = vpow.pop %v8202
    %v8204 = vmul.f32 %v8186, 1.442695
    %v8205 = vpow.pop %v8204
    %v8206 = vmul.f32 %v8187, 1.442695
    %v8207 = vpow.pop %v8206
    %v8208 = vmul.f32 %v8188, 1.442695
    %v8209 = vpow.pop %v8208
    %v8210 = vmul.f32 %v8189, 1.442695
    %v8211 = vpow.pop %v8210
    %v8212 = vmul.f32 %v8190, 1.442695
    %v8213 = vpow.pop %v8212
    %v8214 = vmul.f32 %v8191, 1.442695
    %v8215 = vpow.pop %v8214
    %v8216 = vmul.f32 %v8192, 1.442695
    %v8217 = vpow.pop %v8216
    %v8218 = vmul.f32 %v8193, 1.442695
    %v8219 = vpow.pop %v8218
    %v8220 = vmul.f32 %v8194, 1.442695
    %v8221 = vpow.pop %v8220
    %v8222 = vmul.f32 %v8195, 1.442695
    %v8223 = vpow.pop %v8222
    %v8224 = vmul.f32 %v8196, 1.442695
    %v8225 = vpow.pop %v8224
    %v8226 = vmul.f32 %v8197, 1.442695
    %v8227 = vpow.pop %v8226
    %v8228 = vmul.f32 %v8198, 1.442695
    %v8229 = vpow.pop %v8228
    %v8230 = vmul.f32 %v8199, 1.442695
    %v8231 = vpow.pop %v8230
    %v8232 = vadd.f32 %v8201, 1.0
    %v8233 = vlog2.pop %v8232
    %v8234 = vmul.f32 %v8233, 0.6931472
    %v8235 = vmul.f32 -0.5, %v8201
    %v8236 = vadd.f32 %v8235, 1.0
    %v8237 = vmul.f32 %v8236, %v8201
    %v8238 = vand.u32 2147483647, %v8201
    %vm8239 = vcmp.lt.f32.partialorder %v8238, 0.0004427343
    %v8240 = vsel %vm8239, %v8237, %v8234
    %v8241 = vadd.f32 %v8203, 1.0
    %v8242 = vlog2.pop %v8241
    %v8243 = vmul.f32 %v8242, 0.6931472
    %v8244 = vmul.f32 -0.5, %v8203
    %v8245 = vadd.f32 %v8244, 1.0
    %v8246 = vmul.f32 %v8245, %v8203
    %v8247 = vand.u32 2147483647, %v8203
    %vm8248 = vcmp.lt.f32.partialorder %v8247, 0.0004427343
    %v8249 = vsel %vm8248, %v8246, %v8243
    %v8250 = vadd.f32 %v8205, 1.0
    %v8251 = vlog2.pop %v8250
    %v8252 = vmul.f32 %v8251, 0.6931472
    %v8253 = vmul.f32 -0.5, %v8205
    %v8254 = vadd.f32 %v8253, 1.0
    %v8255 = vmul.f32 %v8254, %v8205
    %v8256 = vand.u32 2147483647, %v8205
    %vm8257 = vcmp.lt.f32.partialorder %v8256, 0.0004427343
    %v8258 = vsel %vm8257, %v8255, %v8252
    %v8259 = vadd.f32 %v8207, 1.0
    %v8260 = vlog2.pop %v8259
    %v8261 = vmul.f32 %v8260, 0.6931472
    %v8262 = vmul.f32 -0.5, %v8207
    %v8263 = vadd.f32 %v8262, 1.0
    %v8264 = vmul.f32 %v8263, %v8207
    %v8265 = vand.u32 2147483647, %v8207
    %vm8266 = vcmp.lt.f32.partialorder %v8265, 0.0004427343
    %v8267 = vsel %vm8266, %v8264, %v8261
    %v8268 = vadd.f32 %v8209, 1.0
    %v8269 = vlog2.pop %v8268
    %v8270 = vmul.f32 %v8269, 0.6931472
    %v8271 = vmul.f32 -0.5, %v8209
    %v8272 = vadd.f32 %v8271, 1.0
    %v8273 = vmul.f32 %v8272, %v8209
    %v8274 = vand.u32 2147483647, %v8209
    %vm8275 = vcmp.lt.f32.partialorder %v8274, 0.0004427343
    %v8276 = vsel %vm8275, %v8273, %v8270
    %v8277 = vadd.f32 %v8211, 1.0
    %v8278 = vlog2.pop %v8277
    %v8279 = vmul.f32 %v8278, 0.6931472
    %v8280 = vmul.f32 -0.5, %v8211
    %v8281 = vadd.f32 %v8280, 1.0
    %v8282 = vmul.f32 %v8281, %v8211
    %v8283 = vand.u32 2147483647, %v8211
    %vm8284 = vcmp.lt.f32.partialorder %v8283, 0.0004427343
    %v8285 = vsel %vm8284, %v8282, %v8279
    %v8286 = vadd.f32 %v8213, 1.0
    %v8287 = vlog2.pop %v8286
    %v8288 = vmul.f32 %v8287, 0.6931472
    %v8289 = vmul.f32 -0.5, %v8213
    %v8290 = vadd.f32 %v8289, 1.0
    %v8291 = vmul.f32 %v8290, %v8213
    %v8292 = vand.u32 2147483647, %v8213
    %vm8293 = vcmp.lt.f32.partialorder %v8292, 0.0004427343
    %v8294 = vsel %vm8293, %v8291, %v8288
    %v8295 = vadd.f32 %v8215, 1.0
    %v8296 = vlog2.pop %v8295
    %v8297 = vmul.f32 %v8296, 0.6931472
    %v8298 = vmul.f32 -0.5, %v8215
    %v8299 = vadd.f32 %v8298, 1.0
    %v8300 = vmul.f32 %v8299, %v8215
    %v8301 = vand.u32 2147483647, %v8215
    %vm8302 = vcmp.lt.f32.partialorder %v8301, 0.0004427343
    %v8303 = vsel %vm8302, %v8300, %v8297
    %v8304 = vadd.f32 %v8217, 1.0
    %v8305 = vlog2.pop %v8304
    %v8306 = vmul.f32 %v8305, 0.6931472
    %v8307 = vmul.f32 -0.5, %v8217
    %v8308 = vadd.f32 %v8307, 1.0
    %v8309 = vmul.f32 %v8308, %v8217
    %v8310 = vand.u32 2147483647, %v8217
    %vm8311 = vcmp.lt.f32.partialorder %v8310, 0.0004427343
    %v8312 = vsel %vm8311, %v8309, %v8306
    %v8313 = vadd.f32 %v8219, 1.0
    %v8314 = vlog2.pop %v8313
    %v8315 = vmul.f32 %v8314, 0.6931472
    %v8316 = vmul.f32 -0.5, %v8219
    %v8317 = vadd.f32 %v8316, 1.0
    %v8318 = vmul.f32 %v8317, %v8219
    %v8319 = vand.u32 2147483647, %v8219
    %vm8320 = vcmp.lt.f32.partialorder %v8319, 0.0004427343
    %v8321 = vsel %vm8320, %v8318, %v8315
    %v8322 = vadd.f32 %v8221, 1.0
    %v8323 = vlog2.pop %v8322
    %v8324 = vmul.f32 %v8323, 0.6931472
    %v8325 = vmul.f32 -0.5, %v8221
    %v8326 = vadd.f32 %v8325, 1.0
    %v8327 = vmul.f32 %v8326, %v8221
    %v8328 = vand.u32 2147483647, %v8221
    %vm8329 = vcmp.lt.f32.partialorder %v8328, 0.0004427343
    %v8330 = vsel %vm8329, %v8327, %v8324
    %v8331 = vadd.f32 %v8223, 1.0
    %v8332 = vlog2.pop %v8331
    %v8333 = vmul.f32 %v8332, 0.6931472
    %v8334 = vmul.f32 -0.5, %v8223
    %v8335 = vadd.f32 %v8334, 1.0
    %v8336 = vmul.f32 %v8335, %v8223
    %v8337 = vand.u32 2147483647, %v8223
    %vm8338 = vcmp.lt.f32.partialorder %v8337, 0.0004427343
    %v8339 = vsel %vm8338, %v8336, %v8333
    %v8340 = vadd.f32 %v8225, 1.0
    %v8341 = vlog2.pop %v8340
    %v8342 = vmul.f32 %v8341, 0.6931472
    %v8343 = vmul.f32 -0.5, %v8225
    %v8344 = vadd.f32 %v8343, 1.0
    %v8345 = vmul.f32 %v8344, %v8225
    %v8346 = vand.u32 2147483647, %v8225
    %vm8347 = vcmp.lt.f32.partialorder %v8346, 0.0004427343
    %v8348 = vsel %vm8347, %v8345, %v8342
    %v8349 = vadd.f32 %v8227, 1.0
    %v8350 = vlog2.pop %v8349
    %v8351 = vmul.f32 %v8350, 0.6931472
    %v8352 = vmul.f32 -0.5, %v8227
    %v8353 = vadd.f32 %v8352, 1.0
    %v8354 = vmul.f32 %v8353, %v8227
    %v8355 = vand.u32 2147483647, %v8227
    %vm8356 = vcmp.lt.f32.partialorder %v8355, 0.0004427343
    %v8357 = vsel %vm8356, %v8354, %v8351
    %v8358 = vadd.f32 %v8229, 1.0
    %v8359 = vlog2.pop %v8358
    %v8360 = vmul.f32 %v8359, 0.6931472
    %v8361 = vmul.f32 -0.5, %v8229
    %v8362 = vadd.f32 %v8361, 1.0
    %v8363 = vmul.f32 %v8362, %v8229
    %v8364 = vand.u32 2147483647, %v8229
    %vm8365 = vcmp.lt.f32.partialorder %v8364, 0.0004427343
    %v8366 = vsel %vm8365, %v8363, %v8360
    %v8367 = vadd.f32 %v8231, 1.0
    %v8368 = vlog2.pop %v8367
    %v8369 = vmul.f32 %v8368, 0.6931472
    %v8370 = vmul.f32 -0.5, %v8231
    %v8371 = vadd.f32 %v8370, 1.0
    %v8372 = vmul.f32 %v8371, %v8231
    %v8373 = vand.u32 2147483647, %v8231
    %vm8374 = vcmp.lt.f32.partialorder %v8373, 0.0004427343
    %v8375 = vsel %vm8374, %v8372, %v8369
    %v8376 = vsel %vm8168, %v7852, %v8240
    %v8377 = vsel %vm8169, %v7856, %v8249
    %v8378 = vsel %vm8170, %v7862, %v8258
    %v8379 = vsel %vm8171, %v7866, %v8267
    %v8380 = vsel %vm8172, %v7872, %v8276
    %v8381 = vsel %vm8173, %v7876, %v8285
    %v8382 = vsel %vm8174, %v7882, %v8294
    %v8383 = vsel %vm8175, %v7886, %v8303
    %v8384 = vsel %vm8176, %v7892, %v8312
    %v8385 = vsel %vm8177, %v7896, %v8321
    %v8386 = vsel %vm8178, %v7902, %v8330
    %v8387 = vsel %vm8179, %v7906, %v8339
    %v8388 = vsel %vm8180, %v7912, %v8348
    %v8389 = vsel %vm8181, %v7916, %v8357
    %v8390 = vsel %vm8182, %v7922, %v8366
    %v8391 = vsel %vm8183, %v7926, %v8375
    %v8392 = vmax.f32 %v8376, 0.0001
    %v8393 = vmax.f32 %v8377, 0.0001
    %v8394 = vmax.f32 %v8378, 0.0001
    %v8395 = vmax.f32 %v8379, 0.0001
    %v8396 = vmax.f32 %v8380, 0.0001
    %v8397 = vmax.f32 %v8381, 0.0001
    %v8398 = vmax.f32 %v8382, 0.0001
    %v8399 = vmax.f32 %v8383, 0.0001
    %v8400 = vmax.f32 %v8384, 0.0001
    %v8401 = vmax.f32 %v8385, 0.0001
    %v8402 = vmax.f32 %v8386, 0.0001
    %v8403 = vmax.f32 %v8387, 0.0001
    %v8404 = vmax.f32 %v8388, 0.0001
    %v8405 = vmax.f32 %v8389, 0.0001
    %v8406 = vmax.f32 %v8390, 0.0001
    %v8407 = vmax.f32 %v8391, 0.0001
    %v8408 = vmin.f32 %v8392, 1000.0
    %v8409 = vmin.f32 %v8393, 1000.0
    %v8410 = vmin.f32 %v8394, 1000.0
    %v8411 = vmin.f32 %v8395, 1000.0
    %v8412 = vmin.f32 %v8396, 1000.0
    %v8413 = vmin.f32 %v8397, 1000.0
    %v8414 = vmin.f32 %v8398, 1000.0
    %v8415 = vmin.f32 %v8399, 1000.0
    %v8416 = vmin.f32 %v8400, 1000.0
    %v8417 = vmin.f32 %v8401, 1000.0
    %v8418 = vmin.f32 %v8402, 1000.0
    %v8419 = vmin.f32 %v8403, 1000.0
    %v8420 = vmin.f32 %v8404, 1000.0
    %v8421 = vmin.f32 %v8405, 1000.0
    %v8422 = vmin.f32 %v8406, 1000.0
    %v8423 = vmin.f32 %v8407, 1000.0
    %8424 = vst.msk [vmem:[%s69] sm:$0xff] %vm224, %v8408
    %8425 = vst.msk [vmem:[%s69 + $0x8] sm:$0xff] %vm224, %v8409
    %8426 = vst.msk [vmem:[%s69 + $0x10] sm:$0xff] %vm224, %v8410
    %8427 = vst.msk [vmem:[%s69 + $0x18] sm:$0xff] %vm224, %v8411
    %8428 = vst.msk [vmem:[%s69 + $0x20] sm:$0xff] %vm224, %v8412
    %8429 = vst.msk [vmem:[%s69 + $0x28] sm:$0xff] %vm224, %v8413
    %8430 = vst.msk [vmem:[%s69 + $0x30] sm:$0xff] %vm224, %v8414
    %8431 = vst.msk [vmem:[%s69 + $0x38] sm:$0xff] %vm224, %v8415
    %8432 = vst.msk [vmem:[%s69 + $0x40] sm:$0xff] %vm224, %v8416
    %8433 = vst.msk [vmem:[%s69 + $0x48] sm:$0xff] %vm224, %v8417
    %8434 = vst.msk [vmem:[%s69 + $0x50] sm:$0xff] %vm224, %v8418
    %8435 = vst.msk [vmem:[%s69 + $0x58] sm:$0xff] %vm224, %v8419
    %8436 = vst.msk [vmem:[%s69 + $0x60] sm:$0xff] %vm224, %v8420
    %8437 = vst.msk [vmem:[%s69 + $0x68] sm:$0xff] %vm224, %v8421
    %8438 = vst.msk [vmem:[%s69 + $0x70] sm:$0xff] %vm224, %v8422
    %8439 = vst.msk [vmem:[%s69 + $0x78] sm:$0xff] %vm224, %v8423
    // Predicated region
    $region122: #{forward.1} parent=1 // pred_check
      _
    $region123: #{forward.1} parent=1 // pred_check_branch
      %8441 = sbr.rel (0) target = $region125
    $region124: #{forward.1} parent=1 // pred_region
      _
    $region125: #{forward.1} parent=1 // pred_fallthru
      _
    // Predicated region
    $region126: #{forward.1} parent=1 // pred_check
      _
    $region127: #{forward.1} parent=1 // pred_check_branch
      %8443 = sbr.rel (0) target = $region129
    $region128: #{forward.1} parent=1 // pred_region
      %s8445 = ssub.s32 2048, 2048
      %8446 = vsyncadd [#allocation3], %s8445
      %s8447 = sshll.u32 [#allocation2], 4
      %s8448 = int_to_ptr.vmem [resolvable:$true] %s8447
      %8453 = dma.vmem_to_hbm [thread:$0]  %s8448, 2048, %s63, [#allocation3], 128, 128, 8
    $region129: #{forward.1} parent=1 // pred_fallthru
      _
    // Predicated region
    $region130: #{forward.1} parent=1 // pred_check
      _
    $region131: #{forward.1} parent=1 // pred_check_branch
      %8455 = sbr.rel (0) target = $region133
    $region132: #{forward.1} parent=1 // pred_region
      _
    $region133: #{forward.1} parent=1 // pred_fallthru
      _
    // Predicated region
    $region134: #{forward.1} parent=1 // pred_check
      _
    $region135: #{forward.1} parent=1 // pred_check_branch
      %8457 = sbr.rel (0) target = $region137
    $region136: #{forward.1} parent=1 // pred_region
      _
    $region137: #{forward.1} parent=1 // pred_fallthru
      _
    // Predicated region
    $region138: #{forward.1} parent=1 // pred_check
      _
    $region139: #{forward.1} parent=1 // pred_check_branch
      %8459 = sbr.rel (0) target = $region141
    $region140: #{forward.1} parent=1 // pred_region
      _
    $region141: #{forward.1} parent=1 // pred_fallthru
      _
    // Predicated region
    $region142: #{forward.1} parent=1 // pred_check
      _
    $region143: #{forward.1} parent=1 // pred_check_branch
      %8461 = sbr.rel (0) target = $region145
    $region144: #{forward.1} parent=1 // pred_region
      _
    $region145: #{forward.1} parent=1 // pred_fallthru
      _
    // Predicated region
    $region146: #{forward.1} parent=1 // pred_check
      _
    $region147: #{forward.1} parent=1 // pred_check_branch
      %8463 = sbr.rel (0) target = $region149
    $region148: #{forward.1} parent=1 // pred_region
      %8464 = dma.done [#allocation3], 2048
    $region149: #{forward.1} parent=1 // pred_fallthru
      _
    // Predicated region
    $region150: #{forward.1} parent=1 // pred_check
      _
    $region151: #{forward.1} parent=1 // pred_check_branch
      %8466 = sbr.rel (0) target = $region153
    $region152: #{forward.1} parent=1 // pred_region
      _
    $region153: #{forward.1} parent=1 // pred_fallthru
      _
    // Predicated region
    $region154: #{forward.1} parent=1 // pred_check
      _
    $region155: #{forward.1} parent=1 // pred_check_branch
      %8468 = sbr.rel (0) target = $region157
    $region156: #{forward.1} parent=1 // pred_region
      _
    $region157: #{forward.1} parent=1 // pred_fallthru
      _
    // Predicated region
    $region158: #{forward.1} parent=1 // pred_check
      _
    $region159: #{forward.1} parent=1 // pred_check_branch
      %8470 = sbr.rel (0) target = $region161
    $region160: #{forward.1} parent=1 // pred_region
      _
    $region161: #{forward.1} parent=1 // pred_fallthru
      _
    %8471 = vsyncpa [#allocation3], 1

</llo_original>
